<compile_context>
chip_gen: v5e
topology: v5e:2x2
jax: 0.10.0
libtpu: 0.0.40
codegen_flags: <defaults>
</compile_context>

<pallas_src>
import functools
import math

import jax
import jax.numpy as jnp
from jax import lax
from jax.experimental import pallas as pl
from jax.experimental.pallas import tpu as pltpu

_MM_DTYPE = jnp.bfloat16            # MXU input dtype (f32 accumulation everywhere)
_LN_EPS = 1e-5
_VMEM_LIMIT = 64 * 1024 * 1024      # <= physical VMEM on v5e/v6e (128 MiB) and v7x (64 MiB)
# TODO(synk): for very large E on v7x, single-buffer the resident weight BlockSpecs
#             (pipeline_mode=pl.Buffered(1)) to stay inside the 64 MiB physical VMEM.


def _cparams(*sem):
    return pltpu.CompilerParams(dimension_semantics=sem, vmem_limit_bytes=_VMEM_LIMIT)


# -----------------------------------------------------------------------------
# In-kernel helpers
# -----------------------------------------------------------------------------
def _ln(x, g, b, eps):
    """LayerNorm over the last dim, f32 math, (1, D) gamma/beta broadcast."""
    x = x.astype(jnp.float32)
    mean = jnp.mean(x, axis=-1, keepdims=True)
    var = jnp.mean((x - mean) ** 2, axis=-1, keepdims=True)
    return (x - mean) * lax.rsqrt(var + eps) * g + b


# -----------------------------------------------------------------------------
# Pallas kernels
# -----------------------------------------------------------------------------
def _kv_proj_ln_kernel(x_ref, g_ref, b_ref, wk_ref, bk_ref, wv_ref, bv_ref,
                       k_ref, v_ref, *, eps):
    """Fused LN -> K-proj / V-proj (bf16 outputs), one row tile per grid step."""
    xn = _ln(x_ref[...], g_ref[...], b_ref[...], eps).astype(_MM_DTYPE)
    k_ref[...] = (jnp.dot(xn, wk_ref[...], preferred_element_type=jnp.float32)
                  + bk_ref[...]).astype(k_ref.dtype)
    v_ref[...] = (jnp.dot(xn, wv_ref[...], preferred_element_type=jnp.float32)
                  + bv_ref[...]).astype(v_ref.dtype)


def _kv_proj_kernel(x_ref, wk_ref, bk_ref, wv_ref, bv_ref, k_ref, v_ref):
    """K/V projection of an already-normalized input (ViT memory, pre-cast bf16)."""
    xb = x_ref[...]
    k_ref[...] = (jnp.dot(xb, wk_ref[...], preferred_element_type=jnp.float32)
                  + bk_ref[...]).astype(k_ref.dtype)
    v_ref[...] = (jnp.dot(xb, wv_ref[...], preferred_element_type=jnp.float32)
                  + bv_ref[...]).astype(v_ref.dtype)


def _attn_block_kernel(xq_ref, k_ref, v_ref, g_ref, b_ref,
                       wq_ref, bq_ref, wo_ref, bo_ref, o_ref, *, nhead, eps):
    """Fused: LN(q) -> Q-proj (scale pre-folded) -> per-head softmax attention ->
    merged single out-proj -> +residual.   One (stream, batch) element per grid step."""
    xq = xq_ref[0, 0]                                    # (Lq, E) f32, residual input
    E = xq.shape[-1]
    dh = E // nhead

    xn = _ln(xq, g_ref[0], b_ref[0], eps)
    # Softmax scale is folded into Wq/bq at parameter-prep time -> no per-step q*scale.
    q = jnp.dot(xn.astype(_MM_DTYPE), wq_ref[...],
                preferred_element_type=jnp.float32) + bq_ref[...]
    qb = q.astype(_MM_DTYPE)                             # single bf16 cast before head loop
    k = k_ref[0]                                         # (Lk, E) bf16, pre-projected
    v = v_ref[0]                                         # (Lk, E) bf16, pre-projected

    heads = []
    # TODO(synk): for large Lq/Lk, tile the key axis with an online-softmax accumulator
    #             (and add a query-row grid axis) instead of one monolithic block.
    for h in range(nhead):                               # static unroll over heads
        sl = slice(h * dh, (h + 1) * dh)
        s = lax.dot_general(qb[:, sl], k[:, sl], (((1,), (1,)), ((), ())),
                            preferred_element_type=jnp.float32)          # (Lq, Lk)
        m = jnp.max(s, axis=-1, keepdims=True)
        p = jnp.exp(s - m)
        p = p * pl.reciprocal(jnp.sum(p, axis=-1, keepdims=True), approx=True)  # EUP
        heads.append(jnp.dot(p.astype(_MM_DTYPE), v[:, sl],
                             preferred_element_type=jnp.float32))         # (Lq, dh)

    o = jnp.concatenate(heads, axis=-1)                  # (Lq, E) merged heads (lane concat)
    out = jnp.dot(o.astype(_MM_DTYPE), wo_ref[...],
                  preferred_element_type=jnp.float32)    # ONE K=E out-proj matmul
    o_ref[0, 0] = xq + out + bo_ref[...]                 # residual + out-proj bias


def _ffn_block_kernel(x_ref, g_ref, b_ref, w1_ref, b1_ref, w2_ref, b2_ref, o_ref, *, eps):
    """Fused: LN -> lin1 -> GELU -> lin2 -> +residual, one row tile per grid step."""
    x = x_ref[...]                                       # (TM, E) f32, residual
    h = _ln(x, g_ref[...], b_ref[...], eps)
    h = jnp.dot(h.astype(_MM_DTYPE), w1_ref[...],
                preferred_element_type=jnp.float32) + b1_ref[...]
    # TODO(synk): PyTorch F.gelu defaults to exact erf-GELU; tanh approximation used here
    #             for guaranteed Mosaic lowering (numerical diff ~1e-3).
    h = jax.nn.gelu(h, approximate=True)
    y = jnp.dot(h.astype(_MM_DTYPE), w2_ref[...],
                preferred_element_type=jnp.float32) + b2_ref[...]
    o_ref[...] = x + y


def _ln_kernel(x_ref, g_ref, b_ref, o_ref, *, eps):
    o_ref[...] = _ln(x_ref[...], g_ref[...], b_ref[...], eps)


# -----------------------------------------------------------------------------
# Pallas wrappers
# -----------------------------------------------------------------------------
def _row_tile(n, max_tile=512):
    """Largest row tile <= max_tile (multiple of 16) that divides n, else full n."""
    if n <= max_tile:
        return n
    t = max_tile - max_tile % 16
    while t >= 16:
        if n % t == 0:
            return t
        t -= 16
    return n


def kv_proj(x, ln, wk, bk, wv, bv, *, eps):
    """Per-layer K/V projection, computed ONCE and shared by both streams.
    x: (B, L, E);  ln: (gamma, beta) or None (input already normalized, bf16)."""
    B, L, E = x.shape
    N = B * L
    x2 = x.reshape(N, E)
    tm = _row_tile(N)
    row = lambda i: (i, 0)
    vec = lambda i: (0, 0)
    if ln is not None:
        kern = functools.partial(_kv_proj_ln_kernel, eps=eps)
        in_specs = [pl.BlockSpec((tm, E), row),
                    pl.BlockSpec((1, E), vec), pl.BlockSpec((1, E), vec),
                    pl.BlockSpec((E, E), vec), pl.BlockSpec((1, E), vec),
                    pl.BlockSpec((E, E), vec), pl.BlockSpec((1, E), vec)]
        args = (x2, ln[0], ln[1], wk, bk, wv, bv)
    else:
        kern = _kv_proj_kernel
        in_specs = [pl.BlockSpec((tm, E), row),
                    pl.BlockSpec((E, E), vec), pl.BlockSpec((1, E), vec),
                    pl.BlockSpec((E, E), vec), pl.BlockSpec((1, E), vec)]
        args = (x2, wk, bk, wv, bv)
    k, v = pl.pallas_call(
        kern,
        out_shape=(jax.ShapeDtypeStruct((N, E), _MM_DTYPE),
                   jax.ShapeDtypeStruct((N, E), _MM_DTYPE)),
        grid=(N // tm,),
        in_specs=in_specs,
        out_specs=(pl.BlockSpec((tm, E), row), pl.BlockSpec((tm, E), row)),
        compiler_params=_cparams("parallel"),
    )(*args)
    return k.reshape(B, L, E), v.reshape(B, L, E)


def attention_block(x_q, k, v, ln_g, ln_b, wq, bq, wo, bo, *, nhead, eps):
    """Fused pre-LN MHA block with residual.  x_q: (NS*B, Lq, E) (NS streams batched),
    k/v: (B, Lk, E) bf16 pre-projected (shared by all streams), ln_g/ln_b: (NS or 1, E)."""
    NSB, Lq, E = x_q.shape
    B, Lk, _ = k.shape
    NS = NSB // B
    xq4 = x_q.reshape(NS, B, Lq, E)
    g3 = ln_g.reshape(-1, 1, E)
    b3 = ln_b.reshape(-1, 1, E)
    per_stream_ln = g3.shape[0] == NS and NS > 1
    ln_idx = (lambda s, b: (s, 0, 0)) if per_stream_ln else (lambda s, b: (0, 0, 0))
    wvec = lambda s, b: (0, 0)
    kern = functools.partial(_attn_block_kernel, nhead=nhead, eps=eps)
    out = pl.pallas_call(
        kern,
        out_shape=jax.ShapeDtypeStruct((NS, B, Lq, E), jnp.float32),
        grid=(NS, B),
        in_specs=[
            pl.BlockSpec((1, 1, Lq, E), lambda s, b: (s, b, 0, 0)),  # x_q (residual)
            pl.BlockSpec((1, Lk, E), lambda s, b: (b, 0, 0)),        # K (shared by streams)
            pl.BlockSpec((1, Lk, E), lambda s, b: (b, 0, 0)),        # V (shared by streams)
            pl.BlockSpec((1, 1, E), ln_idx),                         # LN gamma (per stream)
            pl.BlockSpec((1, 1, E), ln_idx),                         # LN beta
            pl.BlockSpec((E, E), wvec),                              # Wq (scale folded)
            pl.BlockSpec((1, E), wvec),                              # bq (scale folded)
            pl.BlockSpec((E, E), wvec),                              # Wo
            pl.BlockSpec((1, E), wvec),                              # bo
        ],
        out_specs=pl.BlockSpec((1, 1, Lq, E), lambda s, b: (s, b, 0, 0)),
        compiler_params=_cparams("parallel", "parallel"),
    )(xq4, k, v, g3, b3, wq, bq, wo, bo)
    return out.reshape(NSB, Lq, E)


def ffn_block(x, ln, w1, b1, w2, b2, *, eps):
    """Fused pre-LN MLP block with residual; grid over row tiles of (N, E)."""
    B, L, E = x.shape
    N = B * L
    Fdim = w1.shape[1]
    x2 = x.reshape(N, E)
    tm = _row_tile(N)
    row = lambda i: (i, 0)
    vec = lambda i: (0, 0)
    out = pl.pallas_call(
        functools.partial(_ffn_block_kernel, eps=eps),
        out_shape=jax.ShapeDtypeStruct((N, E), jnp.float32),
        grid=(N // tm,),
        in_specs=[
            pl.BlockSpec((tm, E), row),
            pl.BlockSpec((1, E), vec), pl.BlockSpec((1, E), vec),       # LN gamma/beta
            pl.BlockSpec((E, Fdim), vec), pl.BlockSpec((1, Fdim), vec),  # W1 / b1
            pl.BlockSpec((Fdim, E), vec), pl.BlockSpec((1, E), vec),     # W2 / b2
        ],
        out_specs=pl.BlockSpec((tm, E), row),
        compiler_params=_cparams("parallel"),
    )(x2, ln[0], ln[1], w1, b1, w2, b2)
    return out.reshape(B, L, E)


def layernorm(x, gamma, beta, eps):
    """Standalone LN (only used for the final decoder norm)."""
    B, L, E = x.shape
    N = B * L
    x2 = x.reshape(N, E)
    tm = _row_tile(N)
    row = lambda i: (i, 0)
    vec = lambda i: (0, 0)
    out = pl.pallas_call(
        functools.partial(_ln_kernel, eps=eps),
        out_shape=jax.ShapeDtypeStruct((N, E), jnp.float32),
        grid=(N // tm,),
        in_specs=[pl.BlockSpec((tm, E), row),
                  pl.BlockSpec((1, E), vec), pl.BlockSpec((1, E), vec)],
        out_specs=pl.BlockSpec((tm, E), row),
        compiler_params=_cparams("parallel"),
    )(x2, gamma, beta)
    return out.reshape(B, L, E)


# -----------------------------------------------------------------------------
# Model glue
# -----------------------------------------------------------------------------
def decoder_layer(query, content, memory_b, lp, nhead, eps, update_content):
    # TODO(synk): attn_mask / key_padding_mask support not implemented (None only).
    sa, ca = lp["self_attn"], lp["cross_attn"]
    B = query.shape[0]

    # --- Hoisted, deduplicated KV projections (once per layer, shared by both streams) ---
    k_s, v_s = kv_proj(content, (lp["normc_g"], lp["normc_b"]),
                       sa["wk"], sa["bk"], sa["wv"], sa["bv"], eps=eps)      # LN_c fused
    k_m, v_m = kv_proj(memory_b, None, ca["wk"], ca["bk"], ca["wv"], ca["bv"], eps=eps)

    def run(x, lng, lnb):
        # self-attn (q-side LN per stream), cross-attn (norm1 for both streams), FFN.
        t = attention_block(x, k_s, v_s, lng, lnb,
                            sa["wq"], sa["bq"], sa["wo"], sa["bo"], nhead=nhead, eps=eps)
        t = attention_block(t, k_m, v_m, lp["norm1_g"], lp["norm1_b"],
                            ca["wq"], ca["bq"], ca["wo"], ca["bo"], nhead=nhead, eps=eps)
        return ffn_block(t, (lp["norm2_g"], lp["norm2_b"]),
                         lp["lin1_w"], lp["lin1_b"], lp["lin2_w"], lp["lin2_b"], eps=eps)

    if not update_content:
        return run(query, lp["normq_g"], lp["normq_b"]), content

    if query.shape[1] == content.shape[1]:
        # Batch both streams through the SAME pallas_calls (grid = (2, B)): shared weights,
        # shared self-attn KV (= LN_c(content)) and shared cross-attn KV (= memory).
        x = jnp.concatenate([query, content], axis=0)
        lng = jnp.concatenate([lp["normq_g"], lp["normc_g"]], axis=0)
        lnb = jnp.concatenate([lp["normq_b"], lp["normc_b"]], axis=0)
        y = run(x, lng, lnb)
        return y[:B], y[B:]

    # Fallback for unequal sequence lengths: sequential streams (still share hoisted KV).
    q_new = run(query, lp["normq_g"], lp["normq_b"])
    c_new = run(content, lp["normc_g"], lp["normc_b"])
    return q_new, c_new


def decoder_forward(params, query, content, memory, *, nhead, eps=_LN_EPS):
    # memory is pre-LayerNorm'd by ViT and only ever consumed as an MXU input -> cast once.
    memory_b = memory.astype(_MM_DTYPE)
    layers = params["layers"]
    for i, lp in enumerate(layers):
        last = i == len(layers) - 1
        query, content = decoder_layer(query, content, memory_b, lp, nhead, eps,
                                       update_content=not last)
    return layernorm(query, params["final_norm_g"], params["final_norm_b"], eps)


# -----------------------------------------------------------------------------
# Deterministic parameter init (weights pre-transposed (in, out), bf16 storage;
# softmax scale folded into Wq / bq at prep time -> zero runtime cost).
# -----------------------------------------------------------------------------
def _init_mha(key, E, nhead):
    kq, kk, kv, ko = jax.random.split(key, 4)
    scale = 1.0 / math.sqrt(E // nhead)
    return dict(
        wq=((jax.random.normal(kq, (E, E), jnp.float32) * 0.02) * scale).astype(_MM_DTYPE),
        bq=jnp.zeros((1, E), jnp.float32) * scale,
        wk=(jax.random.normal(kk, (E, E), jnp.float32) * 0.02).astype(_MM_DTYPE),
        bk=jnp.zeros((1, E), jnp.float32),
        wv=(jax.random.normal(kv, (E, E), jnp.float32) * 0.02).astype(_MM_DTYPE),
        bv=jnp.zeros((1, E), jnp.float32),
        wo=(jax.random.normal(ko, (E, E), jnp.float32) * 0.02).astype(_MM_DTYPE),
        bo=jnp.zeros((1, E), jnp.float32),
    )


def _init_layer(key, E, Fdim, nhead):
    ks = jax.random.split(key, 4)
    ones = jnp.ones((1, E), jnp.float32)
    zeros = jnp.zeros((1, E), jnp.float32)
    return dict(
        self_attn=_init_mha(ks[0], E, nhead),
        cross_attn=_init_mha(ks[1], E, nhead),
        lin1_w=(jax.random.normal(ks[2], (E, Fdim), jnp.float32) * 0.02).astype(_MM_DTYPE),
        lin1_b=jnp.zeros((1, Fdim), jnp.float32),
        lin2_w=(jax.random.normal(ks[3], (Fdim, E), jnp.float32) * 0.02).astype(_MM_DTYPE),
        lin2_b=jnp.zeros((1, E), jnp.float32),
        norm1_g=ones, norm1_b=zeros,
        norm2_g=ones, norm2_b=zeros,
        normq_g=ones, normq_b=zeros,
        normc_g=ones, normc_b=zeros,
    )


def init_decoder(key, E, depth, nhead, mlp_ratio):
    keys = jax.random.split(key, depth)
    return dict(
        layers=[_init_layer(keys[i], E, E * mlp_ratio, nhead) for i in range(depth)],
        final_norm_g=jnp.ones((1, E), jnp.float32),
        final_norm_b=jnp.zeros((1, E), jnp.float32),
    )


# -----------------------------------------------------------------------------
if __name__ == "__main__":
    # TODO(synk): at tiny demo E (=32 < 128 lanes) outputs are lane-sparse; real models
    #             (E a multiple of 128) get the lane-dense store path automatically.
    EMBED, DEPTH, HEADS, MLP_RATIO = 32, 2, 4, 4
    B, LQ, LC, LM = 2, 8, 8, 16

    root = jax.random.PRNGKey(0)
    kp, kq, kc, km = jax.random.split(root, 4)

    params = init_decoder(kp, EMBED, DEPTH, HEADS, MLP_RATIO)
    query = jax.random.normal(kq, (B, LQ, EMBED), jnp.float32)
    content = jax.random.normal(kc, (B, LC, EMBED), jnp.float32)
    memory = jax.random.normal(km, (B, LM, EMBED), jnp.float32)

    fwd = jax.jit(functools.partial(decoder_forward, nhead=HEADS))
    out = fwd(params, query, content, memory)
    jax.block_until_ready(out)
    assert out.shape == (B, LQ, EMBED) and bool(jnp.all(jnp.isfinite(out)))
    print("KERNEL_OK")
</pallas_src>

<mosaic_0001>
module attributes {stable_mosaic.version = 11 : i64} {
  func.func @_kv_proj_ln_kernel(%arg0: i32, %arg1: memref<16x32xf32, #tpu.memory_space<vmem>>, %arg2: memref<1x32xf32, #tpu.memory_space<vmem>>, %arg3: memref<1x32xf32, #tpu.memory_space<vmem>>, %arg4: memref<32x32xbf16, #tpu.memory_space<vmem>>, %arg5: memref<1x32xf32, #tpu.memory_space<vmem>>, %arg6: memref<32x32xbf16, #tpu.memory_space<vmem>>, %arg7: memref<1x32xf32, #tpu.memory_space<vmem>>, %arg8: memref<16x32xbf16, #tpu.memory_space<vmem>>, %arg9: memref<16x32xbf16, #tpu.memory_space<vmem>>) attributes {dimension_semantics = [#tpu.dimension_semantics<parallel>], iteration_bounds = array<i64: 1>, scalar_prefetch = 0 : i64, scratch_operands = 0 : i64, tpu.core_type = #tpu.core_type<tc>, window_params = [{transform_indices = @transform_0, window_bounds = array<i64: 16, 32>}, {pipeline_mode = #tpu.pipeline_mode<synchronous>, transform_indices = @transform_1, window_bounds = array<i64: 1, 32>}, {pipeline_mode = #tpu.pipeline_mode<synchronous>, transform_indices = @transform_2, window_bounds = array<i64: 1, 32>}, {pipeline_mode = #tpu.pipeline_mode<synchronous>, transform_indices = @transform_3, window_bounds = array<i64: 32, 32>}, {pipeline_mode = #tpu.pipeline_mode<synchronous>, transform_indices = @transform_4, window_bounds = array<i64: 1, 32>}, {pipeline_mode = #tpu.pipeline_mode<synchronous>, transform_indices = @transform_5, window_bounds = array<i64: 32, 32>}, {pipeline_mode = #tpu.pipeline_mode<synchronous>, transform_indices = @transform_6, window_bounds = array<i64: 1, 32>}, {transform_indices = @transform_7, window_bounds = array<i64: 16, 32>}, {transform_indices = @transform_8, window_bounds = array<i64: 16, 32>}]} {
    %c0 = arith.constant 0 : index
    %c0_0 = arith.constant 0 : index
    %0 = vector.load %arg1[%c0, %c0_0] : memref<16x32xf32, #tpu.memory_space<vmem>>, vector<16x32xf32>
    %c0_1 = arith.constant 0 : index
    %c0_2 = arith.constant 0 : index
    %1 = vector.load %arg2[%c0_1, %c0_2] : memref<1x32xf32, #tpu.memory_space<vmem>>, vector<1x32xf32>
    %c0_3 = arith.constant 0 : index
    %c0_4 = arith.constant 0 : index
    %2 = vector.load %arg3[%c0_3, %c0_4] : memref<1x32xf32, #tpu.memory_space<vmem>>, vector<1x32xf32>
    %cst = arith.constant dense<0.000000e+00> : vector<16xf32>
    %3 = vector.multi_reduction <add>, %0, %cst [1] : vector<16x32xf32> to vector<16xf32>
    %4 = vector.shape_cast %3 : vector<16xf32> to vector<16x1xf32>
    %cst_5 = arith.constant 3.200000e+01 : f32
    %5 = vector.broadcast %cst_5 : f32 to vector<16x1xf32>
    %6 = arith.divf %4, %5 : vector<16x1xf32>
    %7 = vector.broadcast %6 : vector<16x1xf32> to vector<16x32xf32>
    %8 = arith.subf %0, %7 : vector<16x32xf32>
    %9 = arith.mulf %8, %8 : vector<16x32xf32>
    %cst_6 = arith.constant dense<0.000000e+00> : vector<16xf32>
    %10 = vector.multi_reduction <add>, %9, %cst_6 [1] : vector<16x32xf32> to vector<16xf32>
    %11 = vector.shape_cast %10 : vector<16xf32> to vector<16x1xf32>
    %cst_7 = arith.constant 3.200000e+01 : f32
    %12 = vector.broadcast %cst_7 : f32 to vector<16x1xf32>
    %13 = arith.divf %11, %12 : vector<16x1xf32>
    %14 = vector.broadcast %6 : vector<16x1xf32> to vector<16x32xf32>
    %15 = arith.subf %0, %14 : vector<16x32xf32>
    %cst_8 = arith.constant 9.99999974E-6 : f32
    %16 = vector.broadcast %cst_8 : f32 to vector<16x1xf32>
    %17 = arith.addf %13, %16 : vector<16x1xf32>
    %18 = math.rsqrt %17 : vector<16x1xf32>
    %19 = vector.broadcast %18 : vector<16x1xf32> to vector<16x32xf32>
    %20 = arith.mulf %15, %19 : vector<16x32xf32>
    %21 = vector.broadcast %1 : vector<1x32xf32> to vector<16x32xf32>
    %22 = arith.mulf %20, %21 : vector<16x32xf32>
    %23 = vector.broadcast %2 : vector<1x32xf32> to vector<16x32xf32>
    %24 = arith.addf %22, %23 : vector<16x32xf32>
    %25 = arith.truncf %24 : vector<16x32xf32> to vector<16x32xbf16>
    %c0_9 = arith.constant 0 : index
    %c0_10 = arith.constant 0 : index
    %26 = vector.load %arg4[%c0_9, %c0_10] : memref<32x32xbf16, #tpu.memory_space<vmem>>, vector<32x32xbf16>
    %cst_11 = arith.constant dense<0.000000e+00> : vector<16x32xf32>
    %27 = tpu.matmul %25, %26, %cst_11 {dimension_numbers = #tpu.dot_dimension_numbers<[1], [0], [0], [1], [0, 0, 1, 1], [], []>} : vector<16x32xbf16>, vector<32x32xbf16>, vector<16x32xf32> -> vector<16x32xf32>
    %c0_12 = arith.constant 0 : index
    %c0_13 = arith.constant 0 : index
    %28 = vector.load %arg5[%c0_12, %c0_13] : memref<1x32xf32, #tpu.memory_space<vmem>>, vector<1x32xf32>
    %29 = vector.broadcast %28 : vector<1x32xf32> to vector<16x32xf32>
    %30 = arith.addf %27, %29 : vector<16x32xf32>
    %31 = arith.truncf %30 : vector<16x32xf32> to vector<16x32xbf16>
    %c0_14 = arith.constant 0 : index
    %c0_15 = arith.constant 0 : index
    %32 = vector.load %arg8[%c0_14, %c0_15] : memref<16x32xbf16, #tpu.memory_space<vmem>>, vector<16x32xbf16>
    tpu.vector_store %arg8[%c0_14, %c0_15], %31 {strides = array<i32>} : memref<16x32xbf16, #tpu.memory_space<vmem>>, vector<16x32xbf16>,
    %c0_16 = arith.constant 0 : index
    %c0_17 = arith.constant 0 : index
    %33 = vector.load %arg6[%c0_16, %c0_17] : memref<32x32xbf16, #tpu.memory_space<vmem>>, vector<32x32xbf16>
    %cst_18 = arith.constant dense<0.000000e+00> : vector<16x32xf32>
    %34 = tpu.matmul %25, %33, %cst_18 {dimension_numbers = #tpu.dot_dimension_numbers<[1], [0], [0], [1], [0, 0, 1, 1], [], []>} : vector<16x32xbf16>, vector<32x32xbf16>, vector<16x32xf32> -> vector<16x32xf32>
    %c0_19 = arith.constant 0 : index
    %c0_20 = arith.constant 0 : index
    %35 = vector.load %arg7[%c0_19, %c0_20] : memref<1x32xf32, #tpu.memory_space<vmem>>, vector<1x32xf32>
    %36 = vector.broadcast %35 : vector<1x32xf32> to vector<16x32xf32>
    %37 = arith.addf %34, %36 : vector<16x32xf32>
    %38 = arith.truncf %37 : vector<16x32xf32> to vector<16x32xbf16>
    %c0_21 = arith.constant 0 : index
    %c0_22 = arith.constant 0 : index
    %39 = vector.load %arg9[%c0_21, %c0_22] : memref<16x32xbf16, #tpu.memory_space<vmem>>, vector<16x32xbf16>
    tpu.vector_store %arg9[%c0_21, %c0_22], %38 {strides = array<i32>} : memref<16x32xbf16, #tpu.memory_space<vmem>>, vector<16x32xbf16>,
    return
  }
  func.func @transform_0(%arg0: i32) -> (i32, i32) {
    %c0_i32 = arith.constant 0 : i32
    %c0_i32_0 = arith.constant 0 : i32
    return %arg0, %c0_i32 : i32, i32
  }
  func.func @transform_1(%arg0: i32) -> (i32, i32) {
    %c0_i32 = arith.constant 0 : i32
    %c0_i32_0 = arith.constant 0 : i32
    %c0_i32_1 = arith.constant 0 : i32
    return %c0_i32, %c0_i32_0 : i32, i32
  }
  func.func @transform_2(%arg0: i32) -> (i32, i32) {
    %c0_i32 = arith.constant 0 : i32
    %c0_i32_0 = arith.constant 0 : i32
    %c0_i32_1 = arith.constant 0 : i32
    return %c0_i32, %c0_i32_0 : i32, i32
  }
  func.func @transform_3(%arg0: i32) -> (i32, i32) {
    %c0_i32 = arith.constant 0 : i32
    %c0_i32_0 = arith.constant 0 : i32
    %c0_i32_1 = arith.constant 0 : i32
    return %c0_i32, %c0_i32_0 : i32, i32
  }
  func.func @transform_4(%arg0: i32) -> (i32, i32) {
    %c0_i32 = arith.constant 0 : i32
    %c0_i32_0 = arith.constant 0 : i32
    %c0_i32_1 = arith.constant 0 : i32
    return %c0_i32, %c0_i32_0 : i32, i32
  }
  func.func @transform_5(%arg0: i32) -> (i32, i32) {
    %c0_i32 = arith.constant 0 : i32
    %c0_i32_0 = arith.constant 0 : i32
    %c0_i32_1 = arith.constant 0 : i32
    return %c0_i32, %c0_i32_0 : i32, i32
  }
  func.func @transform_6(%arg0: i32) -> (i32, i32) {
    %c0_i32 = arith.constant 0 : i32
    %c0_i32_0 = arith.constant 0 : i32
    %c0_i32_1 = arith.constant 0 : i32
    return %c0_i32, %c0_i32_0 : i32, i32
  }
  func.func @transform_7(%arg0: i32) -> (i32, i32) {
    %c0_i32 = arith.constant 0 : i32
    %c0_i32_0 = arith.constant 0 : i32
    return %arg0, %c0_i32 : i32, i32
  }
  func.func @transform_8(%arg0: i32) -> (i32, i32) {
    %c0_i32 = arith.constant 0 : i32
    %c0_i32_0 = arith.constant 0 : i32
    return %arg0, %c0_i32 : i32, i32
  }
}

module attributes {stable_mosaic.version = 11 : i64} {
  func.func @_attn_block_kernel(%arg0: i32, %arg1: i32, %arg2: memref<1x1x8x32xf32, #tpu.memory_space<vmem>>, %arg3: memref<1x8x32xbf16, #tpu.memory_space<vmem>>, %arg4: memref<1x8x32xbf16, #tpu.memory_space<vmem>>, %arg5: memref<1x1x32xf32, #tpu.memory_space<vmem>>, %arg6: memref<1x1x32xf32, #tpu.memory_space<vmem>>, %arg7: memref<32x32xbf16, #tpu.memory_space<vmem>>, %arg8: memref<1x32xf32, #tpu.memory_space<vmem>>, %arg9: memref<32x32xbf16, #tpu.memory_space<vmem>>, %arg10: memref<1x32xf32, #tpu.memory_space<vmem>>, %arg11: memref<1x1x8x32xf32, #tpu.memory_space<vmem>>) attributes {dimension_semantics = [#tpu.dimension_semantics<parallel>, #tpu.dimension_semantics<parallel>], iteration_bounds = array<i64: 2, 2>, scalar_prefetch = 0 : i64, scratch_operands = 0 : i64, tpu.core_type = #tpu.core_type<tc>, window_params = [{transform_indices = @transform_0, window_bounds = array<i64: 1, 1, 8, 32>}, {transform_indices = @transform_1, window_bounds = array<i64: 1, 8, 32>}, {transform_indices = @transform_2, window_bounds = array<i64: 1, 8, 32>}, {transform_indices = @transform_3, window_bounds = array<i64: 1, 1, 32>}, {transform_indices = @transform_4, window_bounds = array<i64: 1, 1, 32>}, {pipeline_mode = #tpu.pipeline_mode<synchronous>, transform_indices = @transform_5, window_bounds = array<i64: 32, 32>}, {pipeline_mode = #tpu.pipeline_mode<synchronous>, transform_indices = @transform_6, window_bounds = array<i64: 1, 32>}, {pipeline_mode = #tpu.pipeline_mode<synchronous>, transform_indices = @transform_7, window_bounds = array<i64: 32, 32>}, {pipeline_mode = #tpu.pipeline_mode<synchronous>, transform_indices = @transform_8, window_bounds = array<i64: 1, 32>}, {transform_indices = @transform_9, window_bounds = array<i64: 1, 1, 8, 32>}]} {
    %c0 = arith.constant 0 : index
    %c0_0 = arith.constant 0 : index
    %c0_1 = arith.constant 0 : index
    %c0_2 = arith.constant 0 : index
    %0 = vector.load %arg2[%c0, %c0_0, %c0_1, %c0_2] : memref<1x1x8x32xf32, #tpu.memory_space<vmem>>, vector<1x1x8x32xf32>
    %1 = vector.shape_cast %0 : vector<1x1x8x32xf32> to vector<8x32xf32>
    %c0_3 = arith.constant 0 : index
    %c0_4 = arith.constant 0 : index
    %c0_5 = arith.constant 0 : index
    %2 = vector.load %arg5[%c0_3, %c0_4, %c0_5] : memref<1x1x32xf32, #tpu.memory_space<vmem>>, vector<1x1x32xf32>
    %3 = vector.shape_cast %2 : vector<1x1x32xf32> to vector<1x32xf32>
    %c0_6 = arith.constant 0 : index
    %c0_7 = arith.constant 0 : index
    %c0_8 = arith.constant 0 : index
    %4 = vector.load %arg6[%c0_6, %c0_7, %c0_8] : memref<1x1x32xf32, #tpu.memory_space<vmem>>, vector<1x1x32xf32>
    %5 = vector.shape_cast %4 : vector<1x1x32xf32> to vector<1x32xf32>
    %cst = arith.constant dense<0.000000e+00> : vector<8xf32>
    %6 = vector.multi_reduction <add>, %1, %cst [1] : vector<8x32xf32> to vector<8xf32>
    %7 = vector.shape_cast %6 : vector<8xf32> to vector<8x1xf32>
    %cst_9 = arith.constant 3.200000e+01 : f32
    %8 = vector.broadcast %cst_9 : f32 to vector<8x1xf32>
    %9 = arith.divf %7, %8 : vector<8x1xf32>
    %10 = vector.broadcast %9 : vector<8x1xf32> to vector<8x32xf32>
    %11 = arith.subf %1, %10 : vector<8x32xf32>
    %12 = arith.mulf %11, %11 : vector<8x32xf32>
    %cst_10 = arith.constant dense<0.000000e+00> : vector<8xf32>
    %13 = vector.multi_reduction <add>, %12, %cst_10 [1] : vector<8x32xf32> to vector<8xf32>
    %14 = vector.shape_cast %13 : vector<8xf32> to vector<8x1xf32>
    %cst_11 = arith.constant 3.200000e+01 : f32
    %15 = vector.broadcast %cst_11 : f32 to vector<8x1xf32>
    %16 = arith.divf %14, %15 : vector<8x1xf32>
    %17 = vector.broadcast %9 : vector<8x1xf32> to vector<8x32xf32>
    %18 = arith.subf %1, %17 : vector<8x32xf32>
    %cst_12 = arith.constant 9.99999974E-6 : f32
    %19 = vector.broadcast %cst_12 : f32 to vector<8x1xf32>
    %20 = arith.addf %16, %19 : vector<8x1xf32>
    %21 = math.rsqrt %20 : vector<8x1xf32>
    %22 = vector.broadcast %21 : vector<8x1xf32> to vector<8x32xf32>
    %23 = arith.mulf %18, %22 : vector<8x32xf32>
    %24 = vector.broadcast %3 : vector<1x32xf32> to vector<8x32xf32>
    %25 = arith.mulf %23, %24 : vector<8x32xf32>
    %26 = vector.broadcast %5 : vector<1x32xf32> to vector<8x32xf32>
    %27 = arith.addf %25, %26 : vector<8x32xf32>
    %28 = arith.truncf %27 : vector<8x32xf32> to vector<8x32xbf16>
    %c0_13 = arith.constant 0 : index
    %c0_14 = arith.constant 0 : index
    %29 = vector.load %arg7[%c0_13, %c0_14] : memref<32x32xbf16, #tpu.memory_space<vmem>>, vector<32x32xbf16>
    %cst_15 = arith.constant dense<0.000000e+00> : vector<8x32xf32>
    %30 = tpu.matmul %28, %29, %cst_15 {dimension_numbers = #tpu.dot_dimension_numbers<[1], [0], [0], [1], [0, 0, 1, 1], [], []>} : vector<8x32xbf16>, vector<32x32xbf16>, vector<8x32xf32> -> vector<8x32xf32>
    %c0_16 = arith.constant 0 : index
    %c0_17 = arith.constant 0 : index
    %31 = vector.load %arg8[%c0_16, %c0_17] : memref<1x32xf32, #tpu.memory_space<vmem>>, vector<1x32xf32>
    %32 = vector.broadcast %31 : vector<1x32xf32> to vector<8x32xf32>
    %33 = arith.addf %30, %32 : vector<8x32xf32>
    %34 = arith.truncf %33 : vector<8x32xf32> to vector<8x32xbf16>
    %c0_18 = arith.constant 0 : index
    %c0_19 = arith.constant 0 : index
    %c0_20 = arith.constant 0 : index
    %35 = vector.load %arg3[%c0_18, %c0_19, %c0_20] : memref<1x8x32xbf16, #tpu.memory_space<vmem>>, vector<1x8x32xbf16>
    %36 = vector.shape_cast %35 : vector<1x8x32xbf16> to vector<8x32xbf16>
    %c0_21 = arith.constant 0 : index
    %c0_22 = arith.constant 0 : index
    %c0_23 = arith.constant 0 : index
    %37 = vector.load %arg4[%c0_21, %c0_22, %c0_23] : memref<1x8x32xbf16, #tpu.memory_space<vmem>>, vector<1x8x32xbf16>
    %38 = vector.shape_cast %37 : vector<1x8x32xbf16> to vector<8x32xbf16>
    %39 = vector.extract_strided_slice %34 {offsets = [0, 0], sizes = [8, 8], strides = [1, 1]} : vector<8x32xbf16> to vector<8x8xbf16>
    %40 = vector.extract_strided_slice %36 {offsets = [0, 0], sizes = [8, 8], strides = [1, 1]} : vector<8x32xbf16> to vector<8x8xbf16>
    %cst_24 = arith.constant dense<0.000000e+00> : vector<8x8xf32>
    %41 = tpu.matmul %39, %40, %cst_24 {dimension_numbers = #tpu.dot_dimension_numbers<[1], [1], [0], [0], [0, 0, 1, 0], [], []>} : vector<8x8xbf16>, vector<8x8xbf16>, vector<8x8xf32> -> vector<8x8xf32>
    %cst_25 = arith.constant dense<0xFF800000> : vector<8xf32>
    %42 = vector.multi_reduction <maximumf>, %41, %cst_25 [1] : vector<8x8xf32> to vector<8xf32>
    %43 = vector.shape_cast %42 : vector<8xf32> to vector<8x1xf32>
    %44 = vector.broadcast %43 : vector<8x1xf32> to vector<8x8xf32>
    %45 = arith.subf %41, %44 : vector<8x8xf32>
    %46 = math.exp %45 : vector<8x8xf32>
    %cst_26 = arith.constant dense<0.000000e+00> : vector<8xf32>
    %47 = vector.multi_reduction <add>, %46, %cst_26 [1] : vector<8x8xf32> to vector<8xf32>
    %48 = vector.shape_cast %47 : vector<8xf32> to vector<8x1xf32>
    %49 = tpu.reciprocal %48 {approx = true} : vector<8x1xf32> -> vector<8x1xf32>
    %50 = vector.broadcast %49 : vector<8x1xf32> to vector<8x8xf32>
    %51 = arith.mulf %46, %50 : vector<8x8xf32>
    %52 = arith.truncf %51 : vector<8x8xf32> to vector<8x8xbf16>
    %53 = vector.extract_strided_slice %38 {offsets = [0, 0], sizes = [8, 8], strides = [1, 1]} : vector<8x32xbf16> to vector<8x8xbf16>
    %cst_27 = arith.constant dense<0.000000e+00> : vector<8x8xf32>
    %54 = tpu.matmul %52, %53, %cst_27 {dimension_numbers = #tpu.dot_dimension_numbers<[1], [0], [0], [1], [0, 0, 1, 1], [], []>} : vector<8x8xbf16>, vector<8x8xbf16>, vector<8x8xf32> -> vector<8x8xf32>
    %55 = vector.extract_strided_slice %34 {offsets = [0, 8], sizes = [8, 8], strides = [1, 1]} : vector<8x32xbf16> to vector<8x8xbf16>
    %56 = vector.extract_strided_slice %36 {offsets = [0, 8], sizes = [8, 8], strides = [1, 1]} : vector<8x32xbf16> to vector<8x8xbf16>
    %cst_28 = arith.constant dense<0.000000e+00> : vector<8x8xf32>
    %57 = tpu.matmul %55, %56, %cst_28 {dimension_numbers = #tpu.dot_dimension_numbers<[1], [1], [0], [0], [0, 0, 1, 0], [], []>} : vector<8x8xbf16>, vector<8x8xbf16>, vector<8x8xf32> -> vector<8x8xf32>
    %cst_29 = arith.constant dense<0xFF800000> : vector<8xf32>
    %58 = vector.multi_reduction <maximumf>, %57, %cst_29 [1] : vector<8x8xf32> to vector<8xf32>
    %59 = vector.shape_cast %58 : vector<8xf32> to vector<8x1xf32>
    %60 = vector.broadcast %59 : vector<8x1xf32> to vector<8x8xf32>
    %61 = arith.subf %57, %60 : vector<8x8xf32>
    %62 = math.exp %61 : vector<8x8xf32>
    %cst_30 = arith.constant dense<0.000000e+00> : vector<8xf32>
    %63 = vector.multi_reduction <add>, %62, %cst_30 [1] : vector<8x8xf32> to vector<8xf32>
    %64 = vector.shape_cast %63 : vector<8xf32> to vector<8x1xf32>
    %65 = tpu.reciprocal %64 {approx = true} : vector<8x1xf32> -> vector<8x1xf32>
    %66 = vector.broadcast %65 : vector<8x1xf32> to vector<8x8xf32>
    %67 = arith.mulf %62, %66 : vector<8x8xf32>
    %68 = arith.truncf %67 : vector<8x8xf32> to vector<8x8xbf16>
    %69 = vector.extract_strided_slice %38 {offsets = [0, 8], sizes = [8, 8], strides = [1, 1]} : vector<8x32xbf16> to vector<8x8xbf16>
    %cst_31 = arith.constant dense<0.000000e+00> : vector<8x8xf32>
    %70 = tpu.matmul %68, %69, %cst_31 {dimension_numbers = #tpu.dot_dimension_numbers<[1], [0], [0], [1], [0, 0, 1, 1], [], []>} : vector<8x8xbf16>, vector<8x8xbf16>, vector<8x8xf32> -> vector<8x8xf32>
    %71 = vector.extract_strided_slice %34 {offsets = [0, 16], sizes = [8, 8], strides = [1, 1]} : vector<8x32xbf16> to vector<8x8xbf16>
    %72 = vector.extract_strided_slice %36 {offsets = [0, 16], sizes = [8, 8], strides = [1, 1]} : vector<8x32xbf16> to vector<8x8xbf16>
    %cst_32 = arith.constant dense<0.000000e+00> : vector<8x8xf32>
    %73 = tpu.matmul %71, %72, %cst_32 {dimension_numbers = #tpu.dot_dimension_numbers<[1], [1], [0], [0], [0, 0, 1, 0], [], []>} : vector<8x8xbf16>, vector<8x8xbf16>, vector<8x8xf32> -> vector<8x8xf32>
    %cst_33 = arith.constant dense<0xFF800000> : vector<8xf32>
    %74 = vector.multi_reduction <maximumf>, %73, %cst_33 [1] : vector<8x8xf32> to vector<8xf32>
    %75 = vector.shape_cast %74 : vector<8xf32> to vector<8x1xf32>
    %76 = vector.broadcast %75 : vector<8x1xf32> to vector<8x8xf32>
    %77 = arith.subf %73, %76 : vector<8x8xf32>
    %78 = math.exp %77 : vector<8x8xf32>
    %cst_34 = arith.constant dense<0.000000e+00> : vector<8xf32>
    %79 = vector.multi_reduction <add>, %78, %cst_34 [1] : vector<8x8xf32> to vector<8xf32>
    %80 = vector.shape_cast %79 : vector<8xf32> to vector<8x1xf32>
    %81 = tpu.reciprocal %80 {approx = true} : vector<8x1xf32> -> vector<8x1xf32>
    %82 = vector.broadcast %81 : vector<8x1xf32> to vector<8x8xf32>
    %83 = arith.mulf %78, %82 : vector<8x8xf32>
    %84 = arith.truncf %83 : vector<8x8xf32> to vector<8x8xbf16>
    %85 = vector.extract_strided_slice %38 {offsets = [0, 16], sizes = [8, 8], strides = [1, 1]} : vector<8x32xbf16> to vector<8x8xbf16>
    %cst_35 = arith.constant dense<0.000000e+00> : vector<8x8xf32>
    %86 = tpu.matmul %84, %85, %cst_35 {dimension_numbers = #tpu.dot_dimension_numbers<[1], [0], [0], [1], [0, 0, 1, 1], [], []>} : vector<8x8xbf16>, vector<8x8xbf16>, vector<8x8xf32> -> vector<8x8xf32>
    %87 = vector.extract_strided_slice %34 {offsets = [0, 24], sizes = [8, 8], strides = [1, 1]} : vector<8x32xbf16> to vector<8x8xbf16>
    %88 = vector.extract_strided_slice %36 {offsets = [0, 24], sizes = [8, 8], strides = [1, 1]} : vector<8x32xbf16> to vector<8x8xbf16>
    %cst_36 = arith.constant dense<0.000000e+00> : vector<8x8xf32>
    %89 = tpu.matmul %87, %88, %cst_36 {dimension_numbers = #tpu.dot_dimension_numbers<[1], [1], [0], [0], [0, 0, 1, 0], [], []>} : vector<8x8xbf16>, vector<8x8xbf16>, vector<8x8xf32> -> vector<8x8xf32>
    %cst_37 = arith.constant dense<0xFF800000> : vector<8xf32>
    %90 = vector.multi_reduction <maximumf>, %89, %cst_37 [1] : vector<8x8xf32> to vector<8xf32>
    %91 = vector.shape_cast %90 : vector<8xf32> to vector<8x1xf32>
    %92 = vector.broadcast %91 : vector<8x1xf32> to vector<8x8xf32>
    %93 = arith.subf %89, %92 : vector<8x8xf32>
    %94 = math.exp %93 : vector<8x8xf32>
    %cst_38 = arith.constant dense<0.000000e+00> : vector<8xf32>
    %95 = vector.multi_reduction <add>, %94, %cst_38 [1] : vector<8x8xf32> to vector<8xf32>
    %96 = vector.shape_cast %95 : vector<8xf32> to vector<8x1xf32>
    %97 = tpu.reciprocal %96 {approx = true} : vector<8x1xf32> -> vector<8x1xf32>
    %98 = vector.broadcast %97 : vector<8x1xf32> to vector<8x8xf32>
    %99 = arith.mulf %94, %98 : vector<8x8xf32>
    %100 = arith.truncf %99 : vector<8x8xf32> to vector<8x8xbf16>
    %101 = vector.extract_strided_slice %38 {offsets = [0, 24], sizes = [8, 8], strides = [1, 1]} : vector<8x32xbf16> to vector<8x8xbf16>
    %cst_39 = arith.constant dense<0.000000e+00> : vector<8x8xf32>
    %102 = tpu.matmul %100, %101, %cst_39 {dimension_numbers = #tpu.dot_dimension_numbers<[1], [0], [0], [1], [0, 0, 1, 1], [], []>} : vector<8x8xbf16>, vector<8x8xbf16>, vector<8x8xf32> -> vector<8x8xf32>
    %103 = tpu.concatenate %54, %70, %86, %102 in 1 : vector<8x8xf32>, vector<8x8xf32>, vector<8x8xf32>, vector<8x8xf32> -> vector<8x32xf32>
    %104 = arith.truncf %103 : vector<8x32xf32> to vector<8x32xbf16>
    %c0_40 = arith.constant 0 : index
    %c0_41 = arith.constant 0 : index
    %105 = vector.load %arg9[%c0_40, %c0_41] : memref<32x32xbf16, #tpu.memory_space<vmem>>, vector<32x32xbf16>
    %cst_42 = arith.constant dense<0.000000e+00> : vector<8x32xf32>
    %106 = tpu.matmul %104, %105, %cst_42 {dimension_numbers = #tpu.dot_dimension_numbers<[1], [0], [0], [1], [0, 0, 1, 1], [], []>} : vector<8x32xbf16>, vector<32x32xbf16>, vector<8x32xf32> -> vector<8x32xf32>
    %107 = arith.addf %1, %106 : vector<8x32xf32>
    %c0_43 = arith.constant 0 : index
    %c0_44 = arith.constant 0 : index
    %108 = vector.load %arg10[%c0_43, %c0_44] : memref<1x32xf32, #tpu.memory_space<vmem>>, vector<1x32xf32>
    %109 = vector.broadcast %108 : vector<1x32xf32> to vector<8x32xf32>
    %110 = arith.addf %107, %109 : vector<8x32xf32>
    %c0_45 = arith.constant 0 : index
    %c0_46 = arith.constant 0 : index
    %c0_47 = arith.constant 0 : index
    %c0_48 = arith.constant 0 : index
    %111 = vector.load %arg11[%c0_45, %c0_46, %c0_47, %c0_48] : memref<1x1x8x32xf32, #tpu.memory_space<vmem>>, vector<1x1x8x32xf32>
    %112 = vector.shape_cast %111 : vector<1x1x8x32xf32> to vector<8x32xf32>
    %113 = vector.shape_cast %110 : vector<8x32xf32> to vector<1x1x8x32xf32>
    tpu.vector_store %arg11[%c0_45, %c0_46, %c0_47, %c0_48], %113 {strides = array<i32>} : memref<1x1x8x32xf32, #tpu.memory_space<vmem>>, vector<1x1x8x32xf32>,
    return
  }
  func.func @transform_0(%arg0: i32, %arg1: i32) -> (i32, i32, i32, i32) {
    %c0_i32 = arith.constant 0 : i32
    %c0_i32_0 = arith.constant 0 : i32
    %c0_i32_1 = arith.constant 0 : i32
    return %arg0, %arg1, %c0_i32, %c0_i32_0 : i32, i32, i32, i32
  }
  func.func @transform_1(%arg0: i32, %arg1: i32) -> (i32, i32, i32) {
    %c0_i32 = arith.constant 0 : i32
    %c0_i32_0 = arith.constant 0 : i32
    %c0_i32_1 = arith.constant 0 : i32
    return %arg1, %c0_i32, %c0_i32_0 : i32, i32, i32
  }
  func.func @transform_2(%arg0: i32, %arg1: i32) -> (i32, i32, i32) {
    %c0_i32 = arith.constant 0 : i32
    %c0_i32_0 = arith.constant 0 : i32
    %c0_i32_1 = arith.constant 0 : i32
    return %arg1, %c0_i32, %c0_i32_0 : i32, i32, i32
  }
  func.func @transform_3(%arg0: i32, %arg1: i32) -> (i32, i32, i32) {
    %c0_i32 = arith.constant 0 : i32
    %c0_i32_0 = arith.constant 0 : i32
    %c0_i32_1 = arith.constant 0 : i32
    return %arg0, %c0_i32, %c0_i32_0 : i32, i32, i32
  }
  func.func @transform_4(%arg0: i32, %arg1: i32) -> (i32, i32, i32) {
    %c0_i32 = arith.constant 0 : i32
    %c0_i32_0 = arith.constant 0 : i32
    %c0_i32_1 = arith.constant 0 : i32
    return %arg0, %c0_i32, %c0_i32_0 : i32, i32, i32
  }
  func.func @transform_5(%arg0: i32, %arg1: i32) -> (i32, i32) {
    %c0_i32 = arith.constant 0 : i32
    %c0_i32_0 = arith.constant 0 : i32
    %c0_i32_1 = arith.constant 0 : i32
    return %c0_i32, %c0_i32_0 : i32, i32
  }
  func.func @transform_6(%arg0: i32, %arg1: i32) -> (i32, i32) {
    %c0_i32 = arith.constant 0 : i32
    %c0_i32_0 = arith.constant 0 : i32
    %c0_i32_1 = arith.constant 0 : i32
    return %c0_i32, %c0_i32_0 : i32, i32
  }
  func.func @transform_7(%arg0: i32, %arg1: i32) -> (i32, i32) {
    %c0_i32 = arith.constant 0 : i32
    %c0_i32_0 = arith.constant 0 : i32
    %c0_i32_1 = arith.constant 0 : i32
    return %c0_i32, %c0_i32_0 : i32, i32
  }
  func.func @transform_8(%arg0: i32, %arg1: i32) -> (i32, i32) {
    %c0_i32 = arith.constant 0 : i32
    %c0_i32_0 = arith.constant 0 : i32
    %c0_i32_1 = arith.constant 0 : i32
    return %c0_i32, %c0_i32_0 : i32, i32
  }
  func.func @transform_9(%arg0: i32, %arg1: i32) -> (i32, i32, i32, i32) {
    %c0_i32 = arith.constant 0 : i32
    %c0_i32_0 = arith.constant 0 : i32
    %c0_i32_1 = arith.constant 0 : i32
    return %arg0, %arg1, %c0_i32, %c0_i32_0 : i32, i32, i32, i32
  }
}

module attributes {stable_mosaic.version = 11 : i64} {
  func.func @_kv_proj_kernel(%arg0: i32, %arg1: memref<32x32xbf16, #tpu.memory_space<vmem>>, %arg2: memref<32x32xbf16, #tpu.memory_space<vmem>>, %arg3: memref<1x32xf32, #tpu.memory_space<vmem>>, %arg4: memref<32x32xbf16, #tpu.memory_space<vmem>>, %arg5: memref<1x32xf32, #tpu.memory_space<vmem>>, %arg6: memref<32x32xbf16, #tpu.memory_space<vmem>>, %arg7: memref<32x32xbf16, #tpu.memory_space<vmem>>) attributes {dimension_semantics = [#tpu.dimension_semantics<parallel>], iteration_bounds = array<i64: 1>, scalar_prefetch = 0 : i64, scratch_operands = 0 : i64, tpu.core_type = #tpu.core_type<tc>, window_params = [{transform_indices = @transform_0, window_bounds = array<i64: 32, 32>}, {pipeline_mode = #tpu.pipeline_mode<synchronous>, transform_indices = @transform_1, window_bounds = array<i64: 32, 32>}, {pipeline_mode = #tpu.pipeline_mode<synchronous>, transform_indices = @transform_2, window_bounds = array<i64: 1, 32>}, {pipeline_mode = #tpu.pipeline_mode<synchronous>, transform_indices = @transform_3, window_bounds = array<i64: 32, 32>}, {pipeline_mode = #tpu.pipeline_mode<synchronous>, transform_indices = @transform_4, window_bounds = array<i64: 1, 32>}, {transform_indices = @transform_5, window_bounds = array<i64: 32, 32>}, {transform_indices = @transform_6, window_bounds = array<i64: 32, 32>}]} {
    %c0 = arith.constant 0 : index
    %c0_0 = arith.constant 0 : index
    %0 = vector.load %arg1[%c0, %c0_0] : memref<32x32xbf16, #tpu.memory_space<vmem>>, vector<32x32xbf16>
    %c0_1 = arith.constant 0 : index
    %c0_2 = arith.constant 0 : index
    %1 = vector.load %arg2[%c0_1, %c0_2] : memref<32x32xbf16, #tpu.memory_space<vmem>>, vector<32x32xbf16>
    %cst = arith.constant dense<0.000000e+00> : vector<32x32xf32>
    %2 = tpu.matmul %0, %1, %cst {dimension_numbers = #tpu.dot_dimension_numbers<[1], [0], [0], [1], [0, 0, 1, 1], [], []>} : vector<32x32xbf16>, vector<32x32xbf16>, vector<32x32xf32> -> vector<32x32xf32>
    %c0_3 = arith.constant 0 : index
    %c0_4 = arith.constant 0 : index
    %3 = vector.load %arg3[%c0_3, %c0_4] : memref<1x32xf32, #tpu.memory_space<vmem>>, vector<1x32xf32>
    %4 = vector.broadcast %3 : vector<1x32xf32> to vector<32x32xf32>
    %5 = arith.addf %2, %4 : vector<32x32xf32>
    %6 = arith.truncf %5 : vector<32x32xf32> to vector<32x32xbf16>
    %c0_5 = arith.constant 0 : index
    %c0_6 = arith.constant 0 : index
    %7 = vector.load %arg6[%c0_5, %c0_6] : memref<32x32xbf16, #tpu.memory_space<vmem>>, vector<32x32xbf16>
    tpu.vector_store %arg6[%c0_5, %c0_6], %6 {strides = array<i32>} : memref<32x32xbf16, #tpu.memory_space<vmem>>, vector<32x32xbf16>,
    %c0_7 = arith.constant 0 : index
    %c0_8 = arith.constant 0 : index
    %8 = vector.load %arg4[%c0_7, %c0_8] : memref<32x32xbf16, #tpu.memory_space<vmem>>, vector<32x32xbf16>
    %cst_9 = arith.constant dense<0.000000e+00> : vector<32x32xf32>
    %9 = tpu.matmul %0, %8, %cst_9 {dimension_numbers = #tpu.dot_dimension_numbers<[1], [0], [0], [1], [0, 0, 1, 1], [], []>} : vector<32x32xbf16>, vector<32x32xbf16>, vector<32x32xf32> -> vector<32x32xf32>
    %c0_10 = arith.constant 0 : index
    %c0_11 = arith.constant 0 : index
    %10 = vector.load %arg5[%c0_10, %c0_11] : memref<1x32xf32, #tpu.memory_space<vmem>>, vector<1x32xf32>
    %11 = vector.broadcast %10 : vector<1x32xf32> to vector<32x32xf32>
    %12 = arith.addf %9, %11 : vector<32x32xf32>
    %13 = arith.truncf %12 : vector<32x32xf32> to vector<32x32xbf16>
    %c0_12 = arith.constant 0 : index
    %c0_13 = arith.constant 0 : index
    %14 = vector.load %arg7[%c0_12, %c0_13] : memref<32x32xbf16, #tpu.memory_space<vmem>>, vector<32x32xbf16>
    tpu.vector_store %arg7[%c0_12, %c0_13], %13 {strides = array<i32>} : memref<32x32xbf16, #tpu.memory_space<vmem>>, vector<32x32xbf16>,
    return
  }
  func.func @transform_0(%arg0: i32) -> (i32, i32) {
    %c0_i32 = arith.constant 0 : i32
    %c0_i32_0 = arith.constant 0 : i32
    return %arg0, %c0_i32 : i32, i32
  }
  func.func @transform_1(%arg0: i32) -> (i32, i32) {
    %c0_i32 = arith.constant 0 : i32
    %c0_i32_0 = arith.constant 0 : i32
    %c0_i32_1 = arith.constant 0 : i32
    return %c0_i32, %c0_i32_0 : i32, i32
  }
  func.func @transform_2(%arg0: i32) -> (i32, i32) {
    %c0_i32 = arith.constant 0 : i32
    %c0_i32_0 = arith.constant 0 : i32
    %c0_i32_1 = arith.constant 0 : i32
    return %c0_i32, %c0_i32_0 : i32, i32
  }
  func.func @transform_3(%arg0: i32) -> (i32, i32) {
    %c0_i32 = arith.constant 0 : i32
    %c0_i32_0 = arith.constant 0 : i32
    %c0_i32_1 = arith.constant 0 : i32
    return %c0_i32, %c0_i32_0 : i32, i32
  }
  func.func @transform_4(%arg0: i32) -> (i32, i32) {
    %c0_i32 = arith.constant 0 : i32
    %c0_i32_0 = arith.constant 0 : i32
    %c0_i32_1 = arith.constant 0 : i32
    return %c0_i32, %c0_i32_0 : i32, i32
  }
  func.func @transform_5(%arg0: i32) -> (i32, i32) {
    %c0_i32 = arith.constant 0 : i32
    %c0_i32_0 = arith.constant 0 : i32
    return %arg0, %c0_i32 : i32, i32
  }
  func.func @transform_6(%arg0: i32) -> (i32, i32) {
    %c0_i32 = arith.constant 0 : i32
    %c0_i32_0 = arith.constant 0 : i32
    return %arg0, %c0_i32 : i32, i32
  }
}

module attributes {stable_mosaic.version = 11 : i64} {
  func.func @_attn_block_kernel(%arg0: i32, %arg1: i32, %arg2: memref<1x1x8x32xf32, #tpu.memory_space<vmem>>, %arg3: memref<1x16x32xbf16, #tpu.memory_space<vmem>>, %arg4: memref<1x16x32xbf16, #tpu.memory_space<vmem>>, %arg5: memref<1x1x32xf32, #tpu.memory_space<vmem>>, %arg6: memref<1x1x32xf32, #tpu.memory_space<vmem>>, %arg7: memref<32x32xbf16, #tpu.memory_space<vmem>>, %arg8: memref<1x32xf32, #tpu.memory_space<vmem>>, %arg9: memref<32x32xbf16, #tpu.memory_space<vmem>>, %arg10: memref<1x32xf32, #tpu.memory_space<vmem>>, %arg11: memref<1x1x8x32xf32, #tpu.memory_space<vmem>>) attributes {dimension_semantics = [#tpu.dimension_semantics<parallel>, #tpu.dimension_semantics<parallel>], iteration_bounds = array<i64: 2, 2>, scalar_prefetch = 0 : i64, scratch_operands = 0 : i64, tpu.core_type = #tpu.core_type<tc>, window_params = [{transform_indices = @transform_0, window_bounds = array<i64: 1, 1, 8, 32>}, {transform_indices = @transform_1, window_bounds = array<i64: 1, 16, 32>}, {transform_indices = @transform_2, window_bounds = array<i64: 1, 16, 32>}, {pipeline_mode = #tpu.pipeline_mode<synchronous>, transform_indices = @transform_3, window_bounds = array<i64: 1, 1, 32>}, {pipeline_mode = #tpu.pipeline_mode<synchronous>, transform_indices = @transform_4, window_bounds = array<i64: 1, 1, 32>}, {pipeline_mode = #tpu.pipeline_mode<synchronous>, transform_indices = @transform_5, window_bounds = array<i64: 32, 32>}, {pipeline_mode = #tpu.pipeline_mode<synchronous>, transform_indices = @transform_6, window_bounds = array<i64: 1, 32>}, {pipeline_mode = #tpu.pipeline_mode<synchronous>, transform_indices = @transform_7, window_bounds = array<i64: 32, 32>}, {pipeline_mode = #tpu.pipeline_mode<synchronous>, transform_indices = @transform_8, window_bounds = array<i64: 1, 32>}, {transform_indices = @transform_9, window_bounds = array<i64: 1, 1, 8, 32>}]} {
    %c0 = arith.constant 0 : index
    %c0_0 = arith.constant 0 : index
    %c0_1 = arith.constant 0 : index
    %c0_2 = arith.constant 0 : index
    %0 = vector.load %arg2[%c0, %c0_0, %c0_1, %c0_2] : memref<1x1x8x32xf32, #tpu.memory_space<vmem>>, vector<1x1x8x32xf32>
    %1 = vector.shape_cast %0 : vector<1x1x8x32xf32> to vector<8x32xf32>
    %c0_3 = arith.constant 0 : index
    %c0_4 = arith.constant 0 : index
    %c0_5 = arith.constant 0 : index
    %2 = vector.load %arg5[%c0_3, %c0_4, %c0_5] : memref<1x1x32xf32, #tpu.memory_space<vmem>>, vector<1x1x32xf32>
    %3 = vector.shape_cast %2 : vector<1x1x32xf32> to vector<1x32xf32>
    %c0_6 = arith.constant 0 : index
    %c0_7 = arith.constant 0 : index
    %c0_8 = arith.constant 0 : index
    %4 = vector.load %arg6[%c0_6, %c0_7, %c0_8] : memref<1x1x32xf32, #tpu.memory_space<vmem>>, vector<1x1x32xf32>
    %5 = vector.shape_cast %4 : vector<1x1x32xf32> to vector<1x32xf32>
    %cst = arith.constant dense<0.000000e+00> : vector<8xf32>
    %6 = vector.multi_reduction <add>, %1, %cst [1] : vector<8x32xf32> to vector<8xf32>
    %7 = vector.shape_cast %6 : vector<8xf32> to vector<8x1xf32>
    %cst_9 = arith.constant 3.200000e+01 : f32
    %8 = vector.broadcast %cst_9 : f32 to vector<8x1xf32>
    %9 = arith.divf %7, %8 : vector<8x1xf32>
    %10 = vector.broadcast %9 : vector<8x1xf32> to vector<8x32xf32>
    %11 = arith.subf %1, %10 : vector<8x32xf32>
    %12 = arith.mulf %11, %11 : vector<8x32xf32>
    %cst_10 = arith.constant dense<0.000000e+00> : vector<8xf32>
    %13 = vector.multi_reduction <add>, %12, %cst_10 [1] : vector<8x32xf32> to vector<8xf32>
    %14 = vector.shape_cast %13 : vector<8xf32> to vector<8x1xf32>
    %cst_11 = arith.constant 3.200000e+01 : f32
    %15 = vector.broadcast %cst_11 : f32 to vector<8x1xf32>
    %16 = arith.divf %14, %15 : vector<8x1xf32>
    %17 = vector.broadcast %9 : vector<8x1xf32> to vector<8x32xf32>
    %18 = arith.subf %1, %17 : vector<8x32xf32>
    %cst_12 = arith.constant 9.99999974E-6 : f32
    %19 = vector.broadcast %cst_12 : f32 to vector<8x1xf32>
    %20 = arith.addf %16, %19 : vector<8x1xf32>
    %21 = math.rsqrt %20 : vector<8x1xf32>
    %22 = vector.broadcast %21 : vector<8x1xf32> to vector<8x32xf32>
    %23 = arith.mulf %18, %22 : vector<8x32xf32>
    %24 = vector.broadcast %3 : vector<1x32xf32> to vector<8x32xf32>
    %25 = arith.mulf %23, %24 : vector<8x32xf32>
    %26 = vector.broadcast %5 : vector<1x32xf32> to vector<8x32xf32>
    %27 = arith.addf %25, %26 : vector<8x32xf32>
    %28 = arith.truncf %27 : vector<8x32xf32> to vector<8x32xbf16>
    %c0_13 = arith.constant 0 : index
    %c0_14 = arith.constant 0 : index
    %29 = vector.load %arg7[%c0_13, %c0_14] : memref<32x32xbf16, #tpu.memory_space<vmem>>, vector<32x32xbf16>
    %cst_15 = arith.constant dense<0.000000e+00> : vector<8x32xf32>
    %30 = tpu.matmul %28, %29, %cst_15 {dimension_numbers = #tpu.dot_dimension_numbers<[1], [0], [0], [1], [0, 0, 1, 1], [], []>} : vector<8x32xbf16>, vector<32x32xbf16>, vector<8x32xf32> -> vector<8x32xf32>
    %c0_16 = arith.constant 0 : index
    %c0_17 = arith.constant 0 : index
    %31 = vector.load %arg8[%c0_16, %c0_17] : memref<1x32xf32, #tpu.memory_space<vmem>>, vector<1x32xf32>
    %32 = vector.broadcast %31 : vector<1x32xf32> to vector<8x32xf32>
    %33 = arith.addf %30, %32 : vector<8x32xf32>
    %34 = arith.truncf %33 : vector<8x32xf32> to vector<8x32xbf16>
    %c0_18 = arith.constant 0 : index
    %c0_19 = arith.constant 0 : index
    %c0_20 = arith.constant 0 : index
    %35 = vector.load %arg3[%c0_18, %c0_19, %c0_20] : memref<1x16x32xbf16, #tpu.memory_space<vmem>>, vector<1x16x32xbf16>
    %36 = vector.shape_cast %35 : vector<1x16x32xbf16> to vector<16x32xbf16>
    %c0_21 = arith.constant 0 : index
    %c0_22 = arith.constant 0 : index
    %c0_23 = arith.constant 0 : index
    %37 = vector.load %arg4[%c0_21, %c0_22, %c0_23] : memref<1x16x32xbf16, #tpu.memory_space<vmem>>, vector<1x16x32xbf16>
    %38 = vector.shape_cast %37 : vector<1x16x32xbf16> to vector<16x32xbf16>
    %39 = vector.extract_strided_slice %34 {offsets = [0, 0], sizes = [8, 8], strides = [1, 1]} : vector<8x32xbf16> to vector<8x8xbf16>
    %40 = vector.extract_strided_slice %36 {offsets = [0, 0], sizes = [16, 8], strides = [1, 1]} : vector<16x32xbf16> to vector<16x8xbf16>
    %cst_24 = arith.constant dense<0.000000e+00> : vector<8x16xf32>
    %41 = tpu.matmul %39, %40, %cst_24 {dimension_numbers = #tpu.dot_dimension_numbers<[1], [1], [0], [0], [0, 0, 1, 0], [], []>} : vector<8x8xbf16>, vector<16x8xbf16>, vector<8x16xf32> -> vector<8x16xf32>
    %cst_25 = arith.constant dense<0xFF800000> : vector<8xf32>
    %42 = vector.multi_reduction <maximumf>, %41, %cst_25 [1] : vector<8x16xf32> to vector<8xf32>
    %43 = vector.shape_cast %42 : vector<8xf32> to vector<8x1xf32>
    %44 = vector.broadcast %43 : vector<8x1xf32> to vector<8x16xf32>
    %45 = arith.subf %41, %44 : vector<8x16xf32>
    %46 = math.exp %45 : vector<8x16xf32>
    %cst_26 = arith.constant dense<0.000000e+00> : vector<8xf32>
    %47 = vector.multi_reduction <add>, %46, %cst_26 [1] : vector<8x16xf32> to vector<8xf32>
    %48 = vector.shape_cast %47 : vector<8xf32> to vector<8x1xf32>
    %49 = tpu.reciprocal %48 {approx = true} : vector<8x1xf32> -> vector<8x1xf32>
    %50 = vector.broadcast %49 : vector<8x1xf32> to vector<8x16xf32>
    %51 = arith.mulf %46, %50 : vector<8x16xf32>
    %52 = arith.truncf %51 : vector<8x16xf32> to vector<8x16xbf16>
    %53 = vector.extract_strided_slice %38 {offsets = [0, 0], sizes = [16, 8], strides = [1, 1]} : vector<16x32xbf16> to vector<16x8xbf16>
    %cst_27 = arith.constant dense<0.000000e+00> : vector<8x8xf32>
    %54 = tpu.matmul %52, %53, %cst_27 {dimension_numbers = #tpu.dot_dimension_numbers<[1], [0], [0], [1], [0, 0, 1, 1], [], []>} : vector<8x16xbf16>, vector<16x8xbf16>, vector<8x8xf32> -> vector<8x8xf32>
    %55 = vector.extract_strided_slice %34 {offsets = [0, 8], sizes = [8, 8], strides = [1, 1]} : vector<8x32xbf16> to vector<8x8xbf16>
    %56 = vector.extract_strided_slice %36 {offsets = [0, 8], sizes = [16, 8], strides = [1, 1]} : vector<16x32xbf16> to vector<16x8xbf16>
    %cst_28 = arith.constant dense<0.000000e+00> : vector<8x16xf32>
    %57 = tpu.matmul %55, %56, %cst_28 {dimension_numbers = #tpu.dot_dimension_numbers<[1], [1], [0], [0], [0, 0, 1, 0], [], []>} : vector<8x8xbf16>, vector<16x8xbf16>, vector<8x16xf32> -> vector<8x16xf32>
    %cst_29 = arith.constant dense<0xFF800000> : vector<8xf32>
    %58 = vector.multi_reduction <maximumf>, %57, %cst_29 [1] : vector<8x16xf32> to vector<8xf32>
    %59 = vector.shape_cast %58 : vector<8xf32> to vector<8x1xf32>
    %60 = vector.broadcast %59 : vector<8x1xf32> to vector<8x16xf32>
    %61 = arith.subf %57, %60 : vector<8x16xf32>
    %62 = math.exp %61 : vector<8x16xf32>
    %cst_30 = arith.constant dense<0.000000e+00> : vector<8xf32>
    %63 = vector.multi_reduction <add>, %62, %cst_30 [1] : vector<8x16xf32> to vector<8xf32>
    %64 = vector.shape_cast %63 : vector<8xf32> to vector<8x1xf32>
    %65 = tpu.reciprocal %64 {approx = true} : vector<8x1xf32> -> vector<8x1xf32>
    %66 = vector.broadcast %65 : vector<8x1xf32> to vector<8x16xf32>
    %67 = arith.mulf %62, %66 : vector<8x16xf32>
    %68 = arith.truncf %67 : vector<8x16xf32> to vector<8x16xbf16>
    %69 = vector.extract_strided_slice %38 {offsets = [0, 8], sizes = [16, 8], strides = [1, 1]} : vector<16x32xbf16> to vector<16x8xbf16>
    %cst_31 = arith.constant dense<0.000000e+00> : vector<8x8xf32>
    %70 = tpu.matmul %68, %69, %cst_31 {dimension_numbers = #tpu.dot_dimension_numbers<[1], [0], [0], [1], [0, 0, 1, 1], [], []>} : vector<8x16xbf16>, vector<16x8xbf16>, vector<8x8xf32> -> vector<8x8xf32>
    %71 = vector.extract_strided_slice %34 {offsets = [0, 16], sizes = [8, 8], strides = [1, 1]} : vector<8x32xbf16> to vector<8x8xbf16>
    %72 = vector.extract_strided_slice %36 {offsets = [0, 16], sizes = [16, 8], strides = [1, 1]} : vector<16x32xbf16> to vector<16x8xbf16>
    %cst_32 = arith.constant dense<0.000000e+00> : vector<8x16xf32>
    %73 = tpu.matmul %71, %72, %cst_32 {dimension_numbers = #tpu.dot_dimension_numbers<[1], [1], [0], [0], [0, 0, 1, 0], [], []>} : vector<8x8xbf16>, vector<16x8xbf16>, vector<8x16xf32> -> vector<8x16xf32>
    %cst_33 = arith.constant dense<0xFF800000> : vector<8xf32>
    %74 = vector.multi_reduction <maximumf>, %73, %cst_33 [1] : vector<8x16xf32> to vector<8xf32>
    %75 = vector.shape_cast %74 : vector<8xf32> to vector<8x1xf32>
    %76 = vector.broadcast %75 : vector<8x1xf32> to vector<8x16xf32>
    %77 = arith.subf %73, %76 : vector<8x16xf32>
    %78 = math.exp %77 : vector<8x16xf32>
    %cst_34 = arith.constant dense<0.000000e+00> : vector<8xf32>
    %79 = vector.multi_reduction <add>, %78, %cst_34 [1] : vector<8x16xf32> to vector<8xf32>
    %80 = vector.shape_cast %79 : vector<8xf32> to vector<8x1xf32>
    %81 = tpu.reciprocal %80 {approx = true} : vector<8x1xf32> -> vector<8x1xf32>
    %82 = vector.broadcast %81 : vector<8x1xf32> to vector<8x16xf32>
    %83 = arith.mulf %78, %82 : vector<8x16xf32>
    %84 = arith.truncf %83 : vector<8x16xf32> to vector<8x16xbf16>
    %85 = vector.extract_strided_slice %38 {offsets = [0, 16], sizes = [16, 8], strides = [1, 1]} : vector<16x32xbf16> to vector<16x8xbf16>
    %cst_35 = arith.constant dense<0.000000e+00> : vector<8x8xf32>
    %86 = tpu.matmul %84, %85, %cst_35 {dimension_numbers = #tpu.dot_dimension_numbers<[1], [0], [0], [1], [0, 0, 1, 1], [], []>} : vector<8x16xbf16>, vector<16x8xbf16>, vector<8x8xf32> -> vector<8x8xf32>
    %87 = vector.extract_strided_slice %34 {offsets = [0, 24], sizes = [8, 8], strides = [1, 1]} : vector<8x32xbf16> to vector<8x8xbf16>
    %88 = vector.extract_strided_slice %36 {offsets = [0, 24], sizes = [16, 8], strides = [1, 1]} : vector<16x32xbf16> to vector<16x8xbf16>
    %cst_36 = arith.constant dense<0.000000e+00> : vector<8x16xf32>
    %89 = tpu.matmul %87, %88, %cst_36 {dimension_numbers = #tpu.dot_dimension_numbers<[1], [1], [0], [0], [0, 0, 1, 0], [], []>} : vector<8x8xbf16>, vector<16x8xbf16>, vector<8x16xf32> -> vector<8x16xf32>
    %cst_37 = arith.constant dense<0xFF800000> : vector<8xf32>
    %90 = vector.multi_reduction <maximumf>, %89, %cst_37 [1] : vector<8x16xf32> to vector<8xf32>
    %91 = vector.shape_cast %90 : vector<8xf32> to vector<8x1xf32>
    %92 = vector.broadcast %91 : vector<8x1xf32> to vector<8x16xf32>
    %93 = arith.subf %89, %92 : vector<8x16xf32>
    %94 = math.exp %93 : vector<8x16xf32>
    %cst_38 = arith.constant dense<0.000000e+00> : vector<8xf32>
    %95 = vector.multi_reduction <add>, %94, %cst_38 [1] : vector<8x16xf32> to vector<8xf32>
    %96 = vector.shape_cast %95 : vector<8xf32> to vector<8x1xf32>
    %97 = tpu.reciprocal %96 {approx = true} : vector<8x1xf32> -> vector<8x1xf32>
    %98 = vector.broadcast %97 : vector<8x1xf32> to vector<8x16xf32>
    %99 = arith.mulf %94, %98 : vector<8x16xf32>
    %100 = arith.truncf %99 : vector<8x16xf32> to vector<8x16xbf16>
    %101 = vector.extract_strided_slice %38 {offsets = [0, 24], sizes = [16, 8], strides = [1, 1]} : vector<16x32xbf16> to vector<16x8xbf16>
    %cst_39 = arith.constant dense<0.000000e+00> : vector<8x8xf32>
    %102 = tpu.matmul %100, %101, %cst_39 {dimension_numbers = #tpu.dot_dimension_numbers<[1], [0], [0], [1], [0, 0, 1, 1], [], []>} : vector<8x16xbf16>, vector<16x8xbf16>, vector<8x8xf32> -> vector<8x8xf32>
    %103 = tpu.concatenate %54, %70, %86, %102 in 1 : vector<8x8xf32>, vector<8x8xf32>, vector<8x8xf32>, vector<8x8xf32> -> vector<8x32xf32>
    %104 = arith.truncf %103 : vector<8x32xf32> to vector<8x32xbf16>
    %c0_40 = arith.constant 0 : index
    %c0_41 = arith.constant 0 : index
    %105 = vector.load %arg9[%c0_40, %c0_41] : memref<32x32xbf16, #tpu.memory_space<vmem>>, vector<32x32xbf16>
    %cst_42 = arith.constant dense<0.000000e+00> : vector<8x32xf32>
    %106 = tpu.matmul %104, %105, %cst_42 {dimension_numbers = #tpu.dot_dimension_numbers<[1], [0], [0], [1], [0, 0, 1, 1], [], []>} : vector<8x32xbf16>, vector<32x32xbf16>, vector<8x32xf32> -> vector<8x32xf32>
    %107 = arith.addf %1, %106 : vector<8x32xf32>
    %c0_43 = arith.constant 0 : index
    %c0_44 = arith.constant 0 : index
    %108 = vector.load %arg10[%c0_43, %c0_44] : memref<1x32xf32, #tpu.memory_space<vmem>>, vector<1x32xf32>
    %109 = vector.broadcast %108 : vector<1x32xf32> to vector<8x32xf32>
    %110 = arith.addf %107, %109 : vector<8x32xf32>
    %c0_45 = arith.constant 0 : index
    %c0_46 = arith.constant 0 : index
    %c0_47 = arith.constant 0 : index
    %c0_48 = arith.constant 0 : index
    %111 = vector.load %arg11[%c0_45, %c0_46, %c0_47, %c0_48] : memref<1x1x8x32xf32, #tpu.memory_space<vmem>>, vector<1x1x8x32xf32>
    %112 = vector.shape_cast %111 : vector<1x1x8x32xf32> to vector<8x32xf32>
    %113 = vector.shape_cast %110 : vector<8x32xf32> to vector<1x1x8x32xf32>
    tpu.vector_store %arg11[%c0_45, %c0_46, %c0_47, %c0_48], %113 {strides = array<i32>} : memref<1x1x8x32xf32, #tpu.memory_space<vmem>>, vector<1x1x8x32xf32>,
    return
  }
  func.func @transform_0(%arg0: i32, %arg1: i32) -> (i32, i32, i32, i32) {
    %c0_i32 = arith.constant 0 : i32
    %c0_i32_0 = arith.constant 0 : i32
    %c0_i32_1 = arith.constant 0 : i32
    return %arg0, %arg1, %c0_i32, %c0_i32_0 : i32, i32, i32, i32
  }
  func.func @transform_1(%arg0: i32, %arg1: i32) -> (i32, i32, i32) {
    %c0_i32 = arith.constant 0 : i32
    %c0_i32_0 = arith.constant 0 : i32
    %c0_i32_1 = arith.constant 0 : i32
    return %arg1, %c0_i32, %c0_i32_0 : i32, i32, i32
  }
  func.func @transform_2(%arg0: i32, %arg1: i32) -> (i32, i32, i32) {
    %c0_i32 = arith.constant 0 : i32
    %c0_i32_0 = arith.constant 0 : i32
    %c0_i32_1 = arith.constant 0 : i32
    return %arg1, %c0_i32, %c0_i32_0 : i32, i32, i32
  }
  func.func @transform_3(%arg0: i32, %arg1: i32) -> (i32, i32, i32) {
    %c0_i32 = arith.constant 0 : i32
    %c0_i32_0 = arith.constant 0 : i32
    %c0_i32_1 = arith.constant 0 : i32
    %c0_i32_2 = arith.constant 0 : i32
    return %c0_i32, %c0_i32_0, %c0_i32_1 : i32, i32, i32
  }
  func.func @transform_4(%arg0: i32, %arg1: i32) -> (i32, i32, i32) {
    %c0_i32 = arith.constant 0 : i32
    %c0_i32_0 = arith.constant 0 : i32
    %c0_i32_1 = arith.constant 0 : i32
    %c0_i32_2 = arith.constant 0 : i32
    return %c0_i32, %c0_i32_0, %c0_i32_1 : i32, i32, i32
  }
  func.func @transform_5(%arg0: i32, %arg1: i32) -> (i32, i32) {
    %c0_i32 = arith.constant 0 : i32
    %c0_i32_0 = arith.constant 0 : i32
    %c0_i32_1 = arith.constant 0 : i32
    return %c0_i32, %c0_i32_0 : i32, i32
  }
  func.func @transform_6(%arg0: i32, %arg1: i32) -> (i32, i32) {
    %c0_i32 = arith.constant 0 : i32
    %c0_i32_0 = arith.constant 0 : i32
    %c0_i32_1 = arith.constant 0 : i32
    return %c0_i32, %c0_i32_0 : i32, i32
  }
  func.func @transform_7(%arg0: i32, %arg1: i32) -> (i32, i32) {
    %c0_i32 = arith.constant 0 : i32
    %c0_i32_0 = arith.constant 0 : i32
    %c0_i32_1 = arith.constant 0 : i32
    return %c0_i32, %c0_i32_0 : i32, i32
  }
  func.func @transform_8(%arg0: i32, %arg1: i32) -> (i32, i32) {
    %c0_i32 = arith.constant 0 : i32
    %c0_i32_0 = arith.constant 0 : i32
    %c0_i32_1 = arith.constant 0 : i32
    return %c0_i32, %c0_i32_0 : i32, i32
  }
  func.func @transform_9(%arg0: i32, %arg1: i32) -> (i32, i32, i32, i32) {
    %c0_i32 = arith.constant 0 : i32
    %c0_i32_0 = arith.constant 0 : i32
    %c0_i32_1 = arith.constant 0 : i32
    return %arg0, %arg1, %c0_i32, %c0_i32_0 : i32, i32, i32, i32
  }
}

module attributes {stable_mosaic.version = 11 : i64} {
  func.func @_kv_proj_ln_kernel(%arg0: i32, %arg1: memref<16x32xf32, #tpu.memory_space<vmem>>, %arg2: memref<1x32xf32, #tpu.memory_space<vmem>>, %arg3: memref<1x32xf32, #tpu.memory_space<vmem>>, %arg4: memref<32x32xbf16, #tpu.memory_space<vmem>>, %arg5: memref<1x32xf32, #tpu.memory_space<vmem>>, %arg6: memref<32x32xbf16, #tpu.memory_space<vmem>>, %arg7: memref<1x32xf32, #tpu.memory_space<vmem>>, %arg8: memref<16x32xbf16, #tpu.memory_space<vmem>>, %arg9: memref<16x32xbf16, #tpu.memory_space<vmem>>) attributes {dimension_semantics = [#tpu.dimension_semantics<parallel>], iteration_bounds = array<i64: 1>, scalar_prefetch = 0 : i64, scratch_operands = 0 : i64, tpu.core_type = #tpu.core_type<tc>, window_params = [{transform_indices = @transform_0, window_bounds = array<i64: 16, 32>}, {pipeline_mode = #tpu.pipeline_mode<synchronous>, transform_indices = @transform_1, window_bounds = array<i64: 1, 32>}, {pipeline_mode = #tpu.pipeline_mode<synchronous>, transform_indices = @transform_2, window_bounds = array<i64: 1, 32>}, {pipeline_mode = #tpu.pipeline_mode<synchronous>, transform_indices = @transform_3, window_bounds = array<i64: 32, 32>}, {pipeline_mode = #tpu.pipeline_mode<synchronous>, transform_indices = @transform_4, window_bounds = array<i64: 1, 32>}, {pipeline_mode = #tpu.pipeline_mode<synchronous>, transform_indices = @transform_5, window_bounds = array<i64: 32, 32>}, {pipeline_mode = #tpu.pipeline_mode<synchronous>, transform_indices = @transform_6, window_bounds = array<i64: 1, 32>}, {transform_indices = @transform_7, window_bounds = array<i64: 16, 32>}, {transform_indices = @transform_8, window_bounds = array<i64: 16, 32>}]} {
    %c0 = arith.constant 0 : index
    %c0_0 = arith.constant 0 : index
    %0 = vector.load %arg1[%c0, %c0_0] : memref<16x32xf32, #tpu.memory_space<vmem>>, vector<16x32xf32>
    %c0_1 = arith.constant 0 : index
    %c0_2 = arith.constant 0 : index
    %1 = vector.load %arg2[%c0_1, %c0_2] : memref<1x32xf32, #tpu.memory_space<vmem>>, vector<1x32xf32>
    %c0_3 = arith.constant 0 : index
    %c0_4 = arith.constant 0 : index
    %2 = vector.load %arg3[%c0_3, %c0_4] : memref<1x32xf32, #tpu.memory_space<vmem>>, vector<1x32xf32>
    %cst = arith.constant dense<0.000000e+00> : vector<16xf32>
    %3 = vector.multi_reduction <add>, %0, %cst [1] : vector<16x32xf32> to vector<16xf32>
    %4 = vector.shape_cast %3 : vector<16xf32> to vector<16x1xf32>
    %cst_5 = arith.constant 3.200000e+01 : f32
    %5 = vector.broadcast %cst_5 : f32 to vector<16x1xf32>
    %6 = arith.divf %4, %5 : vector<16x1xf32>
    %7 = vector.broadcast %6 : vector<16x1xf32> to vector<16x32xf32>
    %8 = arith.subf %0, %7 : vector<16x32xf32>
    %9 = arith.mulf %8, %8 : vector<16x32xf32>
    %cst_6 = arith.constant dense<0.000000e+00> : vector<16xf32>
    %10 = vector.multi_reduction <add>, %9, %cst_6 [1] : vector<16x32xf32> to vector<16xf32>
    %11 = vector.shape_cast %10 : vector<16xf32> to vector<16x1xf32>
    %cst_7 = arith.constant 3.200000e+01 : f32
    %12 = vector.broadcast %cst_7 : f32 to vector<16x1xf32>
    %13 = arith.divf %11, %12 : vector<16x1xf32>
    %14 = vector.broadcast %6 : vector<16x1xf32> to vector<16x32xf32>
    %15 = arith.subf %0, %14 : vector<16x32xf32>
    %cst_8 = arith.constant 9.99999974E-6 : f32
    %16 = vector.broadcast %cst_8 : f32 to vector<16x1xf32>
    %17 = arith.addf %13, %16 : vector<16x1xf32>
    %18 = math.rsqrt %17 : vector<16x1xf32>
    %19 = vector.broadcast %18 : vector<16x1xf32> to vector<16x32xf32>
    %20 = arith.mulf %15, %19 : vector<16x32xf32>
    %21 = vector.broadcast %1 : vector<1x32xf32> to vector<16x32xf32>
    %22 = arith.mulf %20, %21 : vector<16x32xf32>
    %23 = vector.broadcast %2 : vector<1x32xf32> to vector<16x32xf32>
    %24 = arith.addf %22, %23 : vector<16x32xf32>
    %25 = arith.truncf %24 : vector<16x32xf32> to vector<16x32xbf16>
    %c0_9 = arith.constant 0 : index
    %c0_10 = arith.constant 0 : index
    %26 = vector.load %arg4[%c0_9, %c0_10] : memref<32x32xbf16, #tpu.memory_space<vmem>>, vector<32x32xbf16>
    %cst_11 = arith.constant dense<0.000000e+00> : vector<16x32xf32>
    %27 = tpu.matmul %25, %26, %cst_11 {dimension_numbers = #tpu.dot_dimension_numbers<[1], [0], [0], [1], [0, 0, 1, 1], [], []>} : vector<16x32xbf16>, vector<32x32xbf16>, vector<16x32xf32> -> vector<16x32xf32>
    %c0_12 = arith.constant 0 : index
    %c0_13 = arith.constant 0 : index
    %28 = vector.load %arg5[%c0_12, %c0_13] : memref<1x32xf32, #tpu.memory_space<vmem>>, vector<1x32xf32>
    %29 = vector.broadcast %28 : vector<1x32xf32> to vector<16x32xf32>
    %30 = arith.addf %27, %29 : vector<16x32xf32>
    %31 = arith.truncf %30 : vector<16x32xf32> to vector<16x32xbf16>
    %c0_14 = arith.constant 0 : index
    %c0_15 = arith.constant 0 : index
    %32 = vector.load %arg8[%c0_14, %c0_15] : memref<16x32xbf16, #tpu.memory_space<vmem>>, vector<16x32xbf16>
    tpu.vector_store %arg8[%c0_14, %c0_15], %31 {strides = array<i32>} : memref<16x32xbf16, #tpu.memory_space<vmem>>, vector<16x32xbf16>,
    %c0_16 = arith.constant 0 : index
    %c0_17 = arith.constant 0 : index
    %33 = vector.load %arg6[%c0_16, %c0_17] : memref<32x32xbf16, #tpu.memory_space<vmem>>, vector<32x32xbf16>
    %cst_18 = arith.constant dense<0.000000e+00> : vector<16x32xf32>
    %34 = tpu.matmul %25, %33, %cst_18 {dimension_numbers = #tpu.dot_dimension_numbers<[1], [0], [0], [1], [0, 0, 1, 1], [], []>} : vector<16x32xbf16>, vector<32x32xbf16>, vector<16x32xf32> -> vector<16x32xf32>
    %c0_19 = arith.constant 0 : index
    %c0_20 = arith.constant 0 : index
    %35 = vector.load %arg7[%c0_19, %c0_20] : memref<1x32xf32, #tpu.memory_space<vmem>>, vector<1x32xf32>
    %36 = vector.broadcast %35 : vector<1x32xf32> to vector<16x32xf32>
    %37 = arith.addf %34, %36 : vector<16x32xf32>
    %38 = arith.truncf %37 : vector<16x32xf32> to vector<16x32xbf16>
    %c0_21 = arith.constant 0 : index
    %c0_22 = arith.constant 0 : index
    %39 = vector.load %arg9[%c0_21, %c0_22] : memref<16x32xbf16, #tpu.memory_space<vmem>>, vector<16x32xbf16>
    tpu.vector_store %arg9[%c0_21, %c0_22], %38 {strides = array<i32>} : memref<16x32xbf16, #tpu.memory_space<vmem>>, vector<16x32xbf16>,
    return
  }
  func.func @transform_0(%arg0: i32) -> (i32, i32) {
    %c0_i32 = arith.constant 0 : i32
    %c0_i32_0 = arith.constant 0 : i32
    return %arg0, %c0_i32 : i32, i32
  }
  func.func @transform_1(%arg0: i32) -> (i32, i32) {
    %c0_i32 = arith.constant 0 : i32
    %c0_i32_0 = arith.constant 0 : i32
    %c0_i32_1 = arith.constant 0 : i32
    return %c0_i32, %c0_i32_0 : i32, i32
  }
  func.func @transform_2(%arg0: i32) -> (i32, i32) {
    %c0_i32 = arith.constant 0 : i32
    %c0_i32_0 = arith.constant 0 : i32
    %c0_i32_1 = arith.constant 0 : i32
    return %c0_i32, %c0_i32_0 : i32, i32
  }
  func.func @transform_3(%arg0: i32) -> (i32, i32) {
    %c0_i32 = arith.constant 0 : i32
    %c0_i32_0 = arith.constant 0 : i32
    %c0_i32_1 = arith.constant 0 : i32
    return %c0_i32, %c0_i32_0 : i32, i32
  }
  func.func @transform_4(%arg0: i32) -> (i32, i32) {
    %c0_i32 = arith.constant 0 : i32
    %c0_i32_0 = arith.constant 0 : i32
    %c0_i32_1 = arith.constant 0 : i32
    return %c0_i32, %c0_i32_0 : i32, i32
  }
  func.func @transform_5(%arg0: i32) -> (i32, i32) {
    %c0_i32 = arith.constant 0 : i32
    %c0_i32_0 = arith.constant 0 : i32
    %c0_i32_1 = arith.constant 0 : i32
    return %c0_i32, %c0_i32_0 : i32, i32
  }
  func.func @transform_6(%arg0: i32) -> (i32, i32) {
    %c0_i32 = arith.constant 0 : i32
    %c0_i32_0 = arith.constant 0 : i32
    %c0_i32_1 = arith.constant 0 : i32
    return %c0_i32, %c0_i32_0 : i32, i32
  }
  func.func @transform_7(%arg0: i32) -> (i32, i32) {
    %c0_i32 = arith.constant 0 : i32
    %c0_i32_0 = arith.constant 0 : i32
    return %arg0, %c0_i32 : i32, i32
  }
  func.func @transform_8(%arg0: i32) -> (i32, i32) {
    %c0_i32 = arith.constant 0 : i32
    %c0_i32_0 = arith.constant 0 : i32
    return %arg0, %c0_i32 : i32, i32
  }
}

module attributes {stable_mosaic.version = 11 : i64} {
  func.func @_attn_block_kernel(%arg0: i32, %arg1: i32, %arg2: memref<1x1x8x32xf32, #tpu.memory_space<vmem>>, %arg3: memref<1x8x32xbf16, #tpu.memory_space<vmem>>, %arg4: memref<1x8x32xbf16, #tpu.memory_space<vmem>>, %arg5: memref<1x1x32xf32, #tpu.memory_space<vmem>>, %arg6: memref<1x1x32xf32, #tpu.memory_space<vmem>>, %arg7: memref<32x32xbf16, #tpu.memory_space<vmem>>, %arg8: memref<1x32xf32, #tpu.memory_space<vmem>>, %arg9: memref<32x32xbf16, #tpu.memory_space<vmem>>, %arg10: memref<1x32xf32, #tpu.memory_space<vmem>>, %arg11: memref<1x1x8x32xf32, #tpu.memory_space<vmem>>) attributes {dimension_semantics = [#tpu.dimension_semantics<parallel>, #tpu.dimension_semantics<parallel>], iteration_bounds = array<i64: 1, 2>, scalar_prefetch = 0 : i64, scratch_operands = 0 : i64, tpu.core_type = #tpu.core_type<tc>, window_params = [{transform_indices = @transform_0, window_bounds = array<i64: 1, 1, 8, 32>}, {transform_indices = @transform_1, window_bounds = array<i64: 1, 8, 32>}, {transform_indices = @transform_2, window_bounds = array<i64: 1, 8, 32>}, {pipeline_mode = #tpu.pipeline_mode<synchronous>, transform_indices = @transform_3, window_bounds = array<i64: 1, 1, 32>}, {pipeline_mode = #tpu.pipeline_mode<synchronous>, transform_indices = @transform_4, window_bounds = array<i64: 1, 1, 32>}, {pipeline_mode = #tpu.pipeline_mode<synchronous>, transform_indices = @transform_5, window_bounds = array<i64: 32, 32>}, {pipeline_mode = #tpu.pipeline_mode<synchronous>, transform_indices = @transform_6, window_bounds = array<i64: 1, 32>}, {pipeline_mode = #tpu.pipeline_mode<synchronous>, transform_indices = @transform_7, window_bounds = array<i64: 32, 32>}, {pipeline_mode = #tpu.pipeline_mode<synchronous>, transform_indices = @transform_8, window_bounds = array<i64: 1, 32>}, {transform_indices = @transform_9, window_bounds = array<i64: 1, 1, 8, 32>}]} {
    %c0 = arith.constant 0 : index
    %c0_0 = arith.constant 0 : index
    %c0_1 = arith.constant 0 : index
    %c0_2 = arith.constant 0 : index
    %0 = vector.load %arg2[%c0, %c0_0, %c0_1, %c0_2] : memref<1x1x8x32xf32, #tpu.memory_space<vmem>>, vector<1x1x8x32xf32>
    %1 = vector.shape_cast %0 : vector<1x1x8x32xf32> to vector<8x32xf32>
    %c0_3 = arith.constant 0 : index
    %c0_4 = arith.constant 0 : index
    %c0_5 = arith.constant 0 : index
    %2 = vector.load %arg5[%c0_3, %c0_4, %c0_5] : memref<1x1x32xf32, #tpu.memory_space<vmem>>, vector<1x1x32xf32>
    %3 = vector.shape_cast %2 : vector<1x1x32xf32> to vector<1x32xf32>
    %c0_6 = arith.constant 0 : index
    %c0_7 = arith.constant 0 : index
    %c0_8 = arith.constant 0 : index
    %4 = vector.load %arg6[%c0_6, %c0_7, %c0_8] : memref<1x1x32xf32, #tpu.memory_space<vmem>>, vector<1x1x32xf32>
    %5 = vector.shape_cast %4 : vector<1x1x32xf32> to vector<1x32xf32>
    %cst = arith.constant dense<0.000000e+00> : vector<8xf32>
    %6 = vector.multi_reduction <add>, %1, %cst [1] : vector<8x32xf32> to vector<8xf32>
    %7 = vector.shape_cast %6 : vector<8xf32> to vector<8x1xf32>
    %cst_9 = arith.constant 3.200000e+01 : f32
    %8 = vector.broadcast %cst_9 : f32 to vector<8x1xf32>
    %9 = arith.divf %7, %8 : vector<8x1xf32>
    %10 = vector.broadcast %9 : vector<8x1xf32> to vector<8x32xf32>
    %11 = arith.subf %1, %10 : vector<8x32xf32>
    %12 = arith.mulf %11, %11 : vector<8x32xf32>
    %cst_10 = arith.constant dense<0.000000e+00> : vector<8xf32>
    %13 = vector.multi_reduction <add>, %12, %cst_10 [1] : vector<8x32xf32> to vector<8xf32>
    %14 = vector.shape_cast %13 : vector<8xf32> to vector<8x1xf32>
    %cst_11 = arith.constant 3.200000e+01 : f32
    %15 = vector.broadcast %cst_11 : f32 to vector<8x1xf32>
    %16 = arith.divf %14, %15 : vector<8x1xf32>
    %17 = vector.broadcast %9 : vector<8x1xf32> to vector<8x32xf32>
    %18 = arith.subf %1, %17 : vector<8x32xf32>
    %cst_12 = arith.constant 9.99999974E-6 : f32
    %19 = vector.broadcast %cst_12 : f32 to vector<8x1xf32>
    %20 = arith.addf %16, %19 : vector<8x1xf32>
    %21 = math.rsqrt %20 : vector<8x1xf32>
    %22 = vector.broadcast %21 : vector<8x1xf32> to vector<8x32xf32>
    %23 = arith.mulf %18, %22 : vector<8x32xf32>
    %24 = vector.broadcast %3 : vector<1x32xf32> to vector<8x32xf32>
    %25 = arith.mulf %23, %24 : vector<8x32xf32>
    %26 = vector.broadcast %5 : vector<1x32xf32> to vector<8x32xf32>
    %27 = arith.addf %25, %26 : vector<8x32xf32>
    %28 = arith.truncf %27 : vector<8x32xf32> to vector<8x32xbf16>
    %c0_13 = arith.constant 0 : index
    %c0_14 = arith.constant 0 : index
    %29 = vector.load %arg7[%c0_13, %c0_14] : memref<32x32xbf16, #tpu.memory_space<vmem>>, vector<32x32xbf16>
    %cst_15 = arith.constant dense<0.000000e+00> : vector<8x32xf32>
    %30 = tpu.matmul %28, %29, %cst_15 {dimension_numbers = #tpu.dot_dimension_numbers<[1], [0], [0], [1], [0, 0, 1, 1], [], []>} : vector<8x32xbf16>, vector<32x32xbf16>, vector<8x32xf32> -> vector<8x32xf32>
    %c0_16 = arith.constant 0 : index
    %c0_17 = arith.constant 0 : index
    %31 = vector.load %arg8[%c0_16, %c0_17] : memref<1x32xf32, #tpu.memory_space<vmem>>, vector<1x32xf32>
    %32 = vector.broadcast %31 : vector<1x32xf32> to vector<8x32xf32>
    %33 = arith.addf %30, %32 : vector<8x32xf32>
    %34 = arith.truncf %33 : vector<8x32xf32> to vector<8x32xbf16>
    %c0_18 = arith.constant 0 : index
    %c0_19 = arith.constant 0 : index
    %c0_20 = arith.constant 0 : index
    %35 = vector.load %arg3[%c0_18, %c0_19, %c0_20] : memref<1x8x32xbf16, #tpu.memory_space<vmem>>, vector<1x8x32xbf16>
    %36 = vector.shape_cast %35 : vector<1x8x32xbf16> to vector<8x32xbf16>
    %c0_21 = arith.constant 0 : index
    %c0_22 = arith.constant 0 : index
    %c0_23 = arith.constant 0 : index
    %37 = vector.load %arg4[%c0_21, %c0_22, %c0_23] : memref<1x8x32xbf16, #tpu.memory_space<vmem>>, vector<1x8x32xbf16>
    %38 = vector.shape_cast %37 : vector<1x8x32xbf16> to vector<8x32xbf16>
    %39 = vector.extract_strided_slice %34 {offsets = [0, 0], sizes = [8, 8], strides = [1, 1]} : vector<8x32xbf16> to vector<8x8xbf16>
    %40 = vector.extract_strided_slice %36 {offsets = [0, 0], sizes = [8, 8], strides = [1, 1]} : vector<8x32xbf16> to vector<8x8xbf16>
    %cst_24 = arith.constant dense<0.000000e+00> : vector<8x8xf32>
    %41 = tpu.matmul %39, %40, %cst_24 {dimension_numbers = #tpu.dot_dimension_numbers<[1], [1], [0], [0], [0, 0, 1, 0], [], []>} : vector<8x8xbf16>, vector<8x8xbf16>, vector<8x8xf32> -> vector<8x8xf32>
    %cst_25 = arith.constant dense<0xFF800000> : vector<8xf32>
    %42 = vector.multi_reduction <maximumf>, %41, %cst_25 [1] : vector<8x8xf32> to vector<8xf32>
    %43 = vector.shape_cast %42 : vector<8xf32> to vector<8x1xf32>
    %44 = vector.broadcast %43 : vector<8x1xf32> to vector<8x8xf32>
    %45 = arith.subf %41, %44 : vector<8x8xf32>
    %46 = math.exp %45 : vector<8x8xf32>
    %cst_26 = arith.constant dense<0.000000e+00> : vector<8xf32>
    %47 = vector.multi_reduction <add>, %46, %cst_26 [1] : vector<8x8xf32> to vector<8xf32>
    %48 = vector.shape_cast %47 : vector<8xf32> to vector<8x1xf32>
    %49 = tpu.reciprocal %48 {approx = true} : vector<8x1xf32> -> vector<8x1xf32>
    %50 = vector.broadcast %49 : vector<8x1xf32> to vector<8x8xf32>
    %51 = arith.mulf %46, %50 : vector<8x8xf32>
    %52 = arith.truncf %51 : vector<8x8xf32> to vector<8x8xbf16>
    %53 = vector.extract_strided_slice %38 {offsets = [0, 0], sizes = [8, 8], strides = [1, 1]} : vector<8x32xbf16> to vector<8x8xbf16>
    %cst_27 = arith.constant dense<0.000000e+00> : vector<8x8xf32>
    %54 = tpu.matmul %52, %53, %cst_27 {dimension_numbers = #tpu.dot_dimension_numbers<[1], [0], [0], [1], [0, 0, 1, 1], [], []>} : vector<8x8xbf16>, vector<8x8xbf16>, vector<8x8xf32> -> vector<8x8xf32>
    %55 = vector.extract_strided_slice %34 {offsets = [0, 8], sizes = [8, 8], strides = [1, 1]} : vector<8x32xbf16> to vector<8x8xbf16>
    %56 = vector.extract_strided_slice %36 {offsets = [0, 8], sizes = [8, 8], strides = [1, 1]} : vector<8x32xbf16> to vector<8x8xbf16>
    %cst_28 = arith.constant dense<0.000000e+00> : vector<8x8xf32>
    %57 = tpu.matmul %55, %56, %cst_28 {dimension_numbers = #tpu.dot_dimension_numbers<[1], [1], [0], [0], [0, 0, 1, 0], [], []>} : vector<8x8xbf16>, vector<8x8xbf16>, vector<8x8xf32> -> vector<8x8xf32>
    %cst_29 = arith.constant dense<0xFF800000> : vector<8xf32>
    %58 = vector.multi_reduction <maximumf>, %57, %cst_29 [1] : vector<8x8xf32> to vector<8xf32>
    %59 = vector.shape_cast %58 : vector<8xf32> to vector<8x1xf32>
    %60 = vector.broadcast %59 : vector<8x1xf32> to vector<8x8xf32>
    %61 = arith.subf %57, %60 : vector<8x8xf32>
    %62 = math.exp %61 : vector<8x8xf32>
    %cst_30 = arith.constant dense<0.000000e+00> : vector<8xf32>
    %63 = vector.multi_reduction <add>, %62, %cst_30 [1] : vector<8x8xf32> to vector<8xf32>
    %64 = vector.shape_cast %63 : vector<8xf32> to vector<8x1xf32>
    %65 = tpu.reciprocal %64 {approx = true} : vector<8x1xf32> -> vector<8x1xf32>
    %66 = vector.broadcast %65 : vector<8x1xf32> to vector<8x8xf32>
    %67 = arith.mulf %62, %66 : vector<8x8xf32>
    %68 = arith.truncf %67 : vector<8x8xf32> to vector<8x8xbf16>
    %69 = vector.extract_strided_slice %38 {offsets = [0, 8], sizes = [8, 8], strides = [1, 1]} : vector<8x32xbf16> to vector<8x8xbf16>
    %cst_31 = arith.constant dense<0.000000e+00> : vector<8x8xf32>
    %70 = tpu.matmul %68, %69, %cst_31 {dimension_numbers = #tpu.dot_dimension_numbers<[1], [0], [0], [1], [0, 0, 1, 1], [], []>} : vector<8x8xbf16>, vector<8x8xbf16>, vector<8x8xf32> -> vector<8x8xf32>
    %71 = vector.extract_strided_slice %34 {offsets = [0, 16], sizes = [8, 8], strides = [1, 1]} : vector<8x32xbf16> to vector<8x8xbf16>
    %72 = vector.extract_strided_slice %36 {offsets = [0, 16], sizes = [8, 8], strides = [1, 1]} : vector<8x32xbf16> to vector<8x8xbf16>
    %cst_32 = arith.constant dense<0.000000e+00> : vector<8x8xf32>
    %73 = tpu.matmul %71, %72, %cst_32 {dimension_numbers = #tpu.dot_dimension_numbers<[1], [1], [0], [0], [0, 0, 1, 0], [], []>} : vector<8x8xbf16>, vector<8x8xbf16>, vector<8x8xf32> -> vector<8x8xf32>
    %cst_33 = arith.constant dense<0xFF800000> : vector<8xf32>
    %74 = vector.multi_reduction <maximumf>, %73, %cst_33 [1] : vector<8x8xf32> to vector<8xf32>
    %75 = vector.shape_cast %74 : vector<8xf32> to vector<8x1xf32>
    %76 = vector.broadcast %75 : vector<8x1xf32> to vector<8x8xf32>
    %77 = arith.subf %73, %76 : vector<8x8xf32>
    %78 = math.exp %77 : vector<8x8xf32>
    %cst_34 = arith.constant dense<0.000000e+00> : vector<8xf32>
    %79 = vector.multi_reduction <add>, %78, %cst_34 [1] : vector<8x8xf32> to vector<8xf32>
    %80 = vector.shape_cast %79 : vector<8xf32> to vector<8x1xf32>
    %81 = tpu.reciprocal %80 {approx = true} : vector<8x1xf32> -> vector<8x1xf32>
    %82 = vector.broadcast %81 : vector<8x1xf32> to vector<8x8xf32>
    %83 = arith.mulf %78, %82 : vector<8x8xf32>
    %84 = arith.truncf %83 : vector<8x8xf32> to vector<8x8xbf16>
    %85 = vector.extract_strided_slice %38 {offsets = [0, 16], sizes = [8, 8], strides = [1, 1]} : vector<8x32xbf16> to vector<8x8xbf16>
    %cst_35 = arith.constant dense<0.000000e+00> : vector<8x8xf32>
    %86 = tpu.matmul %84, %85, %cst_35 {dimension_numbers = #tpu.dot_dimension_numbers<[1], [0], [0], [1], [0, 0, 1, 1], [], []>} : vector<8x8xbf16>, vector<8x8xbf16>, vector<8x8xf32> -> vector<8x8xf32>
    %87 = vector.extract_strided_slice %34 {offsets = [0, 24], sizes = [8, 8], strides = [1, 1]} : vector<8x32xbf16> to vector<8x8xbf16>
    %88 = vector.extract_strided_slice %36 {offsets = [0, 24], sizes = [8, 8], strides = [1, 1]} : vector<8x32xbf16> to vector<8x8xbf16>
    %cst_36 = arith.constant dense<0.000000e+00> : vector<8x8xf32>
    %89 = tpu.matmul %87, %88, %cst_36 {dimension_numbers = #tpu.dot_dimension_numbers<[1], [1], [0], [0], [0, 0, 1, 0], [], []>} : vector<8x8xbf16>, vector<8x8xbf16>, vector<8x8xf32> -> vector<8x8xf32>
    %cst_37 = arith.constant dense<0xFF800000> : vector<8xf32>
    %90 = vector.multi_reduction <maximumf>, %89, %cst_37 [1] : vector<8x8xf32> to vector<8xf32>
    %91 = vector.shape_cast %90 : vector<8xf32> to vector<8x1xf32>
    %92 = vector.broadcast %91 : vector<8x1xf32> to vector<8x8xf32>
    %93 = arith.subf %89, %92 : vector<8x8xf32>
    %94 = math.exp %93 : vector<8x8xf32>
    %cst_38 = arith.constant dense<0.000000e+00> : vector<8xf32>
    %95 = vector.multi_reduction <add>, %94, %cst_38 [1] : vector<8x8xf32> to vector<8xf32>
    %96 = vector.shape_cast %95 : vector<8xf32> to vector<8x1xf32>
    %97 = tpu.reciprocal %96 {approx = true} : vector<8x1xf32> -> vector<8x1xf32>
    %98 = vector.broadcast %97 : vector<8x1xf32> to vector<8x8xf32>
    %99 = arith.mulf %94, %98 : vector<8x8xf32>
    %100 = arith.truncf %99 : vector<8x8xf32> to vector<8x8xbf16>
    %101 = vector.extract_strided_slice %38 {offsets = [0, 24], sizes = [8, 8], strides = [1, 1]} : vector<8x32xbf16> to vector<8x8xbf16>
    %cst_39 = arith.constant dense<0.000000e+00> : vector<8x8xf32>
    %102 = tpu.matmul %100, %101, %cst_39 {dimension_numbers = #tpu.dot_dimension_numbers<[1], [0], [0], [1], [0, 0, 1, 1], [], []>} : vector<8x8xbf16>, vector<8x8xbf16>, vector<8x8xf32> -> vector<8x8xf32>
    %103 = tpu.concatenate %54, %70, %86, %102 in 1 : vector<8x8xf32>, vector<8x8xf32>, vector<8x8xf32>, vector<8x8xf32> -> vector<8x32xf32>
    %104 = arith.truncf %103 : vector<8x32xf32> to vector<8x32xbf16>
    %c0_40 = arith.constant 0 : index
    %c0_41 = arith.constant 0 : index
    %105 = vector.load %arg9[%c0_40, %c0_41] : memref<32x32xbf16, #tpu.memory_space<vmem>>, vector<32x32xbf16>
    %cst_42 = arith.constant dense<0.000000e+00> : vector<8x32xf32>
    %106 = tpu.matmul %104, %105, %cst_42 {dimension_numbers = #tpu.dot_dimension_numbers<[1], [0], [0], [1], [0, 0, 1, 1], [], []>} : vector<8x32xbf16>, vector<32x32xbf16>, vector<8x32xf32> -> vector<8x32xf32>
    %107 = arith.addf %1, %106 : vector<8x32xf32>
    %c0_43 = arith.constant 0 : index
    %c0_44 = arith.constant 0 : index
    %108 = vector.load %arg10[%c0_43, %c0_44] : memref<1x32xf32, #tpu.memory_space<vmem>>, vector<1x32xf32>
    %109 = vector.broadcast %108 : vector<1x32xf32> to vector<8x32xf32>
    %110 = arith.addf %107, %109 : vector<8x32xf32>
    %c0_45 = arith.constant 0 : index
    %c0_46 = arith.constant 0 : index
    %c0_47 = arith.constant 0 : index
    %c0_48 = arith.constant 0 : index
    %111 = vector.load %arg11[%c0_45, %c0_46, %c0_47, %c0_48] : memref<1x1x8x32xf32, #tpu.memory_space<vmem>>, vector<1x1x8x32xf32>
    %112 = vector.shape_cast %111 : vector<1x1x8x32xf32> to vector<8x32xf32>
    %113 = vector.shape_cast %110 : vector<8x32xf32> to vector<1x1x8x32xf32>
    tpu.vector_store %arg11[%c0_45, %c0_46, %c0_47, %c0_48], %113 {strides = array<i32>} : memref<1x1x8x32xf32, #tpu.memory_space<vmem>>, vector<1x1x8x32xf32>,
    return
  }
  func.func @transform_0(%arg0: i32, %arg1: i32) -> (i32, i32, i32, i32) {
    %c0_i32 = arith.constant 0 : i32
    %c0_i32_0 = arith.constant 0 : i32
    %c0_i32_1 = arith.constant 0 : i32
    return %arg0, %arg1, %c0_i32, %c0_i32_0 : i32, i32, i32, i32
  }
  func.func @transform_1(%arg0: i32, %arg1: i32) -> (i32, i32, i32) {
    %c0_i32 = arith.constant 0 : i32
    %c0_i32_0 = arith.constant 0 : i32
    %c0_i32_1 = arith.constant 0 : i32
    return %arg1, %c0_i32, %c0_i32_0 : i32, i32, i32
  }
  func.func @transform_2(%arg0: i32, %arg1: i32) -> (i32, i32, i32) {
    %c0_i32 = arith.constant 0 : i32
    %c0_i32_0 = arith.constant 0 : i32
    %c0_i32_1 = arith.constant 0 : i32
    return %arg1, %c0_i32, %c0_i32_0 : i32, i32, i32
  }
  func.func @transform_3(%arg0: i32, %arg1: i32) -> (i32, i32, i32) {
    %c0_i32 = arith.constant 0 : i32
    %c0_i32_0 = arith.constant 0 : i32
    %c0_i32_1 = arith.constant 0 : i32
    %c0_i32_2 = arith.constant 0 : i32
    return %c0_i32, %c0_i32_0, %c0_i32_1 : i32, i32, i32
  }
  func.func @transform_4(%arg0: i32, %arg1: i32) -> (i32, i32, i32) {
    %c0_i32 = arith.constant 0 : i32
    %c0_i32_0 = arith.constant 0 : i32
    %c0_i32_1 = arith.constant 0 : i32
    %c0_i32_2 = arith.constant 0 : i32
    return %c0_i32, %c0_i32_0, %c0_i32_1 : i32, i32, i32
  }
  func.func @transform_5(%arg0: i32, %arg1: i32) -> (i32, i32) {
    %c0_i32 = arith.constant 0 : i32
    %c0_i32_0 = arith.constant 0 : i32
    %c0_i32_1 = arith.constant 0 : i32
    return %c0_i32, %c0_i32_0 : i32, i32
  }
  func.func @transform_6(%arg0: i32, %arg1: i32) -> (i32, i32) {
    %c0_i32 = arith.constant 0 : i32
    %c0_i32_0 = arith.constant 0 : i32
    %c0_i32_1 = arith.constant 0 : i32
    return %c0_i32, %c0_i32_0 : i32, i32
  }
  func.func @transform_7(%arg0: i32, %arg1: i32) -> (i32, i32) {
    %c0_i32 = arith.constant 0 : i32
    %c0_i32_0 = arith.constant 0 : i32
    %c0_i32_1 = arith.constant 0 : i32
    return %c0_i32, %c0_i32_0 : i32, i32
  }
  func.func @transform_8(%arg0: i32, %arg1: i32) -> (i32, i32) {
    %c0_i32 = arith.constant 0 : i32
    %c0_i32_0 = arith.constant 0 : i32
    %c0_i32_1 = arith.constant 0 : i32
    return %c0_i32, %c0_i32_0 : i32, i32
  }
  func.func @transform_9(%arg0: i32, %arg1: i32) -> (i32, i32, i32, i32) {
    %c0_i32 = arith.constant 0 : i32
    %c0_i32_0 = arith.constant 0 : i32
    %c0_i32_1 = arith.constant 0 : i32
    return %arg0, %arg1, %c0_i32, %c0_i32_0 : i32, i32, i32, i32
  }
}

module attributes {stable_mosaic.version = 11 : i64} {
  func.func @_ffn_block_kernel(%arg0: i32, %arg1: memref<32x32xf32, #tpu.memory_space<vmem>>, %arg2: memref<1x32xf32, #tpu.memory_space<vmem>>, %arg3: memref<1x32xf32, #tpu.memory_space<vmem>>, %arg4: memref<32x128xbf16, #tpu.memory_space<vmem>>, %arg5: memref<1x128xf32, #tpu.memory_space<vmem>>, %arg6: memref<128x32xbf16, #tpu.memory_space<vmem>>, %arg7: memref<1x32xf32, #tpu.memory_space<vmem>>, %arg8: memref<32x32xf32, #tpu.memory_space<vmem>>) attributes {dimension_semantics = [#tpu.dimension_semantics<parallel>], iteration_bounds = array<i64: 1>, scalar_prefetch = 0 : i64, scratch_operands = 0 : i64, tpu.core_type = #tpu.core_type<tc>, window_params = [{transform_indices = @transform_0, window_bounds = array<i64: 32, 32>}, {pipeline_mode = #tpu.pipeline_mode<synchronous>, transform_indices = @transform_1, window_bounds = array<i64: 1, 32>}, {pipeline_mode = #tpu.pipeline_mode<synchronous>, transform_indices = @transform_2, window_bounds = array<i64: 1, 32>}, {pipeline_mode = #tpu.pipeline_mode<synchronous>, transform_indices = @transform_3, window_bounds = array<i64: 32, 128>}, {pipeline_mode = #tpu.pipeline_mode<synchronous>, transform_indices = @transform_4, window_bounds = array<i64: 1, 128>}, {pipeline_mode = #tpu.pipeline_mode<synchronous>, transform_indices = @transform_5, window_bounds = array<i64: 128, 32>}, {pipeline_mode = #tpu.pipeline_mode<synchronous>, transform_indices = @transform_6, window_bounds = array<i64: 1, 32>}, {transform_indices = @transform_7, window_bounds = array<i64: 32, 32>}]} {
    %c0 = arith.constant 0 : index
    %c0_0 = arith.constant 0 : index
    %0 = vector.load %arg1[%c0, %c0_0] : memref<32x32xf32, #tpu.memory_space<vmem>>, vector<32x32xf32>
    %c0_1 = arith.constant 0 : index
    %c0_2 = arith.constant 0 : index
    %1 = vector.load %arg2[%c0_1, %c0_2] : memref<1x32xf32, #tpu.memory_space<vmem>>, vector<1x32xf32>
    %c0_3 = arith.constant 0 : index
    %c0_4 = arith.constant 0 : index
    %2 = vector.load %arg3[%c0_3, %c0_4] : memref<1x32xf32, #tpu.memory_space<vmem>>, vector<1x32xf32>
    %cst = arith.constant dense<0.000000e+00> : vector<32xf32>
    %3 = vector.multi_reduction <add>, %0, %cst [1] : vector<32x32xf32> to vector<32xf32>
    %4 = vector.shape_cast %3 : vector<32xf32> to vector<32x1xf32>
    %cst_5 = arith.constant 3.200000e+01 : f32
    %5 = vector.broadcast %cst_5 : f32 to vector<32x1xf32>
    %6 = arith.divf %4, %5 : vector<32x1xf32>
    %7 = vector.broadcast %6 : vector<32x1xf32> to vector<32x32xf32>
    %8 = arith.subf %0, %7 : vector<32x32xf32>
    %9 = arith.mulf %8, %8 : vector<32x32xf32>
    %cst_6 = arith.constant dense<0.000000e+00> : vector<32xf32>
    %10 = vector.multi_reduction <add>, %9, %cst_6 [1] : vector<32x32xf32> to vector<32xf32>
    %11 = vector.shape_cast %10 : vector<32xf32> to vector<32x1xf32>
    %cst_7 = arith.constant 3.200000e+01 : f32
    %12 = vector.broadcast %cst_7 : f32 to vector<32x1xf32>
    %13 = arith.divf %11, %12 : vector<32x1xf32>
    %14 = vector.broadcast %6 : vector<32x1xf32> to vector<32x32xf32>
    %15 = arith.subf %0, %14 : vector<32x32xf32>
    %cst_8 = arith.constant 9.99999974E-6 : f32
    %16 = vector.broadcast %cst_8 : f32 to vector<32x1xf32>
    %17 = arith.addf %13, %16 : vector<32x1xf32>
    %18 = math.rsqrt %17 : vector<32x1xf32>
    %19 = vector.broadcast %18 : vector<32x1xf32> to vector<32x32xf32>
    %20 = arith.mulf %15, %19 : vector<32x32xf32>
    %21 = vector.broadcast %1 : vector<1x32xf32> to vector<32x32xf32>
    %22 = arith.mulf %20, %21 : vector<32x32xf32>
    %23 = vector.broadcast %2 : vector<1x32xf32> to vector<32x32xf32>
    %24 = arith.addf %22, %23 : vector<32x32xf32>
    %25 = arith.truncf %24 : vector<32x32xf32> to vector<32x32xbf16>
    %c0_9 = arith.constant 0 : index
    %c0_10 = arith.constant 0 : index
    %26 = vector.load %arg4[%c0_9, %c0_10] : memref<32x128xbf16, #tpu.memory_space<vmem>>, vector<32x128xbf16>
    %cst_11 = arith.constant dense<0.000000e+00> : vector<32x128xf32>
    %27 = tpu.matmul %25, %26, %cst_11 {dimension_numbers = #tpu.dot_dimension_numbers<[1], [0], [0], [1], [0, 0, 1, 1], [], []>} : vector<32x32xbf16>, vector<32x128xbf16>, vector<32x128xf32> -> vector<32x128xf32>
    %c0_12 = arith.constant 0 : index
    %c0_13 = arith.constant 0 : index
    %28 = vector.load %arg5[%c0_12, %c0_13] : memref<1x128xf32, #tpu.memory_space<vmem>>, vector<1x128xf32>
    %29 = vector.broadcast %28 : vector<1x128xf32> to vector<32x128xf32>
    %30 = arith.addf %27, %29 : vector<32x128xf32>
    %31 = arith.mulf %30, %30 : vector<32x128xf32>
    %32 = arith.mulf %30, %31 : vector<32x128xf32>
    %cst_14 = arith.constant 4.471500e-02 : f32
    %33 = vector.broadcast %cst_14 : f32 to vector<32x128xf32>
    %34 = arith.mulf %33, %32 : vector<32x128xf32>
    %35 = arith.addf %30, %34 : vector<32x128xf32>
    %cst_15 = arith.constant 0.797884583 : f32
    %36 = vector.broadcast %cst_15 : f32 to vector<32x128xf32>
    %37 = arith.mulf %36, %35 : vector<32x128xf32>
    %38 = math.tanh %37 : vector<32x128xf32>
    %cst_16 = arith.constant 1.000000e+00 : f32
    %39 = vector.broadcast %cst_16 : f32 to vector<32x128xf32>
    %40 = arith.addf %39, %38 : vector<32x128xf32>
    %cst_17 = arith.constant 5.000000e-01 : f32
    %41 = vector.broadcast %cst_17 : f32 to vector<32x128xf32>
    %42 = arith.mulf %41, %40 : vector<32x128xf32>
    %43 = arith.mulf %30, %42 : vector<32x128xf32>
    %44 = arith.truncf %43 : vector<32x128xf32> to vector<32x128xbf16>
    %c0_18 = arith.constant 0 : index
    %c0_19 = arith.constant 0 : index
    %45 = vector.load %arg6[%c0_18, %c0_19] : memref<128x32xbf16, #tpu.memory_space<vmem>>, vector<128x32xbf16>
    %cst_20 = arith.constant dense<0.000000e+00> : vector<32x32xf32>
    %46 = tpu.matmul %44, %45, %cst_20 {dimension_numbers = #tpu.dot_dimension_numbers<[1], [0], [0], [1], [0, 0, 1, 1], [], []>} : vector<32x128xbf16>, vector<128x32xbf16>, vector<32x32xf32> -> vector<32x32xf32>
    %c0_21 = arith.constant 0 : index
    %c0_22 = arith.constant 0 : index
    %47 = vector.load %arg7[%c0_21, %c0_22] : memref<1x32xf32, #tpu.memory_space<vmem>>, vector<1x32xf32>
    %48 = vector.broadcast %47 : vector<1x32xf32> to vector<32x32xf32>
    %49 = arith.addf %46, %48 : vector<32x32xf32>
    %50 = arith.addf %0, %49 : vector<32x32xf32>
    %c0_23 = arith.constant 0 : index
    %c0_24 = arith.constant 0 : index
    %51 = vector.load %arg8[%c0_23, %c0_24] : memref<32x32xf32, #tpu.memory_space<vmem>>, vector<32x32xf32>
    tpu.vector_store %arg8[%c0_23, %c0_24], %50 {strides = array<i32>} : memref<32x32xf32, #tpu.memory_space<vmem>>, vector<32x32xf32>,
    return
  }
  func.func @transform_0(%arg0: i32) -> (i32, i32) {
    %c0_i32 = arith.constant 0 : i32
    %c0_i32_0 = arith.constant 0 : i32
    return %arg0, %c0_i32 : i32, i32
  }
  func.func @transform_1(%arg0: i32) -> (i32, i32) {
    %c0_i32 = arith.constant 0 : i32
    %c0_i32_0 = arith.constant 0 : i32
    %c0_i32_1 = arith.constant 0 : i32
    return %c0_i32, %c0_i32_0 : i32, i32
  }
  func.func @transform_2(%arg0: i32) -> (i32, i32) {
    %c0_i32 = arith.constant 0 : i32
    %c0_i32_0 = arith.constant 0 : i32
    %c0_i32_1 = arith.constant 0 : i32
    return %c0_i32, %c0_i32_0 : i32, i32
  }
  func.func @transform_3(%arg0: i32) -> (i32, i32) {
    %c0_i32 = arith.constant 0 : i32
    %c0_i32_0 = arith.constant 0 : i32
    %c0_i32_1 = arith.constant 0 : i32
    return %c0_i32, %c0_i32_0 : i32, i32
  }
  func.func @transform_4(%arg0: i32) -> (i32, i32) {
    %c0_i32 = arith.constant 0 : i32
    %c0_i32_0 = arith.constant 0 : i32
    %c0_i32_1 = arith.constant 0 : i32
    return %c0_i32, %c0_i32_0 : i32, i32
  }
  func.func @transform_5(%arg0: i32) -> (i32, i32) {
    %c0_i32 = arith.constant 0 : i32
    %c0_i32_0 = arith.constant 0 : i32
    %c0_i32_1 = arith.constant 0 : i32
    return %c0_i32, %c0_i32_0 : i32, i32
  }
  func.func @transform_6(%arg0: i32) -> (i32, i32) {
    %c0_i32 = arith.constant 0 : i32
    %c0_i32_0 = arith.constant 0 : i32
    %c0_i32_1 = arith.constant 0 : i32
    return %c0_i32, %c0_i32_0 : i32, i32
  }
  func.func @transform_7(%arg0: i32) -> (i32, i32) {
    %c0_i32 = arith.constant 0 : i32
    %c0_i32_0 = arith.constant 0 : i32
    return %arg0, %c0_i32 : i32, i32
  }
}

module attributes {stable_mosaic.version = 11 : i64} {
  func.func @_attn_block_kernel(%arg0: i32, %arg1: i32, %arg2: memref<1x1x8x32xf32, #tpu.memory_space<vmem>>, %arg3: memref<1x16x32xbf16, #tpu.memory_space<vmem>>, %arg4: memref<1x16x32xbf16, #tpu.memory_space<vmem>>, %arg5: memref<1x1x32xf32, #tpu.memory_space<vmem>>, %arg6: memref<1x1x32xf32, #tpu.memory_space<vmem>>, %arg7: memref<32x32xbf16, #tpu.memory_space<vmem>>, %arg8: memref<1x32xf32, #tpu.memory_space<vmem>>, %arg9: memref<32x32xbf16, #tpu.memory_space<vmem>>, %arg10: memref<1x32xf32, #tpu.memory_space<vmem>>, %arg11: memref<1x1x8x32xf32, #tpu.memory_space<vmem>>) attributes {dimension_semantics = [#tpu.dimension_semantics<parallel>, #tpu.dimension_semantics<parallel>], iteration_bounds = array<i64: 1, 2>, scalar_prefetch = 0 : i64, scratch_operands = 0 : i64, tpu.core_type = #tpu.core_type<tc>, window_params = [{transform_indices = @transform_0, window_bounds = array<i64: 1, 1, 8, 32>}, {transform_indices = @transform_1, window_bounds = array<i64: 1, 16, 32>}, {transform_indices = @transform_2, window_bounds = array<i64: 1, 16, 32>}, {pipeline_mode = #tpu.pipeline_mode<synchronous>, transform_indices = @transform_3, window_bounds = array<i64: 1, 1, 32>}, {pipeline_mode = #tpu.pipeline_mode<synchronous>, transform_indices = @transform_4, window_bounds = array<i64: 1, 1, 32>}, {pipeline_mode = #tpu.pipeline_mode<synchronous>, transform_indices = @transform_5, window_bounds = array<i64: 32, 32>}, {pipeline_mode = #tpu.pipeline_mode<synchronous>, transform_indices = @transform_6, window_bounds = array<i64: 1, 32>}, {pipeline_mode = #tpu.pipeline_mode<synchronous>, transform_indices = @transform_7, window_bounds = array<i64: 32, 32>}, {pipeline_mode = #tpu.pipeline_mode<synchronous>, transform_indices = @transform_8, window_bounds = array<i64: 1, 32>}, {transform_indices = @transform_9, window_bounds = array<i64: 1, 1, 8, 32>}]} {
    %c0 = arith.constant 0 : index
    %c0_0 = arith.constant 0 : index
    %c0_1 = arith.constant 0 : index
    %c0_2 = arith.constant 0 : index
    %0 = vector.load %arg2[%c0, %c0_0, %c0_1, %c0_2] : memref<1x1x8x32xf32, #tpu.memory_space<vmem>>, vector<1x1x8x32xf32>
    %1 = vector.shape_cast %0 : vector<1x1x8x32xf32> to vector<8x32xf32>
    %c0_3 = arith.constant 0 : index
    %c0_4 = arith.constant 0 : index
    %c0_5 = arith.constant 0 : index
    %2 = vector.load %arg5[%c0_3, %c0_4, %c0_5] : memref<1x1x32xf32, #tpu.memory_space<vmem>>, vector<1x1x32xf32>
    %3 = vector.shape_cast %2 : vector<1x1x32xf32> to vector<1x32xf32>
    %c0_6 = arith.constant 0 : index
    %c0_7 = arith.constant 0 : index
    %c0_8 = arith.constant 0 : index
    %4 = vector.load %arg6[%c0_6, %c0_7, %c0_8] : memref<1x1x32xf32, #tpu.memory_space<vmem>>, vector<1x1x32xf32>
    %5 = vector.shape_cast %4 : vector<1x1x32xf32> to vector<1x32xf32>
    %cst = arith.constant dense<0.000000e+00> : vector<8xf32>
    %6 = vector.multi_reduction <add>, %1, %cst [1] : vector<8x32xf32> to vector<8xf32>
    %7 = vector.shape_cast %6 : vector<8xf32> to vector<8x1xf32>
    %cst_9 = arith.constant 3.200000e+01 : f32
    %8 = vector.broadcast %cst_9 : f32 to vector<8x1xf32>
    %9 = arith.divf %7, %8 : vector<8x1xf32>
    %10 = vector.broadcast %9 : vector<8x1xf32> to vector<8x32xf32>
    %11 = arith.subf %1, %10 : vector<8x32xf32>
    %12 = arith.mulf %11, %11 : vector<8x32xf32>
    %cst_10 = arith.constant dense<0.000000e+00> : vector<8xf32>
    %13 = vector.multi_reduction <add>, %12, %cst_10 [1] : vector<8x32xf32> to vector<8xf32>
    %14 = vector.shape_cast %13 : vector<8xf32> to vector<8x1xf32>
    %cst_11 = arith.constant 3.200000e+01 : f32
    %15 = vector.broadcast %cst_11 : f32 to vector<8x1xf32>
    %16 = arith.divf %14, %15 : vector<8x1xf32>
    %17 = vector.broadcast %9 : vector<8x1xf32> to vector<8x32xf32>
    %18 = arith.subf %1, %17 : vector<8x32xf32>
    %cst_12 = arith.constant 9.99999974E-6 : f32
    %19 = vector.broadcast %cst_12 : f32 to vector<8x1xf32>
    %20 = arith.addf %16, %19 : vector<8x1xf32>
    %21 = math.rsqrt %20 : vector<8x1xf32>
    %22 = vector.broadcast %21 : vector<8x1xf32> to vector<8x32xf32>
    %23 = arith.mulf %18, %22 : vector<8x32xf32>
    %24 = vector.broadcast %3 : vector<1x32xf32> to vector<8x32xf32>
    %25 = arith.mulf %23, %24 : vector<8x32xf32>
    %26 = vector.broadcast %5 : vector<1x32xf32> to vector<8x32xf32>
    %27 = arith.addf %25, %26 : vector<8x32xf32>
    %28 = arith.truncf %27 : vector<8x32xf32> to vector<8x32xbf16>
    %c0_13 = arith.constant 0 : index
    %c0_14 = arith.constant 0 : index
    %29 = vector.load %arg7[%c0_13, %c0_14] : memref<32x32xbf16, #tpu.memory_space<vmem>>, vector<32x32xbf16>
    %cst_15 = arith.constant dense<0.000000e+00> : vector<8x32xf32>
    %30 = tpu.matmul %28, %29, %cst_15 {dimension_numbers = #tpu.dot_dimension_numbers<[1], [0], [0], [1], [0, 0, 1, 1], [], []>} : vector<8x32xbf16>, vector<32x32xbf16>, vector<8x32xf32> -> vector<8x32xf32>
    %c0_16 = arith.constant 0 : index
    %c0_17 = arith.constant 0 : index
    %31 = vector.load %arg8[%c0_16, %c0_17] : memref<1x32xf32, #tpu.memory_space<vmem>>, vector<1x32xf32>
    %32 = vector.broadcast %31 : vector<1x32xf32> to vector<8x32xf32>
    %33 = arith.addf %30, %32 : vector<8x32xf32>
    %34 = arith.truncf %33 : vector<8x32xf32> to vector<8x32xbf16>
    %c0_18 = arith.constant 0 : index
    %c0_19 = arith.constant 0 : index
    %c0_20 = arith.constant 0 : index
    %35 = vector.load %arg3[%c0_18, %c0_19, %c0_20] : memref<1x16x32xbf16, #tpu.memory_space<vmem>>, vector<1x16x32xbf16>
    %36 = vector.shape_cast %35 : vector<1x16x32xbf16> to vector<16x32xbf16>
    %c0_21 = arith.constant 0 : index
    %c0_22 = arith.constant 0 : index
    %c0_23 = arith.constant 0 : index
    %37 = vector.load %arg4[%c0_21, %c0_22, %c0_23] : memref<1x16x32xbf16, #tpu.memory_space<vmem>>, vector<1x16x32xbf16>
    %38 = vector.shape_cast %37 : vector<1x16x32xbf16> to vector<16x32xbf16>
    %39 = vector.extract_strided_slice %34 {offsets = [0, 0], sizes = [8, 8], strides = [1, 1]} : vector<8x32xbf16> to vector<8x8xbf16>
    %40 = vector.extract_strided_slice %36 {offsets = [0, 0], sizes = [16, 8], strides = [1, 1]} : vector<16x32xbf16> to vector<16x8xbf16>
    %cst_24 = arith.constant dense<0.000000e+00> : vector<8x16xf32>
    %41 = tpu.matmul %39, %40, %cst_24 {dimension_numbers = #tpu.dot_dimension_numbers<[1], [1], [0], [0], [0, 0, 1, 0], [], []>} : vector<8x8xbf16>, vector<16x8xbf16>, vector<8x16xf32> -> vector<8x16xf32>
    %cst_25 = arith.constant dense<0xFF800000> : vector<8xf32>
    %42 = vector.multi_reduction <maximumf>, %41, %cst_25 [1] : vector<8x16xf32> to vector<8xf32>
    %43 = vector.shape_cast %42 : vector<8xf32> to vector<8x1xf32>
    %44 = vector.broadcast %43 : vector<8x1xf32> to vector<8x16xf32>
    %45 = arith.subf %41, %44 : vector<8x16xf32>
    %46 = math.exp %45 : vector<8x16xf32>
    %cst_26 = arith.constant dense<0.000000e+00> : vector<8xf32>
    %47 = vector.multi_reduction <add>, %46, %cst_26 [1] : vector<8x16xf32> to vector<8xf32>
    %48 = vector.shape_cast %47 : vector<8xf32> to vector<8x1xf32>
    %49 = tpu.reciprocal %48 {approx = true} : vector<8x1xf32> -> vector<8x1xf32>
    %50 = vector.broadcast %49 : vector<8x1xf32> to vector<8x16xf32>
    %51 = arith.mulf %46, %50 : vector<8x16xf32>
    %52 = arith.truncf %51 : vector<8x16xf32> to vector<8x16xbf16>
    %53 = vector.extract_strided_slice %38 {offsets = [0, 0], sizes = [16, 8], strides = [1, 1]} : vector<16x32xbf16> to vector<16x8xbf16>
    %cst_27 = arith.constant dense<0.000000e+00> : vector<8x8xf32>
    %54 = tpu.matmul %52, %53, %cst_27 {dimension_numbers = #tpu.dot_dimension_numbers<[1], [0], [0], [1], [0, 0, 1, 1], [], []>} : vector<8x16xbf16>, vector<16x8xbf16>, vector<8x8xf32> -> vector<8x8xf32>
    %55 = vector.extract_strided_slice %34 {offsets = [0, 8], sizes = [8, 8], strides = [1, 1]} : vector<8x32xbf16> to vector<8x8xbf16>
    %56 = vector.extract_strided_slice %36 {offsets = [0, 8], sizes = [16, 8], strides = [1, 1]} : vector<16x32xbf16> to vector<16x8xbf16>
    %cst_28 = arith.constant dense<0.000000e+00> : vector<8x16xf32>
    %57 = tpu.matmul %55, %56, %cst_28 {dimension_numbers = #tpu.dot_dimension_numbers<[1], [1], [0], [0], [0, 0, 1, 0], [], []>} : vector<8x8xbf16>, vector<16x8xbf16>, vector<8x16xf32> -> vector<8x16xf32>
    %cst_29 = arith.constant dense<0xFF800000> : vector<8xf32>
    %58 = vector.multi_reduction <maximumf>, %57, %cst_29 [1] : vector<8x16xf32> to vector<8xf32>
    %59 = vector.shape_cast %58 : vector<8xf32> to vector<8x1xf32>
    %60 = vector.broadcast %59 : vector<8x1xf32> to vector<8x16xf32>
    %61 = arith.subf %57, %60 : vector<8x16xf32>
    %62 = math.exp %61 : vector<8x16xf32>
    %cst_30 = arith.constant dense<0.000000e+00> : vector<8xf32>
    %63 = vector.multi_reduction <add>, %62, %cst_30 [1] : vector<8x16xf32> to vector<8xf32>
    %64 = vector.shape_cast %63 : vector<8xf32> to vector<8x1xf32>
    %65 = tpu.reciprocal %64 {approx = true} : vector<8x1xf32> -> vector<8x1xf32>
    %66 = vector.broadcast %65 : vector<8x1xf32> to vector<8x16xf32>
    %67 = arith.mulf %62, %66 : vector<8x16xf32>
    %68 = arith.truncf %67 : vector<8x16xf32> to vector<8x16xbf16>
    %69 = vector.extract_strided_slice %38 {offsets = [0, 8], sizes = [16, 8], strides = [1, 1]} : vector<16x32xbf16> to vector<16x8xbf16>
    %cst_31 = arith.constant dense<0.000000e+00> : vector<8x8xf32>
    %70 = tpu.matmul %68, %69, %cst_31 {dimension_numbers = #tpu.dot_dimension_numbers<[1], [0], [0], [1], [0, 0, 1, 1], [], []>} : vector<8x16xbf16>, vector<16x8xbf16>, vector<8x8xf32> -> vector<8x8xf32>
    %71 = vector.extract_strided_slice %34 {offsets = [0, 16], sizes = [8, 8], strides = [1, 1]} : vector<8x32xbf16> to vector<8x8xbf16>
    %72 = vector.extract_strided_slice %36 {offsets = [0, 16], sizes = [16, 8], strides = [1, 1]} : vector<16x32xbf16> to vector<16x8xbf16>
    %cst_32 = arith.constant dense<0.000000e+00> : vector<8x16xf32>
    %73 = tpu.matmul %71, %72, %cst_32 {dimension_numbers = #tpu.dot_dimension_numbers<[1], [1], [0], [0], [0, 0, 1, 0], [], []>} : vector<8x8xbf16>, vector<16x8xbf16>, vector<8x16xf32> -> vector<8x16xf32>
    %cst_33 = arith.constant dense<0xFF800000> : vector<8xf32>
    %74 = vector.multi_reduction <maximumf>, %73, %cst_33 [1] : vector<8x16xf32> to vector<8xf32>
    %75 = vector.shape_cast %74 : vector<8xf32> to vector<8x1xf32>
    %76 = vector.broadcast %75 : vector<8x1xf32> to vector<8x16xf32>
    %77 = arith.subf %73, %76 : vector<8x16xf32>
    %78 = math.exp %77 : vector<8x16xf32>
    %cst_34 = arith.constant dense<0.000000e+00> : vector<8xf32>
    %79 = vector.multi_reduction <add>, %78, %cst_34 [1] : vector<8x16xf32> to vector<8xf32>
    %80 = vector.shape_cast %79 : vector<8xf32> to vector<8x1xf32>
    %81 = tpu.reciprocal %80 {approx = true} : vector<8x1xf32> -> vector<8x1xf32>
    %82 = vector.broadcast %81 : vector<8x1xf32> to vector<8x16xf32>
    %83 = arith.mulf %78, %82 : vector<8x16xf32>
    %84 = arith.truncf %83 : vector<8x16xf32> to vector<8x16xbf16>
    %85 = vector.extract_strided_slice %38 {offsets = [0, 16], sizes = [16, 8], strides = [1, 1]} : vector<16x32xbf16> to vector<16x8xbf16>
    %cst_35 = arith.constant dense<0.000000e+00> : vector<8x8xf32>
    %86 = tpu.matmul %84, %85, %cst_35 {dimension_numbers = #tpu.dot_dimension_numbers<[1], [0], [0], [1], [0, 0, 1, 1], [], []>} : vector<8x16xbf16>, vector<16x8xbf16>, vector<8x8xf32> -> vector<8x8xf32>
    %87 = vector.extract_strided_slice %34 {offsets = [0, 24], sizes = [8, 8], strides = [1, 1]} : vector<8x32xbf16> to vector<8x8xbf16>
    %88 = vector.extract_strided_slice %36 {offsets = [0, 24], sizes = [16, 8], strides = [1, 1]} : vector<16x32xbf16> to vector<16x8xbf16>
    %cst_36 = arith.constant dense<0.000000e+00> : vector<8x16xf32>
    %89 = tpu.matmul %87, %88, %cst_36 {dimension_numbers = #tpu.dot_dimension_numbers<[1], [1], [0], [0], [0, 0, 1, 0], [], []>} : vector<8x8xbf16>, vector<16x8xbf16>, vector<8x16xf32> -> vector<8x16xf32>
    %cst_37 = arith.constant dense<0xFF800000> : vector<8xf32>
    %90 = vector.multi_reduction <maximumf>, %89, %cst_37 [1] : vector<8x16xf32> to vector<8xf32>
    %91 = vector.shape_cast %90 : vector<8xf32> to vector<8x1xf32>
    %92 = vector.broadcast %91 : vector<8x1xf32> to vector<8x16xf32>
    %93 = arith.subf %89, %92 : vector<8x16xf32>
    %94 = math.exp %93 : vector<8x16xf32>
    %cst_38 = arith.constant dense<0.000000e+00> : vector<8xf32>
    %95 = vector.multi_reduction <add>, %94, %cst_38 [1] : vector<8x16xf32> to vector<8xf32>
    %96 = vector.shape_cast %95 : vector<8xf32> to vector<8x1xf32>
    %97 = tpu.reciprocal %96 {approx = true} : vector<8x1xf32> -> vector<8x1xf32>
    %98 = vector.broadcast %97 : vector<8x1xf32> to vector<8x16xf32>
    %99 = arith.mulf %94, %98 : vector<8x16xf32>
    %100 = arith.truncf %99 : vector<8x16xf32> to vector<8x16xbf16>
    %101 = vector.extract_strided_slice %38 {offsets = [0, 24], sizes = [16, 8], strides = [1, 1]} : vector<16x32xbf16> to vector<16x8xbf16>
    %cst_39 = arith.constant dense<0.000000e+00> : vector<8x8xf32>
    %102 = tpu.matmul %100, %101, %cst_39 {dimension_numbers = #tpu.dot_dimension_numbers<[1], [0], [0], [1], [0, 0, 1, 1], [], []>} : vector<8x16xbf16>, vector<16x8xbf16>, vector<8x8xf32> -> vector<8x8xf32>
    %103 = tpu.concatenate %54, %70, %86, %102 in 1 : vector<8x8xf32>, vector<8x8xf32>, vector<8x8xf32>, vector<8x8xf32> -> vector<8x32xf32>
    %104 = arith.truncf %103 : vector<8x32xf32> to vector<8x32xbf16>
    %c0_40 = arith.constant 0 : index
    %c0_41 = arith.constant 0 : index
    %105 = vector.load %arg9[%c0_40, %c0_41] : memref<32x32xbf16, #tpu.memory_space<vmem>>, vector<32x32xbf16>
    %cst_42 = arith.constant dense<0.000000e+00> : vector<8x32xf32>
    %106 = tpu.matmul %104, %105, %cst_42 {dimension_numbers = #tpu.dot_dimension_numbers<[1], [0], [0], [1], [0, 0, 1, 1], [], []>} : vector<8x32xbf16>, vector<32x32xbf16>, vector<8x32xf32> -> vector<8x32xf32>
    %107 = arith.addf %1, %106 : vector<8x32xf32>
    %c0_43 = arith.constant 0 : index
    %c0_44 = arith.constant 0 : index
    %108 = vector.load %arg10[%c0_43, %c0_44] : memref<1x32xf32, #tpu.memory_space<vmem>>, vector<1x32xf32>
    %109 = vector.broadcast %108 : vector<1x32xf32> to vector<8x32xf32>
    %110 = arith.addf %107, %109 : vector<8x32xf32>
    %c0_45 = arith.constant 0 : index
    %c0_46 = arith.constant 0 : index
    %c0_47 = arith.constant 0 : index
    %c0_48 = arith.constant 0 : index
    %111 = vector.load %arg11[%c0_45, %c0_46, %c0_47, %c0_48] : memref<1x1x8x32xf32, #tpu.memory_space<vmem>>, vector<1x1x8x32xf32>
    %112 = vector.shape_cast %111 : vector<1x1x8x32xf32> to vector<8x32xf32>
    %113 = vector.shape_cast %110 : vector<8x32xf32> to vector<1x1x8x32xf32>
    tpu.vector_store %arg11[%c0_45, %c0_46, %c0_47, %c0_48], %113 {strides = array<i32>} : memref<1x1x8x32xf32, #tpu.memory_space<vmem>>, vector<1x1x8x32xf32>,
    return
  }
  func.func @transform_0(%arg0: i32, %arg1: i32) -> (i32, i32, i32, i32) {
    %c0_i32 = arith.constant 0 : i32
    %c0_i32_0 = arith.constant 0 : i32
    %c0_i32_1 = arith.constant 0 : i32
    return %arg0, %arg1, %c0_i32, %c0_i32_0 : i32, i32, i32, i32
  }
  func.func @transform_1(%arg0: i32, %arg1: i32) -> (i32, i32, i32) {
    %c0_i32 = arith.constant 0 : i32
    %c0_i32_0 = arith.constant 0 : i32
    %c0_i32_1 = arith.constant 0 : i32
    return %arg1, %c0_i32, %c0_i32_0 : i32, i32, i32
  }
  func.func @transform_2(%arg0: i32, %arg1: i32) -> (i32, i32, i32) {
    %c0_i32 = arith.constant 0 : i32
    %c0_i32_0 = arith.constant 0 : i32
    %c0_i32_1 = arith.constant 0 : i32
    return %arg1, %c0_i32, %c0_i32_0 : i32, i32, i32
  }
  func.func @transform_3(%arg0: i32, %arg1: i32) -> (i32, i32, i32) {
    %c0_i32 = arith.constant 0 : i32
    %c0_i32_0 = arith.constant 0 : i32
    %c0_i32_1 = arith.constant 0 : i32
    %c0_i32_2 = arith.constant 0 : i32
    return %c0_i32, %c0_i32_0, %c0_i32_1 : i32, i32, i32
  }
  func.func @transform_4(%arg0: i32, %arg1: i32) -> (i32, i32, i32) {
    %c0_i32 = arith.constant 0 : i32
    %c0_i32_0 = arith.constant 0 : i32
    %c0_i32_1 = arith.constant 0 : i32
    %c0_i32_2 = arith.constant 0 : i32
    return %c0_i32, %c0_i32_0, %c0_i32_1 : i32, i32, i32
  }
  func.func @transform_5(%arg0: i32, %arg1: i32) -> (i32, i32) {
    %c0_i32 = arith.constant 0 : i32
    %c0_i32_0 = arith.constant 0 : i32
    %c0_i32_1 = arith.constant 0 : i32
    return %c0_i32, %c0_i32_0 : i32, i32
  }
  func.func @transform_6(%arg0: i32, %arg1: i32) -> (i32, i32) {
    %c0_i32 = arith.constant 0 : i32
    %c0_i32_0 = arith.constant 0 : i32
    %c0_i32_1 = arith.constant 0 : i32
    return %c0_i32, %c0_i32_0 : i32, i32
  }
  func.func @transform_7(%arg0: i32, %arg1: i32) -> (i32, i32) {
    %c0_i32 = arith.constant 0 : i32
    %c0_i32_0 = arith.constant 0 : i32
    %c0_i32_1 = arith.constant 0 : i32
    return %c0_i32, %c0_i32_0 : i32, i32
  }
  func.func @transform_8(%arg0: i32, %arg1: i32) -> (i32, i32) {
    %c0_i32 = arith.constant 0 : i32
    %c0_i32_0 = arith.constant 0 : i32
    %c0_i32_1 = arith.constant 0 : i32
    return %c0_i32, %c0_i32_0 : i32, i32
  }
  func.func @transform_9(%arg0: i32, %arg1: i32) -> (i32, i32, i32, i32) {
    %c0_i32 = arith.constant 0 : i32
    %c0_i32_0 = arith.constant 0 : i32
    %c0_i32_1 = arith.constant 0 : i32
    return %arg0, %arg1, %c0_i32, %c0_i32_0 : i32, i32, i32, i32
  }
}

module attributes {stable_mosaic.version = 11 : i64} {
  func.func @_ffn_block_kernel(%arg0: i32, %arg1: memref<16x32xf32, #tpu.memory_space<vmem>>, %arg2: memref<1x32xf32, #tpu.memory_space<vmem>>, %arg3: memref<1x32xf32, #tpu.memory_space<vmem>>, %arg4: memref<32x128xbf16, #tpu.memory_space<vmem>>, %arg5: memref<1x128xf32, #tpu.memory_space<vmem>>, %arg6: memref<128x32xbf16, #tpu.memory_space<vmem>>, %arg7: memref<1x32xf32, #tpu.memory_space<vmem>>, %arg8: memref<16x32xf32, #tpu.memory_space<vmem>>) attributes {dimension_semantics = [#tpu.dimension_semantics<parallel>], iteration_bounds = array<i64: 1>, scalar_prefetch = 0 : i64, scratch_operands = 0 : i64, tpu.core_type = #tpu.core_type<tc>, window_params = [{transform_indices = @transform_0, window_bounds = array<i64: 16, 32>}, {pipeline_mode = #tpu.pipeline_mode<synchronous>, transform_indices = @transform_1, window_bounds = array<i64: 1, 32>}, {pipeline_mode = #tpu.pipeline_mode<synchronous>, transform_indices = @transform_2, window_bounds = array<i64: 1, 32>}, {pipeline_mode = #tpu.pipeline_mode<synchronous>, transform_indices = @transform_3, window_bounds = array<i64: 32, 128>}, {pipeline_mode = #tpu.pipeline_mode<synchronous>, transform_indices = @transform_4, window_bounds = array<i64: 1, 128>}, {pipeline_mode = #tpu.pipeline_mode<synchronous>, transform_indices = @transform_5, window_bounds = array<i64: 128, 32>}, {pipeline_mode = #tpu.pipeline_mode<synchronous>, transform_indices = @transform_6, window_bounds = array<i64: 1, 32>}, {transform_indices = @transform_7, window_bounds = array<i64: 16, 32>}]} {
    %c0 = arith.constant 0 : index
    %c0_0 = arith.constant 0 : index
    %0 = vector.load %arg1[%c0, %c0_0] : memref<16x32xf32, #tpu.memory_space<vmem>>, vector<16x32xf32>
    %c0_1 = arith.constant 0 : index
    %c0_2 = arith.constant 0 : index
    %1 = vector.load %arg2[%c0_1, %c0_2] : memref<1x32xf32, #tpu.memory_space<vmem>>, vector<1x32xf32>
    %c0_3 = arith.constant 0 : index
    %c0_4 = arith.constant 0 : index
    %2 = vector.load %arg3[%c0_3, %c0_4] : memref<1x32xf32, #tpu.memory_space<vmem>>, vector<1x32xf32>
    %cst = arith.constant dense<0.000000e+00> : vector<16xf32>
    %3 = vector.multi_reduction <add>, %0, %cst [1] : vector<16x32xf32> to vector<16xf32>
    %4 = vector.shape_cast %3 : vector<16xf32> to vector<16x1xf32>
    %cst_5 = arith.constant 3.200000e+01 : f32
    %5 = vector.broadcast %cst_5 : f32 to vector<16x1xf32>
    %6 = arith.divf %4, %5 : vector<16x1xf32>
    %7 = vector.broadcast %6 : vector<16x1xf32> to vector<16x32xf32>
    %8 = arith.subf %0, %7 : vector<16x32xf32>
    %9 = arith.mulf %8, %8 : vector<16x32xf32>
    %cst_6 = arith.constant dense<0.000000e+00> : vector<16xf32>
    %10 = vector.multi_reduction <add>, %9, %cst_6 [1] : vector<16x32xf32> to vector<16xf32>
    %11 = vector.shape_cast %10 : vector<16xf32> to vector<16x1xf32>
    %cst_7 = arith.constant 3.200000e+01 : f32
    %12 = vector.broadcast %cst_7 : f32 to vector<16x1xf32>
    %13 = arith.divf %11, %12 : vector<16x1xf32>
    %14 = vector.broadcast %6 : vector<16x1xf32> to vector<16x32xf32>
    %15 = arith.subf %0, %14 : vector<16x32xf32>
    %cst_8 = arith.constant 9.99999974E-6 : f32
    %16 = vector.broadcast %cst_8 : f32 to vector<16x1xf32>
    %17 = arith.addf %13, %16 : vector<16x1xf32>
    %18 = math.rsqrt %17 : vector<16x1xf32>
    %19 = vector.broadcast %18 : vector<16x1xf32> to vector<16x32xf32>
    %20 = arith.mulf %15, %19 : vector<16x32xf32>
    %21 = vector.broadcast %1 : vector<1x32xf32> to vector<16x32xf32>
    %22 = arith.mulf %20, %21 : vector<16x32xf32>
    %23 = vector.broadcast %2 : vector<1x32xf32> to vector<16x32xf32>
    %24 = arith.addf %22, %23 : vector<16x32xf32>
    %25 = arith.truncf %24 : vector<16x32xf32> to vector<16x32xbf16>
    %c0_9 = arith.constant 0 : index
    %c0_10 = arith.constant 0 : index
    %26 = vector.load %arg4[%c0_9, %c0_10] : memref<32x128xbf16, #tpu.memory_space<vmem>>, vector<32x128xbf16>
    %cst_11 = arith.constant dense<0.000000e+00> : vector<16x128xf32>
    %27 = tpu.matmul %25, %26, %cst_11 {dimension_numbers = #tpu.dot_dimension_numbers<[1], [0], [0], [1], [0, 0, 1, 1], [], []>} : vector<16x32xbf16>, vector<32x128xbf16>, vector<16x128xf32> -> vector<16x128xf32>
    %c0_12 = arith.constant 0 : index
    %c0_13 = arith.constant 0 : index
    %28 = vector.load %arg5[%c0_12, %c0_13] : memref<1x128xf32, #tpu.memory_space<vmem>>, vector<1x128xf32>
    %29 = vector.broadcast %28 : vector<1x128xf32> to vector<16x128xf32>
    %30 = arith.addf %27, %29 : vector<16x128xf32>
    %31 = arith.mulf %30, %30 : vector<16x128xf32>
    %32 = arith.mulf %30, %31 : vector<16x128xf32>
    %cst_14 = arith.constant 4.471500e-02 : f32
    %33 = vector.broadcast %cst_14 : f32 to vector<16x128xf32>
    %34 = arith.mulf %33, %32 : vector<16x128xf32>
    %35 = arith.addf %30, %34 : vector<16x128xf32>
    %cst_15 = arith.constant 0.797884583 : f32
    %36 = vector.broadcast %cst_15 : f32 to vector<16x128xf32>
    %37 = arith.mulf %36, %35 : vector<16x128xf32>
    %38 = math.tanh %37 : vector<16x128xf32>
    %cst_16 = arith.constant 1.000000e+00 : f32
    %39 = vector.broadcast %cst_16 : f32 to vector<16x128xf32>
    %40 = arith.addf %39, %38 : vector<16x128xf32>
    %cst_17 = arith.constant 5.000000e-01 : f32
    %41 = vector.broadcast %cst_17 : f32 to vector<16x128xf32>
    %42 = arith.mulf %41, %40 : vector<16x128xf32>
    %43 = arith.mulf %30, %42 : vector<16x128xf32>
    %44 = arith.truncf %43 : vector<16x128xf32> to vector<16x128xbf16>
    %c0_18 = arith.constant 0 : index
    %c0_19 = arith.constant 0 : index
    %45 = vector.load %arg6[%c0_18, %c0_19] : memref<128x32xbf16, #tpu.memory_space<vmem>>, vector<128x32xbf16>
    %cst_20 = arith.constant dense<0.000000e+00> : vector<16x32xf32>
    %46 = tpu.matmul %44, %45, %cst_20 {dimension_numbers = #tpu.dot_dimension_numbers<[1], [0], [0], [1], [0, 0, 1, 1], [], []>} : vector<16x128xbf16>, vector<128x32xbf16>, vector<16x32xf32> -> vector<16x32xf32>
    %c0_21 = arith.constant 0 : index
    %c0_22 = arith.constant 0 : index
    %47 = vector.load %arg7[%c0_21, %c0_22] : memref<1x32xf32, #tpu.memory_space<vmem>>, vector<1x32xf32>
    %48 = vector.broadcast %47 : vector<1x32xf32> to vector<16x32xf32>
    %49 = arith.addf %46, %48 : vector<16x32xf32>
    %50 = arith.addf %0, %49 : vector<16x32xf32>
    %c0_23 = arith.constant 0 : index
    %c0_24 = arith.constant 0 : index
    %51 = vector.load %arg8[%c0_23, %c0_24] : memref<16x32xf32, #tpu.memory_space<vmem>>, vector<16x32xf32>
    tpu.vector_store %arg8[%c0_23, %c0_24], %50 {strides = array<i32>} : memref<16x32xf32, #tpu.memory_space<vmem>>, vector<16x32xf32>,
    return
  }
  func.func @transform_0(%arg0: i32) -> (i32, i32) {
    %c0_i32 = arith.constant 0 : i32
    %c0_i32_0 = arith.constant 0 : i32
    return %arg0, %c0_i32 : i32, i32
  }
  func.func @transform_1(%arg0: i32) -> (i32, i32) {
    %c0_i32 = arith.constant 0 : i32
    %c0_i32_0 = arith.constant 0 : i32
    %c0_i32_1 = arith.constant 0 : i32
    return %c0_i32, %c0_i32_0 : i32, i32
  }
  func.func @transform_2(%arg0: i32) -> (i32, i32) {
    %c0_i32 = arith.constant 0 : i32
    %c0_i32_0 = arith.constant 0 : i32
    %c0_i32_1 = arith.constant 0 : i32
    return %c0_i32, %c0_i32_0 : i32, i32
  }
  func.func @transform_3(%arg0: i32) -> (i32, i32) {
    %c0_i32 = arith.constant 0 : i32
    %c0_i32_0 = arith.constant 0 : i32
    %c0_i32_1 = arith.constant 0 : i32
    return %c0_i32, %c0_i32_0 : i32, i32
  }
  func.func @transform_4(%arg0: i32) -> (i32, i32) {
    %c0_i32 = arith.constant 0 : i32
    %c0_i32_0 = arith.constant 0 : i32
    %c0_i32_1 = arith.constant 0 : i32
    return %c0_i32, %c0_i32_0 : i32, i32
  }
  func.func @transform_5(%arg0: i32) -> (i32, i32) {
    %c0_i32 = arith.constant 0 : i32
    %c0_i32_0 = arith.constant 0 : i32
    %c0_i32_1 = arith.constant 0 : i32
    return %c0_i32, %c0_i32_0 : i32, i32
  }
  func.func @transform_6(%arg0: i32) -> (i32, i32) {
    %c0_i32 = arith.constant 0 : i32
    %c0_i32_0 = arith.constant 0 : i32
    %c0_i32_1 = arith.constant 0 : i32
    return %c0_i32, %c0_i32_0 : i32, i32
  }
  func.func @transform_7(%arg0: i32) -> (i32, i32) {
    %c0_i32 = arith.constant 0 : i32
    %c0_i32_0 = arith.constant 0 : i32
    return %arg0, %c0_i32 : i32, i32
  }
}

module attributes {stable_mosaic.version = 11 : i64} {
  func.func @_ln_kernel(%arg0: i32, %arg1: memref<16x32xf32, #tpu.memory_space<vmem>>, %arg2: memref<1x32xf32, #tpu.memory_space<vmem>>, %arg3: memref<1x32xf32, #tpu.memory_space<vmem>>, %arg4: memref<16x32xf32, #tpu.memory_space<vmem>>) attributes {dimension_semantics = [#tpu.dimension_semantics<parallel>], iteration_bounds = array<i64: 1>, scalar_prefetch = 0 : i64, scratch_operands = 0 : i64, tpu.core_type = #tpu.core_type<tc>, window_params = [{transform_indices = @transform_0, window_bounds = array<i64: 16, 32>}, {pipeline_mode = #tpu.pipeline_mode<synchronous>, transform_indices = @transform_1, window_bounds = array<i64: 1, 32>}, {pipeline_mode = #tpu.pipeline_mode<synchronous>, transform_indices = @transform_2, window_bounds = array<i64: 1, 32>}, {transform_indices = @transform_3, window_bounds = array<i64: 16, 32>}]} {
    %c0 = arith.constant 0 : index
    %c0_0 = arith.constant 0 : index
    %0 = vector.load %arg1[%c0, %c0_0] : memref<16x32xf32, #tpu.memory_space<vmem>>, vector<16x32xf32>
    %c0_1 = arith.constant 0 : index
    %c0_2 = arith.constant 0 : index
    %1 = vector.load %arg2[%c0_1, %c0_2] : memref<1x32xf32, #tpu.memory_space<vmem>>, vector<1x32xf32>
    %c0_3 = arith.constant 0 : index
    %c0_4 = arith.constant 0 : index
    %2 = vector.load %arg3[%c0_3, %c0_4] : memref<1x32xf32, #tpu.memory_space<vmem>>, vector<1x32xf32>
    %cst = arith.constant dense<0.000000e+00> : vector<16xf32>
    %3 = vector.multi_reduction <add>, %0, %cst [1] : vector<16x32xf32> to vector<16xf32>
    %4 = vector.shape_cast %3 : vector<16xf32> to vector<16x1xf32>
    %cst_5 = arith.constant 3.200000e+01 : f32
    %5 = vector.broadcast %cst_5 : f32 to vector<16x1xf32>
    %6 = arith.divf %4, %5 : vector<16x1xf32>
    %7 = vector.broadcast %6 : vector<16x1xf32> to vector<16x32xf32>
    %8 = arith.subf %0, %7 : vector<16x32xf32>
    %9 = arith.mulf %8, %8 : vector<16x32xf32>
    %cst_6 = arith.constant dense<0.000000e+00> : vector<16xf32>
    %10 = vector.multi_reduction <add>, %9, %cst_6 [1] : vector<16x32xf32> to vector<16xf32>
    %11 = vector.shape_cast %10 : vector<16xf32> to vector<16x1xf32>
    %cst_7 = arith.constant 3.200000e+01 : f32
    %12 = vector.broadcast %cst_7 : f32 to vector<16x1xf32>
    %13 = arith.divf %11, %12 : vector<16x1xf32>
    %14 = vector.broadcast %6 : vector<16x1xf32> to vector<16x32xf32>
    %15 = arith.subf %0, %14 : vector<16x32xf32>
    %cst_8 = arith.constant 9.99999974E-6 : f32
    %16 = vector.broadcast %cst_8 : f32 to vector<16x1xf32>
    %17 = arith.addf %13, %16 : vector<16x1xf32>
    %18 = math.rsqrt %17 : vector<16x1xf32>
    %19 = vector.broadcast %18 : vector<16x1xf32> to vector<16x32xf32>
    %20 = arith.mulf %15, %19 : vector<16x32xf32>
    %21 = vector.broadcast %1 : vector<1x32xf32> to vector<16x32xf32>
    %22 = arith.mulf %20, %21 : vector<16x32xf32>
    %23 = vector.broadcast %2 : vector<1x32xf32> to vector<16x32xf32>
    %24 = arith.addf %22, %23 : vector<16x32xf32>
    %c0_9 = arith.constant 0 : index
    %c0_10 = arith.constant 0 : index
    %25 = vector.load %arg4[%c0_9, %c0_10] : memref<16x32xf32, #tpu.memory_space<vmem>>, vector<16x32xf32>
    tpu.vector_store %arg4[%c0_9, %c0_10], %24 {strides = array<i32>} : memref<16x32xf32, #tpu.memory_space<vmem>>, vector<16x32xf32>,
    return
  }
  func.func @transform_0(%arg0: i32) -> (i32, i32) {
    %c0_i32 = arith.constant 0 : i32
    %c0_i32_0 = arith.constant 0 : i32
    return %arg0, %c0_i32 : i32, i32
  }
  func.func @transform_1(%arg0: i32) -> (i32, i32) {
    %c0_i32 = arith.constant 0 : i32
    %c0_i32_0 = arith.constant 0 : i32
    %c0_i32_1 = arith.constant 0 : i32
    return %c0_i32, %c0_i32_0 : i32, i32
  }
  func.func @transform_2(%arg0: i32) -> (i32, i32) {
    %c0_i32 = arith.constant 0 : i32
    %c0_i32_0 = arith.constant 0 : i32
    %c0_i32_1 = arith.constant 0 : i32
    return %c0_i32, %c0_i32_0 : i32, i32
  }
  func.func @transform_3(%arg0: i32) -> (i32, i32) {
    %c0_i32 = arith.constant 0 : i32
    %c0_i32_0 = arith.constant 0 : i32
    return %arg0, %c0_i32 : i32, i32
  }
}

</mosaic_0001>

<llo_original>
// kernel: decoder_forward.11
$region0: #{decoder_forward.11}
  #allocation0 [shape = 'u32[]', space=smem, size = 0x4, offset = 0x4, fixed_abs, tag = 'smem constant byte address 0x4 - core index']
  #allocation1 [shape = 'u32[72,128]{1,0:T(1,128)}', space=vmem, size = 0x9000, scoped, tag = 'internal scratch']
  %s0 = inlined_call_operand.vmem [shape: f32[16,32], index: 0, kind: input, shape index: {}]
  %s1 = inlined_call_operand.vmem [shape: f32[1,32], index: 1, kind: input, shape index: {}]
  %s2 = inlined_call_operand.vmem [shape: f32[1,32], index: 2, kind: input, shape index: {}]
  %s3 = inlined_call_operand.vmem [shape: bf16[32,32], index: 3, kind: input, shape index: {}]
  %s4 = inlined_call_operand.vmem [shape: f32[1,32], index: 4, kind: input, shape index: {}]
  %s5 = inlined_call_operand.hbm [shape: bf16[32,32], index: 5, kind: input, shape index: {}]
  %s6 = inlined_call_operand.vmem [shape: f32[1,32], index: 6, kind: input, shape index: {}]
  %s7 = inlined_call_operand.vmem [shape: bf16[16,32], index: 7, kind: output, shape index: {0}]
  %s8 = inlined_call_operand.vmem [shape: bf16[16,32], index: 8, kind: output, shape index: {1}]
  %9 = xla_tuple %s7, %s8
  %s10 = sld [smem:[#allocation0]]
  $region50: #{decoder_forward.11} parent=0
    _
  %s12 = ssub.s32 1, %s10
  %s13 = scalar_select 0, %s12, %s10
  $region1: #{decoder_forward.11} parent=0
    #allocation2 [shape = 'u8[8192]{0}', space=vmem, size = 0x2000, scoped, tag = 'input window, operand 5, single buffered']
    #allocation3 [shape = 's32[1]{0}', space=sflag, size = 0x4, scoped, tag = 'scoped memory for decoder_forward.11']
    %14 = vsyncpa [#allocation3], 0
    // Predicated region
    $region2: #{decoder_forward.11} parent=1 // pred_check
      _
    $region3: #{decoder_forward.11} parent=1 // pred_check_branch
      %16 = sbr.rel (0) target = $region5
    $region4: #{decoder_forward.11} parent=1 // pred_region
      _
    $region5: #{decoder_forward.11} parent=1 // pred_fallthru
      _
    // Predicated region
    $region6: #{decoder_forward.11} parent=1 // pred_check
      _
    $region7: #{decoder_forward.11} parent=1 // pred_check_branch
      %18 = sbr.rel (0) target = $region9
    $region8: #{decoder_forward.11} parent=1 // pred_region
      _
    $region9: #{decoder_forward.11} parent=1 // pred_fallthru
      _
    // Predicated region
    $region10: #{decoder_forward.11} parent=1 // pred_check
      _
    $region11: #{decoder_forward.11} parent=1 // pred_check_branch
      %20 = sbr.rel (0) target = $region13
    $region12: #{decoder_forward.11} parent=1 // pred_region
      _
    $region13: #{decoder_forward.11} parent=1 // pred_fallthru
      _
    // Predicated region
    $region14: #{decoder_forward.11} parent=1 // pred_check
      _
    $region15: #{decoder_forward.11} parent=1 // pred_check_branch
      %22 = sbr.rel (0) target = $region17
    $region16: #{decoder_forward.11} parent=1 // pred_region
      _
    $region17: #{decoder_forward.11} parent=1 // pred_fallthru
      _
    // Predicated region
    $region18: #{decoder_forward.11} parent=1 // pred_check
      _
    $region19: #{decoder_forward.11} parent=1 // pred_check_branch
      %24 = sbr.rel (0) target = $region21
    $region20: #{decoder_forward.11} parent=1 // pred_region
      _
    $region21: #{decoder_forward.11} parent=1 // pred_fallthru
      _
    // Predicated region
    $region22: #{decoder_forward.11} parent=1 // pred_check
      _
    $region23: #{decoder_forward.11} parent=1 // pred_check_branch
      %26 = sbr.rel (0) target = $region25
    $region24: #{decoder_forward.11} parent=1 // pred_region
      %28 = vsyncadd [#allocation3], 0
      %s29 = sshll.u32 %s5, 4
      %s30 = int_to_ptr.hbm [resolvable:$true] %s29
      %s31 = sshll.u32 [#allocation2], 4
      %s32 = int_to_ptr.vmem [resolvable:$true] %s31
      %37 = dma.hbm_to_vmem [thread:$0]  %s30, 256, %s32, [#allocation3], 64, 64, 4
    $region25: #{decoder_forward.11} parent=1 // pred_fallthru
      _
    // Predicated region
    $region26: #{decoder_forward.11} parent=1 // pred_check
      _
    $region27: #{decoder_forward.11} parent=1 // pred_check_branch
      %39 = sbr.rel (0) target = $region29
    $region28: #{decoder_forward.11} parent=1 // pred_region
      _
    $region29: #{decoder_forward.11} parent=1 // pred_fallthru
      _
    // Predicated region
    $region30: #{decoder_forward.11} parent=1 // pred_check
      _
    $region31: #{decoder_forward.11} parent=1 // pred_check_branch
      %41 = sbr.rel (0) target = $region33
    $region32: #{decoder_forward.11} parent=1 // pred_region
      %43 = dma.done [#allocation3], 256
    $region33: #{decoder_forward.11} parent=1 // pred_fallthru
      _
    %v45 = vld [vmem:[%s0] sm:$0xff]
    %v46 = vld [vmem:[%s0 + $0x8] sm:$0xff]
    %v47 = vld [vmem:[%s1] sm:$0x1]
    %v48 = vld [vmem:[%s2] sm:$0x1]
    %vm49 = vcmask 261120
    %v50 = vsel %vm49, %v45, 0.0
    %51 = vadd.xlane.f32.xlu0 %v50
    %v52 = vpop.xlane.xlu0 %51
    %v53 = vsel %vm49, %v46, 0.0
    %54 = vadd.xlane.f32.xlu0 %v53
    %v55 = vpop.xlane.xlu0 %54
    %v56 = vrcp.pop 32.0
    %v57 = vmul.f32 32.0, %v56
    %v58 = vsub.f32 1.0, %v57
    %v59 = vmul.f32 %v56, %v58
    %v60 = vadd.f32 %v56, %v59
    %vm61 = vweird.f32 %v56
    %v62 = vsel %vm61, %v56, %v60
    %v63 = vmul.f32 %v52, %v62
    %v64 = vmul.f32 %v55, %v62
    %v65 = vsub.f32 %v45, %v63
    %v66 = vsub.f32 %v46, %v64
    %v67 = vmul.f32 %v65, %v65
    %v68 = vmul.f32 %v66, %v66
    %v69 = vsel %vm49, %v67, 0.0
    %70 = vadd.xlane.f32.xlu0 %v69
    %v71 = vpop.xlane.xlu0 %70
    %v72 = vsel %vm49, %v68, 0.0
    %73 = vadd.xlane.f32.xlu0 %v72
    %v74 = vpop.xlane.xlu0 %73
    %v75 = vmul.f32 %v71, %v62
    %v76 = vmul.f32 %v74, %v62
    %v77 = vadd.f32 %v75, 1e-05
    %v78 = vadd.f32 %v76, 1e-05
    %v79 = vrsqrt.pop %v77
    %v80 = vmul.f32 %v79, %v77
    %v81 = vmul.f32 %v80, %v79
    %v82 = vmul.f32 0.5, %v81
    %v83 = vsub.f32 1.5, %v82
    %v84 = vmul.f32 %v79, %v83
    %vm85 = vweird.f32 %v77
    %vm86 = vweird.f32 %v79
    %vm87 = vmor %vm85, %vm86
    %v88 = vsel %vm87, %v79, %v84
    %v89 = vrsqrt.pop %v78
    %v90 = vmul.f32 %v89, %v78
    %v91 = vmul.f32 %v90, %v89
    %v92 = vmul.f32 0.5, %v91
    %v93 = vsub.f32 1.5, %v92
    %v94 = vmul.f32 %v89, %v93
    %vm95 = vweird.f32 %v78
    %vm96 = vweird.f32 %v89
    %vm97 = vmor %vm95, %vm96
    %v98 = vsel %vm97, %v89, %v94
    %v99 = vmul.f32 %v65, %v88
    %v100 = vmul.f32 %v66, %v98
    %v102 = vperm.slane %v47, 0
    %v104 = vmul.f32 %v99, %v102
    %v105 = vmul.f32 %v100, %v102
    %v107 = vperm.slane %v48, 0
    %v109 = vadd.f32 %v104, %v107
    %v110 = vadd.f32 %v105, %v107
    %v111 = vpack.c.bf16 %v110, %v109
    %v112 = vld [vmem:[%s3] sm:$0xf]
    %v113 = vld [vmem:[%s3 + $0x4] sm:$0xf]
    %v114 = vld [vmem:[%s3 + $0x8] sm:$0xf]
    %v115 = vld [vmem:[%s3 + $0xc] sm:$0xf]
    %v116 = vld [vmem:[%s4] sm:$0x1]
    %v118 = vperm.slane %v116, 0
    %v124 = vunpack.c.l.b16 %v112
    %v125 = vunpack.c.l.b16 %v113
    %v126 = vunpack.c.l.b16 %v114
    %v127 = vunpack.c.l.b16 %v115
    %v128 = vpack.c.b16 %v125, %v124
    %v129 = vpack.c.b16 %v127, %v126
    %v133 = vsel %vm49, %v111, 0
    %135 = vmatpush.bf16.msra.mxu0 0
    %136 = vmatpush.bf16.msra.mxu0 0
    %137 = vmatpush.bf16.msra.mxu0 0
    %138 = vmatpush.bf16.msra.mxu0 0
    %139 = vmatpush.bf16.msra.mxu0 0
    %140 = vmatpush.bf16.msra.mxu0 0
    %141 = vmatpush.bf16.msra.mxu0 %v129
    %142 = vmatpush.bf16.msra.mxu0 %v128
    %143 = vmatmul.bf16.gmra.mxu0 %v133
    %v144 = vpop.f32.mrf.mxu0
    %v145 = vadd.f32 %v118, %v144
    %v146 = vpop.f32.mrf.mxu0
    %v147 = vadd.f32 %v118, %v146
    %148 = vdwg.mxu0
    %v149 = vpack.c.bf16 %v145, %v145
    %v150 = vpack.c.bf16 %v147, %v147
    %vm151 = vcmask 257024
    %152 = vst.msk [vmem:[%s7] sm:$0xf] %vm151, %v149
    %153 = vst.msk [vmem:[%s7 + $0x4] sm:$0xf] %vm151, %v150
    %v154 = vld [vmem:[#allocation2] sm:$0xf]
    %v155 = vld [vmem:[#allocation2 + $0x4] sm:$0xf]
    %v156 = vld [vmem:[#allocation2 + $0x8] sm:$0xf]
    %v157 = vld [vmem:[#allocation2 + $0xc] sm:$0xf]
    %v158 = vld [vmem:[%s6] sm:$0x1]
    %v160 = vperm.slane %v158, 0
    %v166 = vunpack.c.l.b16 %v154
    %v167 = vunpack.c.l.b16 %v155
    %v168 = vunpack.c.l.b16 %v156
    %v169 = vunpack.c.l.b16 %v157
    %v170 = vpack.c.b16 %v167, %v166
    %v171 = vpack.c.b16 %v169, %v168
    %174 = vmatpush.bf16.msra.mxu0 0
    %175 = vmatpush.bf16.msra.mxu0 0
    %176 = vmatpush.bf16.msra.mxu0 0
    %177 = vmatpush.bf16.msra.mxu0 0
    %178 = vmatpush.bf16.msra.mxu0 0
    %179 = vmatpush.bf16.msra.mxu0 0
    %180 = vmatpush.bf16.msra.mxu0 %v171
    %181 = vmatpush.bf16.msra.mxu0 %v170
    %182 = vmatmul.bf16.gmra.mxu0 %v133
    %v183 = vpop.f32.mrf.mxu0
    %v184 = vadd.f32 %v160, %v183
    %v185 = vpop.f32.mrf.mxu0
    %v186 = vadd.f32 %v160, %v185
    %187 = vdwg.mxu0
    %v188 = vpack.c.bf16 %v184, %v184
    %v189 = vpack.c.bf16 %v186, %v186
    %190 = vst.msk [vmem:[%s8] sm:$0xf] %vm151, %v188
    %191 = vst.msk [vmem:[%s8 + $0x4] sm:$0xf] %vm151, %v189
    // Predicated region
    $region34: #{decoder_forward.11} parent=1 // pred_check
      _
    $region35: #{decoder_forward.11} parent=1 // pred_check_branch
      %193 = sbr.rel (0) target = $region37
    $region36: #{decoder_forward.11} parent=1 // pred_region
      _
    $region37: #{decoder_forward.11} parent=1 // pred_fallthru
      _
    // Predicated region
    $region38: #{decoder_forward.11} parent=1 // pred_check
      _
    $region39: #{decoder_forward.11} parent=1 // pred_check_branch
      %195 = sbr.rel (0) target = $region41
    $region40: #{decoder_forward.11} parent=1 // pred_region
      _
    $region41: #{decoder_forward.11} parent=1 // pred_fallthru
      _
    // Predicated region
    $region42: #{decoder_forward.11} parent=1 // pred_check
      _
    $region43: #{decoder_forward.11} parent=1 // pred_check_branch
      %197 = sbr.rel (0) target = $region45
    $region44: #{decoder_forward.11} parent=1 // pred_region
      _
    $region45: #{decoder_forward.11} parent=1 // pred_fallthru
      _
    // Predicated region
    $region46: #{decoder_forward.11} parent=1 // pred_check
      _
    $region47: #{decoder_forward.11} parent=1 // pred_check_branch
      %199 = sbr.rel (0) target = $region49
    $region48: #{decoder_forward.11} parent=1 // pred_region
      _
    $region49: #{decoder_forward.11} parent=1 // pred_fallthru
      _
    %200 = vsyncpa [#allocation3], 1

// kernel: decoder_forward.12
$region0: #{decoder_forward.12}
  #allocation0 [shape = 'u32[]', space=smem, size = 0x4, offset = 0x4, fixed_abs, tag = 'smem constant byte address 0x4 - core index']
  #allocation1 [shape = 'u32[72,128]{1,0:T(1,128)}', space=vmem, size = 0x9000, scoped, tag = 'internal scratch']
  %s0 = inlined_call_operand.vmem [shape: bf16[32,32], index: 0, kind: input, shape index: {}]
  %s1 = inlined_call_operand.vmem [shape: bf16[32,32], index: 1, kind: input, shape index: {}]
  %s2 = inlined_call_operand.vmem [shape: f32[1,32], index: 2, kind: input, shape index: {}]
  %s3 = inlined_call_operand.vmem [shape: bf16[32,32], index: 3, kind: input, shape index: {}]
  %s4 = inlined_call_operand.vmem [shape: f32[1,32], index: 4, kind: input, shape index: {}]
  %s5 = inlined_call_operand.vmem [shape: bf16[32,32], index: 5, kind: output, shape index: {0}]
  %s6 = inlined_call_operand.vmem [shape: bf16[32,32], index: 6, kind: output, shape index: {1}]
  %7 = xla_tuple %s5, %s6
  %s8 = sld [smem:[#allocation0]]
  $region38: #{decoder_forward.12} parent=0
    _
  %s10 = ssub.s32 1, %s8
  %s11 = scalar_select 0, %s10, %s8
  // Predicated region
  $region2: #{decoder_forward.12} parent=0 // pred_check
    _
  $region3: #{decoder_forward.12} parent=0 // pred_check_branch
    %13 = sbr.rel (0) target = $region5
  $region4: #{decoder_forward.12} parent=0 // pred_region
    _
  $region5: #{decoder_forward.12} parent=0 // pred_fallthru
    _
  // Predicated region
  $region6: #{decoder_forward.12} parent=0 // pred_check
    _
  $region7: #{decoder_forward.12} parent=0 // pred_check_branch
    %15 = sbr.rel (0) target = $region9
  $region8: #{decoder_forward.12} parent=0 // pred_region
    _
  $region9: #{decoder_forward.12} parent=0 // pred_fallthru
    _
  // Predicated region
  $region10: #{decoder_forward.12} parent=0 // pred_check
    _
  $region11: #{decoder_forward.12} parent=0 // pred_check_branch
    %17 = sbr.rel (0) target = $region13
  $region12: #{decoder_forward.12} parent=0 // pred_region
    _
  $region13: #{decoder_forward.12} parent=0 // pred_fallthru
    _
  // Predicated region
  $region14: #{decoder_forward.12} parent=0 // pred_check
    _
  $region15: #{decoder_forward.12} parent=0 // pred_check_branch
    %19 = sbr.rel (0) target = $region17
  $region16: #{decoder_forward.12} parent=0 // pred_region
    _
  $region17: #{decoder_forward.12} parent=0 // pred_fallthru
    _
  // Predicated region
  $region18: #{decoder_forward.12} parent=0 // pred_check
    _
  $region19: #{decoder_forward.12} parent=0 // pred_check_branch
    %21 = sbr.rel (0) target = $region21
  $region20: #{decoder_forward.12} parent=0 // pred_region
    _
  $region21: #{decoder_forward.12} parent=0 // pred_fallthru
    _
  %v23 = vld [vmem:[%s0] sm:$0xf]
  %v24 = vld [vmem:[%s0 + $0x4] sm:$0xf]
  %v25 = vld [vmem:[%s0 + $0x8] sm:$0xf]
  %v26 = vld [vmem:[%s0 + $0xc] sm:$0xf]
  %v27 = vld [vmem:[%s1] sm:$0xf]
  %v28 = vld [vmem:[%s1 + $0x4] sm:$0xf]
  %v29 = vld [vmem:[%s1 + $0x8] sm:$0xf]
  %v30 = vld [vmem:[%s1 + $0xc] sm:$0xf]
  %v31 = vld [vmem:[%s2] sm:$0x1]
  %v33 = vperm.slane %v31, 0
  %v39 = vunpack.c.l.b16 %v23
  %v40 = vunpack.c.l.b16 %v24
  %v41 = vunpack.c.l.b16 %v25
  %v42 = vunpack.c.l.b16 %v26
  %v43 = vpack.c.b16 %v40, %v39
  %v44 = vpack.c.b16 %v42, %v41
  %v49 = vunpack.c.l.b16 %v27
  %v50 = vunpack.c.l.b16 %v28
  %v51 = vunpack.c.l.b16 %v29
  %v52 = vunpack.c.l.b16 %v30
  %v53 = vpack.c.b16 %v50, %v49
  %v54 = vpack.c.b16 %v52, %v51
  %vm57 = vcmask 261120
  %v59 = vsel %vm57, %v43, 0
  %v62 = vsel %vm57, %v44, 0
  %64 = vmatpush.bf16.msra.mxu0 0
  %65 = vmatpush.bf16.msra.mxu0 0
  %66 = vmatpush.bf16.msra.mxu0 0
  %67 = vmatpush.bf16.msra.mxu0 0
  %68 = vmatpush.bf16.msra.mxu0 0
  %69 = vmatpush.bf16.msra.mxu0 0
  %70 = vmatpush.bf16.msra.mxu0 %v54
  %71 = vmatpush.bf16.msra.mxu0 %v53
  %72 = vmatmul.bf16.gmra.mxu0 %v59
  %v73 = vpop.f32.mrf.mxu0
  %v74 = vadd.f32 %v33, %v73
  %v75 = vpop.f32.mrf.mxu0
  %v76 = vadd.f32 %v33, %v75
  %77 = vmatmul.bf16.gmra.mxu0 %v62
  %v78 = vpop.f32.mrf.mxu0
  %v79 = vadd.f32 %v33, %v78
  %v80 = vpop.f32.mrf.mxu0
  %v81 = vadd.f32 %v33, %v80
  %82 = vdwg.mxu0
  %v83 = vpack.c.bf16 %v74, %v74
  %v84 = vpack.c.bf16 %v76, %v76
  %v85 = vpack.c.bf16 %v79, %v79
  %v86 = vpack.c.bf16 %v81, %v81
  %vm87 = vcmask 257024
  %88 = vst.msk [vmem:[%s5] sm:$0xf] %vm87, %v83
  %89 = vst.msk [vmem:[%s5 + $0x4] sm:$0xf] %vm87, %v84
  %90 = vst.msk [vmem:[%s5 + $0x8] sm:$0xf] %vm87, %v85
  %91 = vst.msk [vmem:[%s5 + $0xc] sm:$0xf] %vm87, %v86
  %v92 = vld [vmem:[%s3] sm:$0xf]
  %v93 = vld [vmem:[%s3 + $0x4] sm:$0xf]
  %v94 = vld [vmem:[%s3 + $0x8] sm:$0xf]
  %v95 = vld [vmem:[%s3 + $0xc] sm:$0xf]
  %v96 = vld [vmem:[%s4] sm:$0x1]
  %v98 = vperm.slane %v96, 0
  %v104 = vunpack.c.l.b16 %v92
  %v105 = vunpack.c.l.b16 %v93
  %v106 = vunpack.c.l.b16 %v94
  %v107 = vunpack.c.l.b16 %v95
  %v108 = vpack.c.b16 %v105, %v104
  %v109 = vpack.c.b16 %v107, %v106
  %112 = vmatpush.bf16.msra.mxu0 0
  %113 = vmatpush.bf16.msra.mxu0 0
  %114 = vmatpush.bf16.msra.mxu0 0
  %115 = vmatpush.bf16.msra.mxu0 0
  %116 = vmatpush.bf16.msra.mxu0 0
  %117 = vmatpush.bf16.msra.mxu0 0
  %118 = vmatpush.bf16.msra.mxu0 %v109
  %119 = vmatpush.bf16.msra.mxu0 %v108
  %120 = vmatmul.bf16.gmra.mxu0 %v59
  %v121 = vpop.f32.mrf.mxu0
  %v122 = vadd.f32 %v98, %v121
  %v123 = vpop.f32.mrf.mxu0
  %v124 = vadd.f32 %v98, %v123
  %125 = vmatmul.bf16.gmra.mxu0 %v62
  %v126 = vpop.f32.mrf.mxu0
  %v127 = vadd.f32 %v98, %v126
  %v128 = vpop.f32.mrf.mxu0
  %v129 = vadd.f32 %v98, %v128
  %130 = vdwg.mxu0
  %v131 = vpack.c.bf16 %v122, %v122
  %v132 = vpack.c.bf16 %v124, %v124
  %v133 = vpack.c.bf16 %v127, %v127
  %v134 = vpack.c.bf16 %v129, %v129
  %135 = vst.msk [vmem:[%s6] sm:$0xf] %vm87, %v131
  %136 = vst.msk [vmem:[%s6 + $0x4] sm:$0xf] %vm87, %v132
  %137 = vst.msk [vmem:[%s6 + $0x8] sm:$0xf] %vm87, %v133
  %138 = vst.msk [vmem:[%s6 + $0xc] sm:$0xf] %vm87, %v134
  // Predicated region
  $region22: #{decoder_forward.12} parent=0 // pred_check
    _
  $region23: #{decoder_forward.12} parent=0 // pred_check_branch
    %140 = sbr.rel (0) target = $region25
  $region24: #{decoder_forward.12} parent=0 // pred_region
    _
  $region25: #{decoder_forward.12} parent=0 // pred_fallthru
    _
  // Predicated region
  $region26: #{decoder_forward.12} parent=0 // pred_check
    _
  $region27: #{decoder_forward.12} parent=0 // pred_check_branch
    %142 = sbr.rel (0) target = $region29
  $region28: #{decoder_forward.12} parent=0 // pred_region
    _
  $region29: #{decoder_forward.12} parent=0 // pred_fallthru
    _
  // Predicated region
  $region30: #{decoder_forward.12} parent=0 // pred_check
    _
  $region31: #{decoder_forward.12} parent=0 // pred_check_branch
    %144 = sbr.rel (0) target = $region33
  $region32: #{decoder_forward.12} parent=0 // pred_region
    _
  $region33: #{decoder_forward.12} parent=0 // pred_fallthru
    _
  // Predicated region
  $region34: #{decoder_forward.12} parent=0 // pred_check
    _
  $region35: #{decoder_forward.12} parent=0 // pred_check_branch
    %146 = sbr.rel (0) target = $region37
  $region36: #{decoder_forward.12} parent=0 // pred_region
    _
  $region37: #{decoder_forward.12} parent=0 // pred_fallthru
    _

// kernel: decoder_forward.13
$region0: #{decoder_forward.13}
  #allocation0 [shape = 'u32[]', space=smem, size = 0x4, offset = 0x4, fixed_abs, tag = 'smem constant byte address 0x4 - core index']
  #allocation1 [shape = 'u32[72,128]{1,0:T(1,128)}', space=vmem, size = 0x9000, scoped, tag = 'internal scratch']
  %s0 = inlined_call_operand.vmem [shape: f32[2,2,8,32], index: 0, kind: input, shape index: {}]
  %s1 = inlined_call_operand.vmem [shape: bf16[2,8,32], index: 1, kind: input, shape index: {}]
  %s2 = inlined_call_operand.vmem [shape: bf16[2,8,32], index: 2, kind: input, shape index: {}]
  %s3 = inlined_call_operand.vmem [shape: f32[2,1,32], index: 3, kind: input, shape index: {}]
  %s4 = inlined_call_operand.vmem [shape: f32[2,1,32], index: 4, kind: input, shape index: {}]
  %s5 = inlined_call_operand.vmem [shape: bf16[32,32], index: 5, kind: input, shape index: {}]
  %s6 = inlined_call_operand.vmem [shape: f32[1,32], index: 6, kind: input, shape index: {}]
  %s7 = inlined_call_operand.vmem [shape: bf16[32,32], index: 7, kind: input, shape index: {}]
  %s8 = inlined_call_operand.vmem [shape: f32[1,32], index: 8, kind: input, shape index: {}]
  %s9 = inlined_call_operand.vmem [shape: f32[2,2,8,32], index: 9, kind: output, shape index: {}]
  %s10 = sld [smem:[#allocation0]]
  $region69: #{decoder_forward.13} parent=0
    _
  %s12 = ssub.s32 1, %s10
  %s13 = scalar_select 0, %s12, %s10
  loop: start=0, step=1, limit=6
  $region2: #{decoder_forward.13} parent=0 // loop_pre_header
    _
  $region3: #{decoder_forward.13} parent=0 // loop_header
    %s15 = sphi 0, %s19
    %p16 = scmp.ge.s32.totalorder %s15, 6
    %s22 = sphi 0, %s34
    %s23 = sphi 0, %s30
    %s24 = sphi 0, %s22
    %s25 = sphi 0, %s23
    %s26 = sphi 0, %s24
    %s27 = sphi 0, %s25
    %s39 = sphi 0, %s41
    %s42 = sphi 0, %s39
    %s43 = sphi 0, %s42
    %s59 = sphi 0, %s43
    %s65 = sphi 0, %s67
    %s68 = sphi 0, %s65
    %s69 = sphi 0, %s68
    %s85 = sphi 0, %s69
    %s91 = sphi 0, %s93
    %s94 = sphi 0, %s91
    %s95 = sphi 0, %s94
    %s111 = sphi 0, %s95
    %s117 = sphi 0, %s119
    %s120 = sphi 0, %s117
    %s121 = sphi 0, %s120
    %s137 = sphi 0, %s121
    %s143 = sphi 0, %s145
    %s146 = sphi 0, %s143
    %s147 = sphi 0, %s146
    %s163 = sphi 0, %s147
    %s167 = sphi 0, %s167
    %s169 = sphi 0, %s167
    %s170 = sphi 0, %s169
    %s184 = sphi 0, %s170
    %s188 = sphi 0, %s188
    %s190 = sphi 0, %s188
    %s191 = sphi 0, %s190
    %s205 = sphi 0, %s191
    %s209 = sphi 0, %s209
    %s211 = sphi 0, %s209
    %s212 = sphi 0, %s211
    %s226 = sphi 0, %s212
    %s230 = sphi 0, %s230
    %s232 = sphi 0, %s230
    %s233 = sphi 0, %s232
    %s247 = sphi 0, %s233
    %s255 = sphi 0, %s257
    %s258 = sphi 0, %s255
    %s259 = sphi 0, %s258
    %s275 = sphi 0, %s259
  $region4: #{decoder_forward.13} parent=0 // loop_header_branch
    %18 = sbr.rel (%p16) target = $region8
  $region5: #{decoder_forward.13} parent=0 // loop_body
    %s20 = ssub.s32 %s15, 1
    %s21 = ssub.s32 %s15, 2
    %s28 = sadd.s32 1, %s23
    %p29 = scmp.ge.s32.totalorder %s28, 2
    %s30 = scalar_select %p29, 0, %s28
    %s31 = sadd.s32 1, %s22
    %s32 = scalar_select %p29, %s31, %s22
    %p33 = scmp.ge.s32.totalorder %s32, 2
    %s34 = scalar_select %p33, 0, %s32
    %s35 = ssub.s32 %s22, %s34
    %s36 = ssub.s32 %s23, %s30
    %s37 = sor.u32 %s35, %s36
    %p38 = scmp.eq.s32.totalorder %s37, 0
    %s40 = sadd.s32 %s39, 1
    %s41 = scalar_select %p38, %s39, %s40
    %p44 = pneg %p38
    %p45 = scmp.eq.s32.totalorder %s15, 3
    %p46 = por %p44, %p45
    %p47 = scmp.ne.s32.totalorder %s39, %s42
    %p48 = scmp.eq.s32.totalorder %s15, 0
    %p49 = por %p47, %p48
    %p50 = scmp.ne.s32.totalorder %s39, %s42
    %p51 = scmp.eq.s32.totalorder %s20, 3
    %p52 = por %p50, %p51
    %p53 = scmp.ne.s32.totalorder %s42, %s43
    %p54 = scmp.eq.s32.totalorder %s20, 0
    %p55 = por %p53, %p54
    %p56 = scmp.ne.s32.totalorder %s42, %s43
    %p57 = scmp.eq.s32.totalorder %s21, 3
    %p58 = por %p56, %p57
    %p60 = scmp.ne.s32.totalorder %s43, %s59
    %p61 = scmp.eq.s32.totalorder %s21, 0
    %p62 = por %p60, %p61
    %s63 = ssub.s32 %s23, %s30
    %p64 = scmp.eq.s32.totalorder %s63, 0
    %s66 = sadd.s32 %s65, 1
    %s67 = scalar_select %p64, %s65, %s66
    %p70 = pneg %p64
    %p71 = scmp.eq.s32.totalorder %s15, 3
    %p72 = por %p70, %p71
    %p73 = scmp.ne.s32.totalorder %s65, %s68
    %p74 = scmp.eq.s32.totalorder %s15, 0
    %p75 = por %p73, %p74
    %p76 = scmp.ne.s32.totalorder %s65, %s68
    %p77 = scmp.eq.s32.totalorder %s20, 3
    %p78 = por %p76, %p77
    %p79 = scmp.ne.s32.totalorder %s68, %s69
    %p80 = scmp.eq.s32.totalorder %s20, 0
    %p81 = por %p79, %p80
    %p82 = scmp.ne.s32.totalorder %s68, %s69
    %p83 = scmp.eq.s32.totalorder %s21, 3
    %p84 = por %p82, %p83
    %p86 = scmp.ne.s32.totalorder %s69, %s85
    %p87 = scmp.eq.s32.totalorder %s21, 0
    %p88 = por %p86, %p87
    %s89 = ssub.s32 %s23, %s30
    %p90 = scmp.eq.s32.totalorder %s89, 0
    %s92 = sadd.s32 %s91, 1
    %s93 = scalar_select %p90, %s91, %s92
    %p96 = pneg %p90
    %p97 = scmp.eq.s32.totalorder %s15, 3
    %p98 = por %p96, %p97
    %p99 = scmp.ne.s32.totalorder %s91, %s94
    %p100 = scmp.eq.s32.totalorder %s15, 0
    %p101 = por %p99, %p100
    %p102 = scmp.ne.s32.totalorder %s91, %s94
    %p103 = scmp.eq.s32.totalorder %s20, 3
    %p104 = por %p102, %p103
    %p105 = scmp.ne.s32.totalorder %s94, %s95
    %p106 = scmp.eq.s32.totalorder %s20, 0
    %p107 = por %p105, %p106
    %p108 = scmp.ne.s32.totalorder %s94, %s95
    %p109 = scmp.eq.s32.totalorder %s21, 3
    %p110 = por %p108, %p109
    %p112 = scmp.ne.s32.totalorder %s95, %s111
    %p113 = scmp.eq.s32.totalorder %s21, 0
    %p114 = por %p112, %p113
    %s115 = ssub.s32 %s22, %s34
    %p116 = scmp.eq.s32.totalorder %s115, 0
    %s118 = sadd.s32 %s117, 1
    %s119 = scalar_select %p116, %s117, %s118
    %p122 = pneg %p116
    %p123 = scmp.eq.s32.totalorder %s15, 3
    %p124 = por %p122, %p123
    %p125 = scmp.ne.s32.totalorder %s117, %s120
    %p126 = scmp.eq.s32.totalorder %s15, 0
    %p127 = por %p125, %p126
    %p128 = scmp.ne.s32.totalorder %s117, %s120
    %p129 = scmp.eq.s32.totalorder %s20, 3
    %p130 = por %p128, %p129
    %p131 = scmp.ne.s32.totalorder %s120, %s121
    %p132 = scmp.eq.s32.totalorder %s20, 0
    %p133 = por %p131, %p132
    %p134 = scmp.ne.s32.totalorder %s120, %s121
    %p135 = scmp.eq.s32.totalorder %s21, 3
    %p136 = por %p134, %p135
    %p138 = scmp.ne.s32.totalorder %s121, %s137
    %p139 = scmp.eq.s32.totalorder %s21, 0
    %p140 = por %p138, %p139
    %s141 = ssub.s32 %s22, %s34
    %p142 = scmp.eq.s32.totalorder %s141, 0
    %s144 = sadd.s32 %s143, 1
    %s145 = scalar_select %p142, %s143, %s144
    %p148 = pneg %p142
    %p149 = scmp.eq.s32.totalorder %s15, 3
    %p150 = por %p148, %p149
    %p151 = scmp.ne.s32.totalorder %s143, %s146
    %p152 = scmp.eq.s32.totalorder %s15, 0
    %p153 = por %p151, %p152
    %p154 = scmp.ne.s32.totalorder %s143, %s146
    %p155 = scmp.eq.s32.totalorder %s20, 3
    %p156 = por %p154, %p155
    %p157 = scmp.ne.s32.totalorder %s146, %s147
    %p158 = scmp.eq.s32.totalorder %s20, 0
    %p159 = por %p157, %p158
    %p160 = scmp.ne.s32.totalorder %s146, %s147
    %p161 = scmp.eq.s32.totalorder %s21, 3
    %p162 = por %p160, %p161
    %p164 = scmp.ne.s32.totalorder %s147, %s163
    %p165 = scmp.eq.s32.totalorder %s21, 0
    %p166 = por %p164, %p165
    %s168 = sadd.s32 %s167, 1
    %p171 = scmp.eq.s32.totalorder %s15, 3
    %p172 = scmp.ne.s32.totalorder %s167, %s169
    %p173 = scmp.eq.s32.totalorder %s15, 0
    %p174 = por %p172, %p173
    %p175 = scmp.ne.s32.totalorder %s167, %s169
    %p176 = scmp.eq.s32.totalorder %s20, 3
    %p177 = por %p175, %p176
    %p178 = scmp.ne.s32.totalorder %s169, %s170
    %p179 = scmp.eq.s32.totalorder %s20, 0
    %p180 = por %p178, %p179
    %p181 = scmp.ne.s32.totalorder %s169, %s170
    %p182 = scmp.eq.s32.totalorder %s21, 3
    %p183 = por %p181, %p182
    %p185 = scmp.ne.s32.totalorder %s170, %s184
    %p186 = scmp.eq.s32.totalorder %s21, 0
    %p187 = por %p185, %p186
    %s189 = sadd.s32 %s188, 1
    %p192 = scmp.eq.s32.totalorder %s15, 3
    %p193 = scmp.ne.s32.totalorder %s188, %s190
    %p194 = scmp.eq.s32.totalorder %s15, 0
    %p195 = por %p193, %p194
    %p196 = scmp.ne.s32.totalorder %s188, %s190
    %p197 = scmp.eq.s32.totalorder %s20, 3
    %p198 = por %p196, %p197
    %p199 = scmp.ne.s32.totalorder %s190, %s191
    %p200 = scmp.eq.s32.totalorder %s20, 0
    %p201 = por %p199, %p200
    %p202 = scmp.ne.s32.totalorder %s190, %s191
    %p203 = scmp.eq.s32.totalorder %s21, 3
    %p204 = por %p202, %p203
    %p206 = scmp.ne.s32.totalorder %s191, %s205
    %p207 = scmp.eq.s32.totalorder %s21, 0
    %p208 = por %p206, %p207
    %s210 = sadd.s32 %s209, 1
    %p213 = scmp.eq.s32.totalorder %s15, 3
    %p214 = scmp.ne.s32.totalorder %s209, %s211
    %p215 = scmp.eq.s32.totalorder %s15, 0
    %p216 = por %p214, %p215
    %p217 = scmp.ne.s32.totalorder %s209, %s211
    %p218 = scmp.eq.s32.totalorder %s20, 3
    %p219 = por %p217, %p218
    %p220 = scmp.ne.s32.totalorder %s211, %s212
    %p221 = scmp.eq.s32.totalorder %s20, 0
    %p222 = por %p220, %p221
    %p223 = scmp.ne.s32.totalorder %s211, %s212
    %p224 = scmp.eq.s32.totalorder %s21, 3
    %p225 = por %p223, %p224
    %p227 = scmp.ne.s32.totalorder %s212, %s226
    %p228 = scmp.eq.s32.totalorder %s21, 0
    %p229 = por %p227, %p228
    %s231 = sadd.s32 %s230, 1
    %p234 = scmp.eq.s32.totalorder %s15, 3
    %p235 = scmp.ne.s32.totalorder %s230, %s232
    %p236 = scmp.eq.s32.totalorder %s15, 0
    %p237 = por %p235, %p236
    %p238 = scmp.ne.s32.totalorder %s230, %s232
    %p239 = scmp.eq.s32.totalorder %s20, 3
    %p240 = por %p238, %p239
    %p241 = scmp.ne.s32.totalorder %s232, %s233
    %p242 = scmp.eq.s32.totalorder %s20, 0
    %p243 = por %p241, %p242
    %p244 = scmp.ne.s32.totalorder %s232, %s233
    %p245 = scmp.eq.s32.totalorder %s21, 3
    %p246 = por %p244, %p245
    %p248 = scmp.ne.s32.totalorder %s233, %s247
    %p249 = scmp.eq.s32.totalorder %s21, 0
    %p250 = por %p248, %p249
    %s251 = ssub.s32 %s22, %s34
    %s252 = ssub.s32 %s23, %s30
    %s253 = sor.u32 %s251, %s252
    %p254 = scmp.eq.s32.totalorder %s253, 0
    %s256 = sadd.s32 %s255, 1
    %s257 = scalar_select %p254, %s255, %s256
    %p260 = pneg %p254
    %p261 = scmp.eq.s32.totalorder %s15, 3
    %p262 = por %p260, %p261
    %p263 = scmp.ne.s32.totalorder %s255, %s258
    %p264 = scmp.eq.s32.totalorder %s15, 0
    %p265 = por %p263, %p264
    %p266 = scmp.ne.s32.totalorder %s255, %s258
    %p267 = scmp.eq.s32.totalorder %s20, 3
    %p268 = por %p266, %p267
    %p269 = scmp.ne.s32.totalorder %s258, %s259
    %p270 = scmp.eq.s32.totalorder %s20, 0
    %p271 = por %p269, %p270
    %p272 = scmp.ne.s32.totalorder %s258, %s259
    %p273 = scmp.eq.s32.totalorder %s21, 3
    %p274 = por %p272, %p273
    %p276 = scmp.ne.s32.totalorder %s259, %s275
    %p277 = scmp.eq.s32.totalorder %s21, 0
    %p278 = por %p276, %p277
    %p279 = scmp.le.s32.totalorder 1, %s15
    %p280 = scmp.lt.s32.totalorder %s15, 5
    %p281 = pnand %p279, %p280
    %p282 = pneg %p281
    // Predicated region
    $region9: #{decoder_forward.13} parent=5 // pred_check
      _
    $region10: #{decoder_forward.13} parent=5 // pred_check_branch
      %284 = sbr.rel (%p281) target = $region12
    $region11: #{decoder_forward.13} parent=5 // pred_region
      %s285 = ssub.s32 %s15, 1
      // Predicated region
      $region13: #{decoder_forward.13} parent=11 // pred_check
        %p286 = pneg %p180
      $region14: #{decoder_forward.13} parent=11 // pred_check_branch
        %288 = sbr.rel (%p286) target = $region16
      $region15: #{decoder_forward.13} parent=11 // pred_region
        _
      $region16: #{decoder_forward.13} parent=11 // pred_fallthru
        _
      // Predicated region
      $region17: #{decoder_forward.13} parent=11 // pred_check
        %p289 = pneg %p201
      $region18: #{decoder_forward.13} parent=11 // pred_check_branch
        %291 = sbr.rel (%p289) target = $region20
      $region19: #{decoder_forward.13} parent=11 // pred_region
        _
      $region20: #{decoder_forward.13} parent=11 // pred_fallthru
        _
      // Predicated region
      $region21: #{decoder_forward.13} parent=11 // pred_check
        %p292 = pneg %p222
      $region22: #{decoder_forward.13} parent=11 // pred_check_branch
        %294 = sbr.rel (%p292) target = $region24
      $region23: #{decoder_forward.13} parent=11 // pred_region
        _
      $region24: #{decoder_forward.13} parent=11 // pred_fallthru
        _
      // Predicated region
      $region25: #{decoder_forward.13} parent=11 // pred_check
        %p295 = pneg %p243
      $region26: #{decoder_forward.13} parent=11 // pred_check_branch
        %297 = sbr.rel (%p295) target = $region28
      $region27: #{decoder_forward.13} parent=11 // pred_region
        _
      $region28: #{decoder_forward.13} parent=11 // pred_fallthru
        _
    $region12: #{decoder_forward.13} parent=5 // pred_fallthru
      _
    %p298 = scmp.lt.s32.totalorder %s15, 4
    // Predicated region
    $region29: #{decoder_forward.13} parent=5 // pred_check
      %p299 = pneg %p298
    $region30: #{decoder_forward.13} parent=5 // pred_check_branch
      %301 = sbr.rel (%p299) target = $region32
    $region31: #{decoder_forward.13} parent=5 // pred_region
      // Predicated region
      $region33: #{decoder_forward.13} parent=31 // pred_check
        %p302 = pneg %p49
      $region34: #{decoder_forward.13} parent=31 // pred_check_branch
        %304 = sbr.rel (%p302) target = $region36
      $region35: #{decoder_forward.13} parent=31 // pred_region
        %p305 = scmp.lt.s32.totalorder %s22, 1
        %s306 = scalar_select %p305, %s22, 1
        %p307 = scmp.lt.s32.totalorder %s23, 1
        %s308 = scalar_select %p307, %s23, 1
        %s309 = smul.addr %s306, 2
        %s310 = sadd.s32 %s308, %s309
        %s311 = smul.addr %s310, 8
        %s312 = scalar_lea.vmem %s0, %s311
      $region36: #{decoder_forward.13} parent=31 // pred_fallthru
        _
      // Predicated region
      $region37: #{decoder_forward.13} parent=31 // pred_check
        %p313 = pneg %p75
      $region38: #{decoder_forward.13} parent=31 // pred_check_branch
        %315 = sbr.rel (%p313) target = $region40
      $region39: #{decoder_forward.13} parent=31 // pred_region
        %p316 = scmp.lt.s32.totalorder %s23, 1
        %s317 = scalar_select %p316, %s23, 1
        %s318 = smul.addr %s317, 4
        %s319 = scalar_lea.vmem %s1, %s318
      $region40: #{decoder_forward.13} parent=31 // pred_fallthru
        _
      // Predicated region
      $region41: #{decoder_forward.13} parent=31 // pred_check
        %p320 = pneg %p101
      $region42: #{decoder_forward.13} parent=31 // pred_check_branch
        %322 = sbr.rel (%p320) target = $region44
      $region43: #{decoder_forward.13} parent=31 // pred_region
        %p323 = scmp.lt.s32.totalorder %s23, 1
        %s324 = scalar_select %p323, %s23, 1
        %s325 = smul.addr %s324, 4
        %s326 = scalar_lea.vmem %s2, %s325
      $region44: #{decoder_forward.13} parent=31 // pred_fallthru
        _
      // Predicated region
      $region45: #{decoder_forward.13} parent=31 // pred_check
        %p327 = pneg %p127
      $region46: #{decoder_forward.13} parent=31 // pred_check_branch
        %329 = sbr.rel (%p327) target = $region48
      $region47: #{decoder_forward.13} parent=31 // pred_region
        %p330 = scmp.lt.s32.totalorder %s22, 1
        %s331 = scalar_select %p330, %s22, 1
        %s332 = scalar_lea.vmem %s3, %s331
      $region48: #{decoder_forward.13} parent=31 // pred_fallthru
        _
      // Predicated region
      $region49: #{decoder_forward.13} parent=31 // pred_check
        %p333 = pneg %p153
      $region50: #{decoder_forward.13} parent=31 // pred_check_branch
        %335 = sbr.rel (%p333) target = $region52
      $region51: #{decoder_forward.13} parent=31 // pred_region
        %p336 = scmp.lt.s32.totalorder %s22, 1
        %s337 = scalar_select %p336, %s22, 1
        %s338 = scalar_lea.vmem %s4, %s337
      $region52: #{decoder_forward.13} parent=31 // pred_fallthru
        _
    $region32: #{decoder_forward.13} parent=5 // pred_fallthru
      _
    %p339 = scmp.le.s32.totalorder 1, %s15
    %p340 = scmp.lt.s32.totalorder %s15, 5
    %p341 = pnand %p339, %p340
    %p342 = pneg %p341
    // Predicated region
    $region53: #{decoder_forward.13} parent=5 // pred_check
      _
    $region54: #{decoder_forward.13} parent=5 // pred_check_branch
      %344 = sbr.rel (%p341) target = $region56
    $region55: #{decoder_forward.13} parent=5 // pred_region
      %s345 = ssub.s32 %s15, 1
      %p346 = scmp.lt.s32.totalorder %s24, 1
      %s347 = scalar_select %p346, %s24, 1
      %p348 = scmp.lt.s32.totalorder %s25, 1
      %s349 = scalar_select %p348, %s25, 1
      %s350 = smul.addr %s347, 2
      %s351 = sadd.s32 %s349, %s350
      %s352 = smul.addr %s351, 8
      %s353 = scalar_lea.vmem %s0, %s352
      %p354 = pneg %p55
      %p355 = pneg %p52
      %p356 = scmp.lt.s32.totalorder %s25, 1
      %s357 = scalar_select %p356, %s25, 1
      %s358 = smul.addr %s357, 4
      %s359 = scalar_lea.vmem %s1, %s358
      %p360 = pneg %p81
      %p361 = pneg %p78
      %p362 = scmp.lt.s32.totalorder %s25, 1
      %s363 = scalar_select %p362, %s25, 1
      %s364 = smul.addr %s363, 4
      %s365 = scalar_lea.vmem %s2, %s364
      %p366 = pneg %p107
      %p367 = pneg %p104
      %p368 = scmp.lt.s32.totalorder %s24, 1
      %s369 = scalar_select %p368, %s24, 1
      %s370 = scalar_lea.vmem %s3, %s369
      %p371 = pneg %p133
      %p372 = pneg %p130
      %p373 = scmp.lt.s32.totalorder %s24, 1
      %s374 = scalar_select %p373, %s24, 1
      %s375 = scalar_lea.vmem %s4, %s374
      %p376 = pneg %p159
      %p377 = pneg %p156
      %p378 = pneg %p180
      %p379 = pneg %p177
      %p380 = pneg %p201
      %p381 = pneg %p198
      %p382 = pneg %p222
      %p383 = pneg %p219
      %p384 = pneg %p243
      %p385 = pneg %p240
      %p386 = pneg %p271
      %p387 = pneg %p268
      %p388 = scmp.lt.s32.totalorder %s24, 1
      %s389 = scalar_select %p388, %s24, 1
      %p390 = scmp.lt.s32.totalorder %s25, 1
      %s391 = scalar_select %p390, %s25, 1
      %s392 = smul.addr %s389, 2
      %s393 = sadd.s32 %s391, %s392
      %s394 = smul.addr %s393, 8
      %s395 = scalar_lea.vmem %s9, %s394
      %p396 = scmp.lt.s32.totalorder %s24, 1
      %s397 = scalar_select %p396, %s24, 1
      %p398 = scmp.lt.s32.totalorder %s25, 1
      %s399 = scalar_select %p398, %s25, 1
      %s400 = smul.addr %s397, 2
      %s401 = sadd.s32 %s399, %s400
      %s402 = smul.addr %s401, 8
      %s403 = scalar_lea.vmem %s0, %s402
      %p404 = scmp.lt.s32.totalorder %s25, 1
      %s405 = scalar_select %p404, %s25, 1
      %s406 = smul.addr %s405, 4
      %s407 = scalar_lea.vmem %s1, %s406
      %p408 = scmp.lt.s32.totalorder %s25, 1
      %s409 = scalar_select %p408, %s25, 1
      %s410 = smul.addr %s409, 4
      %s411 = scalar_lea.vmem %s2, %s410
      %p412 = scmp.lt.s32.totalorder %s24, 1
      %s413 = scalar_select %p412, %s24, 1
      %s414 = scalar_lea.vmem %s3, %s413
      %p415 = scmp.lt.s32.totalorder %s24, 1
      %s416 = scalar_select %p415, %s24, 1
      %s417 = scalar_lea.vmem %s4, %s416
      %p418 = scmp.lt.s32.totalorder %s24, 1
      %s419 = scalar_select %p418, %s24, 1
      %p420 = scmp.lt.s32.totalorder %s25, 1
      %s421 = scalar_select %p420, %s25, 1
      %s422 = smul.addr %s419, 2
      %s423 = sadd.s32 %s421, %s422
      %s424 = smul.addr %s423, 8
      %s425 = scalar_lea.vmem %s9, %s424
      %v427 = vld [vmem:[%s403] sm:$0xff]
      %v428 = vld [vmem:[%s414] sm:$0x1]
      %v429 = vld [vmem:[%s417] sm:$0x1]
      %vm430 = vcmask 261120
      %v431 = vsel %vm430, %v427, 0.0
      %432 = vadd.xlane.f32.xlu0 %v431
      %v433 = vpop.xlane.xlu0 %432
      %v434 = vrcp.pop 32.0
      %v435 = vmul.f32 32.0, %v434
      %v436 = vsub.f32 1.0, %v435
      %v437 = vmul.f32 %v434, %v436
      %v438 = vadd.f32 %v434, %v437
      %vm439 = vweird.f32 %v434
      %v440 = vsel %vm439, %v434, %v438
      %v441 = vmul.f32 %v433, %v440
      %v442 = vsub.f32 %v427, %v441
      %v443 = vmul.f32 %v442, %v442
      %v444 = vsel %vm430, %v443, 0.0
      %445 = vadd.xlane.f32.xlu0 %v444
      %v446 = vpop.xlane.xlu0 %445
      %v447 = vmul.f32 %v446, %v440
      %v448 = vadd.f32 %v447, 1e-05
      %v449 = vrsqrt.pop %v448
      %v450 = vmul.f32 %v449, %v448
      %v451 = vmul.f32 %v450, %v449
      %v452 = vmul.f32 0.5, %v451
      %v453 = vsub.f32 1.5, %v452
      %v454 = vmul.f32 %v449, %v453
      %vm455 = vweird.f32 %v448
      %vm456 = vweird.f32 %v449
      %vm457 = vmor %vm455, %vm456
      %v458 = vsel %vm457, %v449, %v454
      %v459 = vmul.f32 %v442, %v458
      %v461 = vperm.slane %v428, 0
      %v463 = vmul.f32 %v459, %v461
      %v465 = vperm.slane %v429, 0
      %v467 = vadd.f32 %v463, %v465
      %v468 = vpack.c.bf16 %v467, %v467
      %v469 = vld [vmem:[%s5] sm:$0xf]
      %v470 = vld [vmem:[%s5 + $0x4] sm:$0xf]
      %v471 = vld [vmem:[%s5 + $0x8] sm:$0xf]
      %v472 = vld [vmem:[%s5 + $0xc] sm:$0xf]
      %v473 = vld [vmem:[%s6] sm:$0x1]
      %v475 = vperm.slane %v473, 0
      %v481 = vunpack.c.l.b16 %v469
      %v482 = vunpack.c.l.b16 %v470
      %v483 = vunpack.c.l.b16 %v471
      %v484 = vunpack.c.l.b16 %v472
      %v485 = vpack.c.b16 %v482, %v481
      %v486 = vpack.c.b16 %v484, %v483
      %v490 = vsel %vm430, %v468, 0
      %492 = vmatpush.bf16.msra.mxu0 0
      %493 = vmatpush.bf16.msra.mxu0 0
      %494 = vmatpush.bf16.msra.mxu0 0
      %495 = vmatpush.bf16.msra.mxu0 0
      %496 = vmatpush.bf16.msra.mxu0 0
      %497 = vmatpush.bf16.msra.mxu0 0
      %498 = vmatpush.bf16.msra.mxu0 %v486
      %499 = vmatpush.bf16.msra.mxu0 %v485
      %500 = vmatmul.bf16.gmra.mxu0 %v490
      %v501 = vpop.f32.mrf.mxu0
      %v502 = vadd.f32 %v475, %v501
      %v503 = vpop.f32.mrf.mxu0
      %504 = vdwg.mxu0
      %v505 = vpack.c.bf16 %v502, %v502
      %v506 = vld [vmem:[%s407] sm:$0xf]
      %v507 = vld [vmem:[%s411] sm:$0xf]
      %vm508 = vcmask 64512
      %v510 = vsel %vm508, %v505, 0
      %v513 = vsel %vm508, %v506, 0
      %515 = vmatpush.bf16.xpose.msra.mxu0 0
      %516 = vmatpush.bf16.xpose.msra.mxu0 0
      %517 = vmatpush.bf16.xpose.msra.mxu0 0
      %518 = vmatpush.bf16.xpose.msra.mxu0 0
      %519 = vmatpush.bf16.xpose.msra.mxu0 0
      %520 = vmatpush.bf16.xpose.msra.mxu0 0
      %521 = vmatpush.bf16.xpose.msra.mxu0 0
      %522 = vmatpush.bf16.xpose.msra.mxu0 %v513
      %523 = vmatmul.bf16.gmra.mxu0 %v510
      %v524 = vpop.f32.mrf.mxu0
      %v525 = vadd.f32 0.0, %v524
      %v526 = vpop.f32.mrf.mxu0
      %527 = vdwg.mxu0
      %v528 = vsel %vm508, %v525, -inf
      %529 = vmax.xlane.f32.xlu0 %v528
      %v530 = vpop.xlane.xlu0 %529
      %v531 = vsub.f32 %v525, %v530
      %v532 = vmul.f32 %v531, 1.442695
      %v533 = vpow.pop %v532
      %v534 = vsel %vm508, %v533, 0.0
      %535 = vadd.xlane.f32.xlu0 %v534
      %v536 = vpop.xlane.xlu0 %535
      %v537 = vrcp.pop %v536
      %v538 = vmul.f32 %v533, %v537
      %v539 = vpack.c.bf16 %v538, %v538
      %v541 = vsel %vm508, %v539, 0
      %vm543 = vcmask 1043456
      %v545 = vsel %vm543, %v507, 0
      %547 = vmatpush.bf16.msra.mxu0 0
      %548 = vmatpush.bf16.msra.mxu0 0
      %549 = vmatpush.bf16.msra.mxu0 0
      %550 = vmatpush.bf16.msra.mxu0 0
      %551 = vmatpush.bf16.msra.mxu0 0
      %552 = vmatpush.bf16.msra.mxu0 0
      %553 = vmatpush.bf16.msra.mxu0 0
      %554 = vmatpush.bf16.msra.mxu0 %v545
      %555 = vmatmul.bf16.gmra.mxu0 %v541
      %v556 = vpop.f32.mrf.mxu0
      %v557 = vadd.f32 0.0, %v556
      %v558 = vpop.f32.mrf.mxu0
      %559 = vdwg.mxu0
      %v561 = vunpack.c.l.b16 %v505
      %v562 = vpack.c.b16 %v561, %v561
      %563 = vrot.lane.b32.xlu0 %v562, 120
      %v564 = vpop.permute.xlu0 %563
      %v566 = vunpack.c.l.b16 %v506
      %v567 = vpack.c.b16 %v566, %v566
      %568 = vrot.lane.b32.xlu0 %v567, 120
      %v569 = vpop.permute.xlu0 %568
      %v571 = vsel %vm508, %v564, 0
      %v574 = vsel %vm508, %v569, 0
      %576 = vmatpush.bf16.xpose.msra.mxu0 0
      %577 = vmatpush.bf16.xpose.msra.mxu0 0
      %578 = vmatpush.bf16.xpose.msra.mxu0 0
      %579 = vmatpush.bf16.xpose.msra.mxu0 0
      %580 = vmatpush.bf16.xpose.msra.mxu0 0
      %581 = vmatpush.bf16.xpose.msra.mxu0 0
      %582 = vmatpush.bf16.xpose.msra.mxu0 0
      %583 = vmatpush.bf16.xpose.msra.mxu0 %v574
      %584 = vmatmul.bf16.gmra.mxu0 %v571
      %v585 = vpop.f32.mrf.mxu0
      %v586 = vadd.f32 0.0, %v585
      %v587 = vpop.f32.mrf.mxu0
      %588 = vdwg.mxu0
      %v589 = vsel %vm508, %v586, -inf
      %590 = vmax.xlane.f32.xlu0 %v589
      %v591 = vpop.xlane.xlu0 %590
      %v592 = vsub.f32 %v586, %v591
      %v593 = vmul.f32 %v592, 1.442695
      %v594 = vpow.pop %v593
      %v595 = vsel %vm508, %v594, 0.0
      %596 = vadd.xlane.f32.xlu0 %v595
      %v597 = vpop.xlane.xlu0 %596
      %v598 = vrcp.pop %v597
      %v599 = vmul.f32 %v594, %v598
      %v600 = vpack.c.bf16 %v599, %v599
      %v602 = vunpack.c.l.b16 %v507
      %v603 = vpack.c.b16 %v602, %v602
      %604 = vrot.lane.b32.xlu0 %v603, 120
      %v605 = vpop.permute.xlu0 %604
      %v607 = vsel %vm508, %v600, 0
      %v610 = vsel %vm543, %v605, 0
      %612 = vmatpush.bf16.msra.mxu0 0
      %613 = vmatpush.bf16.msra.mxu0 0
      %614 = vmatpush.bf16.msra.mxu0 0
      %615 = vmatpush.bf16.msra.mxu0 0
      %616 = vmatpush.bf16.msra.mxu0 0
      %617 = vmatpush.bf16.msra.mxu0 0
      %618 = vmatpush.bf16.msra.mxu0 0
      %619 = vmatpush.bf16.msra.mxu0 %v610
      %620 = vmatmul.bf16.gmra.mxu0 %v607
      %v621 = vpop.f32.mrf.mxu0
      %v622 = vadd.f32 0.0, %v621
      %v623 = vpop.f32.mrf.mxu0
      %624 = vdwg.mxu0
      %625 = vrot.lane.b32.xlu0 %v562, 112
      %v626 = vpop.permute.xlu0 %625
      %627 = vrot.lane.b32.xlu0 %v567, 112
      %v628 = vpop.permute.xlu0 %627
      %v630 = vsel %vm508, %v626, 0
      %v633 = vsel %vm508, %v628, 0
      %635 = vmatpush.bf16.xpose.msra.mxu0 0
      %636 = vmatpush.bf16.xpose.msra.mxu0 0
      %637 = vmatpush.bf16.xpose.msra.mxu0 0
      %638 = vmatpush.bf16.xpose.msra.mxu0 0
      %639 = vmatpush.bf16.xpose.msra.mxu0 0
      %640 = vmatpush.bf16.xpose.msra.mxu0 0
      %641 = vmatpush.bf16.xpose.msra.mxu0 0
      %642 = vmatpush.bf16.xpose.msra.mxu0 %v633
      %643 = vmatmul.bf16.gmra.mxu0 %v630
      %v644 = vpop.f32.mrf.mxu0
      %v645 = vadd.f32 0.0, %v644
      %v646 = vpop.f32.mrf.mxu0
      %647 = vdwg.mxu0
      %v648 = vsel %vm508, %v645, -inf
      %649 = vmax.xlane.f32.xlu0 %v648
      %v650 = vpop.xlane.xlu0 %649
      %v651 = vsub.f32 %v645, %v650
      %v652 = vmul.f32 %v651, 1.442695
      %v653 = vpow.pop %v652
      %v654 = vsel %vm508, %v653, 0.0
      %655 = vadd.xlane.f32.xlu0 %v654
      %v656 = vpop.xlane.xlu0 %655
      %v657 = vrcp.pop %v656
      %v658 = vmul.f32 %v653, %v657
      %v659 = vpack.c.bf16 %v658, %v658
      %660 = vrot.lane.b32.xlu0 %v603, 112
      %v661 = vpop.permute.xlu0 %660
      %v663 = vsel %vm508, %v659, 0
      %v666 = vsel %vm543, %v661, 0
      %668 = vmatpush.bf16.msra.mxu0 0
      %669 = vmatpush.bf16.msra.mxu0 0
      %670 = vmatpush.bf16.msra.mxu0 0
      %671 = vmatpush.bf16.msra.mxu0 0
      %672 = vmatpush.bf16.msra.mxu0 0
      %673 = vmatpush.bf16.msra.mxu0 0
      %674 = vmatpush.bf16.msra.mxu0 0
      %675 = vmatpush.bf16.msra.mxu0 %v666
      %676 = vmatmul.bf16.gmra.mxu0 %v663
      %v677 = vpop.f32.mrf.mxu0
      %v678 = vadd.f32 0.0, %v677
      %v679 = vpop.f32.mrf.mxu0
      %680 = vdwg.mxu0
      %681 = vrot.lane.b32.xlu0 %v562, 104
      %v682 = vpop.permute.xlu0 %681
      %683 = vrot.lane.b32.xlu0 %v567, 104
      %v684 = vpop.permute.xlu0 %683
      %v686 = vsel %vm508, %v682, 0
      %v689 = vsel %vm508, %v684, 0
      %691 = vmatpush.bf16.xpose.msra.mxu0 0
      %692 = vmatpush.bf16.xpose.msra.mxu0 0
      %693 = vmatpush.bf16.xpose.msra.mxu0 0
      %694 = vmatpush.bf16.xpose.msra.mxu0 0
      %695 = vmatpush.bf16.xpose.msra.mxu0 0
      %696 = vmatpush.bf16.xpose.msra.mxu0 0
      %697 = vmatpush.bf16.xpose.msra.mxu0 0
      %698 = vmatpush.bf16.xpose.msra.mxu0 %v689
      %699 = vmatmul.bf16.gmra.mxu0 %v686
      %v700 = vpop.f32.mrf.mxu0
      %v701 = vadd.f32 0.0, %v700
      %v702 = vpop.f32.mrf.mxu0
      %703 = vdwg.mxu0
      %v704 = vsel %vm508, %v701, -inf
      %705 = vmax.xlane.f32.xlu0 %v704
      %v706 = vpop.xlane.xlu0 %705
      %v707 = vsub.f32 %v701, %v706
      %v708 = vmul.f32 %v707, 1.442695
      %v709 = vpow.pop %v708
      %v710 = vsel %vm508, %v709, 0.0
      %711 = vadd.xlane.f32.xlu0 %v710
      %v712 = vpop.xlane.xlu0 %711
      %v713 = vrcp.pop %v712
      %v714 = vmul.f32 %v709, %v713
      %v715 = vpack.c.bf16 %v714, %v714
      %716 = vrot.lane.b32.xlu0 %v603, 104
      %v717 = vpop.permute.xlu0 %716
      %v719 = vsel %vm508, %v715, 0
      %v722 = vsel %vm543, %v717, 0
      %724 = vmatpush.bf16.msra.mxu0 0
      %725 = vmatpush.bf16.msra.mxu0 0
      %726 = vmatpush.bf16.msra.mxu0 0
      %727 = vmatpush.bf16.msra.mxu0 0
      %728 = vmatpush.bf16.msra.mxu0 0
      %729 = vmatpush.bf16.msra.mxu0 0
      %730 = vmatpush.bf16.msra.mxu0 0
      %731 = vmatpush.bf16.msra.mxu0 %v722
      %732 = vmatmul.bf16.gmra.mxu0 %v719
      %v733 = vpop.f32.mrf.mxu0
      %v734 = vadd.f32 0.0, %v733
      %v735 = vpop.f32.mrf.mxu0
      %736 = vdwg.mxu0
      %738 = vrot.lane.b32.xlu0 %v622, 8
      %v739 = vpop.permute.xlu0 %738
      %742 = vrot.lane.b32.xlu0 %v678, 16
      %v743 = vpop.permute.xlu0 %742
      %746 = vrot.lane.b32.xlu0 %v734, 24
      %v747 = vpop.permute.xlu0 %746
      %v749 = vsel %vm508, %v557, %v739
      %vm750 = vcmask 130048
      %v751 = vsel %vm750, %v749, %v743
      %vm752 = vcmask 195584
      %v753 = vsel %vm752, %v751, %v747
      %v754 = vpack.c.bf16 %v753, %v753
      %v755 = vld [vmem:[%s7] sm:$0xf]
      %v756 = vld [vmem:[%s7 + $0x4] sm:$0xf]
      %v757 = vld [vmem:[%s7 + $0x8] sm:$0xf]
      %v758 = vld [vmem:[%s7 + $0xc] sm:$0xf]
      %v763 = vunpack.c.l.b16 %v755
      %v764 = vunpack.c.l.b16 %v756
      %v765 = vunpack.c.l.b16 %v757
      %v766 = vunpack.c.l.b16 %v758
      %v767 = vpack.c.b16 %v764, %v763
      %v768 = vpack.c.b16 %v766, %v765
      %v772 = vsel %vm430, %v754, 0
      %774 = vmatpush.bf16.msra.mxu0 0
      %775 = vmatpush.bf16.msra.mxu0 0
      %776 = vmatpush.bf16.msra.mxu0 0
      %777 = vmatpush.bf16.msra.mxu0 0
      %778 = vmatpush.bf16.msra.mxu0 0
      %779 = vmatpush.bf16.msra.mxu0 0
      %780 = vmatpush.bf16.msra.mxu0 %v768
      %781 = vmatpush.bf16.msra.mxu0 %v767
      %782 = vmatmul.bf16.gmra.mxu0 %v772
      %v783 = vpop.f32.mrf.mxu0
      %v784 = vadd.f32 0.0, %v783
      %v785 = vpop.f32.mrf.mxu0
      %786 = vdwg.mxu0
      %v787 = vadd.f32 %v427, %v784
      %v788 = vld [vmem:[%s8] sm:$0x1]
      %v790 = vperm.slane %v788, 0
      %v792 = vadd.f32 %v787, %v790
      %793 = vst.msk [vmem:[%s425] sm:$0xff] %vm430, %v792
      %p794 = scmp.lt.s32.totalorder %s24, 1
      %s795 = scalar_select %p794, %s24, 1
      %p796 = scmp.lt.s32.totalorder %s25, 1
      %s797 = scalar_select %p796, %s25, 1
      %s798 = smul.addr %s795, 2
      %s799 = sadd.s32 %s797, %s798
      %s800 = smul.addr %s799, 8
      %s801 = scalar_lea.vmem %s9, %s800
      // Predicated region
      $region57: #{decoder_forward.13} parent=55 // pred_check
        %p802 = pneg %p268
      $region58: #{decoder_forward.13} parent=55 // pred_check_branch
        %804 = sbr.rel (%p802) target = $region60
      $region59: #{decoder_forward.13} parent=55 // pred_region
        _
      $region60: #{decoder_forward.13} parent=55 // pred_fallthru
        _
    $region56: #{decoder_forward.13} parent=5 // pred_fallthru
      _
    %p805 = scmp.le.s32.totalorder 2, %s15
    // Predicated region
    $region61: #{decoder_forward.13} parent=5 // pred_check
      %p806 = pneg %p805
    $region62: #{decoder_forward.13} parent=5 // pred_check_branch
      %808 = sbr.rel (%p806) target = $region64
    $region63: #{decoder_forward.13} parent=5 // pred_region
      %s809 = ssub.s32 %s15, 2
      // Predicated region
      $region65: #{decoder_forward.13} parent=63 // pred_check
        %p810 = pneg %p274
      $region66: #{decoder_forward.13} parent=63 // pred_check_branch
        %812 = sbr.rel (%p810) target = $region68
      $region67: #{decoder_forward.13} parent=63 // pred_region
        %p813 = scmp.lt.s32.totalorder %s26, 1
        %s814 = scalar_select %p813, %s26, 1
        %p815 = scmp.lt.s32.totalorder %s27, 1
        %s816 = scalar_select %p815, %s27, 1
        %s817 = smul.addr %s814, 2
        %s818 = sadd.s32 %s816, %s817
        %s819 = smul.addr %s818, 8
        %s820 = scalar_lea.vmem %s9, %s819
      $region68: #{decoder_forward.13} parent=63 // pred_fallthru
        _
    $region64: #{decoder_forward.13} parent=5 // pred_fallthru
      _
  $region6: #{decoder_forward.13} parent=0 // loop_footer
    %s19 = sadd.s32 1, %s15
  $region7: #{decoder_forward.13} parent=0 // loop_footer_branch
    %14 = sbr.rel target = $region3
  $region8: #{decoder_forward.13} parent=0 // loop_exit
    _

// kernel: decoder_forward.14
$region0: #{decoder_forward.14}
  #allocation0 [shape = 'u32[]', space=smem, size = 0x4, offset = 0x4, fixed_abs, tag = 'smem constant byte address 0x4 - core index']
  #allocation1 [shape = 'u32[72,128]{1,0:T(1,128)}', space=vmem, size = 0x9000, scoped, tag = 'internal scratch']
  %s0 = inlined_call_operand.vmem [shape: f32[2,2,8,32], index: 0, kind: input, shape index: {}]
  %s1 = inlined_call_operand.vmem [shape: bf16[2,16,32], index: 1, kind: input, shape index: {}]
  %s2 = inlined_call_operand.vmem [shape: bf16[2,16,32], index: 2, kind: input, shape index: {}]
  %s3 = inlined_call_operand.vmem [shape: f32[1,1,32], index: 3, kind: input, shape index: {}]
  %s4 = inlined_call_operand.vmem [shape: f32[1,1,32], index: 4, kind: input, shape index: {}]
  %s5 = inlined_call_operand.hbm [shape: bf16[32,32], index: 5, kind: input, shape index: {}]
  %s6 = inlined_call_operand.vmem [shape: f32[1,32], index: 6, kind: input, shape index: {}]
  %s7 = inlined_call_operand.hbm [shape: bf16[32,32], index: 7, kind: input, shape index: {}]
  %s8 = inlined_call_operand.vmem [shape: f32[1,32], index: 8, kind: input, shape index: {}]
  %s9 = inlined_call_operand.vmem [shape: f32[2,2,8,32], index: 9, kind: output, shape index: {}]
  %s10 = sld [smem:[#allocation0]]
  $region77: #{decoder_forward.14} parent=0
    _
  %s12 = ssub.s32 1, %s10
  %s13 = scalar_select 0, %s12, %s10
  $region1: #{decoder_forward.14} parent=0
    #allocation2 [shape = 'u8[8192]{0}', space=vmem, size = 0x2000, scoped, tag = 'input window, operand 5, single buffered']
    #allocation3 [shape = 's32[2]{0}', space=sflag, size = 0x8, scoped, tag = 'scoped memory for decoder_forward.14']
    #allocation4 [shape = 'u8[8192]{0}', space=vmem, size = 0x2000, scoped, tag = 'input window, operand 7, single buffered']
    #allocation5 [shape = 's32[1]{0}', space=sflag, size = 0x4, scoped, tag = 'scoped memory for decoder_forward.14']
    %14 = vsyncpa [#allocation3], 0
    %15 = vsyncpa [#allocation5], 0
    loop: start=0, step=1, limit=6
    $region2: #{decoder_forward.14} parent=1 // loop_pre_header
      _
    $region3: #{decoder_forward.14} parent=1 // loop_header
      %s17 = sphi 0, %s21
      %p18 = scmp.ge.s32.totalorder %s17, 6
      %s24 = sphi 0, %s36
      %s25 = sphi 0, %s32
      %s26 = sphi 0, %s24
      %s27 = sphi 0, %s25
      %s28 = sphi 0, %s26
      %s29 = sphi 0, %s27
      %s41 = sphi 0, %s43
      %s44 = sphi 0, %s41
      %s45 = sphi 0, %s44
      %s61 = sphi 0, %s45
      %s67 = sphi 0, %s69
      %s70 = sphi 0, %s67
      %s71 = sphi 0, %s70
      %s87 = sphi 0, %s71
      %s93 = sphi 0, %s95
      %s96 = sphi 0, %s93
      %s97 = sphi 0, %s96
      %s113 = sphi 0, %s97
      %s117 = sphi 0, %s117
      %s119 = sphi 0, %s117
      %s120 = sphi 0, %s119
      %s134 = sphi 0, %s120
      %s138 = sphi 0, %s138
      %s140 = sphi 0, %s138
      %s141 = sphi 0, %s140
      %s155 = sphi 0, %s141
      %s159 = sphi 0, %s159
      %s161 = sphi 0, %s159
      %s162 = sphi 0, %s161
      %s176 = sphi 0, %s162
      %s180 = sphi 0, %s180
      %s182 = sphi 0, %s180
      %s183 = sphi 0, %s182
      %s197 = sphi 0, %s183
      %s201 = sphi 0, %s201
      %s203 = sphi 0, %s201
      %s204 = sphi 0, %s203
      %s218 = sphi 0, %s204
      %s222 = sphi 0, %s222
      %s224 = sphi 0, %s222
      %s225 = sphi 0, %s224
      %s239 = sphi 0, %s225
      %s247 = sphi 0, %s249
      %s250 = sphi 0, %s247
      %s251 = sphi 0, %s250
      %s267 = sphi 0, %s251
    $region4: #{decoder_forward.14} parent=1 // loop_header_branch
      %20 = sbr.rel (%p18) target = $region8
    $region5: #{decoder_forward.14} parent=1 // loop_body
      %s22 = ssub.s32 %s17, 1
      %s23 = ssub.s32 %s17, 2
      %s30 = sadd.s32 1, %s25
      %p31 = scmp.ge.s32.totalorder %s30, 2
      %s32 = scalar_select %p31, 0, %s30
      %s33 = sadd.s32 1, %s24
      %s34 = scalar_select %p31, %s33, %s24
      %p35 = scmp.ge.s32.totalorder %s34, 2
      %s36 = scalar_select %p35, 0, %s34
      %s37 = ssub.s32 %s24, %s36
      %s38 = ssub.s32 %s25, %s32
      %s39 = sor.u32 %s37, %s38
      %p40 = scmp.eq.s32.totalorder %s39, 0
      %s42 = sadd.s32 %s41, 1
      %s43 = scalar_select %p40, %s41, %s42
      %p46 = pneg %p40
      %p47 = scmp.eq.s32.totalorder %s17, 3
      %p48 = por %p46, %p47
      %p49 = scmp.ne.s32.totalorder %s41, %s44
      %p50 = scmp.eq.s32.totalorder %s17, 0
      %p51 = por %p49, %p50
      %p52 = scmp.ne.s32.totalorder %s41, %s44
      %p53 = scmp.eq.s32.totalorder %s22, 3
      %p54 = por %p52, %p53
      %p55 = scmp.ne.s32.totalorder %s44, %s45
      %p56 = scmp.eq.s32.totalorder %s22, 0
      %p57 = por %p55, %p56
      %p58 = scmp.ne.s32.totalorder %s44, %s45
      %p59 = scmp.eq.s32.totalorder %s23, 3
      %p60 = por %p58, %p59
      %p62 = scmp.ne.s32.totalorder %s45, %s61
      %p63 = scmp.eq.s32.totalorder %s23, 0
      %p64 = por %p62, %p63
      %s65 = ssub.s32 %s25, %s32
      %p66 = scmp.eq.s32.totalorder %s65, 0
      %s68 = sadd.s32 %s67, 1
      %s69 = scalar_select %p66, %s67, %s68
      %p72 = pneg %p66
      %p73 = scmp.eq.s32.totalorder %s17, 3
      %p74 = por %p72, %p73
      %p75 = scmp.ne.s32.totalorder %s67, %s70
      %p76 = scmp.eq.s32.totalorder %s17, 0
      %p77 = por %p75, %p76
      %p78 = scmp.ne.s32.totalorder %s67, %s70
      %p79 = scmp.eq.s32.totalorder %s22, 3
      %p80 = por %p78, %p79
      %p81 = scmp.ne.s32.totalorder %s70, %s71
      %p82 = scmp.eq.s32.totalorder %s22, 0
      %p83 = por %p81, %p82
      %p84 = scmp.ne.s32.totalorder %s70, %s71
      %p85 = scmp.eq.s32.totalorder %s23, 3
      %p86 = por %p84, %p85
      %p88 = scmp.ne.s32.totalorder %s71, %s87
      %p89 = scmp.eq.s32.totalorder %s23, 0
      %p90 = por %p88, %p89
      %s91 = ssub.s32 %s25, %s32
      %p92 = scmp.eq.s32.totalorder %s91, 0
      %s94 = sadd.s32 %s93, 1
      %s95 = scalar_select %p92, %s93, %s94
      %p98 = pneg %p92
      %p99 = scmp.eq.s32.totalorder %s17, 3
      %p100 = por %p98, %p99
      %p101 = scmp.ne.s32.totalorder %s93, %s96
      %p102 = scmp.eq.s32.totalorder %s17, 0
      %p103 = por %p101, %p102
      %p104 = scmp.ne.s32.totalorder %s93, %s96
      %p105 = scmp.eq.s32.totalorder %s22, 3
      %p106 = por %p104, %p105
      %p107 = scmp.ne.s32.totalorder %s96, %s97
      %p108 = scmp.eq.s32.totalorder %s22, 0
      %p109 = por %p107, %p108
      %p110 = scmp.ne.s32.totalorder %s96, %s97
      %p111 = scmp.eq.s32.totalorder %s23, 3
      %p112 = por %p110, %p111
      %p114 = scmp.ne.s32.totalorder %s97, %s113
      %p115 = scmp.eq.s32.totalorder %s23, 0
      %p116 = por %p114, %p115
      %s118 = sadd.s32 %s117, 1
      %p121 = scmp.eq.s32.totalorder %s17, 3
      %p122 = scmp.ne.s32.totalorder %s117, %s119
      %p123 = scmp.eq.s32.totalorder %s17, 0
      %p124 = por %p122, %p123
      %p125 = scmp.ne.s32.totalorder %s117, %s119
      %p126 = scmp.eq.s32.totalorder %s22, 3
      %p127 = por %p125, %p126
      %p128 = scmp.ne.s32.totalorder %s119, %s120
      %p129 = scmp.eq.s32.totalorder %s22, 0
      %p130 = por %p128, %p129
      %p131 = scmp.ne.s32.totalorder %s119, %s120
      %p132 = scmp.eq.s32.totalorder %s23, 3
      %p133 = por %p131, %p132
      %p135 = scmp.ne.s32.totalorder %s120, %s134
      %p136 = scmp.eq.s32.totalorder %s23, 0
      %p137 = por %p135, %p136
      %s139 = sadd.s32 %s138, 1
      %p142 = scmp.eq.s32.totalorder %s17, 3
      %p143 = scmp.ne.s32.totalorder %s138, %s140
      %p144 = scmp.eq.s32.totalorder %s17, 0
      %p145 = por %p143, %p144
      %p146 = scmp.ne.s32.totalorder %s138, %s140
      %p147 = scmp.eq.s32.totalorder %s22, 3
      %p148 = por %p146, %p147
      %p149 = scmp.ne.s32.totalorder %s140, %s141
      %p150 = scmp.eq.s32.totalorder %s22, 0
      %p151 = por %p149, %p150
      %p152 = scmp.ne.s32.totalorder %s140, %s141
      %p153 = scmp.eq.s32.totalorder %s23, 3
      %p154 = por %p152, %p153
      %p156 = scmp.ne.s32.totalorder %s141, %s155
      %p157 = scmp.eq.s32.totalorder %s23, 0
      %p158 = por %p156, %p157
      %s160 = sadd.s32 %s159, 1
      %p163 = scmp.eq.s32.totalorder %s17, 3
      %p164 = scmp.ne.s32.totalorder %s159, %s161
      %p165 = scmp.eq.s32.totalorder %s17, 0
      %p166 = por %p164, %p165
      %p167 = scmp.ne.s32.totalorder %s159, %s161
      %p168 = scmp.eq.s32.totalorder %s22, 3
      %p169 = por %p167, %p168
      %p170 = scmp.ne.s32.totalorder %s161, %s162
      %p171 = scmp.eq.s32.totalorder %s22, 0
      %p172 = por %p170, %p171
      %p173 = scmp.ne.s32.totalorder %s161, %s162
      %p174 = scmp.eq.s32.totalorder %s23, 3
      %p175 = por %p173, %p174
      %p177 = scmp.ne.s32.totalorder %s162, %s176
      %p178 = scmp.eq.s32.totalorder %s23, 0
      %p179 = por %p177, %p178
      %s181 = sadd.s32 %s180, 1
      %p184 = scmp.eq.s32.totalorder %s17, 3
      %p185 = scmp.ne.s32.totalorder %s180, %s182
      %p186 = scmp.eq.s32.totalorder %s17, 0
      %p187 = por %p185, %p186
      %p188 = scmp.ne.s32.totalorder %s180, %s182
      %p189 = scmp.eq.s32.totalorder %s22, 3
      %p190 = por %p188, %p189
      %p191 = scmp.ne.s32.totalorder %s182, %s183
      %p192 = scmp.eq.s32.totalorder %s22, 0
      %p193 = por %p191, %p192
      %p194 = scmp.ne.s32.totalorder %s182, %s183
      %p195 = scmp.eq.s32.totalorder %s23, 3
      %p196 = por %p194, %p195
      %p198 = scmp.ne.s32.totalorder %s183, %s197
      %p199 = scmp.eq.s32.totalorder %s23, 0
      %p200 = por %p198, %p199
      %s202 = sadd.s32 %s201, 1
      %p205 = scmp.eq.s32.totalorder %s17, 3
      %p206 = scmp.ne.s32.totalorder %s201, %s203
      %p207 = scmp.eq.s32.totalorder %s17, 0
      %p208 = por %p206, %p207
      %p209 = scmp.ne.s32.totalorder %s201, %s203
      %p210 = scmp.eq.s32.totalorder %s22, 3
      %p211 = por %p209, %p210
      %p212 = scmp.ne.s32.totalorder %s203, %s204
      %p213 = scmp.eq.s32.totalorder %s22, 0
      %p214 = por %p212, %p213
      %p215 = scmp.ne.s32.totalorder %s203, %s204
      %p216 = scmp.eq.s32.totalorder %s23, 3
      %p217 = por %p215, %p216
      %p219 = scmp.ne.s32.totalorder %s204, %s218
      %p220 = scmp.eq.s32.totalorder %s23, 0
      %p221 = por %p219, %p220
      %s223 = sadd.s32 %s222, 1
      %p226 = scmp.eq.s32.totalorder %s17, 3
      %p227 = scmp.ne.s32.totalorder %s222, %s224
      %p228 = scmp.eq.s32.totalorder %s17, 0
      %p229 = por %p227, %p228
      %p230 = scmp.ne.s32.totalorder %s222, %s224
      %p231 = scmp.eq.s32.totalorder %s22, 3
      %p232 = por %p230, %p231
      %p233 = scmp.ne.s32.totalorder %s224, %s225
      %p234 = scmp.eq.s32.totalorder %s22, 0
      %p235 = por %p233, %p234
      %p236 = scmp.ne.s32.totalorder %s224, %s225
      %p237 = scmp.eq.s32.totalorder %s23, 3
      %p238 = por %p236, %p237
      %p240 = scmp.ne.s32.totalorder %s225, %s239
      %p241 = scmp.eq.s32.totalorder %s23, 0
      %p242 = por %p240, %p241
      %s243 = ssub.s32 %s24, %s36
      %s244 = ssub.s32 %s25, %s32
      %s245 = sor.u32 %s243, %s244
      %p246 = scmp.eq.s32.totalorder %s245, 0
      %s248 = sadd.s32 %s247, 1
      %s249 = scalar_select %p246, %s247, %s248
      %p252 = pneg %p246
      %p253 = scmp.eq.s32.totalorder %s17, 3
      %p254 = por %p252, %p253
      %p255 = scmp.ne.s32.totalorder %s247, %s250
      %p256 = scmp.eq.s32.totalorder %s17, 0
      %p257 = por %p255, %p256
      %p258 = scmp.ne.s32.totalorder %s247, %s250
      %p259 = scmp.eq.s32.totalorder %s22, 3
      %p260 = por %p258, %p259
      %p261 = scmp.ne.s32.totalorder %s250, %s251
      %p262 = scmp.eq.s32.totalorder %s22, 0
      %p263 = por %p261, %p262
      %p264 = scmp.ne.s32.totalorder %s250, %s251
      %p265 = scmp.eq.s32.totalorder %s23, 3
      %p266 = por %p264, %p265
      %p268 = scmp.ne.s32.totalorder %s251, %s267
      %p269 = scmp.eq.s32.totalorder %s23, 0
      %p270 = por %p268, %p269
      %p271 = scmp.le.s32.totalorder 1, %s17
      %p272 = scmp.lt.s32.totalorder %s17, 5
      %p273 = pnand %p271, %p272
      %p274 = pneg %p273
      // Predicated region
      $region9: #{decoder_forward.14} parent=5 // pred_check
        _
      $region10: #{decoder_forward.14} parent=5 // pred_check_branch
        %276 = sbr.rel (%p273) target = $region12
      $region11: #{decoder_forward.14} parent=5 // pred_region
        %s277 = ssub.s32 %s17, 1
        // Predicated region
        $region13: #{decoder_forward.14} parent=11 // pred_check
          %p278 = pneg %p130
        $region14: #{decoder_forward.14} parent=11 // pred_check_branch
          %280 = sbr.rel (%p278) target = $region16
        $region15: #{decoder_forward.14} parent=11 // pred_region
          _
        $region16: #{decoder_forward.14} parent=11 // pred_fallthru
          _
        // Predicated region
        $region17: #{decoder_forward.14} parent=11 // pred_check
          %p281 = pneg %p151
        $region18: #{decoder_forward.14} parent=11 // pred_check_branch
          %283 = sbr.rel (%p281) target = $region20
        $region19: #{decoder_forward.14} parent=11 // pred_region
          _
        $region20: #{decoder_forward.14} parent=11 // pred_fallthru
          _
        // Predicated region
        $region21: #{decoder_forward.14} parent=11 // pred_check
          %p284 = pneg %p172
        $region22: #{decoder_forward.14} parent=11 // pred_check_branch
          %286 = sbr.rel (%p284) target = $region24
        $region23: #{decoder_forward.14} parent=11 // pred_region
          %288 = vsyncadd [#allocation3], 0
          %s289 = sshll.u32 %s5, 4
          %s290 = int_to_ptr.hbm [resolvable:$true] %s289
          %s291 = sshll.u32 [#allocation2], 4
          %s292 = int_to_ptr.vmem [resolvable:$true] %s291
          %297 = dma.hbm_to_vmem [thread:$0]  %s290, 256, %s292, [#allocation3], 64, 64, 4
        $region24: #{decoder_forward.14} parent=11 // pred_fallthru
          _
        // Predicated region
        $region25: #{decoder_forward.14} parent=11 // pred_check
          %p298 = pneg %p193
        $region26: #{decoder_forward.14} parent=11 // pred_check_branch
          %300 = sbr.rel (%p298) target = $region28
        $region27: #{decoder_forward.14} parent=11 // pred_region
          _
        $region28: #{decoder_forward.14} parent=11 // pred_fallthru
          _
        // Predicated region
        $region29: #{decoder_forward.14} parent=11 // pred_check
          %p301 = pneg %p214
        $region30: #{decoder_forward.14} parent=11 // pred_check_branch
          %303 = sbr.rel (%p301) target = $region32
        $region31: #{decoder_forward.14} parent=11 // pred_region
          %305 = vsyncadd [#allocation5], 0
          %s306 = sshll.u32 %s7, 4
          %s307 = int_to_ptr.hbm [resolvable:$true] %s306
          %s308 = sshll.u32 [#allocation4], 4
          %s309 = int_to_ptr.vmem [resolvable:$true] %s308
          %314 = dma.hbm_to_vmem [thread:$0]  %s307, 256, %s309, [#allocation5], 64, 64, 4
        $region32: #{decoder_forward.14} parent=11 // pred_fallthru
          _
        // Predicated region
        $region33: #{decoder_forward.14} parent=11 // pred_check
          %p315 = pneg %p235
        $region34: #{decoder_forward.14} parent=11 // pred_check_branch
          %317 = sbr.rel (%p315) target = $region36
        $region35: #{decoder_forward.14} parent=11 // pred_region
          _
        $region36: #{decoder_forward.14} parent=11 // pred_fallthru
          _
      $region12: #{decoder_forward.14} parent=5 // pred_fallthru
        _
      %p318 = scmp.lt.s32.totalorder %s17, 4
      // Predicated region
      $region37: #{decoder_forward.14} parent=5 // pred_check
        %p319 = pneg %p318
      $region38: #{decoder_forward.14} parent=5 // pred_check_branch
        %321 = sbr.rel (%p319) target = $region40
      $region39: #{decoder_forward.14} parent=5 // pred_region
        // Predicated region
        $region41: #{decoder_forward.14} parent=39 // pred_check
          %p322 = pneg %p51
        $region42: #{decoder_forward.14} parent=39 // pred_check_branch
          %324 = sbr.rel (%p322) target = $region44
        $region43: #{decoder_forward.14} parent=39 // pred_region
          %p325 = scmp.lt.s32.totalorder %s24, 1
          %s326 = scalar_select %p325, %s24, 1
          %p327 = scmp.lt.s32.totalorder %s25, 1
          %s328 = scalar_select %p327, %s25, 1
          %s329 = smul.addr %s326, 2
          %s330 = sadd.s32 %s328, %s329
          %s331 = smul.addr %s330, 8
          %s332 = scalar_lea.vmem %s0, %s331
        $region44: #{decoder_forward.14} parent=39 // pred_fallthru
          _
        // Predicated region
        $region45: #{decoder_forward.14} parent=39 // pred_check
          %p333 = pneg %p77
        $region46: #{decoder_forward.14} parent=39 // pred_check_branch
          %335 = sbr.rel (%p333) target = $region48
        $region47: #{decoder_forward.14} parent=39 // pred_region
          %p336 = scmp.lt.s32.totalorder %s25, 1
          %s337 = scalar_select %p336, %s25, 1
          %s338 = smul.addr %s337, 2
          %s339 = smul.addr %s338, 4
          %s340 = scalar_lea.vmem %s1, %s339
        $region48: #{decoder_forward.14} parent=39 // pred_fallthru
          _
        // Predicated region
        $region49: #{decoder_forward.14} parent=39 // pred_check
          %p341 = pneg %p103
        $region50: #{decoder_forward.14} parent=39 // pred_check_branch
          %343 = sbr.rel (%p341) target = $region52
        $region51: #{decoder_forward.14} parent=39 // pred_region
          %p344 = scmp.lt.s32.totalorder %s25, 1
          %s345 = scalar_select %p344, %s25, 1
          %s346 = smul.addr %s345, 2
          %s347 = smul.addr %s346, 4
          %s348 = scalar_lea.vmem %s2, %s347
        $region52: #{decoder_forward.14} parent=39 // pred_fallthru
          _
      $region40: #{decoder_forward.14} parent=5 // pred_fallthru
        _
      %p349 = scmp.le.s32.totalorder 1, %s17
      %p350 = scmp.lt.s32.totalorder %s17, 5
      %p351 = pnand %p349, %p350
      %p352 = pneg %p351
      // Predicated region
      $region53: #{decoder_forward.14} parent=5 // pred_check
        _
      $region54: #{decoder_forward.14} parent=5 // pred_check_branch
        %354 = sbr.rel (%p351) target = $region56
      $region55: #{decoder_forward.14} parent=5 // pred_region
        %s355 = ssub.s32 %s17, 1
        // Predicated region
        $region57: #{decoder_forward.14} parent=55 // pred_check
          %p356 = pneg %p172
        $region58: #{decoder_forward.14} parent=55 // pred_check_branch
          %358 = sbr.rel (%p356) target = $region60
        $region59: #{decoder_forward.14} parent=55 // pred_region
          %360 = dma.done [#allocation3], 256
        $region60: #{decoder_forward.14} parent=55 // pred_fallthru
          _
        // Predicated region
        $region61: #{decoder_forward.14} parent=55 // pred_check
          %p361 = pneg %p214
        $region62: #{decoder_forward.14} parent=55 // pred_check_branch
          %363 = sbr.rel (%p361) target = $region64
        $region63: #{decoder_forward.14} parent=55 // pred_region
          %365 = dma.done [#allocation5], 256
        $region64: #{decoder_forward.14} parent=55 // pred_fallthru
          _
        %p366 = scmp.lt.s32.totalorder %s26, 1
        %s367 = scalar_select %p366, %s26, 1
        %p368 = scmp.lt.s32.totalorder %s27, 1
        %s369 = scalar_select %p368, %s27, 1
        %s370 = smul.addr %s367, 2
        %s371 = sadd.s32 %s369, %s370
        %s372 = smul.addr %s371, 8
        %s373 = scalar_lea.vmem %s0, %s372
        %p374 = pneg %p57
        %p375 = pneg %p54
        %p376 = scmp.lt.s32.totalorder %s27, 1
        %s377 = scalar_select %p376, %s27, 1
        %s378 = smul.addr %s377, 2
        %s379 = smul.addr %s378, 4
        %s380 = scalar_lea.vmem %s1, %s379
        %p381 = pneg %p83
        %p382 = pneg %p80
        %p383 = scmp.lt.s32.totalorder %s27, 1
        %s384 = scalar_select %p383, %s27, 1
        %s385 = smul.addr %s384, 2
        %s386 = smul.addr %s385, 4
        %s387 = scalar_lea.vmem %s2, %s386
        %p388 = pneg %p109
        %p389 = pneg %p106
        %p390 = pneg %p130
        %p391 = pneg %p127
        %p392 = pneg %p151
        %p393 = pneg %p148
        %p394 = pneg %p172
        %p395 = pneg %p169
        %p396 = pneg %p193
        %p397 = pneg %p190
        %p398 = pneg %p214
        %p399 = pneg %p211
        %p400 = pneg %p235
        %p401 = pneg %p232
        %p402 = pneg %p263
        %p403 = pneg %p260
        %p404 = scmp.lt.s32.totalorder %s26, 1
        %s405 = scalar_select %p404, %s26, 1
        %p406 = scmp.lt.s32.totalorder %s27, 1
        %s407 = scalar_select %p406, %s27, 1
        %s408 = smul.addr %s405, 2
        %s409 = sadd.s32 %s407, %s408
        %s410 = smul.addr %s409, 8
        %s411 = scalar_lea.vmem %s9, %s410
        %p412 = scmp.lt.s32.totalorder %s26, 1
        %s413 = scalar_select %p412, %s26, 1
        %p414 = scmp.lt.s32.totalorder %s27, 1
        %s415 = scalar_select %p414, %s27, 1
        %s416 = smul.addr %s413, 2
        %s417 = sadd.s32 %s415, %s416
        %s418 = smul.addr %s417, 8
        %s419 = scalar_lea.vmem %s0, %s418
        %p420 = scmp.lt.s32.totalorder %s27, 1
        %s421 = scalar_select %p420, %s27, 1
        %s422 = smul.addr %s421, 2
        %s423 = smul.addr %s422, 4
        %s424 = scalar_lea.vmem %s1, %s423
        %p425 = scmp.lt.s32.totalorder %s27, 1
        %s426 = scalar_select %p425, %s27, 1
        %s427 = smul.addr %s426, 2
        %s428 = smul.addr %s427, 4
        %s429 = scalar_lea.vmem %s2, %s428
        %p430 = scmp.lt.s32.totalorder %s26, 1
        %s431 = scalar_select %p430, %s26, 1
        %p432 = scmp.lt.s32.totalorder %s27, 1
        %s433 = scalar_select %p432, %s27, 1
        %s434 = smul.addr %s431, 2
        %s435 = sadd.s32 %s433, %s434
        %s436 = smul.addr %s435, 8
        %s437 = scalar_lea.vmem %s9, %s436
        %v439 = vld [vmem:[%s419] sm:$0xff]
        %v440 = vld [vmem:[%s3] sm:$0x1]
        %v441 = vld [vmem:[%s4] sm:$0x1]
        %vm442 = vcmask 261120
        %v443 = vsel %vm442, %v439, 0.0
        %444 = vadd.xlane.f32.xlu0 %v443
        %v445 = vpop.xlane.xlu0 %444
        %v446 = vrcp.pop 32.0
        %v447 = vmul.f32 32.0, %v446
        %v448 = vsub.f32 1.0, %v447
        %v449 = vmul.f32 %v446, %v448
        %v450 = vadd.f32 %v446, %v449
        %vm451 = vweird.f32 %v446
        %v452 = vsel %vm451, %v446, %v450
        %v453 = vmul.f32 %v445, %v452
        %v454 = vsub.f32 %v439, %v453
        %v455 = vmul.f32 %v454, %v454
        %v456 = vsel %vm442, %v455, 0.0
        %457 = vadd.xlane.f32.xlu0 %v456
        %v458 = vpop.xlane.xlu0 %457
        %v459 = vmul.f32 %v458, %v452
        %v460 = vadd.f32 %v459, 1e-05
        %v461 = vrsqrt.pop %v460
        %v462 = vmul.f32 %v461, %v460
        %v463 = vmul.f32 %v462, %v461
        %v464 = vmul.f32 0.5, %v463
        %v465 = vsub.f32 1.5, %v464
        %v466 = vmul.f32 %v461, %v465
        %vm467 = vweird.f32 %v460
        %vm468 = vweird.f32 %v461
        %vm469 = vmor %vm467, %vm468
        %v470 = vsel %vm469, %v461, %v466
        %v471 = vmul.f32 %v454, %v470
        %v473 = vperm.slane %v440, 0
        %v475 = vmul.f32 %v471, %v473
        %v477 = vperm.slane %v441, 0
        %v479 = vadd.f32 %v475, %v477
        %v480 = vpack.c.bf16 %v479, %v479
        %v481 = vld [vmem:[#allocation2] sm:$0xf]
        %v482 = vld [vmem:[#allocation2 + $0x4] sm:$0xf]
        %v483 = vld [vmem:[#allocation2 + $0x8] sm:$0xf]
        %v484 = vld [vmem:[#allocation2 + $0xc] sm:$0xf]
        %v485 = vld [vmem:[%s6] sm:$0x1]
        %v487 = vperm.slane %v485, 0
        %v493 = vunpack.c.l.b16 %v481
        %v494 = vunpack.c.l.b16 %v482
        %v495 = vunpack.c.l.b16 %v483
        %v496 = vunpack.c.l.b16 %v484
        %v497 = vpack.c.b16 %v494, %v493
        %v498 = vpack.c.b16 %v496, %v495
        %v502 = vsel %vm442, %v480, 0
        %504 = vmatpush.bf16.msra.mxu0 0
        %505 = vmatpush.bf16.msra.mxu0 0
        %506 = vmatpush.bf16.msra.mxu0 0
        %507 = vmatpush.bf16.msra.mxu0 0
        %508 = vmatpush.bf16.msra.mxu0 0
        %509 = vmatpush.bf16.msra.mxu0 0
        %510 = vmatpush.bf16.msra.mxu0 %v498
        %511 = vmatpush.bf16.msra.mxu0 %v497
        %512 = vmatmul.bf16.gmra.mxu0 %v502
        %v513 = vpop.f32.mrf.mxu0
        %v514 = vadd.f32 %v487, %v513
        %v515 = vpop.f32.mrf.mxu0
        %516 = vdwg.mxu0
        %v517 = vpack.c.bf16 %v514, %v514
        %v518 = vld [vmem:[%s424] sm:$0xf]
        %v519 = vld [vmem:[%s424 + $0x4] sm:$0xf]
        %v520 = vld [vmem:[%s429] sm:$0xf]
        %v521 = vld [vmem:[%s429 + $0x4] sm:$0xf]
        %v524 = vunpack.c.l.b16 %v518
        %v525 = vunpack.c.l.b16 %v519
        %v526 = vpack.c.b16 %v525, %v524
        %vm527 = vcmask 64512
        %v529 = vsel %vm527, %v517, 0
        %v532 = vsel %vm527, %v526, 0
        %534 = vmatpush.bf16.xpose.msra.mxu0 0
        %535 = vmatpush.bf16.xpose.msra.mxu0 0
        %536 = vmatpush.bf16.xpose.msra.mxu0 0
        %537 = vmatpush.bf16.xpose.msra.mxu0 0
        %538 = vmatpush.bf16.xpose.msra.mxu0 0
        %539 = vmatpush.bf16.xpose.msra.mxu0 0
        %540 = vmatpush.bf16.xpose.msra.mxu0 0
        %541 = vmatpush.bf16.xpose.msra.mxu0 %v532
        %542 = vmatmul.bf16.gmra.mxu0 %v529
        %v543 = vpop.f32.mrf.mxu0
        %v544 = vadd.f32 0.0, %v543
        %v545 = vpop.f32.mrf.mxu0
        %546 = vdwg.mxu0
        %vm547 = vcmask 130048
        %v548 = vsel %vm547, %v544, -inf
        %549 = vmax.xlane.f32.xlu0 %v548
        %v550 = vpop.xlane.xlu0 %549
        %v551 = vsub.f32 %v544, %v550
        %v552 = vmul.f32 %v551, 1.442695
        %v553 = vpow.pop %v552
        %v554 = vsel %vm547, %v553, 0.0
        %555 = vadd.xlane.f32.xlu0 %v554
        %v556 = vpop.xlane.xlu0 %555
        %v557 = vrcp.pop %v556
        %v558 = vmul.f32 %v553, %v557
        %v559 = vpack.c.bf16 %v558, %v558
        %v562 = vunpack.c.l.b16 %v520
        %v563 = vunpack.c.l.b16 %v521
        %v564 = vpack.c.b16 %v563, %v562
        %v567 = vsel %vm547, %v559, 0
        %569 = vmatpush.bf16.msra.mxu0 0
        %570 = vmatpush.bf16.msra.mxu0 0
        %571 = vmatpush.bf16.msra.mxu0 0
        %572 = vmatpush.bf16.msra.mxu0 0
        %573 = vmatpush.bf16.msra.mxu0 0
        %574 = vmatpush.bf16.msra.mxu0 0
        %575 = vmatpush.bf16.msra.mxu0 0
        %576 = vmatpush.bf16.msra.mxu0 %v564
        %577 = vmatmul.bf16.gmra.mxu0 %v567
        %v578 = vpop.f32.mrf.mxu0
        %v579 = vadd.f32 0.0, %v578
        %v580 = vpop.f32.mrf.mxu0
        %581 = vdwg.mxu0
        %v583 = vunpack.c.l.b16 %v517
        %v584 = vpack.c.b16 %v583, %v583
        %585 = vrot.lane.b32.xlu0 %v584, 120
        %v586 = vpop.permute.xlu0 %585
        %587 = vrot.lane.b32.xlu0 %v526, 120
        %v588 = vpop.permute.xlu0 %587
        %v590 = vsel %vm527, %v586, 0
        %v593 = vsel %vm527, %v588, 0
        %595 = vmatpush.bf16.xpose.msra.mxu0 0
        %596 = vmatpush.bf16.xpose.msra.mxu0 0
        %597 = vmatpush.bf16.xpose.msra.mxu0 0
        %598 = vmatpush.bf16.xpose.msra.mxu0 0
        %599 = vmatpush.bf16.xpose.msra.mxu0 0
        %600 = vmatpush.bf16.xpose.msra.mxu0 0
        %601 = vmatpush.bf16.xpose.msra.mxu0 0
        %602 = vmatpush.bf16.xpose.msra.mxu0 %v593
        %603 = vmatmul.bf16.gmra.mxu0 %v590
        %v604 = vpop.f32.mrf.mxu0
        %v605 = vadd.f32 0.0, %v604
        %v606 = vpop.f32.mrf.mxu0
        %607 = vdwg.mxu0
        %v608 = vsel %vm547, %v605, -inf
        %609 = vmax.xlane.f32.xlu0 %v608
        %v610 = vpop.xlane.xlu0 %609
        %v611 = vsub.f32 %v605, %v610
        %v612 = vmul.f32 %v611, 1.442695
        %v613 = vpow.pop %v612
        %v614 = vsel %vm547, %v613, 0.0
        %615 = vadd.xlane.f32.xlu0 %v614
        %v616 = vpop.xlane.xlu0 %615
        %v617 = vrcp.pop %v616
        %v618 = vmul.f32 %v613, %v617
        %v619 = vpack.c.bf16 %v618, %v618
        %620 = vrot.lane.b32.xlu0 %v564, 120
        %v621 = vpop.permute.xlu0 %620
        %v624 = vsel %vm547, %v619, 0
        %626 = vmatpush.bf16.msra.mxu0 0
        %627 = vmatpush.bf16.msra.mxu0 0
        %628 = vmatpush.bf16.msra.mxu0 0
        %629 = vmatpush.bf16.msra.mxu0 0
        %630 = vmatpush.bf16.msra.mxu0 0
        %631 = vmatpush.bf16.msra.mxu0 0
        %632 = vmatpush.bf16.msra.mxu0 0
        %633 = vmatpush.bf16.msra.mxu0 %v621
        %634 = vmatmul.bf16.gmra.mxu0 %v624
        %v635 = vpop.f32.mrf.mxu0
        %v636 = vadd.f32 0.0, %v635
        %v637 = vpop.f32.mrf.mxu0
        %638 = vdwg.mxu0
        %639 = vrot.lane.b32.xlu0 %v584, 112
        %v640 = vpop.permute.xlu0 %639
        %641 = vrot.lane.b32.xlu0 %v526, 112
        %v642 = vpop.permute.xlu0 %641
        %v644 = vsel %vm527, %v640, 0
        %v647 = vsel %vm527, %v642, 0
        %649 = vmatpush.bf16.xpose.msra.mxu0 0
        %650 = vmatpush.bf16.xpose.msra.mxu0 0
        %651 = vmatpush.bf16.xpose.msra.mxu0 0
        %652 = vmatpush.bf16.xpose.msra.mxu0 0
        %653 = vmatpush.bf16.xpose.msra.mxu0 0
        %654 = vmatpush.bf16.xpose.msra.mxu0 0
        %655 = vmatpush.bf16.xpose.msra.mxu0 0
        %656 = vmatpush.bf16.xpose.msra.mxu0 %v647
        %657 = vmatmul.bf16.gmra.mxu0 %v644
        %v658 = vpop.f32.mrf.mxu0
        %v659 = vadd.f32 0.0, %v658
        %v660 = vpop.f32.mrf.mxu0
        %661 = vdwg.mxu0
        %v662 = vsel %vm547, %v659, -inf
        %663 = vmax.xlane.f32.xlu0 %v662
        %v664 = vpop.xlane.xlu0 %663
        %v665 = vsub.f32 %v659, %v664
        %v666 = vmul.f32 %v665, 1.442695
        %v667 = vpow.pop %v666
        %v668 = vsel %vm547, %v667, 0.0
        %669 = vadd.xlane.f32.xlu0 %v668
        %v670 = vpop.xlane.xlu0 %669
        %v671 = vrcp.pop %v670
        %v672 = vmul.f32 %v667, %v671
        %v673 = vpack.c.bf16 %v672, %v672
        %674 = vrot.lane.b32.xlu0 %v564, 112
        %v675 = vpop.permute.xlu0 %674
        %v678 = vsel %vm547, %v673, 0
        %680 = vmatpush.bf16.msra.mxu0 0
        %681 = vmatpush.bf16.msra.mxu0 0
        %682 = vmatpush.bf16.msra.mxu0 0
        %683 = vmatpush.bf16.msra.mxu0 0
        %684 = vmatpush.bf16.msra.mxu0 0
        %685 = vmatpush.bf16.msra.mxu0 0
        %686 = vmatpush.bf16.msra.mxu0 0
        %687 = vmatpush.bf16.msra.mxu0 %v675
        %688 = vmatmul.bf16.gmra.mxu0 %v678
        %v689 = vpop.f32.mrf.mxu0
        %v690 = vadd.f32 0.0, %v689
        %v691 = vpop.f32.mrf.mxu0
        %692 = vdwg.mxu0
        %693 = vrot.lane.b32.xlu0 %v584, 104
        %v694 = vpop.permute.xlu0 %693
        %695 = vrot.lane.b32.xlu0 %v526, 104
        %v696 = vpop.permute.xlu0 %695
        %v698 = vsel %vm527, %v694, 0
        %v701 = vsel %vm527, %v696, 0
        %703 = vmatpush.bf16.xpose.msra.mxu0 0
        %704 = vmatpush.bf16.xpose.msra.mxu0 0
        %705 = vmatpush.bf16.xpose.msra.mxu0 0
        %706 = vmatpush.bf16.xpose.msra.mxu0 0
        %707 = vmatpush.bf16.xpose.msra.mxu0 0
        %708 = vmatpush.bf16.xpose.msra.mxu0 0
        %709 = vmatpush.bf16.xpose.msra.mxu0 0
        %710 = vmatpush.bf16.xpose.msra.mxu0 %v701
        %711 = vmatmul.bf16.gmra.mxu0 %v698
        %v712 = vpop.f32.mrf.mxu0
        %v713 = vadd.f32 0.0, %v712
        %v714 = vpop.f32.mrf.mxu0
        %715 = vdwg.mxu0
        %v716 = vsel %vm547, %v713, -inf
        %717 = vmax.xlane.f32.xlu0 %v716
        %v718 = vpop.xlane.xlu0 %717
        %v719 = vsub.f32 %v713, %v718
        %v720 = vmul.f32 %v719, 1.442695
        %v721 = vpow.pop %v720
        %v722 = vsel %vm547, %v721, 0.0
        %723 = vadd.xlane.f32.xlu0 %v722
        %v724 = vpop.xlane.xlu0 %723
        %v725 = vrcp.pop %v724
        %v726 = vmul.f32 %v721, %v725
        %v727 = vpack.c.bf16 %v726, %v726
        %728 = vrot.lane.b32.xlu0 %v564, 104
        %v729 = vpop.permute.xlu0 %728
        %v732 = vsel %vm547, %v727, 0
        %734 = vmatpush.bf16.msra.mxu0 0
        %735 = vmatpush.bf16.msra.mxu0 0
        %736 = vmatpush.bf16.msra.mxu0 0
        %737 = vmatpush.bf16.msra.mxu0 0
        %738 = vmatpush.bf16.msra.mxu0 0
        %739 = vmatpush.bf16.msra.mxu0 0
        %740 = vmatpush.bf16.msra.mxu0 0
        %741 = vmatpush.bf16.msra.mxu0 %v729
        %742 = vmatmul.bf16.gmra.mxu0 %v732
        %v743 = vpop.f32.mrf.mxu0
        %v744 = vadd.f32 0.0, %v743
        %v745 = vpop.f32.mrf.mxu0
        %746 = vdwg.mxu0
        %748 = vrot.lane.b32.xlu0 %v636, 8
        %v749 = vpop.permute.xlu0 %748
        %752 = vrot.lane.b32.xlu0 %v690, 16
        %v753 = vpop.permute.xlu0 %752
        %756 = vrot.lane.b32.xlu0 %v744, 24
        %v757 = vpop.permute.xlu0 %756
        %v759 = vsel %vm527, %v579, %v749
        %v760 = vsel %vm547, %v759, %v753
        %vm761 = vcmask 195584
        %v762 = vsel %vm761, %v760, %v757
        %v763 = vpack.c.bf16 %v762, %v762
        %v764 = vld [vmem:[#allocation4] sm:$0xf]
        %v765 = vld [vmem:[#allocation4 + $0x4] sm:$0xf]
        %v766 = vld [vmem:[#allocation4 + $0x8] sm:$0xf]
        %v767 = vld [vmem:[#allocation4 + $0xc] sm:$0xf]
        %v772 = vunpack.c.l.b16 %v764
        %v773 = vunpack.c.l.b16 %v765
        %v774 = vunpack.c.l.b16 %v766
        %v775 = vunpack.c.l.b16 %v767
        %v776 = vpack.c.b16 %v773, %v772
        %v777 = vpack.c.b16 %v775, %v774
        %v781 = vsel %vm442, %v763, 0
        %783 = vmatpush.bf16.msra.mxu0 0
        %784 = vmatpush.bf16.msra.mxu0 0
        %785 = vmatpush.bf16.msra.mxu0 0
        %786 = vmatpush.bf16.msra.mxu0 0
        %787 = vmatpush.bf16.msra.mxu0 0
        %788 = vmatpush.bf16.msra.mxu0 0
        %789 = vmatpush.bf16.msra.mxu0 %v777
        %790 = vmatpush.bf16.msra.mxu0 %v776
        %791 = vmatmul.bf16.gmra.mxu0 %v781
        %v792 = vpop.f32.mrf.mxu0
        %v793 = vadd.f32 0.0, %v792
        %v794 = vpop.f32.mrf.mxu0
        %795 = vdwg.mxu0
        %v796 = vadd.f32 %v439, %v793
        %v797 = vld [vmem:[%s8] sm:$0x1]
        %v799 = vperm.slane %v797, 0
        %v801 = vadd.f32 %v796, %v799
        %802 = vst.msk [vmem:[%s437] sm:$0xff] %vm442, %v801
        %p803 = scmp.lt.s32.totalorder %s26, 1
        %s804 = scalar_select %p803, %s26, 1
        %p805 = scmp.lt.s32.totalorder %s27, 1
        %s806 = scalar_select %p805, %s27, 1
        %s807 = smul.addr %s804, 2
        %s808 = sadd.s32 %s806, %s807
        %s809 = smul.addr %s808, 8
        %s810 = scalar_lea.vmem %s9, %s809
        // Predicated region
        $region65: #{decoder_forward.14} parent=55 // pred_check
          %p811 = pneg %p260
        $region66: #{decoder_forward.14} parent=55 // pred_check_branch
          %813 = sbr.rel (%p811) target = $region68
        $region67: #{decoder_forward.14} parent=55 // pred_region
          _
        $region68: #{decoder_forward.14} parent=55 // pred_fallthru
          _
      $region56: #{decoder_forward.14} parent=5 // pred_fallthru
        _
      %p814 = scmp.le.s32.totalorder 2, %s17
      // Predicated region
      $region69: #{decoder_forward.14} parent=5 // pred_check
        %p815 = pneg %p814
      $region70: #{decoder_forward.14} parent=5 // pred_check_branch
        %817 = sbr.rel (%p815) target = $region72
      $region71: #{decoder_forward.14} parent=5 // pred_region
        %s818 = ssub.s32 %s17, 2
        // Predicated region
        $region73: #{decoder_forward.14} parent=71 // pred_check
          %p819 = pneg %p266
        $region74: #{decoder_forward.14} parent=71 // pred_check_branch
          %821 = sbr.rel (%p819) target = $region76
        $region75: #{decoder_forward.14} parent=71 // pred_region
          %p822 = scmp.lt.s32.totalorder %s28, 1
          %s823 = scalar_select %p822, %s28, 1
          %p824 = scmp.lt.s32.totalorder %s29, 1
          %s825 = scalar_select %p824, %s29, 1
          %s826 = smul.addr %s823, 2
          %s827 = sadd.s32 %s825, %s826
          %s828 = smul.addr %s827, 8
          %s829 = scalar_lea.vmem %s9, %s828
        $region76: #{decoder_forward.14} parent=71 // pred_fallthru
          _
      $region72: #{decoder_forward.14} parent=5 // pred_fallthru
        _
    $region6: #{decoder_forward.14} parent=1 // loop_footer
      %s21 = sadd.s32 1, %s17
    $region7: #{decoder_forward.14} parent=1 // loop_footer_branch
      %16 = sbr.rel target = $region3
    $region8: #{decoder_forward.14} parent=1 // loop_exit
      _
    %830 = vsyncpa [#allocation3], 1
    %s831 = scalar_lea.sflag [#allocation3], 1
    %832 = vsyncpa %s831, 1
    %833 = vsyncpa [#allocation5], 1

// kernel: decoder_forward.16
$region0: #{decoder_forward.16}
  #allocation0 [shape = 'u32[]', space=smem, size = 0x4, offset = 0x4, fixed_abs, tag = 'smem constant byte address 0x4 - core index']
  #allocation1 [shape = 'u32[72,128]{1,0:T(1,128)}', space=vmem, size = 0x9000, scoped, tag = 'internal scratch']
  %s0 = inlined_call_operand.vmem [shape: f32[16,32], index: 0, kind: input, shape index: {}]
  %s1 = inlined_call_operand.vmem [shape: f32[1,32], index: 1, kind: input, shape index: {}]
  %s2 = inlined_call_operand.vmem [shape: f32[1,32], index: 2, kind: input, shape index: {}]
  %s3 = inlined_call_operand.vmem [shape: bf16[32,32], index: 3, kind: input, shape index: {}]
  %s4 = inlined_call_operand.vmem [shape: f32[1,32], index: 4, kind: input, shape index: {}]
  %s5 = inlined_call_operand.vmem [shape: bf16[32,32], index: 5, kind: input, shape index: {}]
  %s6 = inlined_call_operand.vmem [shape: f32[1,32], index: 6, kind: input, shape index: {}]
  %s7 = inlined_call_operand.vmem [shape: bf16[16,32], index: 7, kind: output, shape index: {0}]
  %s8 = inlined_call_operand.vmem [shape: bf16[16,32], index: 8, kind: output, shape index: {1}]
  %9 = xla_tuple %s7, %s8
  %s10 = sld [smem:[#allocation0]]
  $region46: #{decoder_forward.16} parent=0
    _
  %s12 = ssub.s32 1, %s10
  %s13 = scalar_select 0, %s12, %s10
  // Predicated region
  $region2: #{decoder_forward.16} parent=0 // pred_check
    _
  $region3: #{decoder_forward.16} parent=0 // pred_check_branch
    %15 = sbr.rel (0) target = $region5
  $region4: #{decoder_forward.16} parent=0 // pred_region
    _
  $region5: #{decoder_forward.16} parent=0 // pred_fallthru
    _
  // Predicated region
  $region6: #{decoder_forward.16} parent=0 // pred_check
    _
  $region7: #{decoder_forward.16} parent=0 // pred_check_branch
    %17 = sbr.rel (0) target = $region9
  $region8: #{decoder_forward.16} parent=0 // pred_region
    _
  $region9: #{decoder_forward.16} parent=0 // pred_fallthru
    _
  // Predicated region
  $region10: #{decoder_forward.16} parent=0 // pred_check
    _
  $region11: #{decoder_forward.16} parent=0 // pred_check_branch
    %19 = sbr.rel (0) target = $region13
  $region12: #{decoder_forward.16} parent=0 // pred_region
    _
  $region13: #{decoder_forward.16} parent=0 // pred_fallthru
    _
  // Predicated region
  $region14: #{decoder_forward.16} parent=0 // pred_check
    _
  $region15: #{decoder_forward.16} parent=0 // pred_check_branch
    %21 = sbr.rel (0) target = $region17
  $region16: #{decoder_forward.16} parent=0 // pred_region
    _
  $region17: #{decoder_forward.16} parent=0 // pred_fallthru
    _
  // Predicated region
  $region18: #{decoder_forward.16} parent=0 // pred_check
    _
  $region19: #{decoder_forward.16} parent=0 // pred_check_branch
    %23 = sbr.rel (0) target = $region21
  $region20: #{decoder_forward.16} parent=0 // pred_region
    _
  $region21: #{decoder_forward.16} parent=0 // pred_fallthru
    _
  // Predicated region
  $region22: #{decoder_forward.16} parent=0 // pred_check
    _
  $region23: #{decoder_forward.16} parent=0 // pred_check_branch
    %25 = sbr.rel (0) target = $region25
  $region24: #{decoder_forward.16} parent=0 // pred_region
    _
  $region25: #{decoder_forward.16} parent=0 // pred_fallthru
    _
  // Predicated region
  $region26: #{decoder_forward.16} parent=0 // pred_check
    _
  $region27: #{decoder_forward.16} parent=0 // pred_check_branch
    %27 = sbr.rel (0) target = $region29
  $region28: #{decoder_forward.16} parent=0 // pred_region
    _
  $region29: #{decoder_forward.16} parent=0 // pred_fallthru
    _
  %v29 = vld [vmem:[%s0] sm:$0xff]
  %v30 = vld [vmem:[%s0 + $0x8] sm:$0xff]
  %v31 = vld [vmem:[%s1] sm:$0x1]
  %v32 = vld [vmem:[%s2] sm:$0x1]
  %vm33 = vcmask 261120
  %v34 = vsel %vm33, %v29, 0.0
  %35 = vadd.xlane.f32.xlu0 %v34
  %v36 = vpop.xlane.xlu0 %35
  %v37 = vsel %vm33, %v30, 0.0
  %38 = vadd.xlane.f32.xlu0 %v37
  %v39 = vpop.xlane.xlu0 %38
  %v40 = vrcp.pop 32.0
  %v41 = vmul.f32 32.0, %v40
  %v42 = vsub.f32 1.0, %v41
  %v43 = vmul.f32 %v40, %v42
  %v44 = vadd.f32 %v40, %v43
  %vm45 = vweird.f32 %v40
  %v46 = vsel %vm45, %v40, %v44
  %v47 = vmul.f32 %v36, %v46
  %v48 = vmul.f32 %v39, %v46
  %v49 = vsub.f32 %v29, %v47
  %v50 = vsub.f32 %v30, %v48
  %v51 = vmul.f32 %v49, %v49
  %v52 = vmul.f32 %v50, %v50
  %v53 = vsel %vm33, %v51, 0.0
  %54 = vadd.xlane.f32.xlu0 %v53
  %v55 = vpop.xlane.xlu0 %54
  %v56 = vsel %vm33, %v52, 0.0
  %57 = vadd.xlane.f32.xlu0 %v56
  %v58 = vpop.xlane.xlu0 %57
  %v59 = vmul.f32 %v55, %v46
  %v60 = vmul.f32 %v58, %v46
  %v61 = vadd.f32 %v59, 1e-05
  %v62 = vadd.f32 %v60, 1e-05
  %v63 = vrsqrt.pop %v61
  %v64 = vmul.f32 %v63, %v61
  %v65 = vmul.f32 %v64, %v63
  %v66 = vmul.f32 0.5, %v65
  %v67 = vsub.f32 1.5, %v66
  %v68 = vmul.f32 %v63, %v67
  %vm69 = vweird.f32 %v61
  %vm70 = vweird.f32 %v63
  %vm71 = vmor %vm69, %vm70
  %v72 = vsel %vm71, %v63, %v68
  %v73 = vrsqrt.pop %v62
  %v74 = vmul.f32 %v73, %v62
  %v75 = vmul.f32 %v74, %v73
  %v76 = vmul.f32 0.5, %v75
  %v77 = vsub.f32 1.5, %v76
  %v78 = vmul.f32 %v73, %v77
  %vm79 = vweird.f32 %v62
  %vm80 = vweird.f32 %v73
  %vm81 = vmor %vm79, %vm80
  %v82 = vsel %vm81, %v73, %v78
  %v83 = vmul.f32 %v49, %v72
  %v84 = vmul.f32 %v50, %v82
  %v86 = vperm.slane %v31, 0
  %v88 = vmul.f32 %v83, %v86
  %v89 = vmul.f32 %v84, %v86
  %v91 = vperm.slane %v32, 0
  %v93 = vadd.f32 %v88, %v91
  %v94 = vadd.f32 %v89, %v91
  %v95 = vpack.c.bf16 %v94, %v93
  %v96 = vld [vmem:[%s3] sm:$0xf]
  %v97 = vld [vmem:[%s3 + $0x4] sm:$0xf]
  %v98 = vld [vmem:[%s3 + $0x8] sm:$0xf]
  %v99 = vld [vmem:[%s3 + $0xc] sm:$0xf]
  %v100 = vld [vmem:[%s4] sm:$0x1]
  %v102 = vperm.slane %v100, 0
  %v108 = vunpack.c.l.b16 %v96
  %v109 = vunpack.c.l.b16 %v97
  %v110 = vunpack.c.l.b16 %v98
  %v111 = vunpack.c.l.b16 %v99
  %v112 = vpack.c.b16 %v109, %v108
  %v113 = vpack.c.b16 %v111, %v110
  %v117 = vsel %vm33, %v95, 0
  %119 = vmatpush.bf16.msra.mxu0 0
  %120 = vmatpush.bf16.msra.mxu0 0
  %121 = vmatpush.bf16.msra.mxu0 0
  %122 = vmatpush.bf16.msra.mxu0 0
  %123 = vmatpush.bf16.msra.mxu0 0
  %124 = vmatpush.bf16.msra.mxu0 0
  %125 = vmatpush.bf16.msra.mxu0 %v113
  %126 = vmatpush.bf16.msra.mxu0 %v112
  %127 = vmatmul.bf16.gmra.mxu0 %v117
  %v128 = vpop.f32.mrf.mxu0
  %v129 = vadd.f32 %v102, %v128
  %v130 = vpop.f32.mrf.mxu0
  %v131 = vadd.f32 %v102, %v130
  %132 = vdwg.mxu0
  %v133 = vpack.c.bf16 %v129, %v129
  %v134 = vpack.c.bf16 %v131, %v131
  %vm135 = vcmask 257024
  %136 = vst.msk [vmem:[%s7] sm:$0xf] %vm135, %v133
  %137 = vst.msk [vmem:[%s7 + $0x4] sm:$0xf] %vm135, %v134
  %v138 = vld [vmem:[%s5] sm:$0xf]
  %v139 = vld [vmem:[%s5 + $0x4] sm:$0xf]
  %v140 = vld [vmem:[%s5 + $0x8] sm:$0xf]
  %v141 = vld [vmem:[%s5 + $0xc] sm:$0xf]
  %v142 = vld [vmem:[%s6] sm:$0x1]
  %v144 = vperm.slane %v142, 0
  %v150 = vunpack.c.l.b16 %v138
  %v151 = vunpack.c.l.b16 %v139
  %v152 = vunpack.c.l.b16 %v140
  %v153 = vunpack.c.l.b16 %v141
  %v154 = vpack.c.b16 %v151, %v150
  %v155 = vpack.c.b16 %v153, %v152
  %158 = vmatpush.bf16.msra.mxu0 0
  %159 = vmatpush.bf16.msra.mxu0 0
  %160 = vmatpush.bf16.msra.mxu0 0
  %161 = vmatpush.bf16.msra.mxu0 0
  %162 = vmatpush.bf16.msra.mxu0 0
  %163 = vmatpush.bf16.msra.mxu0 0
  %164 = vmatpush.bf16.msra.mxu0 %v155
  %165 = vmatpush.bf16.msra.mxu0 %v154
  %166 = vmatmul.bf16.gmra.mxu0 %v117
  %v167 = vpop.f32.mrf.mxu0
  %v168 = vadd.f32 %v144, %v167
  %v169 = vpop.f32.mrf.mxu0
  %v170 = vadd.f32 %v144, %v169
  %171 = vdwg.mxu0
  %v172 = vpack.c.bf16 %v168, %v168
  %v173 = vpack.c.bf16 %v170, %v170
  %174 = vst.msk [vmem:[%s8] sm:$0xf] %vm135, %v172
  %175 = vst.msk [vmem:[%s8 + $0x4] sm:$0xf] %vm135, %v173
  // Predicated region
  $region30: #{decoder_forward.16} parent=0 // pred_check
    _
  $region31: #{decoder_forward.16} parent=0 // pred_check_branch
    %177 = sbr.rel (0) target = $region33
  $region32: #{decoder_forward.16} parent=0 // pred_region
    _
  $region33: #{decoder_forward.16} parent=0 // pred_fallthru
    _
  // Predicated region
  $region34: #{decoder_forward.16} parent=0 // pred_check
    _
  $region35: #{decoder_forward.16} parent=0 // pred_check_branch
    %179 = sbr.rel (0) target = $region37
  $region36: #{decoder_forward.16} parent=0 // pred_region
    _
  $region37: #{decoder_forward.16} parent=0 // pred_fallthru
    _
  // Predicated region
  $region38: #{decoder_forward.16} parent=0 // pred_check
    _
  $region39: #{decoder_forward.16} parent=0 // pred_check_branch
    %181 = sbr.rel (0) target = $region41
  $region40: #{decoder_forward.16} parent=0 // pred_region
    _
  $region41: #{decoder_forward.16} parent=0 // pred_fallthru
    _
  // Predicated region
  $region42: #{decoder_forward.16} parent=0 // pred_check
    _
  $region43: #{decoder_forward.16} parent=0 // pred_check_branch
    %183 = sbr.rel (0) target = $region45
  $region44: #{decoder_forward.16} parent=0 // pred_region
    _
  $region45: #{decoder_forward.16} parent=0 // pred_fallthru
    _

// kernel: decoder_forward.15
$region0: #{decoder_forward.15}
  #allocation0 [shape = 'u32[]', space=smem, size = 0x4, offset = 0x4, fixed_abs, tag = 'smem constant byte address 0x4 - core index']
  #allocation1 [shape = 'u32[72,128]{1,0:T(1,128)}', space=vmem, size = 0x9000, scoped, tag = 'internal scratch']
  %s0 = inlined_call_operand.vmem [shape: f32[32,32], index: 0, kind: input, shape index: {}]
  %s1 = inlined_call_operand.vmem [shape: f32[1,32], index: 1, kind: input, shape index: {}]
  %s2 = inlined_call_operand.vmem [shape: f32[1,32], index: 2, kind: input, shape index: {}]
  %s3 = inlined_call_operand.vmem [shape: bf16[32,128], index: 3, kind: input, shape index: {}]
  %s4 = inlined_call_operand.vmem [shape: f32[1,128], index: 4, kind: input, shape index: {}]
  %s5 = inlined_call_operand.vmem [shape: bf16[128,32], index: 5, kind: input, shape index: {}]
  %s6 = inlined_call_operand.vmem [shape: f32[1,32], index: 6, kind: input, shape index: {}]
  %s7 = inlined_call_operand.vmem [shape: f32[32,32], index: 7, kind: output, shape index: {}]
  %s8 = sld [smem:[#allocation0]]
  $region38: #{decoder_forward.15} parent=0
    _
  %s10 = ssub.s32 1, %s8
  %s11 = scalar_select 0, %s10, %s8
  // Predicated region
  $region2: #{decoder_forward.15} parent=0 // pred_check
    _
  $region3: #{decoder_forward.15} parent=0 // pred_check_branch
    %13 = sbr.rel (0) target = $region5
  $region4: #{decoder_forward.15} parent=0 // pred_region
    _
  $region5: #{decoder_forward.15} parent=0 // pred_fallthru
    _
  // Predicated region
  $region6: #{decoder_forward.15} parent=0 // pred_check
    _
  $region7: #{decoder_forward.15} parent=0 // pred_check_branch
    %15 = sbr.rel (0) target = $region9
  $region8: #{decoder_forward.15} parent=0 // pred_region
    _
  $region9: #{decoder_forward.15} parent=0 // pred_fallthru
    _
  // Predicated region
  $region10: #{decoder_forward.15} parent=0 // pred_check
    _
  $region11: #{decoder_forward.15} parent=0 // pred_check_branch
    %17 = sbr.rel (0) target = $region13
  $region12: #{decoder_forward.15} parent=0 // pred_region
    _
  $region13: #{decoder_forward.15} parent=0 // pred_fallthru
    _
  // Predicated region
  $region14: #{decoder_forward.15} parent=0 // pred_check
    _
  $region15: #{decoder_forward.15} parent=0 // pred_check_branch
    %19 = sbr.rel (0) target = $region17
  $region16: #{decoder_forward.15} parent=0 // pred_region
    _
  $region17: #{decoder_forward.15} parent=0 // pred_fallthru
    _
  // Predicated region
  $region18: #{decoder_forward.15} parent=0 // pred_check
    _
  $region19: #{decoder_forward.15} parent=0 // pred_check_branch
    %21 = sbr.rel (0) target = $region21
  $region20: #{decoder_forward.15} parent=0 // pred_region
    _
  $region21: #{decoder_forward.15} parent=0 // pred_fallthru
    _
  // Predicated region
  $region22: #{decoder_forward.15} parent=0 // pred_check
    _
  $region23: #{decoder_forward.15} parent=0 // pred_check_branch
    %23 = sbr.rel (0) target = $region25
  $region24: #{decoder_forward.15} parent=0 // pred_region
    _
  $region25: #{decoder_forward.15} parent=0 // pred_fallthru
    _
  // Predicated region
  $region26: #{decoder_forward.15} parent=0 // pred_check
    _
  $region27: #{decoder_forward.15} parent=0 // pred_check_branch
    %25 = sbr.rel (0) target = $region29
  $region28: #{decoder_forward.15} parent=0 // pred_region
    _
  $region29: #{decoder_forward.15} parent=0 // pred_fallthru
    _
  %v27 = vld [vmem:[%s0] sm:$0xff]
  %v28 = vld [vmem:[%s0 + $0x8] sm:$0xff]
  %v29 = vld [vmem:[%s0 + $0x10] sm:$0xff]
  %v30 = vld [vmem:[%s0 + $0x18] sm:$0xff]
  %v31 = vld [vmem:[%s1] sm:$0x1]
  %v32 = vld [vmem:[%s2] sm:$0x1]
  %vm33 = vcmask 261120
  %v34 = vsel %vm33, %v27, 0.0
  %35 = vadd.xlane.f32.xlu0 %v34
  %v36 = vpop.xlane.xlu0 %35
  %v37 = vsel %vm33, %v28, 0.0
  %38 = vadd.xlane.f32.xlu0 %v37
  %v39 = vpop.xlane.xlu0 %38
  %v40 = vsel %vm33, %v29, 0.0
  %41 = vadd.xlane.f32.xlu0 %v40
  %v42 = vpop.xlane.xlu0 %41
  %v43 = vsel %vm33, %v30, 0.0
  %44 = vadd.xlane.f32.xlu0 %v43
  %v45 = vpop.xlane.xlu0 %44
  %v46 = vrcp.pop 32.0
  %v47 = vmul.f32 32.0, %v46
  %v48 = vsub.f32 1.0, %v47
  %v49 = vmul.f32 %v46, %v48
  %v50 = vadd.f32 %v46, %v49
  %vm51 = vweird.f32 %v46
  %v52 = vsel %vm51, %v46, %v50
  %v53 = vmul.f32 %v36, %v52
  %v54 = vmul.f32 %v39, %v52
  %v55 = vmul.f32 %v42, %v52
  %v56 = vmul.f32 %v45, %v52
  %v57 = vsub.f32 %v27, %v53
  %v58 = vsub.f32 %v28, %v54
  %v59 = vsub.f32 %v29, %v55
  %v60 = vsub.f32 %v30, %v56
  %v61 = vmul.f32 %v57, %v57
  %v62 = vmul.f32 %v58, %v58
  %v63 = vmul.f32 %v59, %v59
  %v64 = vmul.f32 %v60, %v60
  %v65 = vsel %vm33, %v61, 0.0
  %66 = vadd.xlane.f32.xlu0 %v65
  %v67 = vpop.xlane.xlu0 %66
  %v68 = vsel %vm33, %v62, 0.0
  %69 = vadd.xlane.f32.xlu0 %v68
  %v70 = vpop.xlane.xlu0 %69
  %v71 = vsel %vm33, %v63, 0.0
  %72 = vadd.xlane.f32.xlu0 %v71
  %v73 = vpop.xlane.xlu0 %72
  %v74 = vsel %vm33, %v64, 0.0
  %75 = vadd.xlane.f32.xlu0 %v74
  %v76 = vpop.xlane.xlu0 %75
  %v77 = vmul.f32 %v67, %v52
  %v78 = vmul.f32 %v70, %v52
  %v79 = vmul.f32 %v73, %v52
  %v80 = vmul.f32 %v76, %v52
  %v81 = vadd.f32 %v77, 1e-05
  %v82 = vadd.f32 %v78, 1e-05
  %v83 = vadd.f32 %v79, 1e-05
  %v84 = vadd.f32 %v80, 1e-05
  %v85 = vrsqrt.pop %v81
  %v86 = vmul.f32 %v85, %v81
  %v87 = vmul.f32 %v86, %v85
  %v88 = vmul.f32 0.5, %v87
  %v89 = vsub.f32 1.5, %v88
  %v90 = vmul.f32 %v85, %v89
  %vm91 = vweird.f32 %v81
  %vm92 = vweird.f32 %v85
  %vm93 = vmor %vm91, %vm92
  %v94 = vsel %vm93, %v85, %v90
  %v95 = vrsqrt.pop %v82
  %v96 = vmul.f32 %v95, %v82
  %v97 = vmul.f32 %v96, %v95
  %v98 = vmul.f32 0.5, %v97
  %v99 = vsub.f32 1.5, %v98
  %v100 = vmul.f32 %v95, %v99
  %vm101 = vweird.f32 %v82
  %vm102 = vweird.f32 %v95
  %vm103 = vmor %vm101, %vm102
  %v104 = vsel %vm103, %v95, %v100
  %v105 = vrsqrt.pop %v83
  %v106 = vmul.f32 %v105, %v83
  %v107 = vmul.f32 %v106, %v105
  %v108 = vmul.f32 0.5, %v107
  %v109 = vsub.f32 1.5, %v108
  %v110 = vmul.f32 %v105, %v109
  %vm111 = vweird.f32 %v83
  %vm112 = vweird.f32 %v105
  %vm113 = vmor %vm111, %vm112
  %v114 = vsel %vm113, %v105, %v110
  %v115 = vrsqrt.pop %v84
  %v116 = vmul.f32 %v115, %v84
  %v117 = vmul.f32 %v116, %v115
  %v118 = vmul.f32 0.5, %v117
  %v119 = vsub.f32 1.5, %v118
  %v120 = vmul.f32 %v115, %v119
  %vm121 = vweird.f32 %v84
  %vm122 = vweird.f32 %v115
  %vm123 = vmor %vm121, %vm122
  %v124 = vsel %vm123, %v115, %v120
  %v125 = vmul.f32 %v57, %v94
  %v126 = vmul.f32 %v58, %v104
  %v127 = vmul.f32 %v59, %v114
  %v128 = vmul.f32 %v60, %v124
  %v130 = vperm.slane %v31, 0
  %v132 = vmul.f32 %v125, %v130
  %v133 = vmul.f32 %v126, %v130
  %v134 = vmul.f32 %v127, %v130
  %v135 = vmul.f32 %v128, %v130
  %v137 = vperm.slane %v32, 0
  %v139 = vadd.f32 %v132, %v137
  %v140 = vadd.f32 %v133, %v137
  %v141 = vadd.f32 %v134, %v137
  %v142 = vadd.f32 %v135, %v137
  %v143 = vpack.c.bf16 %v140, %v139
  %v144 = vpack.c.bf16 %v142, %v141
  %v145 = vld [vmem:[%s3] sm:$0xf]
  %v146 = vld [vmem:[%s3 + $0x4] sm:$0xf]
  %v147 = vld [vmem:[%s3 + $0x8] sm:$0xf]
  %v148 = vld [vmem:[%s3 + $0xc] sm:$0xf]
  %v149 = vld [vmem:[%s4] sm:$0x1]
  %v151 = vperm.slane %v149, 0
  %v157 = vunpack.c.l.b16 %v145
  %v158 = vunpack.c.l.b16 %v146
  %v159 = vunpack.c.l.b16 %v147
  %v160 = vunpack.c.l.b16 %v148
  %v161 = vpack.c.b16 %v158, %v157
  %v162 = vpack.c.b16 %v160, %v159
  %v166 = vsel %vm33, %v143, 0
  %v169 = vsel %vm33, %v144, 0
  %171 = vmatpush.bf16.msra.mxu0 0
  %172 = vmatpush.bf16.msra.mxu0 0
  %173 = vmatpush.bf16.msra.mxu0 0
  %174 = vmatpush.bf16.msra.mxu0 0
  %175 = vmatpush.bf16.msra.mxu0 0
  %176 = vmatpush.bf16.msra.mxu0 0
  %177 = vmatpush.bf16.msra.mxu0 %v162
  %178 = vmatpush.bf16.msra.mxu0 %v161
  %179 = vmatmul.bf16.gmra.mxu0 %v166
  %v180 = vpop.f32.mrf.mxu0
  %v181 = vadd.f32 %v151, %v180
  %v182 = vpop.f32.mrf.mxu0
  %v183 = vadd.f32 %v151, %v182
  %184 = vmatmul.bf16.gmra.mxu0 %v169
  %v185 = vpop.f32.mrf.mxu0
  %v186 = vadd.f32 %v151, %v185
  %v187 = vpop.f32.mrf.mxu0
  %v188 = vadd.f32 %v151, %v187
  %189 = vdwg.mxu0
  %v190 = vmul.f32 %v181, %v181
  %v191 = vmul.f32 %v183, %v183
  %v192 = vmul.f32 %v186, %v186
  %v193 = vmul.f32 %v188, %v188
  %v194 = vmul.f32 %v181, %v190
  %v195 = vmul.f32 %v183, %v191
  %v196 = vmul.f32 %v186, %v192
  %v197 = vmul.f32 %v188, %v193
  %v198 = vmul.f32 %v194, 0.044715
  %v199 = vmul.f32 %v195, 0.044715
  %v200 = vmul.f32 %v196, 0.044715
  %v201 = vmul.f32 %v197, 0.044715
  %v202 = vadd.f32 %v181, %v198
  %v203 = vadd.f32 %v183, %v199
  %v204 = vadd.f32 %v186, %v200
  %v205 = vadd.f32 %v188, %v201
  %v206 = vmul.f32 %v202, 0.7978846
  %v207 = vmul.f32 %v203, 0.7978846
  %v208 = vmul.f32 %v204, 0.7978846
  %v209 = vmul.f32 %v205, 0.7978846
  %v210 = vtanh.pop %v206
  %v211 = vtanh.pop %v207
  %v212 = vtanh.pop %v208
  %v213 = vtanh.pop %v209
  %v214 = vadd.f32 %v210, 1.0
  %v215 = vadd.f32 %v211, 1.0
  %v216 = vadd.f32 %v212, 1.0
  %v217 = vadd.f32 %v213, 1.0
  %v218 = vmul.f32 %v214, 0.5
  %v219 = vmul.f32 %v215, 0.5
  %v220 = vmul.f32 %v216, 0.5
  %v221 = vmul.f32 %v217, 0.5
  %v222 = vmul.f32 %v181, %v218
  %v223 = vmul.f32 %v183, %v219
  %v224 = vmul.f32 %v186, %v220
  %v225 = vmul.f32 %v188, %v221
  %v226 = vpack.c.bf16 %v223, %v222
  %v227 = vpack.c.bf16 %v225, %v224
  %v228 = vld [vmem:[%s5] sm:$0xf]
  %v229 = vld [vmem:[%s5 + $0x4] sm:$0xf]
  %v230 = vld [vmem:[%s5 + $0x8] sm:$0xf]
  %v231 = vld [vmem:[%s5 + $0xc] sm:$0xf]
  %v232 = vld [vmem:[%s5 + $0x10] sm:$0xf]
  %v233 = vld [vmem:[%s5 + $0x14] sm:$0xf]
  %v234 = vld [vmem:[%s5 + $0x18] sm:$0xf]
  %v235 = vld [vmem:[%s5 + $0x1c] sm:$0xf]
  %v236 = vld [vmem:[%s5 + $0x20] sm:$0xf]
  %v237 = vld [vmem:[%s5 + $0x24] sm:$0xf]
  %v238 = vld [vmem:[%s5 + $0x28] sm:$0xf]
  %v239 = vld [vmem:[%s5 + $0x2c] sm:$0xf]
  %v240 = vld [vmem:[%s5 + $0x30] sm:$0xf]
  %v241 = vld [vmem:[%s5 + $0x34] sm:$0xf]
  %v242 = vld [vmem:[%s5 + $0x38] sm:$0xf]
  %v243 = vld [vmem:[%s5 + $0x3c] sm:$0xf]
  %v244 = vld [vmem:[%s6] sm:$0x1]
  %v246 = vperm.slane %v244, 0
  %v264 = vunpack.c.l.b16 %v228
  %v265 = vunpack.c.l.b16 %v229
  %v266 = vunpack.c.l.b16 %v230
  %v267 = vunpack.c.l.b16 %v231
  %v268 = vunpack.c.l.b16 %v232
  %v269 = vunpack.c.l.b16 %v233
  %v270 = vunpack.c.l.b16 %v234
  %v271 = vunpack.c.l.b16 %v235
  %v272 = vunpack.c.l.b16 %v236
  %v273 = vunpack.c.l.b16 %v237
  %v274 = vunpack.c.l.b16 %v238
  %v275 = vunpack.c.l.b16 %v239
  %v276 = vunpack.c.l.b16 %v240
  %v277 = vunpack.c.l.b16 %v241
  %v278 = vunpack.c.l.b16 %v242
  %v279 = vunpack.c.l.b16 %v243
  %v280 = vpack.c.b16 %v265, %v264
  %v281 = vpack.c.b16 %v267, %v266
  %v282 = vpack.c.b16 %v269, %v268
  %v283 = vpack.c.b16 %v271, %v270
  %v284 = vpack.c.b16 %v273, %v272
  %v285 = vpack.c.b16 %v275, %v274
  %v286 = vpack.c.b16 %v277, %v276
  %v287 = vpack.c.b16 %v279, %v278
  %296 = vmatpush.bf16.msra.mxu0 %v287
  %297 = vmatpush.bf16.msra.mxu0 %v286
  %298 = vmatpush.bf16.msra.mxu0 %v285
  %299 = vmatpush.bf16.msra.mxu0 %v284
  %300 = vmatpush.bf16.msra.mxu0 %v283
  %301 = vmatpush.bf16.msra.mxu0 %v282
  %302 = vmatpush.bf16.msra.mxu0 %v281
  %303 = vmatpush.bf16.msra.mxu0 %v280
  %304 = vmatmul.bf16.gmra.mxu0 %v226
  %v305 = vpop.f32.mrf.mxu0
  %v306 = vadd.f32 %v246, %v305
  %v307 = vpop.f32.mrf.mxu0
  %v308 = vadd.f32 %v246, %v307
  %309 = vmatmul.bf16.gmra.mxu0 %v227
  %v310 = vpop.f32.mrf.mxu0
  %v311 = vadd.f32 %v246, %v310
  %v312 = vpop.f32.mrf.mxu0
  %v313 = vadd.f32 %v246, %v312
  %314 = vdwg.mxu0
  %v315 = vadd.f32 %v27, %v306
  %v316 = vadd.f32 %v28, %v308
  %v317 = vadd.f32 %v29, %v311
  %v318 = vadd.f32 %v30, %v313
  %319 = vst.msk [vmem:[%s7] sm:$0xff] %vm33, %v315
  %320 = vst.msk [vmem:[%s7 + $0x8] sm:$0xff] %vm33, %v316
  %321 = vst.msk [vmem:[%s7 + $0x10] sm:$0xff] %vm33, %v317
  %322 = vst.msk [vmem:[%s7 + $0x18] sm:$0xff] %vm33, %v318
  // Predicated region
  $region30: #{decoder_forward.15} parent=0 // pred_check
    _
  $region31: #{decoder_forward.15} parent=0 // pred_check_branch
    %324 = sbr.rel (0) target = $region33
  $region32: #{decoder_forward.15} parent=0 // pred_region
    _
  $region33: #{decoder_forward.15} parent=0 // pred_fallthru
    _
  // Predicated region
  $region34: #{decoder_forward.15} parent=0 // pred_check
    _
  $region35: #{decoder_forward.15} parent=0 // pred_check_branch
    %326 = sbr.rel (0) target = $region37
  $region36: #{decoder_forward.15} parent=0 // pred_region
    _
  $region37: #{decoder_forward.15} parent=0 // pred_fallthru
    _

// kernel: decoder_forward.18
$region0: #{decoder_forward.18}
  #allocation0 [shape = 'u32[]', space=smem, size = 0x4, offset = 0x4, fixed_abs, tag = 'smem constant byte address 0x4 - core index']
  #allocation1 [shape = 'u32[72,128]{1,0:T(1,128)}', space=vmem, size = 0x9000, scoped, tag = 'internal scratch']
  %s0 = inlined_call_operand.vmem [shape: f32[1,2,8,32], index: 0, kind: input, shape index: {}]
  %s1 = inlined_call_operand.vmem [shape: bf16[2,8,32], index: 1, kind: input, shape index: {}]
  %s2 = inlined_call_operand.vmem [shape: bf16[2,8,32], index: 2, kind: input, shape index: {}]
  %s3 = inlined_call_operand.vmem [shape: f32[1,1,32], index: 3, kind: input, shape index: {}]
  %s4 = inlined_call_operand.vmem [shape: f32[1,1,32], index: 4, kind: input, shape index: {}]
  %s5 = inlined_call_operand.vmem [shape: bf16[32,32], index: 5, kind: input, shape index: {}]
  %s6 = inlined_call_operand.vmem [shape: f32[1,32], index: 6, kind: input, shape index: {}]
  %s7 = inlined_call_operand.vmem [shape: bf16[32,32], index: 7, kind: input, shape index: {}]
  %s8 = inlined_call_operand.vmem [shape: f32[1,32], index: 8, kind: input, shape index: {}]
  %s9 = inlined_call_operand.vmem [shape: f32[1,2,8,32], index: 9, kind: output, shape index: {}]
  %s10 = sld [smem:[#allocation0]]
  $region69: #{decoder_forward.18} parent=0
    _
  %s12 = ssub.s32 1, %s10
  %s13 = scalar_select 0, %s12, %s10
  loop: start=0, step=1, limit=4
  $region2: #{decoder_forward.18} parent=0 // loop_pre_header
    _
  $region3: #{decoder_forward.18} parent=0 // loop_header
    %s15 = sphi 0, %s19
    %p16 = scmp.ge.s32.totalorder %s15, 4
    %s22 = sphi 0, %s34
    %s23 = sphi 0, %s30
    %s24 = sphi 0, %s22
    %s25 = sphi 0, %s23
    %s26 = sphi 0, %s24
    %s27 = sphi 0, %s25
    %s39 = sphi 0, %s41
    %s42 = sphi 0, %s39
    %s43 = sphi 0, %s42
    %s59 = sphi 0, %s43
    %s65 = sphi 0, %s67
    %s68 = sphi 0, %s65
    %s69 = sphi 0, %s68
    %s85 = sphi 0, %s69
    %s91 = sphi 0, %s93
    %s94 = sphi 0, %s91
    %s95 = sphi 0, %s94
    %s111 = sphi 0, %s95
    %s115 = sphi 0, %s115
    %s117 = sphi 0, %s115
    %s118 = sphi 0, %s117
    %s132 = sphi 0, %s118
    %s136 = sphi 0, %s136
    %s138 = sphi 0, %s136
    %s139 = sphi 0, %s138
    %s153 = sphi 0, %s139
    %s157 = sphi 0, %s157
    %s159 = sphi 0, %s157
    %s160 = sphi 0, %s159
    %s174 = sphi 0, %s160
    %s178 = sphi 0, %s178
    %s180 = sphi 0, %s178
    %s181 = sphi 0, %s180
    %s195 = sphi 0, %s181
    %s199 = sphi 0, %s199
    %s201 = sphi 0, %s199
    %s202 = sphi 0, %s201
    %s216 = sphi 0, %s202
    %s220 = sphi 0, %s220
    %s222 = sphi 0, %s220
    %s223 = sphi 0, %s222
    %s237 = sphi 0, %s223
    %s245 = sphi 0, %s247
    %s248 = sphi 0, %s245
    %s249 = sphi 0, %s248
    %s265 = sphi 0, %s249
  $region4: #{decoder_forward.18} parent=0 // loop_header_branch
    %18 = sbr.rel (%p16) target = $region8
  $region5: #{decoder_forward.18} parent=0 // loop_body
    %s20 = ssub.s32 %s15, 1
    %s21 = ssub.s32 %s15, 2
    %s28 = sadd.s32 1, %s23
    %p29 = scmp.ge.s32.totalorder %s28, 2
    %s30 = scalar_select %p29, 0, %s28
    %s31 = sadd.s32 1, %s22
    %s32 = scalar_select %p29, %s31, %s22
    %p33 = scmp.ge.s32.totalorder %s32, 1
    %s34 = scalar_select %p33, 0, %s32
    %s35 = ssub.s32 %s22, %s34
    %s36 = ssub.s32 %s23, %s30
    %s37 = sor.u32 %s35, %s36
    %p38 = scmp.eq.s32.totalorder %s37, 0
    %s40 = sadd.s32 %s39, 1
    %s41 = scalar_select %p38, %s39, %s40
    %p44 = pneg %p38
    %p45 = scmp.eq.s32.totalorder %s15, 1
    %p46 = por %p44, %p45
    %p47 = scmp.ne.s32.totalorder %s39, %s42
    %p48 = scmp.eq.s32.totalorder %s15, 0
    %p49 = por %p47, %p48
    %p50 = scmp.ne.s32.totalorder %s39, %s42
    %p51 = scmp.eq.s32.totalorder %s20, 1
    %p52 = por %p50, %p51
    %p53 = scmp.ne.s32.totalorder %s42, %s43
    %p54 = scmp.eq.s32.totalorder %s20, 0
    %p55 = por %p53, %p54
    %p56 = scmp.ne.s32.totalorder %s42, %s43
    %p57 = scmp.eq.s32.totalorder %s21, 1
    %p58 = por %p56, %p57
    %p60 = scmp.ne.s32.totalorder %s43, %s59
    %p61 = scmp.eq.s32.totalorder %s21, 0
    %p62 = por %p60, %p61
    %s63 = ssub.s32 %s23, %s30
    %p64 = scmp.eq.s32.totalorder %s63, 0
    %s66 = sadd.s32 %s65, 1
    %s67 = scalar_select %p64, %s65, %s66
    %p70 = pneg %p64
    %p71 = scmp.eq.s32.totalorder %s15, 1
    %p72 = por %p70, %p71
    %p73 = scmp.ne.s32.totalorder %s65, %s68
    %p74 = scmp.eq.s32.totalorder %s15, 0
    %p75 = por %p73, %p74
    %p76 = scmp.ne.s32.totalorder %s65, %s68
    %p77 = scmp.eq.s32.totalorder %s20, 1
    %p78 = por %p76, %p77
    %p79 = scmp.ne.s32.totalorder %s68, %s69
    %p80 = scmp.eq.s32.totalorder %s20, 0
    %p81 = por %p79, %p80
    %p82 = scmp.ne.s32.totalorder %s68, %s69
    %p83 = scmp.eq.s32.totalorder %s21, 1
    %p84 = por %p82, %p83
    %p86 = scmp.ne.s32.totalorder %s69, %s85
    %p87 = scmp.eq.s32.totalorder %s21, 0
    %p88 = por %p86, %p87
    %s89 = ssub.s32 %s23, %s30
    %p90 = scmp.eq.s32.totalorder %s89, 0
    %s92 = sadd.s32 %s91, 1
    %s93 = scalar_select %p90, %s91, %s92
    %p96 = pneg %p90
    %p97 = scmp.eq.s32.totalorder %s15, 1
    %p98 = por %p96, %p97
    %p99 = scmp.ne.s32.totalorder %s91, %s94
    %p100 = scmp.eq.s32.totalorder %s15, 0
    %p101 = por %p99, %p100
    %p102 = scmp.ne.s32.totalorder %s91, %s94
    %p103 = scmp.eq.s32.totalorder %s20, 1
    %p104 = por %p102, %p103
    %p105 = scmp.ne.s32.totalorder %s94, %s95
    %p106 = scmp.eq.s32.totalorder %s20, 0
    %p107 = por %p105, %p106
    %p108 = scmp.ne.s32.totalorder %s94, %s95
    %p109 = scmp.eq.s32.totalorder %s21, 1
    %p110 = por %p108, %p109
    %p112 = scmp.ne.s32.totalorder %s95, %s111
    %p113 = scmp.eq.s32.totalorder %s21, 0
    %p114 = por %p112, %p113
    %s116 = sadd.s32 %s115, 1
    %p119 = scmp.eq.s32.totalorder %s15, 1
    %p120 = scmp.ne.s32.totalorder %s115, %s117
    %p121 = scmp.eq.s32.totalorder %s15, 0
    %p122 = por %p120, %p121
    %p123 = scmp.ne.s32.totalorder %s115, %s117
    %p124 = scmp.eq.s32.totalorder %s20, 1
    %p125 = por %p123, %p124
    %p126 = scmp.ne.s32.totalorder %s117, %s118
    %p127 = scmp.eq.s32.totalorder %s20, 0
    %p128 = por %p126, %p127
    %p129 = scmp.ne.s32.totalorder %s117, %s118
    %p130 = scmp.eq.s32.totalorder %s21, 1
    %p131 = por %p129, %p130
    %p133 = scmp.ne.s32.totalorder %s118, %s132
    %p134 = scmp.eq.s32.totalorder %s21, 0
    %p135 = por %p133, %p134
    %s137 = sadd.s32 %s136, 1
    %p140 = scmp.eq.s32.totalorder %s15, 1
    %p141 = scmp.ne.s32.totalorder %s136, %s138
    %p142 = scmp.eq.s32.totalorder %s15, 0
    %p143 = por %p141, %p142
    %p144 = scmp.ne.s32.totalorder %s136, %s138
    %p145 = scmp.eq.s32.totalorder %s20, 1
    %p146 = por %p144, %p145
    %p147 = scmp.ne.s32.totalorder %s138, %s139
    %p148 = scmp.eq.s32.totalorder %s20, 0
    %p149 = por %p147, %p148
    %p150 = scmp.ne.s32.totalorder %s138, %s139
    %p151 = scmp.eq.s32.totalorder %s21, 1
    %p152 = por %p150, %p151
    %p154 = scmp.ne.s32.totalorder %s139, %s153
    %p155 = scmp.eq.s32.totalorder %s21, 0
    %p156 = por %p154, %p155
    %s158 = sadd.s32 %s157, 1
    %p161 = scmp.eq.s32.totalorder %s15, 1
    %p162 = scmp.ne.s32.totalorder %s157, %s159
    %p163 = scmp.eq.s32.totalorder %s15, 0
    %p164 = por %p162, %p163
    %p165 = scmp.ne.s32.totalorder %s157, %s159
    %p166 = scmp.eq.s32.totalorder %s20, 1
    %p167 = por %p165, %p166
    %p168 = scmp.ne.s32.totalorder %s159, %s160
    %p169 = scmp.eq.s32.totalorder %s20, 0
    %p170 = por %p168, %p169
    %p171 = scmp.ne.s32.totalorder %s159, %s160
    %p172 = scmp.eq.s32.totalorder %s21, 1
    %p173 = por %p171, %p172
    %p175 = scmp.ne.s32.totalorder %s160, %s174
    %p176 = scmp.eq.s32.totalorder %s21, 0
    %p177 = por %p175, %p176
    %s179 = sadd.s32 %s178, 1
    %p182 = scmp.eq.s32.totalorder %s15, 1
    %p183 = scmp.ne.s32.totalorder %s178, %s180
    %p184 = scmp.eq.s32.totalorder %s15, 0
    %p185 = por %p183, %p184
    %p186 = scmp.ne.s32.totalorder %s178, %s180
    %p187 = scmp.eq.s32.totalorder %s20, 1
    %p188 = por %p186, %p187
    %p189 = scmp.ne.s32.totalorder %s180, %s181
    %p190 = scmp.eq.s32.totalorder %s20, 0
    %p191 = por %p189, %p190
    %p192 = scmp.ne.s32.totalorder %s180, %s181
    %p193 = scmp.eq.s32.totalorder %s21, 1
    %p194 = por %p192, %p193
    %p196 = scmp.ne.s32.totalorder %s181, %s195
    %p197 = scmp.eq.s32.totalorder %s21, 0
    %p198 = por %p196, %p197
    %s200 = sadd.s32 %s199, 1
    %p203 = scmp.eq.s32.totalorder %s15, 1
    %p204 = scmp.ne.s32.totalorder %s199, %s201
    %p205 = scmp.eq.s32.totalorder %s15, 0
    %p206 = por %p204, %p205
    %p207 = scmp.ne.s32.totalorder %s199, %s201
    %p208 = scmp.eq.s32.totalorder %s20, 1
    %p209 = por %p207, %p208
    %p210 = scmp.ne.s32.totalorder %s201, %s202
    %p211 = scmp.eq.s32.totalorder %s20, 0
    %p212 = por %p210, %p211
    %p213 = scmp.ne.s32.totalorder %s201, %s202
    %p214 = scmp.eq.s32.totalorder %s21, 1
    %p215 = por %p213, %p214
    %p217 = scmp.ne.s32.totalorder %s202, %s216
    %p218 = scmp.eq.s32.totalorder %s21, 0
    %p219 = por %p217, %p218
    %s221 = sadd.s32 %s220, 1
    %p224 = scmp.eq.s32.totalorder %s15, 1
    %p225 = scmp.ne.s32.totalorder %s220, %s222
    %p226 = scmp.eq.s32.totalorder %s15, 0
    %p227 = por %p225, %p226
    %p228 = scmp.ne.s32.totalorder %s220, %s222
    %p229 = scmp.eq.s32.totalorder %s20, 1
    %p230 = por %p228, %p229
    %p231 = scmp.ne.s32.totalorder %s222, %s223
    %p232 = scmp.eq.s32.totalorder %s20, 0
    %p233 = por %p231, %p232
    %p234 = scmp.ne.s32.totalorder %s222, %s223
    %p235 = scmp.eq.s32.totalorder %s21, 1
    %p236 = por %p234, %p235
    %p238 = scmp.ne.s32.totalorder %s223, %s237
    %p239 = scmp.eq.s32.totalorder %s21, 0
    %p240 = por %p238, %p239
    %s241 = ssub.s32 %s22, %s34
    %s242 = ssub.s32 %s23, %s30
    %s243 = sor.u32 %s241, %s242
    %p244 = scmp.eq.s32.totalorder %s243, 0
    %s246 = sadd.s32 %s245, 1
    %s247 = scalar_select %p244, %s245, %s246
    %p250 = pneg %p244
    %p251 = scmp.eq.s32.totalorder %s15, 1
    %p252 = por %p250, %p251
    %p253 = scmp.ne.s32.totalorder %s245, %s248
    %p254 = scmp.eq.s32.totalorder %s15, 0
    %p255 = por %p253, %p254
    %p256 = scmp.ne.s32.totalorder %s245, %s248
    %p257 = scmp.eq.s32.totalorder %s20, 1
    %p258 = por %p256, %p257
    %p259 = scmp.ne.s32.totalorder %s248, %s249
    %p260 = scmp.eq.s32.totalorder %s20, 0
    %p261 = por %p259, %p260
    %p262 = scmp.ne.s32.totalorder %s248, %s249
    %p263 = scmp.eq.s32.totalorder %s21, 1
    %p264 = por %p262, %p263
    %p266 = scmp.ne.s32.totalorder %s249, %s265
    %p267 = scmp.eq.s32.totalorder %s21, 0
    %p268 = por %p266, %p267
    %p269 = scmp.le.s32.totalorder 1, %s15
    %p270 = scmp.lt.s32.totalorder %s15, 3
    %p271 = pnand %p269, %p270
    %p272 = pneg %p271
    // Predicated region
    $region9: #{decoder_forward.18} parent=5 // pred_check
      _
    $region10: #{decoder_forward.18} parent=5 // pred_check_branch
      %274 = sbr.rel (%p271) target = $region12
    $region11: #{decoder_forward.18} parent=5 // pred_region
      %s275 = ssub.s32 %s15, 1
      // Predicated region
      $region13: #{decoder_forward.18} parent=11 // pred_check
        %p276 = pneg %p128
      $region14: #{decoder_forward.18} parent=11 // pred_check_branch
        %278 = sbr.rel (%p276) target = $region16
      $region15: #{decoder_forward.18} parent=11 // pred_region
        _
      $region16: #{decoder_forward.18} parent=11 // pred_fallthru
        _
      // Predicated region
      $region17: #{decoder_forward.18} parent=11 // pred_check
        %p279 = pneg %p149
      $region18: #{decoder_forward.18} parent=11 // pred_check_branch
        %281 = sbr.rel (%p279) target = $region20
      $region19: #{decoder_forward.18} parent=11 // pred_region
        _
      $region20: #{decoder_forward.18} parent=11 // pred_fallthru
        _
      // Predicated region
      $region21: #{decoder_forward.18} parent=11 // pred_check
        %p282 = pneg %p170
      $region22: #{decoder_forward.18} parent=11 // pred_check_branch
        %284 = sbr.rel (%p282) target = $region24
      $region23: #{decoder_forward.18} parent=11 // pred_region
        _
      $region24: #{decoder_forward.18} parent=11 // pred_fallthru
        _
      // Predicated region
      $region25: #{decoder_forward.18} parent=11 // pred_check
        %p285 = pneg %p191
      $region26: #{decoder_forward.18} parent=11 // pred_check_branch
        %287 = sbr.rel (%p285) target = $region28
      $region27: #{decoder_forward.18} parent=11 // pred_region
        _
      $region28: #{decoder_forward.18} parent=11 // pred_fallthru
        _
      // Predicated region
      $region29: #{decoder_forward.18} parent=11 // pred_check
        %p288 = pneg %p212
      $region30: #{decoder_forward.18} parent=11 // pred_check_branch
        %290 = sbr.rel (%p288) target = $region32
      $region31: #{decoder_forward.18} parent=11 // pred_region
        _
      $region32: #{decoder_forward.18} parent=11 // pred_fallthru
        _
      // Predicated region
      $region33: #{decoder_forward.18} parent=11 // pred_check
        %p291 = pneg %p233
      $region34: #{decoder_forward.18} parent=11 // pred_check_branch
        %293 = sbr.rel (%p291) target = $region36
      $region35: #{decoder_forward.18} parent=11 // pred_region
        _
      $region36: #{decoder_forward.18} parent=11 // pred_fallthru
        _
    $region12: #{decoder_forward.18} parent=5 // pred_fallthru
      _
    %p294 = scmp.lt.s32.totalorder %s15, 2
    // Predicated region
    $region37: #{decoder_forward.18} parent=5 // pred_check
      %p295 = pneg %p294
    $region38: #{decoder_forward.18} parent=5 // pred_check_branch
      %297 = sbr.rel (%p295) target = $region40
    $region39: #{decoder_forward.18} parent=5 // pred_region
      // Predicated region
      $region41: #{decoder_forward.18} parent=39 // pred_check
        %p298 = pneg %p49
      $region42: #{decoder_forward.18} parent=39 // pred_check_branch
        %300 = sbr.rel (%p298) target = $region44
      $region43: #{decoder_forward.18} parent=39 // pred_region
        %p301 = scmp.lt.s32.totalorder %s22, 0
        %s302 = scalar_select %p301, %s22, 0
        %p303 = scmp.lt.s32.totalorder %s23, 1
        %s304 = scalar_select %p303, %s23, 1
        %s305 = smul.addr %s302, 2
        %s306 = sadd.s32 %s304, %s305
        %s307 = smul.addr %s306, 8
        %s308 = scalar_lea.vmem %s0, %s307
      $region44: #{decoder_forward.18} parent=39 // pred_fallthru
        _
      // Predicated region
      $region45: #{decoder_forward.18} parent=39 // pred_check
        %p309 = pneg %p75
      $region46: #{decoder_forward.18} parent=39 // pred_check_branch
        %311 = sbr.rel (%p309) target = $region48
      $region47: #{decoder_forward.18} parent=39 // pred_region
        %p312 = scmp.lt.s32.totalorder %s23, 1
        %s313 = scalar_select %p312, %s23, 1
        %s314 = smul.addr %s313, 4
        %s315 = scalar_lea.vmem %s1, %s314
      $region48: #{decoder_forward.18} parent=39 // pred_fallthru
        _
      // Predicated region
      $region49: #{decoder_forward.18} parent=39 // pred_check
        %p316 = pneg %p101
      $region50: #{decoder_forward.18} parent=39 // pred_check_branch
        %318 = sbr.rel (%p316) target = $region52
      $region51: #{decoder_forward.18} parent=39 // pred_region
        %p319 = scmp.lt.s32.totalorder %s23, 1
        %s320 = scalar_select %p319, %s23, 1
        %s321 = smul.addr %s320, 4
        %s322 = scalar_lea.vmem %s2, %s321
      $region52: #{decoder_forward.18} parent=39 // pred_fallthru
        _
    $region40: #{decoder_forward.18} parent=5 // pred_fallthru
      _
    %p323 = scmp.le.s32.totalorder 1, %s15
    %p324 = scmp.lt.s32.totalorder %s15, 3
    %p325 = pnand %p323, %p324
    %p326 = pneg %p325
    // Predicated region
    $region53: #{decoder_forward.18} parent=5 // pred_check
      _
    $region54: #{decoder_forward.18} parent=5 // pred_check_branch
      %328 = sbr.rel (%p325) target = $region56
    $region55: #{decoder_forward.18} parent=5 // pred_region
      %s329 = ssub.s32 %s15, 1
      %p330 = scmp.lt.s32.totalorder %s24, 0
      %s331 = scalar_select %p330, %s24, 0
      %p332 = scmp.lt.s32.totalorder %s25, 1
      %s333 = scalar_select %p332, %s25, 1
      %s334 = smul.addr %s331, 2
      %s335 = sadd.s32 %s333, %s334
      %s336 = smul.addr %s335, 8
      %s337 = scalar_lea.vmem %s0, %s336
      %p338 = pneg %p55
      %p339 = pneg %p52
      %p340 = scmp.lt.s32.totalorder %s25, 1
      %s341 = scalar_select %p340, %s25, 1
      %s342 = smul.addr %s341, 4
      %s343 = scalar_lea.vmem %s1, %s342
      %p344 = pneg %p81
      %p345 = pneg %p78
      %p346 = scmp.lt.s32.totalorder %s25, 1
      %s347 = scalar_select %p346, %s25, 1
      %s348 = smul.addr %s347, 4
      %s349 = scalar_lea.vmem %s2, %s348
      %p350 = pneg %p107
      %p351 = pneg %p104
      %p352 = pneg %p128
      %p353 = pneg %p125
      %p354 = pneg %p149
      %p355 = pneg %p146
      %p356 = pneg %p170
      %p357 = pneg %p167
      %p358 = pneg %p191
      %p359 = pneg %p188
      %p360 = pneg %p212
      %p361 = pneg %p209
      %p362 = pneg %p233
      %p363 = pneg %p230
      %p364 = pneg %p261
      %p365 = pneg %p258
      %p366 = scmp.lt.s32.totalorder %s24, 0
      %s367 = scalar_select %p366, %s24, 0
      %p368 = scmp.lt.s32.totalorder %s25, 1
      %s369 = scalar_select %p368, %s25, 1
      %s370 = smul.addr %s367, 2
      %s371 = sadd.s32 %s369, %s370
      %s372 = smul.addr %s371, 8
      %s373 = scalar_lea.vmem %s9, %s372
      %p374 = scmp.lt.s32.totalorder %s24, 0
      %s375 = scalar_select %p374, %s24, 0
      %p376 = scmp.lt.s32.totalorder %s25, 1
      %s377 = scalar_select %p376, %s25, 1
      %s378 = smul.addr %s375, 2
      %s379 = sadd.s32 %s377, %s378
      %s380 = smul.addr %s379, 8
      %s381 = scalar_lea.vmem %s0, %s380
      %p382 = scmp.lt.s32.totalorder %s25, 1
      %s383 = scalar_select %p382, %s25, 1
      %s384 = smul.addr %s383, 4
      %s385 = scalar_lea.vmem %s1, %s384
      %p386 = scmp.lt.s32.totalorder %s25, 1
      %s387 = scalar_select %p386, %s25, 1
      %s388 = smul.addr %s387, 4
      %s389 = scalar_lea.vmem %s2, %s388
      %p390 = scmp.lt.s32.totalorder %s24, 0
      %s391 = scalar_select %p390, %s24, 0
      %p392 = scmp.lt.s32.totalorder %s25, 1
      %s393 = scalar_select %p392, %s25, 1
      %s394 = smul.addr %s391, 2
      %s395 = sadd.s32 %s393, %s394
      %s396 = smul.addr %s395, 8
      %s397 = scalar_lea.vmem %s9, %s396
      %v399 = vld [vmem:[%s381] sm:$0xff]
      %v400 = vld [vmem:[%s3] sm:$0x1]
      %v401 = vld [vmem:[%s4] sm:$0x1]
      %vm402 = vcmask 261120
      %v403 = vsel %vm402, %v399, 0.0
      %404 = vadd.xlane.f32.xlu0 %v403
      %v405 = vpop.xlane.xlu0 %404
      %v406 = vrcp.pop 32.0
      %v407 = vmul.f32 32.0, %v406
      %v408 = vsub.f32 1.0, %v407
      %v409 = vmul.f32 %v406, %v408
      %v410 = vadd.f32 %v406, %v409
      %vm411 = vweird.f32 %v406
      %v412 = vsel %vm411, %v406, %v410
      %v413 = vmul.f32 %v405, %v412
      %v414 = vsub.f32 %v399, %v413
      %v415 = vmul.f32 %v414, %v414
      %v416 = vsel %vm402, %v415, 0.0
      %417 = vadd.xlane.f32.xlu0 %v416
      %v418 = vpop.xlane.xlu0 %417
      %v419 = vmul.f32 %v418, %v412
      %v420 = vadd.f32 %v419, 1e-05
      %v421 = vrsqrt.pop %v420
      %v422 = vmul.f32 %v421, %v420
      %v423 = vmul.f32 %v422, %v421
      %v424 = vmul.f32 0.5, %v423
      %v425 = vsub.f32 1.5, %v424
      %v426 = vmul.f32 %v421, %v425
      %vm427 = vweird.f32 %v420
      %vm428 = vweird.f32 %v421
      %vm429 = vmor %vm427, %vm428
      %v430 = vsel %vm429, %v421, %v426
      %v431 = vmul.f32 %v414, %v430
      %v433 = vperm.slane %v400, 0
      %v435 = vmul.f32 %v431, %v433
      %v437 = vperm.slane %v401, 0
      %v439 = vadd.f32 %v435, %v437
      %v440 = vpack.c.bf16 %v439, %v439
      %v441 = vld [vmem:[%s5] sm:$0xf]
      %v442 = vld [vmem:[%s5 + $0x4] sm:$0xf]
      %v443 = vld [vmem:[%s5 + $0x8] sm:$0xf]
      %v444 = vld [vmem:[%s5 + $0xc] sm:$0xf]
      %v445 = vld [vmem:[%s6] sm:$0x1]
      %v447 = vperm.slane %v445, 0
      %v453 = vunpack.c.l.b16 %v441
      %v454 = vunpack.c.l.b16 %v442
      %v455 = vunpack.c.l.b16 %v443
      %v456 = vunpack.c.l.b16 %v444
      %v457 = vpack.c.b16 %v454, %v453
      %v458 = vpack.c.b16 %v456, %v455
      %v462 = vsel %vm402, %v440, 0
      %464 = vmatpush.bf16.msra.mxu0 0
      %465 = vmatpush.bf16.msra.mxu0 0
      %466 = vmatpush.bf16.msra.mxu0 0
      %467 = vmatpush.bf16.msra.mxu0 0
      %468 = vmatpush.bf16.msra.mxu0 0
      %469 = vmatpush.bf16.msra.mxu0 0
      %470 = vmatpush.bf16.msra.mxu0 %v458
      %471 = vmatpush.bf16.msra.mxu0 %v457
      %472 = vmatmul.bf16.gmra.mxu0 %v462
      %v473 = vpop.f32.mrf.mxu0
      %v474 = vadd.f32 %v447, %v473
      %v475 = vpop.f32.mrf.mxu0
      %476 = vdwg.mxu0
      %v477 = vpack.c.bf16 %v474, %v474
      %v478 = vld [vmem:[%s385] sm:$0xf]
      %v479 = vld [vmem:[%s389] sm:$0xf]
      %vm480 = vcmask 64512
      %v482 = vsel %vm480, %v477, 0
      %v485 = vsel %vm480, %v478, 0
      %487 = vmatpush.bf16.xpose.msra.mxu0 0
      %488 = vmatpush.bf16.xpose.msra.mxu0 0
      %489 = vmatpush.bf16.xpose.msra.mxu0 0
      %490 = vmatpush.bf16.xpose.msra.mxu0 0
      %491 = vmatpush.bf16.xpose.msra.mxu0 0
      %492 = vmatpush.bf16.xpose.msra.mxu0 0
      %493 = vmatpush.bf16.xpose.msra.mxu0 0
      %494 = vmatpush.bf16.xpose.msra.mxu0 %v485
      %495 = vmatmul.bf16.gmra.mxu0 %v482
      %v496 = vpop.f32.mrf.mxu0
      %v497 = vadd.f32 0.0, %v496
      %v498 = vpop.f32.mrf.mxu0
      %499 = vdwg.mxu0
      %v500 = vsel %vm480, %v497, -inf
      %501 = vmax.xlane.f32.xlu0 %v500
      %v502 = vpop.xlane.xlu0 %501
      %v503 = vsub.f32 %v497, %v502
      %v504 = vmul.f32 %v503, 1.442695
      %v505 = vpow.pop %v504
      %v506 = vsel %vm480, %v505, 0.0
      %507 = vadd.xlane.f32.xlu0 %v506
      %v508 = vpop.xlane.xlu0 %507
      %v509 = vrcp.pop %v508
      %v510 = vmul.f32 %v505, %v509
      %v511 = vpack.c.bf16 %v510, %v510
      %v513 = vsel %vm480, %v511, 0
      %vm515 = vcmask 1043456
      %v517 = vsel %vm515, %v479, 0
      %519 = vmatpush.bf16.msra.mxu0 0
      %520 = vmatpush.bf16.msra.mxu0 0
      %521 = vmatpush.bf16.msra.mxu0 0
      %522 = vmatpush.bf16.msra.mxu0 0
      %523 = vmatpush.bf16.msra.mxu0 0
      %524 = vmatpush.bf16.msra.mxu0 0
      %525 = vmatpush.bf16.msra.mxu0 0
      %526 = vmatpush.bf16.msra.mxu0 %v517
      %527 = vmatmul.bf16.gmra.mxu0 %v513
      %v528 = vpop.f32.mrf.mxu0
      %v529 = vadd.f32 0.0, %v528
      %v530 = vpop.f32.mrf.mxu0
      %531 = vdwg.mxu0
      %v533 = vunpack.c.l.b16 %v477
      %v534 = vpack.c.b16 %v533, %v533
      %535 = vrot.lane.b32.xlu0 %v534, 120
      %v536 = vpop.permute.xlu0 %535
      %v538 = vunpack.c.l.b16 %v478
      %v539 = vpack.c.b16 %v538, %v538
      %540 = vrot.lane.b32.xlu0 %v539, 120
      %v541 = vpop.permute.xlu0 %540
      %v543 = vsel %vm480, %v536, 0
      %v546 = vsel %vm480, %v541, 0
      %548 = vmatpush.bf16.xpose.msra.mxu0 0
      %549 = vmatpush.bf16.xpose.msra.mxu0 0
      %550 = vmatpush.bf16.xpose.msra.mxu0 0
      %551 = vmatpush.bf16.xpose.msra.mxu0 0
      %552 = vmatpush.bf16.xpose.msra.mxu0 0
      %553 = vmatpush.bf16.xpose.msra.mxu0 0
      %554 = vmatpush.bf16.xpose.msra.mxu0 0
      %555 = vmatpush.bf16.xpose.msra.mxu0 %v546
      %556 = vmatmul.bf16.gmra.mxu0 %v543
      %v557 = vpop.f32.mrf.mxu0
      %v558 = vadd.f32 0.0, %v557
      %v559 = vpop.f32.mrf.mxu0
      %560 = vdwg.mxu0
      %v561 = vsel %vm480, %v558, -inf
      %562 = vmax.xlane.f32.xlu0 %v561
      %v563 = vpop.xlane.xlu0 %562
      %v564 = vsub.f32 %v558, %v563
      %v565 = vmul.f32 %v564, 1.442695
      %v566 = vpow.pop %v565
      %v567 = vsel %vm480, %v566, 0.0
      %568 = vadd.xlane.f32.xlu0 %v567
      %v569 = vpop.xlane.xlu0 %568
      %v570 = vrcp.pop %v569
      %v571 = vmul.f32 %v566, %v570
      %v572 = vpack.c.bf16 %v571, %v571
      %v574 = vunpack.c.l.b16 %v479
      %v575 = vpack.c.b16 %v574, %v574
      %576 = vrot.lane.b32.xlu0 %v575, 120
      %v577 = vpop.permute.xlu0 %576
      %v579 = vsel %vm480, %v572, 0
      %v582 = vsel %vm515, %v577, 0
      %584 = vmatpush.bf16.msra.mxu0 0
      %585 = vmatpush.bf16.msra.mxu0 0
      %586 = vmatpush.bf16.msra.mxu0 0
      %587 = vmatpush.bf16.msra.mxu0 0
      %588 = vmatpush.bf16.msra.mxu0 0
      %589 = vmatpush.bf16.msra.mxu0 0
      %590 = vmatpush.bf16.msra.mxu0 0
      %591 = vmatpush.bf16.msra.mxu0 %v582
      %592 = vmatmul.bf16.gmra.mxu0 %v579
      %v593 = vpop.f32.mrf.mxu0
      %v594 = vadd.f32 0.0, %v593
      %v595 = vpop.f32.mrf.mxu0
      %596 = vdwg.mxu0
      %597 = vrot.lane.b32.xlu0 %v534, 112
      %v598 = vpop.permute.xlu0 %597
      %599 = vrot.lane.b32.xlu0 %v539, 112
      %v600 = vpop.permute.xlu0 %599
      %v602 = vsel %vm480, %v598, 0
      %v605 = vsel %vm480, %v600, 0
      %607 = vmatpush.bf16.xpose.msra.mxu0 0
      %608 = vmatpush.bf16.xpose.msra.mxu0 0
      %609 = vmatpush.bf16.xpose.msra.mxu0 0
      %610 = vmatpush.bf16.xpose.msra.mxu0 0
      %611 = vmatpush.bf16.xpose.msra.mxu0 0
      %612 = vmatpush.bf16.xpose.msra.mxu0 0
      %613 = vmatpush.bf16.xpose.msra.mxu0 0
      %614 = vmatpush.bf16.xpose.msra.mxu0 %v605
      %615 = vmatmul.bf16.gmra.mxu0 %v602
      %v616 = vpop.f32.mrf.mxu0
      %v617 = vadd.f32 0.0, %v616
      %v618 = vpop.f32.mrf.mxu0
      %619 = vdwg.mxu0
      %v620 = vsel %vm480, %v617, -inf
      %621 = vmax.xlane.f32.xlu0 %v620
      %v622 = vpop.xlane.xlu0 %621
      %v623 = vsub.f32 %v617, %v622
      %v624 = vmul.f32 %v623, 1.442695
      %v625 = vpow.pop %v624
      %v626 = vsel %vm480, %v625, 0.0
      %627 = vadd.xlane.f32.xlu0 %v626
      %v628 = vpop.xlane.xlu0 %627
      %v629 = vrcp.pop %v628
      %v630 = vmul.f32 %v625, %v629
      %v631 = vpack.c.bf16 %v630, %v630
      %632 = vrot.lane.b32.xlu0 %v575, 112
      %v633 = vpop.permute.xlu0 %632
      %v635 = vsel %vm480, %v631, 0
      %v638 = vsel %vm515, %v633, 0
      %640 = vmatpush.bf16.msra.mxu0 0
      %641 = vmatpush.bf16.msra.mxu0 0
      %642 = vmatpush.bf16.msra.mxu0 0
      %643 = vmatpush.bf16.msra.mxu0 0
      %644 = vmatpush.bf16.msra.mxu0 0
      %645 = vmatpush.bf16.msra.mxu0 0
      %646 = vmatpush.bf16.msra.mxu0 0
      %647 = vmatpush.bf16.msra.mxu0 %v638
      %648 = vmatmul.bf16.gmra.mxu0 %v635
      %v649 = vpop.f32.mrf.mxu0
      %v650 = vadd.f32 0.0, %v649
      %v651 = vpop.f32.mrf.mxu0
      %652 = vdwg.mxu0
      %653 = vrot.lane.b32.xlu0 %v534, 104
      %v654 = vpop.permute.xlu0 %653
      %655 = vrot.lane.b32.xlu0 %v539, 104
      %v656 = vpop.permute.xlu0 %655
      %v658 = vsel %vm480, %v654, 0
      %v661 = vsel %vm480, %v656, 0
      %663 = vmatpush.bf16.xpose.msra.mxu0 0
      %664 = vmatpush.bf16.xpose.msra.mxu0 0
      %665 = vmatpush.bf16.xpose.msra.mxu0 0
      %666 = vmatpush.bf16.xpose.msra.mxu0 0
      %667 = vmatpush.bf16.xpose.msra.mxu0 0
      %668 = vmatpush.bf16.xpose.msra.mxu0 0
      %669 = vmatpush.bf16.xpose.msra.mxu0 0
      %670 = vmatpush.bf16.xpose.msra.mxu0 %v661
      %671 = vmatmul.bf16.gmra.mxu0 %v658
      %v672 = vpop.f32.mrf.mxu0
      %v673 = vadd.f32 0.0, %v672
      %v674 = vpop.f32.mrf.mxu0
      %675 = vdwg.mxu0
      %v676 = vsel %vm480, %v673, -inf
      %677 = vmax.xlane.f32.xlu0 %v676
      %v678 = vpop.xlane.xlu0 %677
      %v679 = vsub.f32 %v673, %v678
      %v680 = vmul.f32 %v679, 1.442695
      %v681 = vpow.pop %v680
      %v682 = vsel %vm480, %v681, 0.0
      %683 = vadd.xlane.f32.xlu0 %v682
      %v684 = vpop.xlane.xlu0 %683
      %v685 = vrcp.pop %v684
      %v686 = vmul.f32 %v681, %v685
      %v687 = vpack.c.bf16 %v686, %v686
      %688 = vrot.lane.b32.xlu0 %v575, 104
      %v689 = vpop.permute.xlu0 %688
      %v691 = vsel %vm480, %v687, 0
      %v694 = vsel %vm515, %v689, 0
      %696 = vmatpush.bf16.msra.mxu0 0
      %697 = vmatpush.bf16.msra.mxu0 0
      %698 = vmatpush.bf16.msra.mxu0 0
      %699 = vmatpush.bf16.msra.mxu0 0
      %700 = vmatpush.bf16.msra.mxu0 0
      %701 = vmatpush.bf16.msra.mxu0 0
      %702 = vmatpush.bf16.msra.mxu0 0
      %703 = vmatpush.bf16.msra.mxu0 %v694
      %704 = vmatmul.bf16.gmra.mxu0 %v691
      %v705 = vpop.f32.mrf.mxu0
      %v706 = vadd.f32 0.0, %v705
      %v707 = vpop.f32.mrf.mxu0
      %708 = vdwg.mxu0
      %710 = vrot.lane.b32.xlu0 %v594, 8
      %v711 = vpop.permute.xlu0 %710
      %714 = vrot.lane.b32.xlu0 %v650, 16
      %v715 = vpop.permute.xlu0 %714
      %718 = vrot.lane.b32.xlu0 %v706, 24
      %v719 = vpop.permute.xlu0 %718
      %v721 = vsel %vm480, %v529, %v711
      %vm722 = vcmask 130048
      %v723 = vsel %vm722, %v721, %v715
      %vm724 = vcmask 195584
      %v725 = vsel %vm724, %v723, %v719
      %v726 = vpack.c.bf16 %v725, %v725
      %v727 = vld [vmem:[%s7] sm:$0xf]
      %v728 = vld [vmem:[%s7 + $0x4] sm:$0xf]
      %v729 = vld [vmem:[%s7 + $0x8] sm:$0xf]
      %v730 = vld [vmem:[%s7 + $0xc] sm:$0xf]
      %v735 = vunpack.c.l.b16 %v727
      %v736 = vunpack.c.l.b16 %v728
      %v737 = vunpack.c.l.b16 %v729
      %v738 = vunpack.c.l.b16 %v730
      %v739 = vpack.c.b16 %v736, %v735
      %v740 = vpack.c.b16 %v738, %v737
      %v744 = vsel %vm402, %v726, 0
      %746 = vmatpush.bf16.msra.mxu0 0
      %747 = vmatpush.bf16.msra.mxu0 0
      %748 = vmatpush.bf16.msra.mxu0 0
      %749 = vmatpush.bf16.msra.mxu0 0
      %750 = vmatpush.bf16.msra.mxu0 0
      %751 = vmatpush.bf16.msra.mxu0 0
      %752 = vmatpush.bf16.msra.mxu0 %v740
      %753 = vmatpush.bf16.msra.mxu0 %v739
      %754 = vmatmul.bf16.gmra.mxu0 %v744
      %v755 = vpop.f32.mrf.mxu0
      %v756 = vadd.f32 0.0, %v755
      %v757 = vpop.f32.mrf.mxu0
      %758 = vdwg.mxu0
      %v759 = vadd.f32 %v399, %v756
      %v760 = vld [vmem:[%s8] sm:$0x1]
      %v762 = vperm.slane %v760, 0
      %v764 = vadd.f32 %v759, %v762
      %765 = vst.msk [vmem:[%s397] sm:$0xff] %vm402, %v764
      %p766 = scmp.lt.s32.totalorder %s24, 0
      %s767 = scalar_select %p766, %s24, 0
      %p768 = scmp.lt.s32.totalorder %s25, 1
      %s769 = scalar_select %p768, %s25, 1
      %s770 = smul.addr %s767, 2
      %s771 = sadd.s32 %s769, %s770
      %s772 = smul.addr %s771, 8
      %s773 = scalar_lea.vmem %s9, %s772
      // Predicated region
      $region57: #{decoder_forward.18} parent=55 // pred_check
        %p774 = pneg %p258
      $region58: #{decoder_forward.18} parent=55 // pred_check_branch
        %776 = sbr.rel (%p774) target = $region60
      $region59: #{decoder_forward.18} parent=55 // pred_region
        _
      $region60: #{decoder_forward.18} parent=55 // pred_fallthru
        _
    $region56: #{decoder_forward.18} parent=5 // pred_fallthru
      _
    %p777 = scmp.le.s32.totalorder 2, %s15
    // Predicated region
    $region61: #{decoder_forward.18} parent=5 // pred_check
      %p778 = pneg %p777
    $region62: #{decoder_forward.18} parent=5 // pred_check_branch
      %780 = sbr.rel (%p778) target = $region64
    $region63: #{decoder_forward.18} parent=5 // pred_region
      %s781 = ssub.s32 %s15, 2
      // Predicated region
      $region65: #{decoder_forward.18} parent=63 // pred_check
        %p782 = pneg %p264
      $region66: #{decoder_forward.18} parent=63 // pred_check_branch
        %784 = sbr.rel (%p782) target = $region68
      $region67: #{decoder_forward.18} parent=63 // pred_region
        %p785 = scmp.lt.s32.totalorder %s26, 0
        %s786 = scalar_select %p785, %s26, 0
        %p787 = scmp.lt.s32.totalorder %s27, 1
        %s788 = scalar_select %p787, %s27, 1
        %s789 = smul.addr %s786, 2
        %s790 = sadd.s32 %s788, %s789
        %s791 = smul.addr %s790, 8
        %s792 = scalar_lea.vmem %s9, %s791
      $region68: #{decoder_forward.18} parent=63 // pred_fallthru
        _
    $region64: #{decoder_forward.18} parent=5 // pred_fallthru
      _
  $region6: #{decoder_forward.18} parent=0 // loop_footer
    %s19 = sadd.s32 1, %s15
  $region7: #{decoder_forward.18} parent=0 // loop_footer_branch
    %14 = sbr.rel target = $region3
  $region8: #{decoder_forward.18} parent=0 // loop_exit
    _

// kernel: decoder_forward.19
$region0: #{decoder_forward.19}
  #allocation0 [shape = 'u32[]', space=smem, size = 0x4, offset = 0x4, fixed_abs, tag = 'smem constant byte address 0x4 - core index']
  #allocation1 [shape = 'u32[72,128]{1,0:T(1,128)}', space=vmem, size = 0x9000, scoped, tag = 'internal scratch']
  %s0 = inlined_call_operand.vmem [shape: f32[1,2,8,32], index: 0, kind: input, shape index: {}]
  %s1 = inlined_call_operand.vmem [shape: bf16[2,16,32], index: 1, kind: input, shape index: {}]
  %s2 = inlined_call_operand.vmem [shape: bf16[2,16,32], index: 2, kind: input, shape index: {}]
  %s3 = inlined_call_operand.vmem [shape: f32[1,1,32], index: 3, kind: input, shape index: {}]
  %s4 = inlined_call_operand.vmem [shape: f32[1,1,32], index: 4, kind: input, shape index: {}]
  %s5 = inlined_call_operand.vmem [shape: bf16[32,32], index: 5, kind: input, shape index: {}]
  %s6 = inlined_call_operand.vmem [shape: f32[1,32], index: 6, kind: input, shape index: {}]
  %s7 = inlined_call_operand.hbm [shape: bf16[32,32], index: 7, kind: input, shape index: {}]
  %s8 = inlined_call_operand.vmem [shape: f32[1,32], index: 8, kind: input, shape index: {}]
  %s9 = inlined_call_operand.vmem [shape: f32[1,2,8,32], index: 9, kind: output, shape index: {}]
  %s10 = sld [smem:[#allocation0]]
  $region73: #{decoder_forward.19} parent=0
    _
  %s12 = ssub.s32 1, %s10
  %s13 = scalar_select 0, %s12, %s10
  $region1: #{decoder_forward.19} parent=0
    #allocation2 [shape = 'u8[8192]{0}', space=vmem, size = 0x2000, scoped, tag = 'input window, operand 7, single buffered']
    #allocation3 [shape = 's32[2]{0}', space=sflag, size = 0x8, scoped, tag = 'scoped memory for decoder_forward.19']
    %14 = vsyncpa [#allocation3], 0
    loop: start=0, step=1, limit=4
    $region2: #{decoder_forward.19} parent=1 // loop_pre_header
      _
    $region3: #{decoder_forward.19} parent=1 // loop_header
      %s16 = sphi 0, %s20
      %p17 = scmp.ge.s32.totalorder %s16, 4
      %s23 = sphi 0, %s35
      %s24 = sphi 0, %s31
      %s25 = sphi 0, %s23
      %s26 = sphi 0, %s24
      %s27 = sphi 0, %s25
      %s28 = sphi 0, %s26
      %s40 = sphi 0, %s42
      %s43 = sphi 0, %s40
      %s44 = sphi 0, %s43
      %s60 = sphi 0, %s44
      %s66 = sphi 0, %s68
      %s69 = sphi 0, %s66
      %s70 = sphi 0, %s69
      %s86 = sphi 0, %s70
      %s92 = sphi 0, %s94
      %s95 = sphi 0, %s92
      %s96 = sphi 0, %s95
      %s112 = sphi 0, %s96
      %s116 = sphi 0, %s116
      %s118 = sphi 0, %s116
      %s119 = sphi 0, %s118
      %s133 = sphi 0, %s119
      %s137 = sphi 0, %s137
      %s139 = sphi 0, %s137
      %s140 = sphi 0, %s139
      %s154 = sphi 0, %s140
      %s158 = sphi 0, %s158
      %s160 = sphi 0, %s158
      %s161 = sphi 0, %s160
      %s175 = sphi 0, %s161
      %s179 = sphi 0, %s179
      %s181 = sphi 0, %s179
      %s182 = sphi 0, %s181
      %s196 = sphi 0, %s182
      %s200 = sphi 0, %s200
      %s202 = sphi 0, %s200
      %s203 = sphi 0, %s202
      %s217 = sphi 0, %s203
      %s221 = sphi 0, %s221
      %s223 = sphi 0, %s221
      %s224 = sphi 0, %s223
      %s238 = sphi 0, %s224
      %s246 = sphi 0, %s248
      %s249 = sphi 0, %s246
      %s250 = sphi 0, %s249
      %s266 = sphi 0, %s250
    $region4: #{decoder_forward.19} parent=1 // loop_header_branch
      %19 = sbr.rel (%p17) target = $region8
    $region5: #{decoder_forward.19} parent=1 // loop_body
      %s21 = ssub.s32 %s16, 1
      %s22 = ssub.s32 %s16, 2
      %s29 = sadd.s32 1, %s24
      %p30 = scmp.ge.s32.totalorder %s29, 2
      %s31 = scalar_select %p30, 0, %s29
      %s32 = sadd.s32 1, %s23
      %s33 = scalar_select %p30, %s32, %s23
      %p34 = scmp.ge.s32.totalorder %s33, 1
      %s35 = scalar_select %p34, 0, %s33
      %s36 = ssub.s32 %s23, %s35
      %s37 = ssub.s32 %s24, %s31
      %s38 = sor.u32 %s36, %s37
      %p39 = scmp.eq.s32.totalorder %s38, 0
      %s41 = sadd.s32 %s40, 1
      %s42 = scalar_select %p39, %s40, %s41
      %p45 = pneg %p39
      %p46 = scmp.eq.s32.totalorder %s16, 1
      %p47 = por %p45, %p46
      %p48 = scmp.ne.s32.totalorder %s40, %s43
      %p49 = scmp.eq.s32.totalorder %s16, 0
      %p50 = por %p48, %p49
      %p51 = scmp.ne.s32.totalorder %s40, %s43
      %p52 = scmp.eq.s32.totalorder %s21, 1
      %p53 = por %p51, %p52
      %p54 = scmp.ne.s32.totalorder %s43, %s44
      %p55 = scmp.eq.s32.totalorder %s21, 0
      %p56 = por %p54, %p55
      %p57 = scmp.ne.s32.totalorder %s43, %s44
      %p58 = scmp.eq.s32.totalorder %s22, 1
      %p59 = por %p57, %p58
      %p61 = scmp.ne.s32.totalorder %s44, %s60
      %p62 = scmp.eq.s32.totalorder %s22, 0
      %p63 = por %p61, %p62
      %s64 = ssub.s32 %s24, %s31
      %p65 = scmp.eq.s32.totalorder %s64, 0
      %s67 = sadd.s32 %s66, 1
      %s68 = scalar_select %p65, %s66, %s67
      %p71 = pneg %p65
      %p72 = scmp.eq.s32.totalorder %s16, 1
      %p73 = por %p71, %p72
      %p74 = scmp.ne.s32.totalorder %s66, %s69
      %p75 = scmp.eq.s32.totalorder %s16, 0
      %p76 = por %p74, %p75
      %p77 = scmp.ne.s32.totalorder %s66, %s69
      %p78 = scmp.eq.s32.totalorder %s21, 1
      %p79 = por %p77, %p78
      %p80 = scmp.ne.s32.totalorder %s69, %s70
      %p81 = scmp.eq.s32.totalorder %s21, 0
      %p82 = por %p80, %p81
      %p83 = scmp.ne.s32.totalorder %s69, %s70
      %p84 = scmp.eq.s32.totalorder %s22, 1
      %p85 = por %p83, %p84
      %p87 = scmp.ne.s32.totalorder %s70, %s86
      %p88 = scmp.eq.s32.totalorder %s22, 0
      %p89 = por %p87, %p88
      %s90 = ssub.s32 %s24, %s31
      %p91 = scmp.eq.s32.totalorder %s90, 0
      %s93 = sadd.s32 %s92, 1
      %s94 = scalar_select %p91, %s92, %s93
      %p97 = pneg %p91
      %p98 = scmp.eq.s32.totalorder %s16, 1
      %p99 = por %p97, %p98
      %p100 = scmp.ne.s32.totalorder %s92, %s95
      %p101 = scmp.eq.s32.totalorder %s16, 0
      %p102 = por %p100, %p101
      %p103 = scmp.ne.s32.totalorder %s92, %s95
      %p104 = scmp.eq.s32.totalorder %s21, 1
      %p105 = por %p103, %p104
      %p106 = scmp.ne.s32.totalorder %s95, %s96
      %p107 = scmp.eq.s32.totalorder %s21, 0
      %p108 = por %p106, %p107
      %p109 = scmp.ne.s32.totalorder %s95, %s96
      %p110 = scmp.eq.s32.totalorder %s22, 1
      %p111 = por %p109, %p110
      %p113 = scmp.ne.s32.totalorder %s96, %s112
      %p114 = scmp.eq.s32.totalorder %s22, 0
      %p115 = por %p113, %p114
      %s117 = sadd.s32 %s116, 1
      %p120 = scmp.eq.s32.totalorder %s16, 1
      %p121 = scmp.ne.s32.totalorder %s116, %s118
      %p122 = scmp.eq.s32.totalorder %s16, 0
      %p123 = por %p121, %p122
      %p124 = scmp.ne.s32.totalorder %s116, %s118
      %p125 = scmp.eq.s32.totalorder %s21, 1
      %p126 = por %p124, %p125
      %p127 = scmp.ne.s32.totalorder %s118, %s119
      %p128 = scmp.eq.s32.totalorder %s21, 0
      %p129 = por %p127, %p128
      %p130 = scmp.ne.s32.totalorder %s118, %s119
      %p131 = scmp.eq.s32.totalorder %s22, 1
      %p132 = por %p130, %p131
      %p134 = scmp.ne.s32.totalorder %s119, %s133
      %p135 = scmp.eq.s32.totalorder %s22, 0
      %p136 = por %p134, %p135
      %s138 = sadd.s32 %s137, 1
      %p141 = scmp.eq.s32.totalorder %s16, 1
      %p142 = scmp.ne.s32.totalorder %s137, %s139
      %p143 = scmp.eq.s32.totalorder %s16, 0
      %p144 = por %p142, %p143
      %p145 = scmp.ne.s32.totalorder %s137, %s139
      %p146 = scmp.eq.s32.totalorder %s21, 1
      %p147 = por %p145, %p146
      %p148 = scmp.ne.s32.totalorder %s139, %s140
      %p149 = scmp.eq.s32.totalorder %s21, 0
      %p150 = por %p148, %p149
      %p151 = scmp.ne.s32.totalorder %s139, %s140
      %p152 = scmp.eq.s32.totalorder %s22, 1
      %p153 = por %p151, %p152
      %p155 = scmp.ne.s32.totalorder %s140, %s154
      %p156 = scmp.eq.s32.totalorder %s22, 0
      %p157 = por %p155, %p156
      %s159 = sadd.s32 %s158, 1
      %p162 = scmp.eq.s32.totalorder %s16, 1
      %p163 = scmp.ne.s32.totalorder %s158, %s160
      %p164 = scmp.eq.s32.totalorder %s16, 0
      %p165 = por %p163, %p164
      %p166 = scmp.ne.s32.totalorder %s158, %s160
      %p167 = scmp.eq.s32.totalorder %s21, 1
      %p168 = por %p166, %p167
      %p169 = scmp.ne.s32.totalorder %s160, %s161
      %p170 = scmp.eq.s32.totalorder %s21, 0
      %p171 = por %p169, %p170
      %p172 = scmp.ne.s32.totalorder %s160, %s161
      %p173 = scmp.eq.s32.totalorder %s22, 1
      %p174 = por %p172, %p173
      %p176 = scmp.ne.s32.totalorder %s161, %s175
      %p177 = scmp.eq.s32.totalorder %s22, 0
      %p178 = por %p176, %p177
      %s180 = sadd.s32 %s179, 1
      %p183 = scmp.eq.s32.totalorder %s16, 1
      %p184 = scmp.ne.s32.totalorder %s179, %s181
      %p185 = scmp.eq.s32.totalorder %s16, 0
      %p186 = por %p184, %p185
      %p187 = scmp.ne.s32.totalorder %s179, %s181
      %p188 = scmp.eq.s32.totalorder %s21, 1
      %p189 = por %p187, %p188
      %p190 = scmp.ne.s32.totalorder %s181, %s182
      %p191 = scmp.eq.s32.totalorder %s21, 0
      %p192 = por %p190, %p191
      %p193 = scmp.ne.s32.totalorder %s181, %s182
      %p194 = scmp.eq.s32.totalorder %s22, 1
      %p195 = por %p193, %p194
      %p197 = scmp.ne.s32.totalorder %s182, %s196
      %p198 = scmp.eq.s32.totalorder %s22, 0
      %p199 = por %p197, %p198
      %s201 = sadd.s32 %s200, 1
      %p204 = scmp.eq.s32.totalorder %s16, 1
      %p205 = scmp.ne.s32.totalorder %s200, %s202
      %p206 = scmp.eq.s32.totalorder %s16, 0
      %p207 = por %p205, %p206
      %p208 = scmp.ne.s32.totalorder %s200, %s202
      %p209 = scmp.eq.s32.totalorder %s21, 1
      %p210 = por %p208, %p209
      %p211 = scmp.ne.s32.totalorder %s202, %s203
      %p212 = scmp.eq.s32.totalorder %s21, 0
      %p213 = por %p211, %p212
      %p214 = scmp.ne.s32.totalorder %s202, %s203
      %p215 = scmp.eq.s32.totalorder %s22, 1
      %p216 = por %p214, %p215
      %p218 = scmp.ne.s32.totalorder %s203, %s217
      %p219 = scmp.eq.s32.totalorder %s22, 0
      %p220 = por %p218, %p219
      %s222 = sadd.s32 %s221, 1
      %p225 = scmp.eq.s32.totalorder %s16, 1
      %p226 = scmp.ne.s32.totalorder %s221, %s223
      %p227 = scmp.eq.s32.totalorder %s16, 0
      %p228 = por %p226, %p227
      %p229 = scmp.ne.s32.totalorder %s221, %s223
      %p230 = scmp.eq.s32.totalorder %s21, 1
      %p231 = por %p229, %p230
      %p232 = scmp.ne.s32.totalorder %s223, %s224
      %p233 = scmp.eq.s32.totalorder %s21, 0
      %p234 = por %p232, %p233
      %p235 = scmp.ne.s32.totalorder %s223, %s224
      %p236 = scmp.eq.s32.totalorder %s22, 1
      %p237 = por %p235, %p236
      %p239 = scmp.ne.s32.totalorder %s224, %s238
      %p240 = scmp.eq.s32.totalorder %s22, 0
      %p241 = por %p239, %p240
      %s242 = ssub.s32 %s23, %s35
      %s243 = ssub.s32 %s24, %s31
      %s244 = sor.u32 %s242, %s243
      %p245 = scmp.eq.s32.totalorder %s244, 0
      %s247 = sadd.s32 %s246, 1
      %s248 = scalar_select %p245, %s246, %s247
      %p251 = pneg %p245
      %p252 = scmp.eq.s32.totalorder %s16, 1
      %p253 = por %p251, %p252
      %p254 = scmp.ne.s32.totalorder %s246, %s249
      %p255 = scmp.eq.s32.totalorder %s16, 0
      %p256 = por %p254, %p255
      %p257 = scmp.ne.s32.totalorder %s246, %s249
      %p258 = scmp.eq.s32.totalorder %s21, 1
      %p259 = por %p257, %p258
      %p260 = scmp.ne.s32.totalorder %s249, %s250
      %p261 = scmp.eq.s32.totalorder %s21, 0
      %p262 = por %p260, %p261
      %p263 = scmp.ne.s32.totalorder %s249, %s250
      %p264 = scmp.eq.s32.totalorder %s22, 1
      %p265 = por %p263, %p264
      %p267 = scmp.ne.s32.totalorder %s250, %s266
      %p268 = scmp.eq.s32.totalorder %s22, 0
      %p269 = por %p267, %p268
      %p270 = scmp.le.s32.totalorder 1, %s16
      %p271 = scmp.lt.s32.totalorder %s16, 3
      %p272 = pnand %p270, %p271
      %p273 = pneg %p272
      // Predicated region
      $region9: #{decoder_forward.19} parent=5 // pred_check
        _
      $region10: #{decoder_forward.19} parent=5 // pred_check_branch
        %275 = sbr.rel (%p272) target = $region12
      $region11: #{decoder_forward.19} parent=5 // pred_region
        %s276 = ssub.s32 %s16, 1
        // Predicated region
        $region13: #{decoder_forward.19} parent=11 // pred_check
          %p277 = pneg %p129
        $region14: #{decoder_forward.19} parent=11 // pred_check_branch
          %279 = sbr.rel (%p277) target = $region16
        $region15: #{decoder_forward.19} parent=11 // pred_region
          _
        $region16: #{decoder_forward.19} parent=11 // pred_fallthru
          _
        // Predicated region
        $region17: #{decoder_forward.19} parent=11 // pred_check
          %p280 = pneg %p150
        $region18: #{decoder_forward.19} parent=11 // pred_check_branch
          %282 = sbr.rel (%p280) target = $region20
        $region19: #{decoder_forward.19} parent=11 // pred_region
          _
        $region20: #{decoder_forward.19} parent=11 // pred_fallthru
          _
        // Predicated region
        $region21: #{decoder_forward.19} parent=11 // pred_check
          %p283 = pneg %p171
        $region22: #{decoder_forward.19} parent=11 // pred_check_branch
          %285 = sbr.rel (%p283) target = $region24
        $region23: #{decoder_forward.19} parent=11 // pred_region
          _
        $region24: #{decoder_forward.19} parent=11 // pred_fallthru
          _
        // Predicated region
        $region25: #{decoder_forward.19} parent=11 // pred_check
          %p286 = pneg %p192
        $region26: #{decoder_forward.19} parent=11 // pred_check_branch
          %288 = sbr.rel (%p286) target = $region28
        $region27: #{decoder_forward.19} parent=11 // pred_region
          _
        $region28: #{decoder_forward.19} parent=11 // pred_fallthru
          _
        // Predicated region
        $region29: #{decoder_forward.19} parent=11 // pred_check
          %p289 = pneg %p213
        $region30: #{decoder_forward.19} parent=11 // pred_check_branch
          %291 = sbr.rel (%p289) target = $region32
        $region31: #{decoder_forward.19} parent=11 // pred_region
          %293 = vsyncadd [#allocation3], 0
          %s294 = sshll.u32 %s7, 4
          %s295 = int_to_ptr.hbm [resolvable:$true] %s294
          %s296 = sshll.u32 [#allocation2], 4
          %s297 = int_to_ptr.vmem [resolvable:$true] %s296
          %302 = dma.hbm_to_vmem [thread:$0]  %s295, 256, %s297, [#allocation3], 64, 64, 4
        $region32: #{decoder_forward.19} parent=11 // pred_fallthru
          _
        // Predicated region
        $region33: #{decoder_forward.19} parent=11 // pred_check
          %p303 = pneg %p234
        $region34: #{decoder_forward.19} parent=11 // pred_check_branch
          %305 = sbr.rel (%p303) target = $region36
        $region35: #{decoder_forward.19} parent=11 // pred_region
          _
        $region36: #{decoder_forward.19} parent=11 // pred_fallthru
          _
      $region12: #{decoder_forward.19} parent=5 // pred_fallthru
        _
      %p306 = scmp.lt.s32.totalorder %s16, 2
      // Predicated region
      $region37: #{decoder_forward.19} parent=5 // pred_check
        %p307 = pneg %p306
      $region38: #{decoder_forward.19} parent=5 // pred_check_branch
        %309 = sbr.rel (%p307) target = $region40
      $region39: #{decoder_forward.19} parent=5 // pred_region
        // Predicated region
        $region41: #{decoder_forward.19} parent=39 // pred_check
          %p310 = pneg %p50
        $region42: #{decoder_forward.19} parent=39 // pred_check_branch
          %312 = sbr.rel (%p310) target = $region44
        $region43: #{decoder_forward.19} parent=39 // pred_region
          %p313 = scmp.lt.s32.totalorder %s23, 0
          %s314 = scalar_select %p313, %s23, 0
          %p315 = scmp.lt.s32.totalorder %s24, 1
          %s316 = scalar_select %p315, %s24, 1
          %s317 = smul.addr %s314, 2
          %s318 = sadd.s32 %s316, %s317
          %s319 = smul.addr %s318, 8
          %s320 = scalar_lea.vmem %s0, %s319
        $region44: #{decoder_forward.19} parent=39 // pred_fallthru
          _
        // Predicated region
        $region45: #{decoder_forward.19} parent=39 // pred_check
          %p321 = pneg %p76
        $region46: #{decoder_forward.19} parent=39 // pred_check_branch
          %323 = sbr.rel (%p321) target = $region48
        $region47: #{decoder_forward.19} parent=39 // pred_region
          %p324 = scmp.lt.s32.totalorder %s24, 1
          %s325 = scalar_select %p324, %s24, 1
          %s326 = smul.addr %s325, 2
          %s327 = smul.addr %s326, 4
          %s328 = scalar_lea.vmem %s1, %s327
        $region48: #{decoder_forward.19} parent=39 // pred_fallthru
          _
        // Predicated region
        $region49: #{decoder_forward.19} parent=39 // pred_check
          %p329 = pneg %p102
        $region50: #{decoder_forward.19} parent=39 // pred_check_branch
          %331 = sbr.rel (%p329) target = $region52
        $region51: #{decoder_forward.19} parent=39 // pred_region
          %p332 = scmp.lt.s32.totalorder %s24, 1
          %s333 = scalar_select %p332, %s24, 1
          %s334 = smul.addr %s333, 2
          %s335 = smul.addr %s334, 4
          %s336 = scalar_lea.vmem %s2, %s335
        $region52: #{decoder_forward.19} parent=39 // pred_fallthru
          _
      $region40: #{decoder_forward.19} parent=5 // pred_fallthru
        _
      %p337 = scmp.le.s32.totalorder 1, %s16
      %p338 = scmp.lt.s32.totalorder %s16, 3
      %p339 = pnand %p337, %p338
      %p340 = pneg %p339
      // Predicated region
      $region53: #{decoder_forward.19} parent=5 // pred_check
        _
      $region54: #{decoder_forward.19} parent=5 // pred_check_branch
        %342 = sbr.rel (%p339) target = $region56
      $region55: #{decoder_forward.19} parent=5 // pred_region
        %s343 = ssub.s32 %s16, 1
        // Predicated region
        $region57: #{decoder_forward.19} parent=55 // pred_check
          %p344 = pneg %p213
        $region58: #{decoder_forward.19} parent=55 // pred_check_branch
          %346 = sbr.rel (%p344) target = $region60
        $region59: #{decoder_forward.19} parent=55 // pred_region
          %348 = dma.done [#allocation3], 256
        $region60: #{decoder_forward.19} parent=55 // pred_fallthru
          _
        %p349 = scmp.lt.s32.totalorder %s25, 0
        %s350 = scalar_select %p349, %s25, 0
        %p351 = scmp.lt.s32.totalorder %s26, 1
        %s352 = scalar_select %p351, %s26, 1
        %s353 = smul.addr %s350, 2
        %s354 = sadd.s32 %s352, %s353
        %s355 = smul.addr %s354, 8
        %s356 = scalar_lea.vmem %s0, %s355
        %p357 = pneg %p56
        %p358 = pneg %p53
        %p359 = scmp.lt.s32.totalorder %s26, 1
        %s360 = scalar_select %p359, %s26, 1
        %s361 = smul.addr %s360, 2
        %s362 = smul.addr %s361, 4
        %s363 = scalar_lea.vmem %s1, %s362
        %p364 = pneg %p82
        %p365 = pneg %p79
        %p366 = scmp.lt.s32.totalorder %s26, 1
        %s367 = scalar_select %p366, %s26, 1
        %s368 = smul.addr %s367, 2
        %s369 = smul.addr %s368, 4
        %s370 = scalar_lea.vmem %s2, %s369
        %p371 = pneg %p108
        %p372 = pneg %p105
        %p373 = pneg %p129
        %p374 = pneg %p126
        %p375 = pneg %p150
        %p376 = pneg %p147
        %p377 = pneg %p171
        %p378 = pneg %p168
        %p379 = pneg %p192
        %p380 = pneg %p189
        %p381 = pneg %p213
        %p382 = pneg %p210
        %p383 = pneg %p234
        %p384 = pneg %p231
        %p385 = pneg %p262
        %p386 = pneg %p259
        %p387 = scmp.lt.s32.totalorder %s25, 0
        %s388 = scalar_select %p387, %s25, 0
        %p389 = scmp.lt.s32.totalorder %s26, 1
        %s390 = scalar_select %p389, %s26, 1
        %s391 = smul.addr %s388, 2
        %s392 = sadd.s32 %s390, %s391
        %s393 = smul.addr %s392, 8
        %s394 = scalar_lea.vmem %s9, %s393
        %p395 = scmp.lt.s32.totalorder %s25, 0
        %s396 = scalar_select %p395, %s25, 0
        %p397 = scmp.lt.s32.totalorder %s26, 1
        %s398 = scalar_select %p397, %s26, 1
        %s399 = smul.addr %s396, 2
        %s400 = sadd.s32 %s398, %s399
        %s401 = smul.addr %s400, 8
        %s402 = scalar_lea.vmem %s0, %s401
        %p403 = scmp.lt.s32.totalorder %s26, 1
        %s404 = scalar_select %p403, %s26, 1
        %s405 = smul.addr %s404, 2
        %s406 = smul.addr %s405, 4
        %s407 = scalar_lea.vmem %s1, %s406
        %p408 = scmp.lt.s32.totalorder %s26, 1
        %s409 = scalar_select %p408, %s26, 1
        %s410 = smul.addr %s409, 2
        %s411 = smul.addr %s410, 4
        %s412 = scalar_lea.vmem %s2, %s411
        %p413 = scmp.lt.s32.totalorder %s25, 0
        %s414 = scalar_select %p413, %s25, 0
        %p415 = scmp.lt.s32.totalorder %s26, 1
        %s416 = scalar_select %p415, %s26, 1
        %s417 = smul.addr %s414, 2
        %s418 = sadd.s32 %s416, %s417
        %s419 = smul.addr %s418, 8
        %s420 = scalar_lea.vmem %s9, %s419
        %v422 = vld [vmem:[%s402] sm:$0xff]
        %v423 = vld [vmem:[%s3] sm:$0x1]
        %v424 = vld [vmem:[%s4] sm:$0x1]
        %vm425 = vcmask 261120
        %v426 = vsel %vm425, %v422, 0.0
        %427 = vadd.xlane.f32.xlu0 %v426
        %v428 = vpop.xlane.xlu0 %427
        %v429 = vrcp.pop 32.0
        %v430 = vmul.f32 32.0, %v429
        %v431 = vsub.f32 1.0, %v430
        %v432 = vmul.f32 %v429, %v431
        %v433 = vadd.f32 %v429, %v432
        %vm434 = vweird.f32 %v429
        %v435 = vsel %vm434, %v429, %v433
        %v436 = vmul.f32 %v428, %v435
        %v437 = vsub.f32 %v422, %v436
        %v438 = vmul.f32 %v437, %v437
        %v439 = vsel %vm425, %v438, 0.0
        %440 = vadd.xlane.f32.xlu0 %v439
        %v441 = vpop.xlane.xlu0 %440
        %v442 = vmul.f32 %v441, %v435
        %v443 = vadd.f32 %v442, 1e-05
        %v444 = vrsqrt.pop %v443
        %v445 = vmul.f32 %v444, %v443
        %v446 = vmul.f32 %v445, %v444
        %v447 = vmul.f32 0.5, %v446
        %v448 = vsub.f32 1.5, %v447
        %v449 = vmul.f32 %v444, %v448
        %vm450 = vweird.f32 %v443
        %vm451 = vweird.f32 %v444
        %vm452 = vmor %vm450, %vm451
        %v453 = vsel %vm452, %v444, %v449
        %v454 = vmul.f32 %v437, %v453
        %v456 = vperm.slane %v423, 0
        %v458 = vmul.f32 %v454, %v456
        %v460 = vperm.slane %v424, 0
        %v462 = vadd.f32 %v458, %v460
        %v463 = vpack.c.bf16 %v462, %v462
        %v464 = vld [vmem:[%s5] sm:$0xf]
        %v465 = vld [vmem:[%s5 + $0x4] sm:$0xf]
        %v466 = vld [vmem:[%s5 + $0x8] sm:$0xf]
        %v467 = vld [vmem:[%s5 + $0xc] sm:$0xf]
        %v468 = vld [vmem:[%s6] sm:$0x1]
        %v470 = vperm.slane %v468, 0
        %v476 = vunpack.c.l.b16 %v464
        %v477 = vunpack.c.l.b16 %v465
        %v478 = vunpack.c.l.b16 %v466
        %v479 = vunpack.c.l.b16 %v467
        %v480 = vpack.c.b16 %v477, %v476
        %v481 = vpack.c.b16 %v479, %v478
        %v485 = vsel %vm425, %v463, 0
        %487 = vmatpush.bf16.msra.mxu0 0
        %488 = vmatpush.bf16.msra.mxu0 0
        %489 = vmatpush.bf16.msra.mxu0 0
        %490 = vmatpush.bf16.msra.mxu0 0
        %491 = vmatpush.bf16.msra.mxu0 0
        %492 = vmatpush.bf16.msra.mxu0 0
        %493 = vmatpush.bf16.msra.mxu0 %v481
        %494 = vmatpush.bf16.msra.mxu0 %v480
        %495 = vmatmul.bf16.gmra.mxu0 %v485
        %v496 = vpop.f32.mrf.mxu0
        %v497 = vadd.f32 %v470, %v496
        %v498 = vpop.f32.mrf.mxu0
        %499 = vdwg.mxu0
        %v500 = vpack.c.bf16 %v497, %v497
        %v501 = vld [vmem:[%s407] sm:$0xf]
        %v502 = vld [vmem:[%s407 + $0x4] sm:$0xf]
        %v503 = vld [vmem:[%s412] sm:$0xf]
        %v504 = vld [vmem:[%s412 + $0x4] sm:$0xf]
        %v507 = vunpack.c.l.b16 %v501
        %v508 = vunpack.c.l.b16 %v502
        %v509 = vpack.c.b16 %v508, %v507
        %vm510 = vcmask 64512
        %v512 = vsel %vm510, %v500, 0
        %v515 = vsel %vm510, %v509, 0
        %517 = vmatpush.bf16.xpose.msra.mxu0 0
        %518 = vmatpush.bf16.xpose.msra.mxu0 0
        %519 = vmatpush.bf16.xpose.msra.mxu0 0
        %520 = vmatpush.bf16.xpose.msra.mxu0 0
        %521 = vmatpush.bf16.xpose.msra.mxu0 0
        %522 = vmatpush.bf16.xpose.msra.mxu0 0
        %523 = vmatpush.bf16.xpose.msra.mxu0 0
        %524 = vmatpush.bf16.xpose.msra.mxu0 %v515
        %525 = vmatmul.bf16.gmra.mxu0 %v512
        %v526 = vpop.f32.mrf.mxu0
        %v527 = vadd.f32 0.0, %v526
        %v528 = vpop.f32.mrf.mxu0
        %529 = vdwg.mxu0
        %vm530 = vcmask 130048
        %v531 = vsel %vm530, %v527, -inf
        %532 = vmax.xlane.f32.xlu0 %v531
        %v533 = vpop.xlane.xlu0 %532
        %v534 = vsub.f32 %v527, %v533
        %v535 = vmul.f32 %v534, 1.442695
        %v536 = vpow.pop %v535
        %v537 = vsel %vm530, %v536, 0.0
        %538 = vadd.xlane.f32.xlu0 %v537
        %v539 = vpop.xlane.xlu0 %538
        %v540 = vrcp.pop %v539
        %v541 = vmul.f32 %v536, %v540
        %v542 = vpack.c.bf16 %v541, %v541
        %v545 = vunpack.c.l.b16 %v503
        %v546 = vunpack.c.l.b16 %v504
        %v547 = vpack.c.b16 %v546, %v545
        %v550 = vsel %vm530, %v542, 0
        %552 = vmatpush.bf16.msra.mxu0 0
        %553 = vmatpush.bf16.msra.mxu0 0
        %554 = vmatpush.bf16.msra.mxu0 0
        %555 = vmatpush.bf16.msra.mxu0 0
        %556 = vmatpush.bf16.msra.mxu0 0
        %557 = vmatpush.bf16.msra.mxu0 0
        %558 = vmatpush.bf16.msra.mxu0 0
        %559 = vmatpush.bf16.msra.mxu0 %v547
        %560 = vmatmul.bf16.gmra.mxu0 %v550
        %v561 = vpop.f32.mrf.mxu0
        %v562 = vadd.f32 0.0, %v561
        %v563 = vpop.f32.mrf.mxu0
        %564 = vdwg.mxu0
        %v566 = vunpack.c.l.b16 %v500
        %v567 = vpack.c.b16 %v566, %v566
        %568 = vrot.lane.b32.xlu0 %v567, 120
        %v569 = vpop.permute.xlu0 %568
        %570 = vrot.lane.b32.xlu0 %v509, 120
        %v571 = vpop.permute.xlu0 %570
        %v573 = vsel %vm510, %v569, 0
        %v576 = vsel %vm510, %v571, 0
        %578 = vmatpush.bf16.xpose.msra.mxu0 0
        %579 = vmatpush.bf16.xpose.msra.mxu0 0
        %580 = vmatpush.bf16.xpose.msra.mxu0 0
        %581 = vmatpush.bf16.xpose.msra.mxu0 0
        %582 = vmatpush.bf16.xpose.msra.mxu0 0
        %583 = vmatpush.bf16.xpose.msra.mxu0 0
        %584 = vmatpush.bf16.xpose.msra.mxu0 0
        %585 = vmatpush.bf16.xpose.msra.mxu0 %v576
        %586 = vmatmul.bf16.gmra.mxu0 %v573
        %v587 = vpop.f32.mrf.mxu0
        %v588 = vadd.f32 0.0, %v587
        %v589 = vpop.f32.mrf.mxu0
        %590 = vdwg.mxu0
        %v591 = vsel %vm530, %v588, -inf
        %592 = vmax.xlane.f32.xlu0 %v591
        %v593 = vpop.xlane.xlu0 %592
        %v594 = vsub.f32 %v588, %v593
        %v595 = vmul.f32 %v594, 1.442695
        %v596 = vpow.pop %v595
        %v597 = vsel %vm530, %v596, 0.0
        %598 = vadd.xlane.f32.xlu0 %v597
        %v599 = vpop.xlane.xlu0 %598
        %v600 = vrcp.pop %v599
        %v601 = vmul.f32 %v596, %v600
        %v602 = vpack.c.bf16 %v601, %v601
        %603 = vrot.lane.b32.xlu0 %v547, 120
        %v604 = vpop.permute.xlu0 %603
        %v607 = vsel %vm530, %v602, 0
        %609 = vmatpush.bf16.msra.mxu0 0
        %610 = vmatpush.bf16.msra.mxu0 0
        %611 = vmatpush.bf16.msra.mxu0 0
        %612 = vmatpush.bf16.msra.mxu0 0
        %613 = vmatpush.bf16.msra.mxu0 0
        %614 = vmatpush.bf16.msra.mxu0 0
        %615 = vmatpush.bf16.msra.mxu0 0
        %616 = vmatpush.bf16.msra.mxu0 %v604
        %617 = vmatmul.bf16.gmra.mxu0 %v607
        %v618 = vpop.f32.mrf.mxu0
        %v619 = vadd.f32 0.0, %v618
        %v620 = vpop.f32.mrf.mxu0
        %621 = vdwg.mxu0
        %622 = vrot.lane.b32.xlu0 %v567, 112
        %v623 = vpop.permute.xlu0 %622
        %624 = vrot.lane.b32.xlu0 %v509, 112
        %v625 = vpop.permute.xlu0 %624
        %v627 = vsel %vm510, %v623, 0
        %v630 = vsel %vm510, %v625, 0
        %632 = vmatpush.bf16.xpose.msra.mxu0 0
        %633 = vmatpush.bf16.xpose.msra.mxu0 0
        %634 = vmatpush.bf16.xpose.msra.mxu0 0
        %635 = vmatpush.bf16.xpose.msra.mxu0 0
        %636 = vmatpush.bf16.xpose.msra.mxu0 0
        %637 = vmatpush.bf16.xpose.msra.mxu0 0
        %638 = vmatpush.bf16.xpose.msra.mxu0 0
        %639 = vmatpush.bf16.xpose.msra.mxu0 %v630
        %640 = vmatmul.bf16.gmra.mxu0 %v627
        %v641 = vpop.f32.mrf.mxu0
        %v642 = vadd.f32 0.0, %v641
        %v643 = vpop.f32.mrf.mxu0
        %644 = vdwg.mxu0
        %v645 = vsel %vm530, %v642, -inf
        %646 = vmax.xlane.f32.xlu0 %v645
        %v647 = vpop.xlane.xlu0 %646
        %v648 = vsub.f32 %v642, %v647
        %v649 = vmul.f32 %v648, 1.442695
        %v650 = vpow.pop %v649
        %v651 = vsel %vm530, %v650, 0.0
        %652 = vadd.xlane.f32.xlu0 %v651
        %v653 = vpop.xlane.xlu0 %652
        %v654 = vrcp.pop %v653
        %v655 = vmul.f32 %v650, %v654
        %v656 = vpack.c.bf16 %v655, %v655
        %657 = vrot.lane.b32.xlu0 %v547, 112
        %v658 = vpop.permute.xlu0 %657
        %v661 = vsel %vm530, %v656, 0
        %663 = vmatpush.bf16.msra.mxu0 0
        %664 = vmatpush.bf16.msra.mxu0 0
        %665 = vmatpush.bf16.msra.mxu0 0
        %666 = vmatpush.bf16.msra.mxu0 0
        %667 = vmatpush.bf16.msra.mxu0 0
        %668 = vmatpush.bf16.msra.mxu0 0
        %669 = vmatpush.bf16.msra.mxu0 0
        %670 = vmatpush.bf16.msra.mxu0 %v658
        %671 = vmatmul.bf16.gmra.mxu0 %v661
        %v672 = vpop.f32.mrf.mxu0
        %v673 = vadd.f32 0.0, %v672
        %v674 = vpop.f32.mrf.mxu0
        %675 = vdwg.mxu0
        %676 = vrot.lane.b32.xlu0 %v567, 104
        %v677 = vpop.permute.xlu0 %676
        %678 = vrot.lane.b32.xlu0 %v509, 104
        %v679 = vpop.permute.xlu0 %678
        %v681 = vsel %vm510, %v677, 0
        %v684 = vsel %vm510, %v679, 0
        %686 = vmatpush.bf16.xpose.msra.mxu0 0
        %687 = vmatpush.bf16.xpose.msra.mxu0 0
        %688 = vmatpush.bf16.xpose.msra.mxu0 0
        %689 = vmatpush.bf16.xpose.msra.mxu0 0
        %690 = vmatpush.bf16.xpose.msra.mxu0 0
        %691 = vmatpush.bf16.xpose.msra.mxu0 0
        %692 = vmatpush.bf16.xpose.msra.mxu0 0
        %693 = vmatpush.bf16.xpose.msra.mxu0 %v684
        %694 = vmatmul.bf16.gmra.mxu0 %v681
        %v695 = vpop.f32.mrf.mxu0
        %v696 = vadd.f32 0.0, %v695
        %v697 = vpop.f32.mrf.mxu0
        %698 = vdwg.mxu0
        %v699 = vsel %vm530, %v696, -inf
        %700 = vmax.xlane.f32.xlu0 %v699
        %v701 = vpop.xlane.xlu0 %700
        %v702 = vsub.f32 %v696, %v701
        %v703 = vmul.f32 %v702, 1.442695
        %v704 = vpow.pop %v703
        %v705 = vsel %vm530, %v704, 0.0
        %706 = vadd.xlane.f32.xlu0 %v705
        %v707 = vpop.xlane.xlu0 %706
        %v708 = vrcp.pop %v707
        %v709 = vmul.f32 %v704, %v708
        %v710 = vpack.c.bf16 %v709, %v709
        %711 = vrot.lane.b32.xlu0 %v547, 104
        %v712 = vpop.permute.xlu0 %711
        %v715 = vsel %vm530, %v710, 0
        %717 = vmatpush.bf16.msra.mxu0 0
        %718 = vmatpush.bf16.msra.mxu0 0
        %719 = vmatpush.bf16.msra.mxu0 0
        %720 = vmatpush.bf16.msra.mxu0 0
        %721 = vmatpush.bf16.msra.mxu0 0
        %722 = vmatpush.bf16.msra.mxu0 0
        %723 = vmatpush.bf16.msra.mxu0 0
        %724 = vmatpush.bf16.msra.mxu0 %v712
        %725 = vmatmul.bf16.gmra.mxu0 %v715
        %v726 = vpop.f32.mrf.mxu0
        %v727 = vadd.f32 0.0, %v726
        %v728 = vpop.f32.mrf.mxu0
        %729 = vdwg.mxu0
        %731 = vrot.lane.b32.xlu0 %v619, 8
        %v732 = vpop.permute.xlu0 %731
        %735 = vrot.lane.b32.xlu0 %v673, 16
        %v736 = vpop.permute.xlu0 %735
        %739 = vrot.lane.b32.xlu0 %v727, 24
        %v740 = vpop.permute.xlu0 %739
        %v742 = vsel %vm510, %v562, %v732
        %v743 = vsel %vm530, %v742, %v736
        %vm744 = vcmask 195584
        %v745 = vsel %vm744, %v743, %v740
        %v746 = vpack.c.bf16 %v745, %v745
        %v747 = vld [vmem:[#allocation2] sm:$0xf]
        %v748 = vld [vmem:[#allocation2 + $0x4] sm:$0xf]
        %v749 = vld [vmem:[#allocation2 + $0x8] sm:$0xf]
        %v750 = vld [vmem:[#allocation2 + $0xc] sm:$0xf]
        %v755 = vunpack.c.l.b16 %v747
        %v756 = vunpack.c.l.b16 %v748
        %v757 = vunpack.c.l.b16 %v749
        %v758 = vunpack.c.l.b16 %v750
        %v759 = vpack.c.b16 %v756, %v755
        %v760 = vpack.c.b16 %v758, %v757
        %v764 = vsel %vm425, %v746, 0
        %766 = vmatpush.bf16.msra.mxu0 0
        %767 = vmatpush.bf16.msra.mxu0 0
        %768 = vmatpush.bf16.msra.mxu0 0
        %769 = vmatpush.bf16.msra.mxu0 0
        %770 = vmatpush.bf16.msra.mxu0 0
        %771 = vmatpush.bf16.msra.mxu0 0
        %772 = vmatpush.bf16.msra.mxu0 %v760
        %773 = vmatpush.bf16.msra.mxu0 %v759
        %774 = vmatmul.bf16.gmra.mxu0 %v764
        %v775 = vpop.f32.mrf.mxu0
        %v776 = vadd.f32 0.0, %v775
        %v777 = vpop.f32.mrf.mxu0
        %778 = vdwg.mxu0
        %v779 = vadd.f32 %v422, %v776
        %v780 = vld [vmem:[%s8] sm:$0x1]
        %v782 = vperm.slane %v780, 0
        %v784 = vadd.f32 %v779, %v782
        %785 = vst.msk [vmem:[%s420] sm:$0xff] %vm425, %v784
        %p786 = scmp.lt.s32.totalorder %s25, 0
        %s787 = scalar_select %p786, %s25, 0
        %p788 = scmp.lt.s32.totalorder %s26, 1
        %s789 = scalar_select %p788, %s26, 1
        %s790 = smul.addr %s787, 2
        %s791 = sadd.s32 %s789, %s790
        %s792 = smul.addr %s791, 8
        %s793 = scalar_lea.vmem %s9, %s792
        // Predicated region
        $region61: #{decoder_forward.19} parent=55 // pred_check
          %p794 = pneg %p259
        $region62: #{decoder_forward.19} parent=55 // pred_check_branch
          %796 = sbr.rel (%p794) target = $region64
        $region63: #{decoder_forward.19} parent=55 // pred_region
          _
        $region64: #{decoder_forward.19} parent=55 // pred_fallthru
          _
      $region56: #{decoder_forward.19} parent=5 // pred_fallthru
        _
      %p797 = scmp.le.s32.totalorder 2, %s16
      // Predicated region
      $region65: #{decoder_forward.19} parent=5 // pred_check
        %p798 = pneg %p797
      $region66: #{decoder_forward.19} parent=5 // pred_check_branch
        %800 = sbr.rel (%p798) target = $region68
      $region67: #{decoder_forward.19} parent=5 // pred_region
        %s801 = ssub.s32 %s16, 2
        // Predicated region
        $region69: #{decoder_forward.19} parent=67 // pred_check
          %p802 = pneg %p265
        $region70: #{decoder_forward.19} parent=67 // pred_check_branch
          %804 = sbr.rel (%p802) target = $region72
        $region71: #{decoder_forward.19} parent=67 // pred_region
          %p805 = scmp.lt.s32.totalorder %s27, 0
          %s806 = scalar_select %p805, %s27, 0
          %p807 = scmp.lt.s32.totalorder %s28, 1
          %s808 = scalar_select %p807, %s28, 1
          %s809 = smul.addr %s806, 2
          %s810 = sadd.s32 %s808, %s809
          %s811 = smul.addr %s810, 8
          %s812 = scalar_lea.vmem %s9, %s811
        $region72: #{decoder_forward.19} parent=67 // pred_fallthru
          _
      $region68: #{decoder_forward.19} parent=5 // pred_fallthru
        _
    $region6: #{decoder_forward.19} parent=1 // loop_footer
      %s20 = sadd.s32 1, %s16
    $region7: #{decoder_forward.19} parent=1 // loop_footer_branch
      %15 = sbr.rel target = $region3
    $region8: #{decoder_forward.19} parent=1 // loop_exit
      _
    %813 = vsyncpa [#allocation3], 1
    %s814 = scalar_lea.sflag [#allocation3], 1
    %815 = vsyncpa %s814, 1

// kernel: decoder_forward.20
$region0: #{decoder_forward.20}
  #allocation0 [shape = 'u32[]', space=smem, size = 0x4, offset = 0x4, fixed_abs, tag = 'smem constant byte address 0x4 - core index']
  #allocation1 [shape = 'u32[72,128]{1,0:T(1,128)}', space=vmem, size = 0x9000, scoped, tag = 'internal scratch']
  %s0 = inlined_call_operand.vmem [shape: f32[16,32], index: 0, kind: input, shape index: {}]
  %s1 = inlined_call_operand.vmem [shape: f32[1,32], index: 1, kind: input, shape index: {}]
  %s2 = inlined_call_operand.vmem [shape: f32[1,32], index: 2, kind: input, shape index: {}]
  %s3 = inlined_call_operand.vmem [shape: bf16[32,128], index: 3, kind: input, shape index: {}]
  %s4 = inlined_call_operand.vmem [shape: f32[1,128], index: 4, kind: input, shape index: {}]
  %s5 = inlined_call_operand.vmem [shape: bf16[128,32], index: 5, kind: input, shape index: {}]
  %s6 = inlined_call_operand.vmem [shape: f32[1,32], index: 6, kind: input, shape index: {}]
  %s7 = inlined_call_operand.vmem [shape: f32[16,32], index: 7, kind: output, shape index: {}]
  %s8 = sld [smem:[#allocation0]]
  $region38: #{decoder_forward.20} parent=0
    _
  %s10 = ssub.s32 1, %s8
  %s11 = scalar_select 0, %s10, %s8
  // Predicated region
  $region2: #{decoder_forward.20} parent=0 // pred_check
    _
  $region3: #{decoder_forward.20} parent=0 // pred_check_branch
    %13 = sbr.rel (0) target = $region5
  $region4: #{decoder_forward.20} parent=0 // pred_region
    _
  $region5: #{decoder_forward.20} parent=0 // pred_fallthru
    _
  // Predicated region
  $region6: #{decoder_forward.20} parent=0 // pred_check
    _
  $region7: #{decoder_forward.20} parent=0 // pred_check_branch
    %15 = sbr.rel (0) target = $region9
  $region8: #{decoder_forward.20} parent=0 // pred_region
    _
  $region9: #{decoder_forward.20} parent=0 // pred_fallthru
    _
  // Predicated region
  $region10: #{decoder_forward.20} parent=0 // pred_check
    _
  $region11: #{decoder_forward.20} parent=0 // pred_check_branch
    %17 = sbr.rel (0) target = $region13
  $region12: #{decoder_forward.20} parent=0 // pred_region
    _
  $region13: #{decoder_forward.20} parent=0 // pred_fallthru
    _
  // Predicated region
  $region14: #{decoder_forward.20} parent=0 // pred_check
    _
  $region15: #{decoder_forward.20} parent=0 // pred_check_branch
    %19 = sbr.rel (0) target = $region17
  $region16: #{decoder_forward.20} parent=0 // pred_region
    _
  $region17: #{decoder_forward.20} parent=0 // pred_fallthru
    _
  // Predicated region
  $region18: #{decoder_forward.20} parent=0 // pred_check
    _
  $region19: #{decoder_forward.20} parent=0 // pred_check_branch
    %21 = sbr.rel (0) target = $region21
  $region20: #{decoder_forward.20} parent=0 // pred_region
    _
  $region21: #{decoder_forward.20} parent=0 // pred_fallthru
    _
  // Predicated region
  $region22: #{decoder_forward.20} parent=0 // pred_check
    _
  $region23: #{decoder_forward.20} parent=0 // pred_check_branch
    %23 = sbr.rel (0) target = $region25
  $region24: #{decoder_forward.20} parent=0 // pred_region
    _
  $region25: #{decoder_forward.20} parent=0 // pred_fallthru
    _
  // Predicated region
  $region26: #{decoder_forward.20} parent=0 // pred_check
    _
  $region27: #{decoder_forward.20} parent=0 // pred_check_branch
    %25 = sbr.rel (0) target = $region29
  $region28: #{decoder_forward.20} parent=0 // pred_region
    _
  $region29: #{decoder_forward.20} parent=0 // pred_fallthru
    _
  %v27 = vld [vmem:[%s0] sm:$0xff]
  %v28 = vld [vmem:[%s0 + $0x8] sm:$0xff]
  %v29 = vld [vmem:[%s1] sm:$0x1]
  %v30 = vld [vmem:[%s2] sm:$0x1]
  %vm31 = vcmask 261120
  %v32 = vsel %vm31, %v27, 0.0
  %33 = vadd.xlane.f32.xlu0 %v32
  %v34 = vpop.xlane.xlu0 %33
  %v35 = vsel %vm31, %v28, 0.0
  %36 = vadd.xlane.f32.xlu0 %v35
  %v37 = vpop.xlane.xlu0 %36
  %v38 = vrcp.pop 32.0
  %v39 = vmul.f32 32.0, %v38
  %v40 = vsub.f32 1.0, %v39
  %v41 = vmul.f32 %v38, %v40
  %v42 = vadd.f32 %v38, %v41
  %vm43 = vweird.f32 %v38
  %v44 = vsel %vm43, %v38, %v42
  %v45 = vmul.f32 %v34, %v44
  %v46 = vmul.f32 %v37, %v44
  %v47 = vsub.f32 %v27, %v45
  %v48 = vsub.f32 %v28, %v46
  %v49 = vmul.f32 %v47, %v47
  %v50 = vmul.f32 %v48, %v48
  %v51 = vsel %vm31, %v49, 0.0
  %52 = vadd.xlane.f32.xlu0 %v51
  %v53 = vpop.xlane.xlu0 %52
  %v54 = vsel %vm31, %v50, 0.0
  %55 = vadd.xlane.f32.xlu0 %v54
  %v56 = vpop.xlane.xlu0 %55
  %v57 = vmul.f32 %v53, %v44
  %v58 = vmul.f32 %v56, %v44
  %v59 = vadd.f32 %v57, 1e-05
  %v60 = vadd.f32 %v58, 1e-05
  %v61 = vrsqrt.pop %v59
  %v62 = vmul.f32 %v61, %v59
  %v63 = vmul.f32 %v62, %v61
  %v64 = vmul.f32 0.5, %v63
  %v65 = vsub.f32 1.5, %v64
  %v66 = vmul.f32 %v61, %v65
  %vm67 = vweird.f32 %v59
  %vm68 = vweird.f32 %v61
  %vm69 = vmor %vm67, %vm68
  %v70 = vsel %vm69, %v61, %v66
  %v71 = vrsqrt.pop %v60
  %v72 = vmul.f32 %v71, %v60
  %v73 = vmul.f32 %v72, %v71
  %v74 = vmul.f32 0.5, %v73
  %v75 = vsub.f32 1.5, %v74
  %v76 = vmul.f32 %v71, %v75
  %vm77 = vweird.f32 %v60
  %vm78 = vweird.f32 %v71
  %vm79 = vmor %vm77, %vm78
  %v80 = vsel %vm79, %v71, %v76
  %v81 = vmul.f32 %v47, %v70
  %v82 = vmul.f32 %v48, %v80
  %v84 = vperm.slane %v29, 0
  %v86 = vmul.f32 %v81, %v84
  %v87 = vmul.f32 %v82, %v84
  %v89 = vperm.slane %v30, 0
  %v91 = vadd.f32 %v86, %v89
  %v92 = vadd.f32 %v87, %v89
  %v93 = vpack.c.bf16 %v92, %v91
  %v94 = vld [vmem:[%s3] sm:$0xf]
  %v95 = vld [vmem:[%s3 + $0x4] sm:$0xf]
  %v96 = vld [vmem:[%s3 + $0x8] sm:$0xf]
  %v97 = vld [vmem:[%s3 + $0xc] sm:$0xf]
  %v98 = vld [vmem:[%s4] sm:$0x1]
  %v100 = vperm.slane %v98, 0
  %v106 = vunpack.c.l.b16 %v94
  %v107 = vunpack.c.l.b16 %v95
  %v108 = vunpack.c.l.b16 %v96
  %v109 = vunpack.c.l.b16 %v97
  %v110 = vpack.c.b16 %v107, %v106
  %v111 = vpack.c.b16 %v109, %v108
  %v115 = vsel %vm31, %v93, 0
  %117 = vmatpush.bf16.msra.mxu0 0
  %118 = vmatpush.bf16.msra.mxu0 0
  %119 = vmatpush.bf16.msra.mxu0 0
  %120 = vmatpush.bf16.msra.mxu0 0
  %121 = vmatpush.bf16.msra.mxu0 0
  %122 = vmatpush.bf16.msra.mxu0 0
  %123 = vmatpush.bf16.msra.mxu0 %v111
  %124 = vmatpush.bf16.msra.mxu0 %v110
  %125 = vmatmul.bf16.gmra.mxu0 %v115
  %v126 = vpop.f32.mrf.mxu0
  %v127 = vadd.f32 %v100, %v126
  %v128 = vpop.f32.mrf.mxu0
  %v129 = vadd.f32 %v100, %v128
  %130 = vdwg.mxu0
  %v131 = vmul.f32 %v127, %v127
  %v132 = vmul.f32 %v129, %v129
  %v133 = vmul.f32 %v127, %v131
  %v134 = vmul.f32 %v129, %v132
  %v135 = vmul.f32 %v133, 0.044715
  %v136 = vmul.f32 %v134, 0.044715
  %v137 = vadd.f32 %v127, %v135
  %v138 = vadd.f32 %v129, %v136
  %v139 = vmul.f32 %v137, 0.7978846
  %v140 = vmul.f32 %v138, 0.7978846
  %v141 = vtanh.pop %v139
  %v142 = vtanh.pop %v140
  %v143 = vadd.f32 %v141, 1.0
  %v144 = vadd.f32 %v142, 1.0
  %v145 = vmul.f32 %v143, 0.5
  %v146 = vmul.f32 %v144, 0.5
  %v147 = vmul.f32 %v127, %v145
  %v148 = vmul.f32 %v129, %v146
  %v149 = vpack.c.bf16 %v148, %v147
  %v150 = vld [vmem:[%s5] sm:$0xf]
  %v151 = vld [vmem:[%s5 + $0x4] sm:$0xf]
  %v152 = vld [vmem:[%s5 + $0x8] sm:$0xf]
  %v153 = vld [vmem:[%s5 + $0xc] sm:$0xf]
  %v154 = vld [vmem:[%s5 + $0x10] sm:$0xf]
  %v155 = vld [vmem:[%s5 + $0x14] sm:$0xf]
  %v156 = vld [vmem:[%s5 + $0x18] sm:$0xf]
  %v157 = vld [vmem:[%s5 + $0x1c] sm:$0xf]
  %v158 = vld [vmem:[%s5 + $0x20] sm:$0xf]
  %v159 = vld [vmem:[%s5 + $0x24] sm:$0xf]
  %v160 = vld [vmem:[%s5 + $0x28] sm:$0xf]
  %v161 = vld [vmem:[%s5 + $0x2c] sm:$0xf]
  %v162 = vld [vmem:[%s5 + $0x30] sm:$0xf]
  %v163 = vld [vmem:[%s5 + $0x34] sm:$0xf]
  %v164 = vld [vmem:[%s5 + $0x38] sm:$0xf]
  %v165 = vld [vmem:[%s5 + $0x3c] sm:$0xf]
  %v166 = vld [vmem:[%s6] sm:$0x1]
  %v168 = vperm.slane %v166, 0
  %v186 = vunpack.c.l.b16 %v150
  %v187 = vunpack.c.l.b16 %v151
  %v188 = vunpack.c.l.b16 %v152
  %v189 = vunpack.c.l.b16 %v153
  %v190 = vunpack.c.l.b16 %v154
  %v191 = vunpack.c.l.b16 %v155
  %v192 = vunpack.c.l.b16 %v156
  %v193 = vunpack.c.l.b16 %v157
  %v194 = vunpack.c.l.b16 %v158
  %v195 = vunpack.c.l.b16 %v159
  %v196 = vunpack.c.l.b16 %v160
  %v197 = vunpack.c.l.b16 %v161
  %v198 = vunpack.c.l.b16 %v162
  %v199 = vunpack.c.l.b16 %v163
  %v200 = vunpack.c.l.b16 %v164
  %v201 = vunpack.c.l.b16 %v165
  %v202 = vpack.c.b16 %v187, %v186
  %v203 = vpack.c.b16 %v189, %v188
  %v204 = vpack.c.b16 %v191, %v190
  %v205 = vpack.c.b16 %v193, %v192
  %v206 = vpack.c.b16 %v195, %v194
  %v207 = vpack.c.b16 %v197, %v196
  %v208 = vpack.c.b16 %v199, %v198
  %v209 = vpack.c.b16 %v201, %v200
  %218 = vmatpush.bf16.msra.mxu0 %v209
  %219 = vmatpush.bf16.msra.mxu0 %v208
  %220 = vmatpush.bf16.msra.mxu0 %v207
  %221 = vmatpush.bf16.msra.mxu0 %v206
  %222 = vmatpush.bf16.msra.mxu0 %v205
  %223 = vmatpush.bf16.msra.mxu0 %v204
  %224 = vmatpush.bf16.msra.mxu0 %v203
  %225 = vmatpush.bf16.msra.mxu0 %v202
  %226 = vmatmul.bf16.gmra.mxu0 %v149
  %v227 = vpop.f32.mrf.mxu0
  %v228 = vadd.f32 %v168, %v227
  %v229 = vpop.f32.mrf.mxu0
  %v230 = vadd.f32 %v168, %v229
  %231 = vdwg.mxu0
  %v232 = vadd.f32 %v27, %v228
  %v233 = vadd.f32 %v28, %v230
  %234 = vst.msk [vmem:[%s7] sm:$0xff] %vm31, %v232
  %235 = vst.msk [vmem:[%s7 + $0x8] sm:$0xff] %vm31, %v233
  // Predicated region
  $region30: #{decoder_forward.20} parent=0 // pred_check
    _
  $region31: #{decoder_forward.20} parent=0 // pred_check_branch
    %237 = sbr.rel (0) target = $region33
  $region32: #{decoder_forward.20} parent=0 // pred_region
    _
  $region33: #{decoder_forward.20} parent=0 // pred_fallthru
    _
  // Predicated region
  $region34: #{decoder_forward.20} parent=0 // pred_check
    _
  $region35: #{decoder_forward.20} parent=0 // pred_check_branch
    %239 = sbr.rel (0) target = $region37
  $region36: #{decoder_forward.20} parent=0 // pred_region
    _
  $region37: #{decoder_forward.20} parent=0 // pred_fallthru
    _

// kernel: decoder_forward.21
$region0: #{decoder_forward.21}
  #allocation0 [shape = 'u32[]', space=smem, size = 0x4, offset = 0x4, fixed_abs, tag = 'smem constant byte address 0x4 - core index']
  #allocation1 [shape = 'u32[72,128]{1,0:T(1,128)}', space=vmem, size = 0x9000, scoped, tag = 'internal scratch']
  %s0 = inlined_call_operand.vmem [shape: f32[16,32], index: 0, kind: input, shape index: {}]
  %s1 = inlined_call_operand.vmem [shape: f32[1,32], index: 1, kind: input, shape index: {}]
  %s2 = inlined_call_operand.vmem [shape: f32[1,32], index: 2, kind: input, shape index: {}]
  %s3 = inlined_call_operand.hbm [shape: f32[16,32], index: 3, kind: output, shape index: {}]
  %s4 = sld [smem:[#allocation0]]
  $region22: #{decoder_forward.21} parent=0
    _
  %s6 = ssub.s32 1, %s4
  %s7 = scalar_select 0, %s6, %s4
  $region1: #{decoder_forward.21} parent=0
    #allocation2 [shape = 'u8[8192]{0}', space=vmem, size = 0x2000, scoped, tag = 'output window, operand 0, single buffered']
    #allocation3 [shape = 's32[1]{0}', space=sflag, size = 0x4, scoped, tag = 'scoped memory for decoder_forward.21']
    %8 = vsyncpa [#allocation3], 0
    // Predicated region
    $region2: #{decoder_forward.21} parent=1 // pred_check
      _
    $region3: #{decoder_forward.21} parent=1 // pred_check_branch
      %10 = sbr.rel (0) target = $region5
    $region4: #{decoder_forward.21} parent=1 // pred_region
      _
    $region5: #{decoder_forward.21} parent=1 // pred_fallthru
      _
    // Predicated region
    $region6: #{decoder_forward.21} parent=1 // pred_check
      _
    $region7: #{decoder_forward.21} parent=1 // pred_check_branch
      %12 = sbr.rel (0) target = $region9
    $region8: #{decoder_forward.21} parent=1 // pred_region
      _
    $region9: #{decoder_forward.21} parent=1 // pred_fallthru
      _
    // Predicated region
    $region10: #{decoder_forward.21} parent=1 // pred_check
      _
    $region11: #{decoder_forward.21} parent=1 // pred_check_branch
      %14 = sbr.rel (0) target = $region13
    $region12: #{decoder_forward.21} parent=1 // pred_region
      _
    $region13: #{decoder_forward.21} parent=1 // pred_fallthru
      _
    %v15 = vld [vmem:[%s0] sm:$0xff]
    %v16 = vld [vmem:[%s0 + $0x8] sm:$0xff]
    %v17 = vld [vmem:[%s1] sm:$0x1]
    %v18 = vld [vmem:[%s2] sm:$0x1]
    %vm19 = vcmask 261120
    %v20 = vsel %vm19, %v15, 0.0
    %21 = vadd.xlane.f32.xlu0 %v20
    %v22 = vpop.xlane.xlu0 %21
    %v23 = vsel %vm19, %v16, 0.0
    %24 = vadd.xlane.f32.xlu0 %v23
    %v25 = vpop.xlane.xlu0 %24
    %v26 = vrcp.pop 32.0
    %v27 = vmul.f32 32.0, %v26
    %v28 = vsub.f32 1.0, %v27
    %v29 = vmul.f32 %v26, %v28
    %v30 = vadd.f32 %v26, %v29
    %vm31 = vweird.f32 %v26
    %v32 = vsel %vm31, %v26, %v30
    %v33 = vmul.f32 %v22, %v32
    %v34 = vmul.f32 %v25, %v32
    %v35 = vsub.f32 %v15, %v33
    %v36 = vsub.f32 %v16, %v34
    %v37 = vmul.f32 %v35, %v35
    %v38 = vmul.f32 %v36, %v36
    %v39 = vsel %vm19, %v37, 0.0
    %40 = vadd.xlane.f32.xlu0 %v39
    %v41 = vpop.xlane.xlu0 %40
    %v42 = vsel %vm19, %v38, 0.0
    %43 = vadd.xlane.f32.xlu0 %v42
    %v44 = vpop.xlane.xlu0 %43
    %v45 = vmul.f32 %v41, %v32
    %v46 = vmul.f32 %v44, %v32
    %v47 = vadd.f32 %v45, 1e-05
    %v48 = vadd.f32 %v46, 1e-05
    %v49 = vrsqrt.pop %v47
    %v50 = vmul.f32 %v49, %v47
    %v51 = vmul.f32 %v50, %v49
    %v52 = vmul.f32 0.5, %v51
    %v53 = vsub.f32 1.5, %v52
    %v54 = vmul.f32 %v49, %v53
    %vm55 = vweird.f32 %v47
    %vm56 = vweird.f32 %v49
    %vm57 = vmor %vm55, %vm56
    %v58 = vsel %vm57, %v49, %v54
    %v59 = vrsqrt.pop %v48
    %v60 = vmul.f32 %v59, %v48
    %v61 = vmul.f32 %v60, %v59
    %v62 = vmul.f32 0.5, %v61
    %v63 = vsub.f32 1.5, %v62
    %v64 = vmul.f32 %v59, %v63
    %vm65 = vweird.f32 %v48
    %vm66 = vweird.f32 %v59
    %vm67 = vmor %vm65, %vm66
    %v68 = vsel %vm67, %v59, %v64
    %v69 = vmul.f32 %v35, %v58
    %v70 = vmul.f32 %v36, %v68
    %v72 = vperm.slane %v17, 0
    %v74 = vmul.f32 %v69, %v72
    %v75 = vmul.f32 %v70, %v72
    %v77 = vperm.slane %v18, 0
    %v79 = vadd.f32 %v74, %v77
    %v80 = vadd.f32 %v75, %v77
    %81 = vst.msk [vmem:[#allocation2] sm:$0xff] %vm19, %v79
    %82 = vst.msk [vmem:[#allocation2 + $0x8] sm:$0xff] %vm19, %v80
    // Predicated region
    $region14: #{decoder_forward.21} parent=1 // pred_check
      _
    $region15: #{decoder_forward.21} parent=1 // pred_check_branch
      %84 = sbr.rel (0) target = $region17
    $region16: #{decoder_forward.21} parent=1 // pred_region
      %86 = vsyncadd [#allocation3], 0
      %s87 = sshll.u32 [#allocation2], 4
      %s88 = int_to_ptr.vmem [resolvable:$true] %s87
      %s89 = sshll.u32 %s3, 4
      %s90 = int_to_ptr.hbm [resolvable:$true] %s89
      %95 = dma.vmem_to_hbm [thread:$0]  %s88, 256, %s90, [#allocation3], 128, 128, 8
    $region17: #{decoder_forward.21} parent=1 // pred_fallthru
      _
    // Predicated region
    $region18: #{decoder_forward.21} parent=1 // pred_check
      _
    $region19: #{decoder_forward.21} parent=1 // pred_check_branch
      %97 = sbr.rel (0) target = $region21
    $region20: #{decoder_forward.21} parent=1 // pred_region
      %99 = dma.done [#allocation3], 256
    $region21: #{decoder_forward.21} parent=1 // pred_fallthru
      _
    %100 = vsyncpa [#allocation3], 1

</llo_original>
